<compile_context>
chip_gen: v5e
topology: v5e:2x2
jax: 0.10.0
libtpu: 0.0.40
codegen_flags: <defaults>
</compile_context>

<pallas_src>
import functools
import math

import jax
import jax.numpy as jnp
from jax import lax
from jax.experimental import pallas as pl
from jax.experimental.pallas import tpu as pltpu

F32 = jnp.float32
BF16 = jnp.bfloat16          # storage + MXU-input dtype (f32 accumulation)
LN_EPS = 1e-5

# Matmul tile targets; bf16 double-buffered blocks stay well inside the default
# scoped VMEM on v5e (16 MiB) and v6e/v7x (32 MiB).
_TM, _TN, _TK = 256, 512, 512


def _round_up(x, m):
    return ((x + m - 1) // m) * m


def _pick_tile(dim, target, aligns=(256, 128)):
    """Largest block <= target that divides `dim`; prefers 256-aligned tiles
    (v6e/v7x 2x256^2 MXU), then 128 (v5e); falls back to the full dim."""
    if dim <= target:
        return dim
    for align in aligns:
        cand = (target // align) * align
        while cand >= align:
            if dim % cand == 0:
                return cand
            cand -= align
    return dim


def _seq_tile(n, target=256):
    """Token tile for attention: multiple of 16 dividing n, else the full n."""
    if n <= target:
        return n
    cand = (target // 16) * 16
    while cand >= 16:
        if n % cand == 0:
            return cand
        cand -= 16
    return n


# ---------------------------------------------------------------------------
# Pallas kernels
# ---------------------------------------------------------------------------
def _dense_kernel(x_ref, w_ref, b_ref, *refs, act, has_residual):
    """Tiled y = act(x @ w + b) [+ residual]; grid (M/tm, N/tn, K/tk)."""
    if has_residual:
        res_ref, o_ref, acc_ref = refs
    else:
        res_ref = None
        o_ref, acc_ref = refs

    @pl.when(pl.program_id(2) == 0)
    def _():
        acc_ref[...] = jnp.zeros_like(acc_ref)

    acc_ref[...] += jnp.dot(x_ref[...], w_ref[...],
                            preferred_element_type=jnp.float32)

    @pl.when(pl.program_id(2) == pl.num_programs(2) - 1)
    def _():
        y = acc_ref[...] + b_ref[...]
        if act == "gelu":
            y = jax.nn.gelu(y)
        elif act == "relu":
            y = jnp.maximum(y, 0.0)
        if has_residual:
            y = y + res_ref[...].astype(jnp.float32)
        o_ref[...] = y.astype(o_ref.dtype)


def _ln_dense_kernel(x_ref, g_ref, b_ref, w_ref, bias_ref, o_ref, xn_ref,
                     *, act, eps):
    """Fused y = act(LayerNorm(x) @ w + bias); grid (M/tm, N/tn), full K.
    LN is computed once per row tile (j == 0) into a bf16 VMEM scratch and
    reused for every N tile."""
    @pl.when(pl.program_id(1) == 0)
    def _():
        x = x_ref[...].astype(jnp.float32)
        mu = jnp.mean(x, axis=-1, keepdims=True)
        var = jnp.mean(jnp.square(x - mu), axis=-1, keepdims=True)
        xn = (x - mu) * lax.rsqrt(var + eps)
        xn_ref[...] = (xn * g_ref[...] + b_ref[...]).astype(xn_ref.dtype)

    y = jnp.dot(xn_ref[...], w_ref[...],
                preferred_element_type=jnp.float32) + bias_ref[...]
    if act == "gelu":
        y = jax.nn.gelu(y)
    elif act == "relu":
        y = jnp.maximum(y, 0.0)
    o_ref[...] = y.astype(o_ref.dtype)


def _layernorm_kernel(x_ref, g_ref, b_ref, o_ref, *, eps):
    x = x_ref[...].astype(jnp.float32)
    mu = jnp.mean(x, axis=-1, keepdims=True)
    var = jnp.mean(jnp.square(x - mu), axis=-1, keepdims=True)
    y = (x - mu) * lax.rsqrt(var + eps)
    o_ref[...] = (y * g_ref[...] + b_ref[...]).astype(o_ref.dtype)


def _flash_attn_kernel(q_ref, k_ref, v_ref, o_ref, m_ref, l_ref, acc_ref,
                       *, heads, scale):
    """Token-major flash attention.  Grid (B, Nq/tq, Nk/tk); all heads handled
    inside one grid step via static lane slices of the packed feature dim.
    Online softmax over the KV grid axis -> no [N,N] score materialization."""
    kv_i = pl.program_id(2)
    last = kv_i == pl.num_programs(2) - 1
    dim = q_ref.shape[2]
    dh = dim // heads

    @pl.when(kv_i == 0)
    def _():
        m_ref[...] = jnp.full_like(m_ref, -jnp.inf)
        l_ref[...] = jnp.zeros_like(l_ref)
        acc_ref[...] = jnp.zeros_like(acc_ref)

    for h in range(heads):
        sl = slice(h * dh, (h + 1) * dh)
        qh = q_ref[0, :, sl]                                     # [tq, dh] bf16
        kh = k_ref[0, :, sl]                                     # [tk, dh] bf16
        vh = v_ref[0, :, sl]                                     # [tk, dh] bf16
        s = lax.dot_general(qh, kh, (((1,), (1,)), ((), ())),
                            preferred_element_type=jnp.float32) * scale
        m_prev = m_ref[:, h:h + 1]
        l_prev = l_ref[:, h:h + 1]
        m_new = jnp.maximum(m_prev, jnp.max(s, axis=-1, keepdims=True))
        alpha = jnp.exp(m_prev - m_new)
        p = jnp.exp(s - m_new)
        l_new = alpha * l_prev + jnp.sum(p, axis=-1, keepdims=True)
        acc_new = alpha * acc_ref[:, sl] + jnp.dot(
            p.astype(vh.dtype), vh, preferred_element_type=jnp.float32)
        m_ref[:, h:h + 1] = m_new
        l_ref[:, h:h + 1] = l_new
        acc_ref[:, sl] = acc_new

        @pl.when(last)
        def _(acc_new=acc_new, l_new=l_new, sl=sl):
            o_ref[0, :, sl] = (acc_new * pl.reciprocal(l_new, approx=True)
                               ).astype(o_ref.dtype)


def _regression_kernel(x_ref, g_ref, b_ref, w1_ref, b1_ref, w2_ref, b2_ref,
                       o_ref, *, eps):
    """Fused regression head: final LN + feature-dim mean pool + fc1(relu) +
    fc2 (rot/tr heads block-diagonal), one VMEM-resident block."""
    x = x_ref[...].astype(jnp.float32)                           # [B, N, D]
    mu = jnp.mean(x, axis=-1, keepdims=True)
    var = jnp.mean(jnp.square(x - mu), axis=-1, keepdims=True)
    y = (x - mu) * lax.rsqrt(var + eps)
    y = y * g_ref[...] + b_ref[...]
    pooled = jnp.mean(y, axis=-1)                                # [B, N]
    h = jnp.dot(pooled, w1_ref[...],
                preferred_element_type=jnp.float32) + b1_ref[...]
    h = jnp.maximum(h, 0.0)
    out = jnp.dot(h, w2_ref[...],
                  preferred_element_type=jnp.float32) + b2_ref[...]
    o_ref[...] = out.astype(o_ref.dtype)


# ---------------------------------------------------------------------------
# Kernel wrappers
# ---------------------------------------------------------------------------
def dense(x2d, fc, act="none", residual=None):
    """Tiled, pipelined y = act(x @ w + b) [+ residual].  bf16 in/out, f32 acc.
    Rows are zero-padded to a tile multiple (cdiv grid) instead of shrinking
    the row tile; residual buffer is aliased to the output."""
    M, K = x2d.shape
    N = fc["w"].shape[1]
    x2d = x2d.astype(BF16)
    tm = min(_TM, _round_up(M, 16))            # 16: bf16 sublane packing
    Mp = _round_up(M, tm)
    tn = _pick_tile(N, _TN)
    tk = _pick_tile(K, _TK)
    if Mp != M:
        x2d = jnp.pad(x2d, ((0, Mp - M), (0, 0)))
    args = [x2d, fc["w"], fc["b"].reshape(1, N)]
    in_specs = [pl.BlockSpec((tm, tk), lambda i, j, k: (i, k)),
                pl.BlockSpec((tk, tn), lambda i, j, k: (k, j)),
                pl.BlockSpec((1, tn), lambda i, j, k: (0, j))]
    io_aliases = {}
    if residual is not None:
        res = residual.astype(BF16)
        if Mp != M:
            res = jnp.pad(res, ((0, Mp - M), (0, 0)))
        args.append(res)
        in_specs.append(pl.BlockSpec((tm, tn), lambda i, j, k: (i, j)))
        io_aliases = {3: 0}                    # donate residual buffer -> out
    out = pl.pallas_call(
        functools.partial(_dense_kernel, act=act,
                          has_residual=residual is not None),
        grid=(Mp // tm, N // tn, K // tk),
        in_specs=in_specs,
        out_specs=pl.BlockSpec((tm, tn), lambda i, j, k: (i, j)),
        out_shape=jax.ShapeDtypeStruct((Mp, N), BF16),
        scratch_shapes=[pltpu.VMEM((tm, tn), jnp.float32)],
        input_output_aliases=io_aliases,
        compiler_params=pltpu.CompilerParams(
            dimension_semantics=("parallel", "parallel", "arbitrary")),
    )(*args)
    return out if Mp == M else out[:M]


def ln_dense(x2d, ln, fc, act="none"):
    """Fused y = act(LayerNorm(x) @ w + b); LN cached in VMEM across N tiles."""
    M, K = x2d.shape
    N = fc["w"].shape[1]
    x2d = x2d.astype(BF16)
    tm = min(_TM, _round_up(M, 16))
    Mp = _round_up(M, tm)
    tn = _pick_tile(N, _TN)
    if Mp != M:
        x2d = jnp.pad(x2d, ((0, Mp - M), (0, 0)))
    out = pl.pallas_call(
        functools.partial(_ln_dense_kernel, act=act, eps=LN_EPS),
        grid=(Mp // tm, N // tn),
        in_specs=[pl.BlockSpec((tm, K), lambda i, j: (i, 0)),
                  pl.BlockSpec((1, K), lambda i, j: (0, 0)),
                  pl.BlockSpec((1, K), lambda i, j: (0, 0)),
                  pl.BlockSpec((K, tn), lambda i, j: (0, j)),
                  pl.BlockSpec((1, tn), lambda i, j: (0, j))],
        out_specs=pl.BlockSpec((tm, tn), lambda i, j: (i, j)),
        out_shape=jax.ShapeDtypeStruct((Mp, N), BF16),
        scratch_shapes=[pltpu.VMEM((tm, K), BF16)],
        compiler_params=pltpu.CompilerParams(
            # j must run in-order per row tile (LN scratch written at j == 0).
            dimension_semantics=("parallel", "arbitrary")),
    )(x2d, ln["g"].reshape(1, K), ln["b"].reshape(1, K),
      fc["w"], fc["b"].reshape(1, N))
    return out if Mp == M else out[:M]


def layer_norm(x2d, ln):
    M, D = x2d.shape
    x2d = x2d.astype(BF16)
    tm = min(2 * _TM, _round_up(M, 16))
    Mp = _round_up(M, tm)
    if Mp != M:
        x2d = jnp.pad(x2d, ((0, Mp - M), (0, 0)))
    out = pl.pallas_call(
        functools.partial(_layernorm_kernel, eps=LN_EPS),
        grid=(Mp // tm,),
        in_specs=[pl.BlockSpec((tm, D), lambda i: (i, 0)),
                  pl.BlockSpec((1, D), lambda i: (0, 0)),
                  pl.BlockSpec((1, D), lambda i: (0, 0))],
        out_specs=pl.BlockSpec((tm, D), lambda i: (i, 0)),
        out_shape=jax.ShapeDtypeStruct((Mp, D), BF16),
        compiler_params=pltpu.CompilerParams(dimension_semantics=("parallel",)),
    )(x2d, ln["g"].reshape(1, D), ln["b"].reshape(1, D))
    return out if Mp == M else out[:M]


def attention(q_arr, kv_arr, heads, dim):
    """Token-major MHA (flash-style KV loop), all heads per grid step.

    Self-attention : q_arr = packed qkv [B, N, 3*dim], kv_arr = None.
    Cross-attention: q_arr = q [B, Nq, dim], kv_arr = packed kv [B, Nk, 2*dim].
    Requires dim % 128 == 0 so the packed lane slabs are legal BlockSpec blocks.
    Output [B, Nq, dim] bf16, token-major (no XLA head transposes needed).
    """
    if kv_arr is None:
        kv_arr = q_arr
        q_off, k_off, v_off = 0, 1, 2
    else:
        q_off, k_off, v_off = 0, 0, 1
    B, Nq = q_arr.shape[0], q_arr.shape[1]
    Nk = kv_arr.shape[1]
    assert dim % heads == 0 and dim % 128 == 0
    dh = dim // heads
    tq = _seq_tile(Nq)
    tk = _seq_tile(Nk)
    return pl.pallas_call(
        functools.partial(_flash_attn_kernel, heads=heads,
                          scale=1.0 / math.sqrt(dh)),
        grid=(B, Nq // tq, Nk // tk),
        in_specs=[
            pl.BlockSpec((1, tq, dim), lambda b, qi, kv: (b, qi, q_off)),
            pl.BlockSpec((1, tk, dim), lambda b, qi, kv: (b, kv, k_off)),
            pl.BlockSpec((1, tk, dim), lambda b, qi, kv: (b, kv, v_off)),
        ],
        out_specs=pl.BlockSpec((1, tq, dim), lambda b, qi, kv: (b, qi, 0)),
        out_shape=jax.ShapeDtypeStruct((B, Nq, dim), BF16),
        scratch_shapes=[pltpu.VMEM((tq, heads), jnp.float32),
                        pltpu.VMEM((tq, heads), jnp.float32),
                        pltpu.VMEM((tq, dim), jnp.float32)],
        compiler_params=pltpu.CompilerParams(
            dimension_semantics=("parallel", "parallel", "arbitrary")),
    )(q_arr, kv_arr, kv_arr)


def regression(x, ln_f, p):
    """x: [B, N, D] -> (rot [B,3], tr [B,3]); one fused, VMEM-resident kernel."""
    # TODO(synk): `Regression` is not in the provided source; implemented as
    # (final-LN + mean over feature dim) -> fused 2-layer rot/tr FC heads.
    B, N, D = x.shape
    out = pl.pallas_call(
        functools.partial(_regression_kernel, eps=LN_EPS),
        out_shape=jax.ShapeDtypeStruct((B, 6), F32),
    )(x.astype(BF16),
      ln_f["g"].reshape(1, 1, D), ln_f["b"].reshape(1, 1, D),
      p["fc1"]["w"], p["fc1"]["b"].reshape(1, -1),
      p["fc2"]["w"], p["fc2"]["b"].reshape(1, -1))
    return out[:, :3], out[:, 3:]


# ---------------------------------------------------------------------------
# Model building blocks (thin glue around the kernels)
# ---------------------------------------------------------------------------
def encoder_block(x, p, heads):
    """Pre-LN self-attention block: fused LN+QKV, token-major flash attention,
    out-proj+residual, LN+fc1, fc2+residual."""
    B, N, D = x.shape
    x2 = x.reshape(B * N, D)
    qkv = ln_dense(x2, p["ln1"], p["qkv"])                        # [B*N, 3D]
    o = attention(qkv.reshape(B, N, 3 * D), None, heads, D)       # [B, N, D]
    x2 = dense(o.reshape(B * N, D), p["proj"], residual=x2)
    h = ln_dense(x2, p["ln2"], p["fc1"], act="gelu")
    x2 = dense(h, p["fc2"], residual=x2)
    return x2.reshape(B, N, D)


def cross_block(x, ctx, p, heads):
    """Pre-LN cross-attention block: queries from x, keys/values from ctx."""
    B, Nq, D = x.shape
    Nk = ctx.shape[1]
    x2 = x.reshape(B * Nq, D)
    ctx2 = ctx.reshape(B * Nk, D)
    q = ln_dense(x2, p["ln_q"], p["q"])                           # [B*Nq, D]
    kv = ln_dense(ctx2, p["ln_kv"], p["kv"])                      # [B*Nk, 2D]
    o = attention(q.reshape(B, Nq, D), kv.reshape(B, Nk, 2 * D), heads, D)
    x2 = dense(o.reshape(B * Nq, D), p["proj"], residual=x2)
    h = ln_dense(x2, p["ln2"], p["fc1"], act="gelu")
    x2 = dense(h, p["fc2"], residual=x2)
    return x2.reshape(B, Nq, D)


def backbone(img_nchw, p, *, patch, heads):
    """Simplified Swin stand-in: patch-embed (+LN) + global-attn encoder."""
    # TODO(synk): timm swin_tiny internals (window/shifted attention, patch
    # merging, relative-position bias) are replaced by this simplified encoder.
    B, C, H, W = img_nchw.shape
    Hp, Wp = H // patch, W // patch
    x = img_nchw.reshape(B, C, Hp, patch, Wp, patch)
    x = x.transpose(0, 2, 4, 1, 3, 5).reshape(B, Hp * Wp, C * patch * patch)
    N = Hp * Wp
    x2 = dense(x.reshape(B * N, -1), p["patch_embed"])
    x2 = layer_norm(x2, p["patch_ln"])
    x = x2.reshape(B, N, -1)
    for blk in p["blocks"]:
        x = encoder_block(x, blk, heads)
    return x  # [B, N, dim] bf16


def calibvit_v2_forward(params, rgb, depth, *, cfg):
    feat_rgb = backbone(rgb, params["rgb_swin"], patch=cfg["patch"],
                        heads=cfg["heads"])
    feat_depth = backbone(depth, params["depth_swin"], patch=cfg["patch"],
                          heads=cfg["heads"])
    activation = jnp.concatenate([feat_rgb, feat_depth], axis=1)   # [B, 2N, D]
    activation = activation + params["pos_emb"]                    # bf16 add
    x = activation
    for layer in params["vit"]["layers"]:
        x = cross_block(x, activation, layer, cfg["heads"])
    return regression(x, params["vit"]["ln_f"], params["regression"])


# ---------------------------------------------------------------------------
# Deterministic parameter initialization (weights stored bf16, biases/LN f32)
# ---------------------------------------------------------------------------
class KeyGen:
    def __init__(self, seed=0):
        self._key = jax.random.PRNGKey(seed)

    def __call__(self):
        self._key, sub = jax.random.split(self._key)
        return sub


def _dense_p(kg, din, dout):
    return {"w": (0.02 * jax.random.normal(kg(), (din, dout), F32)).astype(BF16),
            "b": jnp.zeros((dout,), F32)}


def _ln_p(dim):
    return {"g": jnp.ones((dim,), F32), "b": jnp.zeros((dim,), F32)}


def _encoder_block_p(kg, dim, hidden):
    return {"ln1": _ln_p(dim),
            "qkv": _dense_p(kg, dim, 3 * dim),     # fused Q|K|V projection
            "proj": _dense_p(kg, dim, dim),
            "ln2": _ln_p(dim),
            "fc1": _dense_p(kg, dim, hidden),
            "fc2": _dense_p(kg, hidden, dim)}


def _cross_block_p(kg, dim, hidden):
    return {"ln_q": _ln_p(dim), "ln_kv": _ln_p(dim),
            "q": _dense_p(kg, dim, dim),
            "kv": _dense_p(kg, dim, 2 * dim),      # fused K|V projection
            "proj": _dense_p(kg, dim, dim),
            "ln2": _ln_p(dim),
            "fc1": _dense_p(kg, dim, hidden),
            "fc2": _dense_p(kg, hidden, dim)}


def _backbone_p(kg, in_ch, patch, dim, n_blocks):
    return {"patch_embed": _dense_p(kg, in_ch * patch * patch, dim),
            "patch_ln": _ln_p(dim),
            "blocks": [_encoder_block_p(kg, dim, 4 * dim) for _ in range(n_blocks)]}


def _regression_p(kg, n_tok, hidden):
    # rot/tr heads fused: fc1 weights concatenated on the output dim, fc2
    # block-diagonal -> identical to two independent 2-layer heads but one
    # lane-dense kernel.  Kept f32 (tiny).
    w1 = jnp.concatenate(
        [0.02 * jax.random.normal(kg(), (n_tok, hidden), F32),
         0.02 * jax.random.normal(kg(), (n_tok, hidden), F32)], axis=1)
    w2 = jnp.zeros((2 * hidden, 6), F32)
    w2 = w2.at[:hidden, :3].set(0.02 * jax.random.normal(kg(), (hidden, 3), F32))
    w2 = w2.at[hidden:, 3:].set(0.02 * jax.random.normal(kg(), (hidden, 3), F32))
    return {"fc1": {"w": w1, "b": jnp.zeros((2 * hidden,), F32)},
            "fc2": {"w": w2, "b": jnp.zeros((6,), F32)}}


def init_params(cfg):
    kg = KeyGen(0)
    dim, n_tok = cfg["dim"], cfg["n_tokens_total"]
    return {
        "rgb_swin": _backbone_p(kg, 3, cfg["patch"], dim, cfg["backbone_blocks"]),
        "depth_swin": _backbone_p(kg, 1, cfg["patch"], dim, cfg["backbone_blocks"]),
        "pos_emb": jax.random.normal(kg(), (1, n_tok, dim), F32).astype(BF16),
        "vit": {
            "layers": [_cross_block_p(kg, dim, cfg["vit_mlp_dim"])
                       for _ in range(cfg["ca_layers"])],
            "ln_f": _ln_p(dim),
        },
        "regression": _regression_p(kg, n_tok, cfg["fc_hidden"]),
    }


# ---------------------------------------------------------------------------
if __name__ == "__main__":
    # Small shapes consistent with the module: rgb [B,3,H,W], depth [B,1,H,W];
    # patch downsample -> N tokens per modality, concatenated to 2N tokens of
    # width `dim`, pos-emb (1, 2N, dim), regression in_channels == 2N (analog
    # of 320 in the real model).  dim is a multiple of 128 so the packed-QKV
    # lane slabs are legal TPU blocks.
    B, H, W = 2, 16, 16
    patch = 4
    tokens_per_modality = (H // patch) * (W // patch)    # 16
    cfg = dict(
        patch=patch,
        dim=128,
        heads=4,                       # config.ca_heads -> Dh = 32
        ca_layers=2,                   # config.ca_layers
        vit_mlp_dim=128,               # mlp_dim = config.dim in vit_rgb
        backbone_blocks=1,
        n_tokens_total=2 * tokens_per_modality,          # 32 (analog of 320)
        fc_hidden=64,                  # config.fc_hidden_layer_size
    )

    params = init_params(cfg)

    key = jax.random.PRNGKey(0)
    k_rgb, k_depth = jax.random.split(key)
    rgb = jax.random.normal(k_rgb, (B, 3, H, W), F32)
    depth = jax.random.normal(k_depth, (B, 1, H, W), F32)

    fwd = jax.jit(functools.partial(calibvit_v2_forward, cfg=cfg))
    x_rot, x_tr = fwd(params, rgb, depth)
    jax.block_until_ready((x_rot, x_tr))

    assert x_rot.shape == (B, 3) and x_tr.shape == (B, 3)
    assert bool(jnp.all(jnp.isfinite(x_rot))) and bool(jnp.all(jnp.isfinite(x_tr)))
    print("KERNEL_OK")
</pallas_src>

<mosaic_0001>
module attributes {stable_mosaic.version = 11 : i64} {
  func.func @_dense_kernel(%arg0: i32, %arg1: i32, %arg2: i32, %arg3: memref<32x48xbf16, #tpu.memory_space<vmem>>, %arg4: memref<48x128xbf16, #tpu.memory_space<vmem>>, %arg5: memref<1x128xf32, #tpu.memory_space<vmem>>, %arg6: memref<32x128xbf16, #tpu.memory_space<vmem>>, %arg7: memref<32x128xf32, #tpu.memory_space<vmem>>) attributes {dimension_semantics = [#tpu.dimension_semantics<parallel>, #tpu.dimension_semantics<parallel>, #tpu.dimension_semantics<arbitrary>], iteration_bounds = array<i64: 1, 1, 1>, scalar_prefetch = 0 : i64, scratch_operands = 1 : i64, tpu.core_type = #tpu.core_type<tc>, window_params = [{transform_indices = @transform_0, window_bounds = array<i64: 32, 48>}, {transform_indices = @transform_1, window_bounds = array<i64: 48, 128>}, {transform_indices = @transform_2, window_bounds = array<i64: 1, 128>}, {transform_indices = @transform_3, window_bounds = array<i64: 32, 128>}]} {
    %c0_i32 = arith.constant 0 : i32
    %0 = arith.cmpi eq, %arg2, %c0_i32 : i32
    %1 = arith.extui %0 : i1 to i32
    %c0_i32_0 = arith.constant 0 : i32
    %2 = arith.cmpi ne, %1, %c0_i32_0 : i32
    scf.if %2 {
      %cst_10 = arith.constant 0.000000e+00 : f32
      %12 = vector.broadcast %cst_10 : f32 to vector<32x128xf32>
      %c0_11 = arith.constant 0 : index
      %c0_12 = arith.constant 0 : index
      %13 = vector.load %arg7[%c0_11, %c0_12] : memref<32x128xf32, #tpu.memory_space<vmem>>, vector<32x128xf32>
      tpu.vector_store %arg7[%c0_11, %c0_12], %12 {strides = array<i32>} : memref<32x128xf32, #tpu.memory_space<vmem>>, vector<32x128xf32>,
    } else {
    }
    %c0 = arith.constant 0 : index
    %c0_1 = arith.constant 0 : index
    %3 = vector.load %arg7[%c0, %c0_1] : memref<32x128xf32, #tpu.memory_space<vmem>>, vector<32x128xf32>
    %c0_2 = arith.constant 0 : index
    %c0_3 = arith.constant 0 : index
    %4 = vector.load %arg3[%c0_2, %c0_3] : memref<32x48xbf16, #tpu.memory_space<vmem>>, vector<32x48xbf16>
    %c0_4 = arith.constant 0 : index
    %c0_5 = arith.constant 0 : index
    %5 = vector.load %arg4[%c0_4, %c0_5] : memref<48x128xbf16, #tpu.memory_space<vmem>>, vector<48x128xbf16>
    %cst = arith.constant dense<0.000000e+00> : vector<32x128xf32>
    %6 = tpu.matmul %4, %5, %cst {dimension_numbers = #tpu.dot_dimension_numbers<[1], [0], [0], [1], [0, 0, 1, 1], [], []>} : vector<32x48xbf16>, vector<48x128xbf16>, vector<32x128xf32> -> vector<32x128xf32>
    %7 = arith.addf %3, %6 : vector<32x128xf32>
    %c0_6 = arith.constant 0 : index
    %c0_7 = arith.constant 0 : index
    %8 = vector.load %arg7[%c0_6, %c0_7] : memref<32x128xf32, #tpu.memory_space<vmem>>, vector<32x128xf32>
    tpu.vector_store %arg7[%c0_6, %c0_7], %7 {strides = array<i32>} : memref<32x128xf32, #tpu.memory_space<vmem>>, vector<32x128xf32>,
    %c0_i32_8 = arith.constant 0 : i32
    %9 = arith.cmpi eq, %arg2, %c0_i32_8 : i32
    %10 = arith.extui %9 : i1 to i32
    %c0_i32_9 = arith.constant 0 : i32
    %11 = arith.cmpi ne, %10, %c0_i32_9 : i32
    scf.if %11 {
      %c0_10 = arith.constant 0 : index
      %c0_11 = arith.constant 0 : index
      %12 = vector.load %arg7[%c0_10, %c0_11] : memref<32x128xf32, #tpu.memory_space<vmem>>, vector<32x128xf32>
      %c0_12 = arith.constant 0 : index
      %c0_13 = arith.constant 0 : index
      %13 = vector.load %arg5[%c0_12, %c0_13] : memref<1x128xf32, #tpu.memory_space<vmem>>, vector<1x128xf32>
      %14 = vector.broadcast %13 : vector<1x128xf32> to vector<32x128xf32>
      %15 = arith.addf %12, %14 : vector<32x128xf32>
      %16 = arith.truncf %15 : vector<32x128xf32> to vector<32x128xbf16>
      %c0_14 = arith.constant 0 : index
      %c0_15 = arith.constant 0 : index
      %17 = vector.load %arg6[%c0_14, %c0_15] : memref<32x128xbf16, #tpu.memory_space<vmem>>, vector<32x128xbf16>
      tpu.vector_store %arg6[%c0_14, %c0_15], %16 {strides = array<i32>} : memref<32x128xbf16, #tpu.memory_space<vmem>>, vector<32x128xbf16>,
    } else {
    }
    return
  }
  func.func @transform_0(%arg0: i32, %arg1: i32, %arg2: i32) -> (i32, i32) {
    %c0_i32 = arith.constant 0 : i32
    return %arg0, %arg2 : i32, i32
  }
  func.func @transform_1(%arg0: i32, %arg1: i32, %arg2: i32) -> (i32, i32) {
    %c0_i32 = arith.constant 0 : i32
    return %arg2, %arg1 : i32, i32
  }
  func.func @transform_2(%arg0: i32, %arg1: i32, %arg2: i32) -> (i32, i32) {
    %c0_i32 = arith.constant 0 : i32
    %c0_i32_0 = arith.constant 0 : i32
    return %c0_i32, %arg1 : i32, i32
  }
  func.func @transform_3(%arg0: i32, %arg1: i32, %arg2: i32) -> (i32, i32) {
    %c0_i32 = arith.constant 0 : i32
    return %arg0, %arg1 : i32, i32
  }
}

module attributes {stable_mosaic.version = 11 : i64} {
  func.func @_layernorm_kernel(%arg0: i32, %arg1: memref<32x128xbf16, #tpu.memory_space<vmem>>, %arg2: memref<1x128xf32, #tpu.memory_space<vmem>>, %arg3: memref<1x128xf32, #tpu.memory_space<vmem>>, %arg4: memref<32x128xbf16, #tpu.memory_space<vmem>>) attributes {dimension_semantics = [#tpu.dimension_semantics<parallel>], iteration_bounds = array<i64: 1>, scalar_prefetch = 0 : i64, scratch_operands = 0 : i64, tpu.core_type = #tpu.core_type<tc>, window_params = [{transform_indices = @transform_0, window_bounds = array<i64: 32, 128>}, {pipeline_mode = #tpu.pipeline_mode<synchronous>, transform_indices = @transform_1, window_bounds = array<i64: 1, 128>}, {pipeline_mode = #tpu.pipeline_mode<synchronous>, transform_indices = @transform_2, window_bounds = array<i64: 1, 128>}, {transform_indices = @transform_3, window_bounds = array<i64: 32, 128>}]} {
    %c0 = arith.constant 0 : index
    %c0_0 = arith.constant 0 : index
    %0 = vector.load %arg1[%c0, %c0_0] : memref<32x128xbf16, #tpu.memory_space<vmem>>, vector<32x128xbf16>
    %1 = arith.extf %0 : vector<32x128xbf16> to vector<32x128xf32>
    %cst = arith.constant dense<0.000000e+00> : vector<32xf32>
    %2 = vector.multi_reduction <add>, %1, %cst [1] : vector<32x128xf32> to vector<32xf32>
    %3 = vector.shape_cast %2 : vector<32xf32> to vector<32x1xf32>
    %cst_1 = arith.constant 1.280000e+02 : f32
    %4 = vector.broadcast %cst_1 : f32 to vector<32x1xf32>
    %5 = arith.divf %3, %4 : vector<32x1xf32>
    %6 = vector.broadcast %5 : vector<32x1xf32> to vector<32x128xf32>
    %7 = arith.subf %1, %6 : vector<32x128xf32>
    %8 = arith.mulf %7, %7 : vector<32x128xf32>
    %cst_2 = arith.constant dense<0.000000e+00> : vector<32xf32>
    %9 = vector.multi_reduction <add>, %8, %cst_2 [1] : vector<32x128xf32> to vector<32xf32>
    %10 = vector.shape_cast %9 : vector<32xf32> to vector<32x1xf32>
    %cst_3 = arith.constant 1.280000e+02 : f32
    %11 = vector.broadcast %cst_3 : f32 to vector<32x1xf32>
    %12 = arith.divf %10, %11 : vector<32x1xf32>
    %13 = vector.broadcast %5 : vector<32x1xf32> to vector<32x128xf32>
    %14 = arith.subf %1, %13 : vector<32x128xf32>
    %cst_4 = arith.constant 9.99999974E-6 : f32
    %15 = vector.broadcast %cst_4 : f32 to vector<32x1xf32>
    %16 = arith.addf %12, %15 : vector<32x1xf32>
    %17 = math.rsqrt %16 : vector<32x1xf32>
    %18 = vector.broadcast %17 : vector<32x1xf32> to vector<32x128xf32>
    %19 = arith.mulf %14, %18 : vector<32x128xf32>
    %c0_5 = arith.constant 0 : index
    %c0_6 = arith.constant 0 : index
    %20 = vector.load %arg2[%c0_5, %c0_6] : memref<1x128xf32, #tpu.memory_space<vmem>>, vector<1x128xf32>
    %21 = vector.broadcast %20 : vector<1x128xf32> to vector<32x128xf32>
    %22 = arith.mulf %19, %21 : vector<32x128xf32>
    %c0_7 = arith.constant 0 : index
    %c0_8 = arith.constant 0 : index
    %23 = vector.load %arg3[%c0_7, %c0_8] : memref<1x128xf32, #tpu.memory_space<vmem>>, vector<1x128xf32>
    %24 = vector.broadcast %23 : vector<1x128xf32> to vector<32x128xf32>
    %25 = arith.addf %22, %24 : vector<32x128xf32>
    %26 = arith.truncf %25 : vector<32x128xf32> to vector<32x128xbf16>
    %c0_9 = arith.constant 0 : index
    %c0_10 = arith.constant 0 : index
    %27 = vector.load %arg4[%c0_9, %c0_10] : memref<32x128xbf16, #tpu.memory_space<vmem>>, vector<32x128xbf16>
    tpu.vector_store %arg4[%c0_9, %c0_10], %26 {strides = array<i32>} : memref<32x128xbf16, #tpu.memory_space<vmem>>, vector<32x128xbf16>,
    return
  }
  func.func @transform_0(%arg0: i32) -> (i32, i32) {
    %c0_i32 = arith.constant 0 : i32
    %c0_i32_0 = arith.constant 0 : i32
    return %arg0, %c0_i32 : i32, i32
  }
  func.func @transform_1(%arg0: i32) -> (i32, i32) {
    %c0_i32 = arith.constant 0 : i32
    %c0_i32_0 = arith.constant 0 : i32
    %c0_i32_1 = arith.constant 0 : i32
    return %c0_i32, %c0_i32_0 : i32, i32
  }
  func.func @transform_2(%arg0: i32) -> (i32, i32) {
    %c0_i32 = arith.constant 0 : i32
    %c0_i32_0 = arith.constant 0 : i32
    %c0_i32_1 = arith.constant 0 : i32
    return %c0_i32, %c0_i32_0 : i32, i32
  }
  func.func @transform_3(%arg0: i32) -> (i32, i32) {
    %c0_i32 = arith.constant 0 : i32
    %c0_i32_0 = arith.constant 0 : i32
    return %arg0, %c0_i32 : i32, i32
  }
}

module attributes {stable_mosaic.version = 11 : i64} {
  func.func @_flash_attn_kernel(%arg0: i32, %arg1: i32, %arg2: i32, %arg3: memref<1x16x128xbf16, #tpu.memory_space<vmem>>, %arg4: memref<1x16x128xbf16, #tpu.memory_space<vmem>>, %arg5: memref<1x16x128xbf16, #tpu.memory_space<vmem>>, %arg6: memref<1x16x128xbf16, #tpu.memory_space<vmem>>, %arg7: memref<16x4xf32, #tpu.memory_space<vmem>>, %arg8: memref<16x4xf32, #tpu.memory_space<vmem>>, %arg9: memref<16x128xf32, #tpu.memory_space<vmem>>) attributes {dimension_semantics = [#tpu.dimension_semantics<parallel>, #tpu.dimension_semantics<parallel>, #tpu.dimension_semantics<arbitrary>], iteration_bounds = array<i64: 2, 1, 1>, scalar_prefetch = 0 : i64, scratch_operands = 3 : i64, tpu.core_type = #tpu.core_type<tc>, window_params = [{transform_indices = @transform_0, window_bounds = array<i64: 1, 16, 128>}, {transform_indices = @transform_1, window_bounds = array<i64: 1, 16, 128>}, {transform_indices = @transform_2, window_bounds = array<i64: 1, 16, 128>}, {transform_indices = @transform_3, window_bounds = array<i64: 1, 16, 128>}]} {
    %c0_i32 = arith.constant 0 : i32
    %0 = arith.cmpi eq, %arg2, %c0_i32 : i32
    %c0_i32_0 = arith.constant 0 : i32
    %1 = arith.cmpi eq, %arg2, %c0_i32_0 : i32
    %2 = arith.extui %1 : i1 to i32
    %c0_i32_1 = arith.constant 0 : i32
    %3 = arith.cmpi ne, %2, %c0_i32_1 : i32
    scf.if %3 {
      %cst_102 = arith.constant 0xFF800000 : f32
      %140 = vector.broadcast %cst_102 : f32 to vector<16x4xf32>
      %c0_103 = arith.constant 0 : index
      %c0_104 = arith.constant 0 : index
      %141 = vector.load %arg7[%c0_103, %c0_104] : memref<16x4xf32, #tpu.memory_space<vmem>>, vector<16x4xf32>
      tpu.vector_store %arg7[%c0_103, %c0_104], %140 {strides = array<i32>} : memref<16x4xf32, #tpu.memory_space<vmem>>, vector<16x4xf32>,
      %cst_105 = arith.constant 0.000000e+00 : f32
      %142 = vector.broadcast %cst_105 : f32 to vector<16x4xf32>
      %c0_106 = arith.constant 0 : index
      %c0_107 = arith.constant 0 : index
      %143 = vector.load %arg8[%c0_106, %c0_107] : memref<16x4xf32, #tpu.memory_space<vmem>>, vector<16x4xf32>
      tpu.vector_store %arg8[%c0_106, %c0_107], %142 {strides = array<i32>} : memref<16x4xf32, #tpu.memory_space<vmem>>, vector<16x4xf32>,
      %cst_108 = arith.constant 0.000000e+00 : f32
      %144 = vector.broadcast %cst_108 : f32 to vector<16x128xf32>
      %c0_109 = arith.constant 0 : index
      %c0_110 = arith.constant 0 : index
      %145 = vector.load %arg9[%c0_109, %c0_110] : memref<16x128xf32, #tpu.memory_space<vmem>>, vector<16x128xf32>
      tpu.vector_store %arg9[%c0_109, %c0_110], %144 {strides = array<i32>} : memref<16x128xf32, #tpu.memory_space<vmem>>, vector<16x128xf32>,
    } else {
    }
    %c0 = arith.constant 0 : index
    %c0_2 = arith.constant 0 : index
    %c0_3 = arith.constant 0 : index
    %4 = vector.load %arg3[%c0, %c0_2, %c0_3] : memref<1x16x128xbf16, #tpu.memory_space<vmem>>, vector<1x16x32xbf16>
    %5 = vector.shape_cast %4 : vector<1x16x32xbf16> to vector<16x32xbf16>
    %c0_4 = arith.constant 0 : index
    %c0_5 = arith.constant 0 : index
    %c0_6 = arith.constant 0 : index
    %6 = vector.load %arg4[%c0_4, %c0_5, %c0_6] : memref<1x16x128xbf16, #tpu.memory_space<vmem>>, vector<1x16x32xbf16>
    %7 = vector.shape_cast %6 : vector<1x16x32xbf16> to vector<16x32xbf16>
    %c0_7 = arith.constant 0 : index
    %c0_8 = arith.constant 0 : index
    %c0_9 = arith.constant 0 : index
    %8 = vector.load %arg5[%c0_7, %c0_8, %c0_9] : memref<1x16x128xbf16, #tpu.memory_space<vmem>>, vector<1x16x32xbf16>
    %9 = vector.shape_cast %8 : vector<1x16x32xbf16> to vector<16x32xbf16>
    %cst = arith.constant dense<0.000000e+00> : vector<16x16xf32>
    %10 = tpu.matmul %5, %7, %cst {dimension_numbers = #tpu.dot_dimension_numbers<[1], [1], [0], [0], [0, 0, 1, 0], [], []>} : vector<16x32xbf16>, vector<16x32xbf16>, vector<16x16xf32> -> vector<16x16xf32>
    %cst_10 = arith.constant 0.176776692 : f32
    %11 = vector.broadcast %cst_10 : f32 to vector<16x16xf32>
    %12 = arith.mulf %10, %11 : vector<16x16xf32>
    %c0_11 = arith.constant 0 : index
    %c0_12 = arith.constant 0 : index
    %13 = vector.load %arg7[%c0_11, %c0_12] : memref<16x4xf32, #tpu.memory_space<vmem>>, vector<16x1xf32>
    %c0_13 = arith.constant 0 : index
    %c0_14 = arith.constant 0 : index
    %14 = vector.load %arg8[%c0_13, %c0_14] : memref<16x4xf32, #tpu.memory_space<vmem>>, vector<16x1xf32>
    %cst_15 = arith.constant dense<0xFF800000> : vector<16xf32>
    %15 = vector.multi_reduction <maximumf>, %12, %cst_15 [1] : vector<16x16xf32> to vector<16xf32>
    %16 = vector.shape_cast %15 : vector<16xf32> to vector<16x1xf32>
    %17 = arith.maximumf %13, %16 : vector<16x1xf32>
    %18 = arith.subf %13, %17 : vector<16x1xf32>
    %19 = math.exp %18 : vector<16x1xf32>
    %20 = vector.broadcast %17 : vector<16x1xf32> to vector<16x16xf32>
    %21 = arith.subf %12, %20 : vector<16x16xf32>
    %22 = math.exp %21 : vector<16x16xf32>
    %23 = arith.mulf %19, %14 : vector<16x1xf32>
    %cst_16 = arith.constant dense<0.000000e+00> : vector<16xf32>
    %24 = vector.multi_reduction <add>, %22, %cst_16 [1] : vector<16x16xf32> to vector<16xf32>
    %25 = vector.shape_cast %24 : vector<16xf32> to vector<16x1xf32>
    %26 = arith.addf %23, %25 : vector<16x1xf32>
    %c0_17 = arith.constant 0 : index
    %c0_18 = arith.constant 0 : index
    %27 = vector.load %arg9[%c0_17, %c0_18] : memref<16x128xf32, #tpu.memory_space<vmem>>, vector<16x32xf32>
    %28 = vector.broadcast %19 : vector<16x1xf32> to vector<16x32xf32>
    %29 = arith.mulf %28, %27 : vector<16x32xf32>
    %30 = arith.truncf %22 : vector<16x16xf32> to vector<16x16xbf16>
    %cst_19 = arith.constant dense<0.000000e+00> : vector<16x32xf32>
    %31 = tpu.matmul %30, %9, %cst_19 {dimension_numbers = #tpu.dot_dimension_numbers<[1], [0], [0], [1], [0, 0, 1, 1], [], []>} : vector<16x16xbf16>, vector<16x32xbf16>, vector<16x32xf32> -> vector<16x32xf32>
    %32 = arith.addf %29, %31 : vector<16x32xf32>
    %c0_20 = arith.constant 0 : index
    %c0_21 = arith.constant 0 : index
    %33 = vector.load %arg7[%c0_20, %c0_21] : memref<16x4xf32, #tpu.memory_space<vmem>>, vector<16x1xf32>
    tpu.vector_store %arg7[%c0_20, %c0_21], %17 {strides = array<i32>} : memref<16x4xf32, #tpu.memory_space<vmem>>, vector<16x1xf32>,
    %c0_22 = arith.constant 0 : index
    %c0_23 = arith.constant 0 : index
    %34 = vector.load %arg8[%c0_22, %c0_23] : memref<16x4xf32, #tpu.memory_space<vmem>>, vector<16x1xf32>
    tpu.vector_store %arg8[%c0_22, %c0_23], %26 {strides = array<i32>} : memref<16x4xf32, #tpu.memory_space<vmem>>, vector<16x1xf32>,
    %c0_24 = arith.constant 0 : index
    %c0_25 = arith.constant 0 : index
    %35 = vector.load %arg9[%c0_24, %c0_25] : memref<16x128xf32, #tpu.memory_space<vmem>>, vector<16x32xf32>
    tpu.vector_store %arg9[%c0_24, %c0_25], %32 {strides = array<i32>} : memref<16x128xf32, #tpu.memory_space<vmem>>, vector<16x32xf32>,
    %36 = arith.extui %0 : i1 to i32
    %c0_i32_26 = arith.constant 0 : i32
    %37 = arith.cmpi ne, %36, %c0_i32_26 : i32
    scf.if %37 {
      %140 = tpu.reciprocal %26 {approx = true} : vector<16x1xf32> -> vector<16x1xf32>
      %141 = vector.broadcast %140 : vector<16x1xf32> to vector<16x32xf32>
      %142 = arith.mulf %32, %141 : vector<16x32xf32>
      %143 = arith.truncf %142 : vector<16x32xf32> to vector<16x32xbf16>
      %c0_102 = arith.constant 0 : index
      %c0_103 = arith.constant 0 : index
      %c0_104 = arith.constant 0 : index
      %144 = vector.load %arg6[%c0_102, %c0_103, %c0_104] : memref<1x16x128xbf16, #tpu.memory_space<vmem>>, vector<1x16x32xbf16>
      %145 = vector.shape_cast %144 : vector<1x16x32xbf16> to vector<16x32xbf16>
      %146 = vector.shape_cast %143 : vector<16x32xbf16> to vector<1x16x32xbf16>
      tpu.vector_store %arg6[%c0_102, %c0_103, %c0_104], %146 {strides = array<i32>} : memref<1x16x128xbf16, #tpu.memory_space<vmem>>, vector<1x16x32xbf16>,
    } else {
    }
    %c0_27 = arith.constant 0 : index
    %c0_28 = arith.constant 0 : index
    %c32 = arith.constant 32 : index
    %38 = vector.load %arg3[%c0_27, %c0_28, %c32] : memref<1x16x128xbf16, #tpu.memory_space<vmem>>, vector<1x16x32xbf16>
    %39 = vector.shape_cast %38 : vector<1x16x32xbf16> to vector<16x32xbf16>
    %c0_29 = arith.constant 0 : index
    %c0_30 = arith.constant 0 : index
    %c32_31 = arith.constant 32 : index
    %40 = vector.load %arg4[%c0_29, %c0_30, %c32_31] : memref<1x16x128xbf16, #tpu.memory_space<vmem>>, vector<1x16x32xbf16>
    %41 = vector.shape_cast %40 : vector<1x16x32xbf16> to vector<16x32xbf16>
    %c0_32 = arith.constant 0 : index
    %c0_33 = arith.constant 0 : index
    %c32_34 = arith.constant 32 : index
    %42 = vector.load %arg5[%c0_32, %c0_33, %c32_34] : memref<1x16x128xbf16, #tpu.memory_space<vmem>>, vector<1x16x32xbf16>
    %43 = vector.shape_cast %42 : vector<1x16x32xbf16> to vector<16x32xbf16>
    %cst_35 = arith.constant dense<0.000000e+00> : vector<16x16xf32>
    %44 = tpu.matmul %39, %41, %cst_35 {dimension_numbers = #tpu.dot_dimension_numbers<[1], [1], [0], [0], [0, 0, 1, 0], [], []>} : vector<16x32xbf16>, vector<16x32xbf16>, vector<16x16xf32> -> vector<16x16xf32>
    %cst_36 = arith.constant 0.176776692 : f32
    %45 = vector.broadcast %cst_36 : f32 to vector<16x16xf32>
    %46 = arith.mulf %44, %45 : vector<16x16xf32>
    %c0_37 = arith.constant 0 : index
    %c1 = arith.constant 1 : index
    %47 = vector.load %arg7[%c0_37, %c1] : memref<16x4xf32, #tpu.memory_space<vmem>>, vector<16x1xf32>
    %c0_38 = arith.constant 0 : index
    %c1_39 = arith.constant 1 : index
    %48 = vector.load %arg8[%c0_38, %c1_39] : memref<16x4xf32, #tpu.memory_space<vmem>>, vector<16x1xf32>
    %cst_40 = arith.constant dense<0xFF800000> : vector<16xf32>
    %49 = vector.multi_reduction <maximumf>, %46, %cst_40 [1] : vector<16x16xf32> to vector<16xf32>
    %50 = vector.shape_cast %49 : vector<16xf32> to vector<16x1xf32>
    %51 = arith.maximumf %47, %50 : vector<16x1xf32>
    %52 = arith.subf %47, %51 : vector<16x1xf32>
    %53 = math.exp %52 : vector<16x1xf32>
    %54 = vector.broadcast %51 : vector<16x1xf32> to vector<16x16xf32>
    %55 = arith.subf %46, %54 : vector<16x16xf32>
    %56 = math.exp %55 : vector<16x16xf32>
    %57 = arith.mulf %53, %48 : vector<16x1xf32>
    %cst_41 = arith.constant dense<0.000000e+00> : vector<16xf32>
    %58 = vector.multi_reduction <add>, %56, %cst_41 [1] : vector<16x16xf32> to vector<16xf32>
    %59 = vector.shape_cast %58 : vector<16xf32> to vector<16x1xf32>
    %60 = arith.addf %57, %59 : vector<16x1xf32>
    %c0_42 = arith.constant 0 : index
    %c32_43 = arith.constant 32 : index
    %61 = vector.load %arg9[%c0_42, %c32_43] : memref<16x128xf32, #tpu.memory_space<vmem>>, vector<16x32xf32>
    %62 = vector.broadcast %53 : vector<16x1xf32> to vector<16x32xf32>
    %63 = arith.mulf %62, %61 : vector<16x32xf32>
    %64 = arith.truncf %56 : vector<16x16xf32> to vector<16x16xbf16>
    %cst_44 = arith.constant dense<0.000000e+00> : vector<16x32xf32>
    %65 = tpu.matmul %64, %43, %cst_44 {dimension_numbers = #tpu.dot_dimension_numbers<[1], [0], [0], [1], [0, 0, 1, 1], [], []>} : vector<16x16xbf16>, vector<16x32xbf16>, vector<16x32xf32> -> vector<16x32xf32>
    %66 = arith.addf %63, %65 : vector<16x32xf32>
    %c0_45 = arith.constant 0 : index
    %c1_46 = arith.constant 1 : index
    %67 = vector.load %arg7[%c0_45, %c1_46] : memref<16x4xf32, #tpu.memory_space<vmem>>, vector<16x1xf32>
    tpu.vector_store %arg7[%c0_45, %c1_46], %51 {strides = array<i32>} : memref<16x4xf32, #tpu.memory_space<vmem>>, vector<16x1xf32>,
    %c0_47 = arith.constant 0 : index
    %c1_48 = arith.constant 1 : index
    %68 = vector.load %arg8[%c0_47, %c1_48] : memref<16x4xf32, #tpu.memory_space<vmem>>, vector<16x1xf32>
    tpu.vector_store %arg8[%c0_47, %c1_48], %60 {strides = array<i32>} : memref<16x4xf32, #tpu.memory_space<vmem>>, vector<16x1xf32>,
    %c0_49 = arith.constant 0 : index
    %c32_50 = arith.constant 32 : index
    %69 = vector.load %arg9[%c0_49, %c32_50] : memref<16x128xf32, #tpu.memory_space<vmem>>, vector<16x32xf32>
    tpu.vector_store %arg9[%c0_49, %c32_50], %66 {strides = array<i32>} : memref<16x128xf32, #tpu.memory_space<vmem>>, vector<16x32xf32>,
    %70 = arith.extui %0 : i1 to i32
    %c0_i32_51 = arith.constant 0 : i32
    %71 = arith.cmpi ne, %70, %c0_i32_51 : i32
    scf.if %71 {
      %140 = tpu.reciprocal %60 {approx = true} : vector<16x1xf32> -> vector<16x1xf32>
      %141 = vector.broadcast %140 : vector<16x1xf32> to vector<16x32xf32>
      %142 = arith.mulf %66, %141 : vector<16x32xf32>
      %143 = arith.truncf %142 : vector<16x32xf32> to vector<16x32xbf16>
      %c0_102 = arith.constant 0 : index
      %c0_103 = arith.constant 0 : index
      %c32_104 = arith.constant 32 : index
      %144 = vector.load %arg6[%c0_102, %c0_103, %c32_104] : memref<1x16x128xbf16, #tpu.memory_space<vmem>>, vector<1x16x32xbf16>
      %145 = vector.shape_cast %144 : vector<1x16x32xbf16> to vector<16x32xbf16>
      %146 = vector.shape_cast %143 : vector<16x32xbf16> to vector<1x16x32xbf16>
      tpu.vector_store %arg6[%c0_102, %c0_103, %c32_104], %146 {strides = array<i32>} : memref<1x16x128xbf16, #tpu.memory_space<vmem>>, vector<1x16x32xbf16>,
    } else {
    }
    %c0_52 = arith.constant 0 : index
    %c0_53 = arith.constant 0 : index
    %c64 = arith.constant 64 : index
    %72 = vector.load %arg3[%c0_52, %c0_53, %c64] : memref<1x16x128xbf16, #tpu.memory_space<vmem>>, vector<1x16x32xbf16>
    %73 = vector.shape_cast %72 : vector<1x16x32xbf16> to vector<16x32xbf16>
    %c0_54 = arith.constant 0 : index
    %c0_55 = arith.constant 0 : index
    %c64_56 = arith.constant 64 : index
    %74 = vector.load %arg4[%c0_54, %c0_55, %c64_56] : memref<1x16x128xbf16, #tpu.memory_space<vmem>>, vector<1x16x32xbf16>
    %75 = vector.shape_cast %74 : vector<1x16x32xbf16> to vector<16x32xbf16>
    %c0_57 = arith.constant 0 : index
    %c0_58 = arith.constant 0 : index
    %c64_59 = arith.constant 64 : index
    %76 = vector.load %arg5[%c0_57, %c0_58, %c64_59] : memref<1x16x128xbf16, #tpu.memory_space<vmem>>, vector<1x16x32xbf16>
    %77 = vector.shape_cast %76 : vector<1x16x32xbf16> to vector<16x32xbf16>
    %cst_60 = arith.constant dense<0.000000e+00> : vector<16x16xf32>
    %78 = tpu.matmul %73, %75, %cst_60 {dimension_numbers = #tpu.dot_dimension_numbers<[1], [1], [0], [0], [0, 0, 1, 0], [], []>} : vector<16x32xbf16>, vector<16x32xbf16>, vector<16x16xf32> -> vector<16x16xf32>
    %cst_61 = arith.constant 0.176776692 : f32
    %79 = vector.broadcast %cst_61 : f32 to vector<16x16xf32>
    %80 = arith.mulf %78, %79 : vector<16x16xf32>
    %c0_62 = arith.constant 0 : index
    %c2 = arith.constant 2 : index
    %81 = vector.load %arg7[%c0_62, %c2] : memref<16x4xf32, #tpu.memory_space<vmem>>, vector<16x1xf32>
    %c0_63 = arith.constant 0 : index
    %c2_64 = arith.constant 2 : index
    %82 = vector.load %arg8[%c0_63, %c2_64] : memref<16x4xf32, #tpu.memory_space<vmem>>, vector<16x1xf32>
    %cst_65 = arith.constant dense<0xFF800000> : vector<16xf32>
    %83 = vector.multi_reduction <maximumf>, %80, %cst_65 [1] : vector<16x16xf32> to vector<16xf32>
    %84 = vector.shape_cast %83 : vector<16xf32> to vector<16x1xf32>
    %85 = arith.maximumf %81, %84 : vector<16x1xf32>
    %86 = arith.subf %81, %85 : vector<16x1xf32>
    %87 = math.exp %86 : vector<16x1xf32>
    %88 = vector.broadcast %85 : vector<16x1xf32> to vector<16x16xf32>
    %89 = arith.subf %80, %88 : vector<16x16xf32>
    %90 = math.exp %89 : vector<16x16xf32>
    %91 = arith.mulf %87, %82 : vector<16x1xf32>
    %cst_66 = arith.constant dense<0.000000e+00> : vector<16xf32>
    %92 = vector.multi_reduction <add>, %90, %cst_66 [1] : vector<16x16xf32> to vector<16xf32>
    %93 = vector.shape_cast %92 : vector<16xf32> to vector<16x1xf32>
    %94 = arith.addf %91, %93 : vector<16x1xf32>
    %c0_67 = arith.constant 0 : index
    %c64_68 = arith.constant 64 : index
    %95 = vector.load %arg9[%c0_67, %c64_68] : memref<16x128xf32, #tpu.memory_space<vmem>>, vector<16x32xf32>
    %96 = vector.broadcast %87 : vector<16x1xf32> to vector<16x32xf32>
    %97 = arith.mulf %96, %95 : vector<16x32xf32>
    %98 = arith.truncf %90 : vector<16x16xf32> to vector<16x16xbf16>
    %cst_69 = arith.constant dense<0.000000e+00> : vector<16x32xf32>
    %99 = tpu.matmul %98, %77, %cst_69 {dimension_numbers = #tpu.dot_dimension_numbers<[1], [0], [0], [1], [0, 0, 1, 1], [], []>} : vector<16x16xbf16>, vector<16x32xbf16>, vector<16x32xf32> -> vector<16x32xf32>
    %100 = arith.addf %97, %99 : vector<16x32xf32>
    %c0_70 = arith.constant 0 : index
    %c2_71 = arith.constant 2 : index
    %101 = vector.load %arg7[%c0_70, %c2_71] : memref<16x4xf32, #tpu.memory_space<vmem>>, vector<16x1xf32>
    tpu.vector_store %arg7[%c0_70, %c2_71], %85 {strides = array<i32>} : memref<16x4xf32, #tpu.memory_space<vmem>>, vector<16x1xf32>,
    %c0_72 = arith.constant 0 : index
    %c2_73 = arith.constant 2 : index
    %102 = vector.load %arg8[%c0_72, %c2_73] : memref<16x4xf32, #tpu.memory_space<vmem>>, vector<16x1xf32>
    tpu.vector_store %arg8[%c0_72, %c2_73], %94 {strides = array<i32>} : memref<16x4xf32, #tpu.memory_space<vmem>>, vector<16x1xf32>,
    %c0_74 = arith.constant 0 : index
    %c64_75 = arith.constant 64 : index
    %103 = vector.load %arg9[%c0_74, %c64_75] : memref<16x128xf32, #tpu.memory_space<vmem>>, vector<16x32xf32>
    tpu.vector_store %arg9[%c0_74, %c64_75], %100 {strides = array<i32>} : memref<16x128xf32, #tpu.memory_space<vmem>>, vector<16x32xf32>,
    %104 = arith.extui %0 : i1 to i32
    %c0_i32_76 = arith.constant 0 : i32
    %105 = arith.cmpi ne, %104, %c0_i32_76 : i32
    scf.if %105 {
      %140 = tpu.reciprocal %94 {approx = true} : vector<16x1xf32> -> vector<16x1xf32>
      %141 = vector.broadcast %140 : vector<16x1xf32> to vector<16x32xf32>
      %142 = arith.mulf %100, %141 : vector<16x32xf32>
      %143 = arith.truncf %142 : vector<16x32xf32> to vector<16x32xbf16>
      %c0_102 = arith.constant 0 : index
      %c0_103 = arith.constant 0 : index
      %c64_104 = arith.constant 64 : index
      %144 = vector.load %arg6[%c0_102, %c0_103, %c64_104] : memref<1x16x128xbf16, #tpu.memory_space<vmem>>, vector<1x16x32xbf16>
      %145 = vector.shape_cast %144 : vector<1x16x32xbf16> to vector<16x32xbf16>
      %146 = vector.shape_cast %143 : vector<16x32xbf16> to vector<1x16x32xbf16>
      tpu.vector_store %arg6[%c0_102, %c0_103, %c64_104], %146 {strides = array<i32>} : memref<1x16x128xbf16, #tpu.memory_space<vmem>>, vector<1x16x32xbf16>,
    } else {
    }
    %c0_77 = arith.constant 0 : index
    %c0_78 = arith.constant 0 : index
    %c96 = arith.constant 96 : index
    %106 = vector.load %arg3[%c0_77, %c0_78, %c96] : memref<1x16x128xbf16, #tpu.memory_space<vmem>>, vector<1x16x32xbf16>
    %107 = vector.shape_cast %106 : vector<1x16x32xbf16> to vector<16x32xbf16>
    %c0_79 = arith.constant 0 : index
    %c0_80 = arith.constant 0 : index
    %c96_81 = arith.constant 96 : index
    %108 = vector.load %arg4[%c0_79, %c0_80, %c96_81] : memref<1x16x128xbf16, #tpu.memory_space<vmem>>, vector<1x16x32xbf16>
    %109 = vector.shape_cast %108 : vector<1x16x32xbf16> to vector<16x32xbf16>
    %c0_82 = arith.constant 0 : index
    %c0_83 = arith.constant 0 : index
    %c96_84 = arith.constant 96 : index
    %110 = vector.load %arg5[%c0_82, %c0_83, %c96_84] : memref<1x16x128xbf16, #tpu.memory_space<vmem>>, vector<1x16x32xbf16>
    %111 = vector.shape_cast %110 : vector<1x16x32xbf16> to vector<16x32xbf16>
    %cst_85 = arith.constant dense<0.000000e+00> : vector<16x16xf32>
    %112 = tpu.matmul %107, %109, %cst_85 {dimension_numbers = #tpu.dot_dimension_numbers<[1], [1], [0], [0], [0, 0, 1, 0], [], []>} : vector<16x32xbf16>, vector<16x32xbf16>, vector<16x16xf32> -> vector<16x16xf32>
    %cst_86 = arith.constant 0.176776692 : f32
    %113 = vector.broadcast %cst_86 : f32 to vector<16x16xf32>
    %114 = arith.mulf %112, %113 : vector<16x16xf32>
    %c0_87 = arith.constant 0 : index
    %c3 = arith.constant 3 : index
    %115 = vector.load %arg7[%c0_87, %c3] : memref<16x4xf32, #tpu.memory_space<vmem>>, vector<16x1xf32>
    %c0_88 = arith.constant 0 : index
    %c3_89 = arith.constant 3 : index
    %116 = vector.load %arg8[%c0_88, %c3_89] : memref<16x4xf32, #tpu.memory_space<vmem>>, vector<16x1xf32>
    %cst_90 = arith.constant dense<0xFF800000> : vector<16xf32>
    %117 = vector.multi_reduction <maximumf>, %114, %cst_90 [1] : vector<16x16xf32> to vector<16xf32>
    %118 = vector.shape_cast %117 : vector<16xf32> to vector<16x1xf32>
    %119 = arith.maximumf %115, %118 : vector<16x1xf32>
    %120 = arith.subf %115, %119 : vector<16x1xf32>
    %121 = math.exp %120 : vector<16x1xf32>
    %122 = vector.broadcast %119 : vector<16x1xf32> to vector<16x16xf32>
    %123 = arith.subf %114, %122 : vector<16x16xf32>
    %124 = math.exp %123 : vector<16x16xf32>
    %125 = arith.mulf %121, %116 : vector<16x1xf32>
    %cst_91 = arith.constant dense<0.000000e+00> : vector<16xf32>
    %126 = vector.multi_reduction <add>, %124, %cst_91 [1] : vector<16x16xf32> to vector<16xf32>
    %127 = vector.shape_cast %126 : vector<16xf32> to vector<16x1xf32>
    %128 = arith.addf %125, %127 : vector<16x1xf32>
    %c0_92 = arith.constant 0 : index
    %c96_93 = arith.constant 96 : index
    %129 = vector.load %arg9[%c0_92, %c96_93] : memref<16x128xf32, #tpu.memory_space<vmem>>, vector<16x32xf32>
    %130 = vector.broadcast %121 : vector<16x1xf32> to vector<16x32xf32>
    %131 = arith.mulf %130, %129 : vector<16x32xf32>
    %132 = arith.truncf %124 : vector<16x16xf32> to vector<16x16xbf16>
    %cst_94 = arith.constant dense<0.000000e+00> : vector<16x32xf32>
    %133 = tpu.matmul %132, %111, %cst_94 {dimension_numbers = #tpu.dot_dimension_numbers<[1], [0], [0], [1], [0, 0, 1, 1], [], []>} : vector<16x16xbf16>, vector<16x32xbf16>, vector<16x32xf32> -> vector<16x32xf32>
    %134 = arith.addf %131, %133 : vector<16x32xf32>
    %c0_95 = arith.constant 0 : index
    %c3_96 = arith.constant 3 : index
    %135 = vector.load %arg7[%c0_95, %c3_96] : memref<16x4xf32, #tpu.memory_space<vmem>>, vector<16x1xf32>
    tpu.vector_store %arg7[%c0_95, %c3_96], %119 {strides = array<i32>} : memref<16x4xf32, #tpu.memory_space<vmem>>, vector<16x1xf32>,
    %c0_97 = arith.constant 0 : index
    %c3_98 = arith.constant 3 : index
    %136 = vector.load %arg8[%c0_97, %c3_98] : memref<16x4xf32, #tpu.memory_space<vmem>>, vector<16x1xf32>
    tpu.vector_store %arg8[%c0_97, %c3_98], %128 {strides = array<i32>} : memref<16x4xf32, #tpu.memory_space<vmem>>, vector<16x1xf32>,
    %c0_99 = arith.constant 0 : index
    %c96_100 = arith.constant 96 : index
    %137 = vector.load %arg9[%c0_99, %c96_100] : memref<16x128xf32, #tpu.memory_space<vmem>>, vector<16x32xf32>
    tpu.vector_store %arg9[%c0_99, %c96_100], %134 {strides = array<i32>} : memref<16x128xf32, #tpu.memory_space<vmem>>, vector<16x32xf32>,
    %138 = arith.extui %0 : i1 to i32
    %c0_i32_101 = arith.constant 0 : i32
    %139 = arith.cmpi ne, %138, %c0_i32_101 : i32
    scf.if %139 {
      %140 = tpu.reciprocal %128 {approx = true} : vector<16x1xf32> -> vector<16x1xf32>
      %141 = vector.broadcast %140 : vector<16x1xf32> to vector<16x32xf32>
      %142 = arith.mulf %134, %141 : vector<16x32xf32>
      %143 = arith.truncf %142 : vector<16x32xf32> to vector<16x32xbf16>
      %c0_102 = arith.constant 0 : index
      %c0_103 = arith.constant 0 : index
      %c96_104 = arith.constant 96 : index
      %144 = vector.load %arg6[%c0_102, %c0_103, %c96_104] : memref<1x16x128xbf16, #tpu.memory_space<vmem>>, vector<1x16x32xbf16>
      %145 = vector.shape_cast %144 : vector<1x16x32xbf16> to vector<16x32xbf16>
      %146 = vector.shape_cast %143 : vector<16x32xbf16> to vector<1x16x32xbf16>
      tpu.vector_store %arg6[%c0_102, %c0_103, %c96_104], %146 {strides = array<i32>} : memref<1x16x128xbf16, #tpu.memory_space<vmem>>, vector<1x16x32xbf16>,
    } else {
    }
    return
  }
  func.func @transform_0(%arg0: i32, %arg1: i32, %arg2: i32) -> (i32, i32, i32) {
    %c0_i32 = arith.constant 0 : i32
    %c0_i32_0 = arith.constant 0 : i32
    return %arg0, %arg1, %c0_i32 : i32, i32, i32
  }
  func.func @transform_1(%arg0: i32, %arg1: i32, %arg2: i32) -> (i32, i32, i32) {
    %c1_i32 = arith.constant 1 : i32
    %c0_i32 = arith.constant 0 : i32
    return %arg0, %arg2, %c1_i32 : i32, i32, i32
  }
  func.func @transform_2(%arg0: i32, %arg1: i32, %arg2: i32) -> (i32, i32, i32) {
    %c2_i32 = arith.constant 2 : i32
    %c0_i32 = arith.constant 0 : i32
    return %arg0, %arg2, %c2_i32 : i32, i32, i32
  }
  func.func @transform_3(%arg0: i32, %arg1: i32, %arg2: i32) -> (i32, i32, i32) {
    %c0_i32 = arith.constant 0 : i32
    %c0_i32_0 = arith.constant 0 : i32
    return %arg0, %arg1, %c0_i32 : i32, i32, i32
  }
}

module attributes {stable_mosaic.version = 11 : i64} {
  func.func @_ln_dense_kernel(%arg0: i32, %arg1: i32, %arg2: memref<32x128xbf16, #tpu.memory_space<vmem>>, %arg3: memref<1x128xf32, #tpu.memory_space<vmem>>, %arg4: memref<1x128xf32, #tpu.memory_space<vmem>>, %arg5: memref<128x384xbf16, #tpu.memory_space<vmem>>, %arg6: memref<1x384xf32, #tpu.memory_space<vmem>>, %arg7: memref<32x384xbf16, #tpu.memory_space<vmem>>, %arg8: memref<32x128xbf16, #tpu.memory_space<vmem>>) attributes {dimension_semantics = [#tpu.dimension_semantics<parallel>, #tpu.dimension_semantics<arbitrary>], iteration_bounds = array<i64: 1, 1>, scalar_prefetch = 0 : i64, scratch_operands = 1 : i64, tpu.core_type = #tpu.core_type<tc>, window_params = [{transform_indices = @transform_0, window_bounds = array<i64: 32, 128>}, {pipeline_mode = #tpu.pipeline_mode<synchronous>, transform_indices = @transform_1, window_bounds = array<i64: 1, 128>}, {pipeline_mode = #tpu.pipeline_mode<synchronous>, transform_indices = @transform_2, window_bounds = array<i64: 1, 128>}, {transform_indices = @transform_3, window_bounds = array<i64: 128, 384>}, {transform_indices = @transform_4, window_bounds = array<i64: 1, 384>}, {transform_indices = @transform_5, window_bounds = array<i64: 32, 384>}]} {
    %c0_i32 = arith.constant 0 : i32
    %0 = arith.cmpi eq, %arg1, %c0_i32 : i32
    %1 = arith.extui %0 : i1 to i32
    %c0_i32_0 = arith.constant 0 : i32
    %2 = arith.cmpi ne, %1, %c0_i32_0 : i32
    scf.if %2 {
      %c0_8 = arith.constant 0 : index
      %c0_9 = arith.constant 0 : index
      %11 = vector.load %arg2[%c0_8, %c0_9] : memref<32x128xbf16, #tpu.memory_space<vmem>>, vector<32x128xbf16>
      %12 = arith.extf %11 : vector<32x128xbf16> to vector<32x128xf32>
      %cst_10 = arith.constant dense<0.000000e+00> : vector<32xf32>
      %13 = vector.multi_reduction <add>, %12, %cst_10 [1] : vector<32x128xf32> to vector<32xf32>
      %14 = vector.shape_cast %13 : vector<32xf32> to vector<32x1xf32>
      %cst_11 = arith.constant 1.280000e+02 : f32
      %15 = vector.broadcast %cst_11 : f32 to vector<32x1xf32>
      %16 = arith.divf %14, %15 : vector<32x1xf32>
      %17 = vector.broadcast %16 : vector<32x1xf32> to vector<32x128xf32>
      %18 = arith.subf %12, %17 : vector<32x128xf32>
      %19 = arith.mulf %18, %18 : vector<32x128xf32>
      %cst_12 = arith.constant dense<0.000000e+00> : vector<32xf32>
      %20 = vector.multi_reduction <add>, %19, %cst_12 [1] : vector<32x128xf32> to vector<32xf32>
      %21 = vector.shape_cast %20 : vector<32xf32> to vector<32x1xf32>
      %cst_13 = arith.constant 1.280000e+02 : f32
      %22 = vector.broadcast %cst_13 : f32 to vector<32x1xf32>
      %23 = arith.divf %21, %22 : vector<32x1xf32>
      %24 = vector.broadcast %16 : vector<32x1xf32> to vector<32x128xf32>
      %25 = arith.subf %12, %24 : vector<32x128xf32>
      %cst_14 = arith.constant 9.99999974E-6 : f32
      %26 = vector.broadcast %cst_14 : f32 to vector<32x1xf32>
      %27 = arith.addf %23, %26 : vector<32x1xf32>
      %28 = math.rsqrt %27 : vector<32x1xf32>
      %29 = vector.broadcast %28 : vector<32x1xf32> to vector<32x128xf32>
      %30 = arith.mulf %25, %29 : vector<32x128xf32>
      %c0_15 = arith.constant 0 : index
      %c0_16 = arith.constant 0 : index
      %31 = vector.load %arg3[%c0_15, %c0_16] : memref<1x128xf32, #tpu.memory_space<vmem>>, vector<1x128xf32>
      %32 = vector.broadcast %31 : vector<1x128xf32> to vector<32x128xf32>
      %33 = arith.mulf %30, %32 : vector<32x128xf32>
      %c0_17 = arith.constant 0 : index
      %c0_18 = arith.constant 0 : index
      %34 = vector.load %arg4[%c0_17, %c0_18] : memref<1x128xf32, #tpu.memory_space<vmem>>, vector<1x128xf32>
      %35 = vector.broadcast %34 : vector<1x128xf32> to vector<32x128xf32>
      %36 = arith.addf %33, %35 : vector<32x128xf32>
      %37 = arith.truncf %36 : vector<32x128xf32> to vector<32x128xbf16>
      %c0_19 = arith.constant 0 : index
      %c0_20 = arith.constant 0 : index
      %38 = vector.load %arg8[%c0_19, %c0_20] : memref<32x128xbf16, #tpu.memory_space<vmem>>, vector<32x128xbf16>
      tpu.vector_store %arg8[%c0_19, %c0_20], %37 {strides = array<i32>} : memref<32x128xbf16, #tpu.memory_space<vmem>>, vector<32x128xbf16>,
    } else {
    }
    %c0 = arith.constant 0 : index
    %c0_1 = arith.constant 0 : index
    %3 = vector.load %arg8[%c0, %c0_1] : memref<32x128xbf16, #tpu.memory_space<vmem>>, vector<32x128xbf16>
    %c0_2 = arith.constant 0 : index
    %c0_3 = arith.constant 0 : index
    %4 = vector.load %arg5[%c0_2, %c0_3] : memref<128x384xbf16, #tpu.memory_space<vmem>>, vector<128x384xbf16>
    %cst = arith.constant dense<0.000000e+00> : vector<32x384xf32>
    %5 = tpu.matmul %3, %4, %cst {dimension_numbers = #tpu.dot_dimension_numbers<[1], [0], [0], [1], [0, 0, 1, 1], [], []>} : vector<32x128xbf16>, vector<128x384xbf16>, vector<32x384xf32> -> vector<32x384xf32>
    %c0_4 = arith.constant 0 : index
    %c0_5 = arith.constant 0 : index
    %6 = vector.load %arg6[%c0_4, %c0_5] : memref<1x384xf32, #tpu.memory_space<vmem>>, vector<1x384xf32>
    %7 = vector.broadcast %6 : vector<1x384xf32> to vector<32x384xf32>
    %8 = arith.addf %5, %7 : vector<32x384xf32>
    %9 = arith.truncf %8 : vector<32x384xf32> to vector<32x384xbf16>
    %c0_6 = arith.constant 0 : index
    %c0_7 = arith.constant 0 : index
    %10 = vector.load %arg7[%c0_6, %c0_7] : memref<32x384xbf16, #tpu.memory_space<vmem>>, vector<32x384xbf16>
    tpu.vector_store %arg7[%c0_6, %c0_7], %9 {strides = array<i32>} : memref<32x384xbf16, #tpu.memory_space<vmem>>, vector<32x384xbf16>,
    return
  }
  func.func @transform_0(%arg0: i32, %arg1: i32) -> (i32, i32) {
    %c0_i32 = arith.constant 0 : i32
    %c0_i32_0 = arith.constant 0 : i32
    return %arg0, %c0_i32 : i32, i32
  }
  func.func @transform_1(%arg0: i32, %arg1: i32) -> (i32, i32) {
    %c0_i32 = arith.constant 0 : i32
    %c0_i32_0 = arith.constant 0 : i32
    %c0_i32_1 = arith.constant 0 : i32
    return %c0_i32, %c0_i32_0 : i32, i32
  }
  func.func @transform_2(%arg0: i32, %arg1: i32) -> (i32, i32) {
    %c0_i32 = arith.constant 0 : i32
    %c0_i32_0 = arith.constant 0 : i32
    %c0_i32_1 = arith.constant 0 : i32
    return %c0_i32, %c0_i32_0 : i32, i32
  }
  func.func @transform_3(%arg0: i32, %arg1: i32) -> (i32, i32) {
    %c0_i32 = arith.constant 0 : i32
    %c0_i32_0 = arith.constant 0 : i32
    return %c0_i32, %arg1 : i32, i32
  }
  func.func @transform_4(%arg0: i32, %arg1: i32) -> (i32, i32) {
    %c0_i32 = arith.constant 0 : i32
    %c0_i32_0 = arith.constant 0 : i32
    return %c0_i32, %arg1 : i32, i32
  }
  func.func @transform_5(%arg0: i32, %arg1: i32) -> (i32, i32) {
    %c0_i32 = arith.constant 0 : i32
    return %arg0, %arg1 : i32, i32
  }
}

module attributes {stable_mosaic.version = 11 : i64} {
  func.func @_dense_kernel(%arg0: i32, %arg1: i32, %arg2: i32, %arg3: memref<32x128xbf16, #tpu.memory_space<vmem>>, %arg4: memref<128x128xbf16, #tpu.memory_space<vmem>>, %arg5: memref<1x128xf32, #tpu.memory_space<vmem>>, %arg6: memref<32x128xbf16, #tpu.memory_space<vmem>>, %arg7: memref<32x128xbf16, #tpu.memory_space<vmem>>, %arg8: memref<32x128xf32, #tpu.memory_space<vmem>>) attributes {dimension_semantics = [#tpu.dimension_semantics<parallel>, #tpu.dimension_semantics<parallel>, #tpu.dimension_semantics<arbitrary>], iteration_bounds = array<i64: 1, 1, 1>, scalar_prefetch = 0 : i64, scratch_operands = 1 : i64, tpu.core_type = #tpu.core_type<tc>, window_params = [{transform_indices = @transform_0, window_bounds = array<i64: 32, 128>}, {transform_indices = @transform_1, window_bounds = array<i64: 128, 128>}, {transform_indices = @transform_2, window_bounds = array<i64: 1, 128>}, {transform_indices = @transform_3, window_bounds = array<i64: 32, 128>}, {transform_indices = @transform_4, window_bounds = array<i64: 32, 128>}]} {
    %c0_i32 = arith.constant 0 : i32
    %0 = arith.cmpi eq, %arg2, %c0_i32 : i32
    %1 = arith.extui %0 : i1 to i32
    %c0_i32_0 = arith.constant 0 : i32
    %2 = arith.cmpi ne, %1, %c0_i32_0 : i32
    scf.if %2 {
      %cst_10 = arith.constant 0.000000e+00 : f32
      %12 = vector.broadcast %cst_10 : f32 to vector<32x128xf32>
      %c0_11 = arith.constant 0 : index
      %c0_12 = arith.constant 0 : index
      %13 = vector.load %arg8[%c0_11, %c0_12] : memref<32x128xf32, #tpu.memory_space<vmem>>, vector<32x128xf32>
      tpu.vector_store %arg8[%c0_11, %c0_12], %12 {strides = array<i32>} : memref<32x128xf32, #tpu.memory_space<vmem>>, vector<32x128xf32>,
    } else {
    }
    %c0 = arith.constant 0 : index
    %c0_1 = arith.constant 0 : index
    %3 = vector.load %arg8[%c0, %c0_1] : memref<32x128xf32, #tpu.memory_space<vmem>>, vector<32x128xf32>
    %c0_2 = arith.constant 0 : index
    %c0_3 = arith.constant 0 : index
    %4 = vector.load %arg3[%c0_2, %c0_3] : memref<32x128xbf16, #tpu.memory_space<vmem>>, vector<32x128xbf16>
    %c0_4 = arith.constant 0 : index
    %c0_5 = arith.constant 0 : index
    %5 = vector.load %arg4[%c0_4, %c0_5] : memref<128x128xbf16, #tpu.memory_space<vmem>>, vector<128x128xbf16>
    %cst = arith.constant dense<0.000000e+00> : vector<32x128xf32>
    %6 = tpu.matmul %4, %5, %cst {dimension_numbers = #tpu.dot_dimension_numbers<[1], [0], [0], [1], [0, 0, 1, 1], [], []>} : vector<32x128xbf16>, vector<128x128xbf16>, vector<32x128xf32> -> vector<32x128xf32>
    %7 = arith.addf %3, %6 : vector<32x128xf32>
    %c0_6 = arith.constant 0 : index
    %c0_7 = arith.constant 0 : index
    %8 = vector.load %arg8[%c0_6, %c0_7] : memref<32x128xf32, #tpu.memory_space<vmem>>, vector<32x128xf32>
    tpu.vector_store %arg8[%c0_6, %c0_7], %7 {strides = array<i32>} : memref<32x128xf32, #tpu.memory_space<vmem>>, vector<32x128xf32>,
    %c0_i32_8 = arith.constant 0 : i32
    %9 = arith.cmpi eq, %arg2, %c0_i32_8 : i32
    %10 = arith.extui %9 : i1 to i32
    %c0_i32_9 = arith.constant 0 : i32
    %11 = arith.cmpi ne, %10, %c0_i32_9 : i32
    scf.if %11 {
      %c0_10 = arith.constant 0 : index
      %c0_11 = arith.constant 0 : index
      %12 = vector.load %arg8[%c0_10, %c0_11] : memref<32x128xf32, #tpu.memory_space<vmem>>, vector<32x128xf32>
      %c0_12 = arith.constant 0 : index
      %c0_13 = arith.constant 0 : index
      %13 = vector.load %arg5[%c0_12, %c0_13] : memref<1x128xf32, #tpu.memory_space<vmem>>, vector<1x128xf32>
      %14 = vector.broadcast %13 : vector<1x128xf32> to vector<32x128xf32>
      %15 = arith.addf %12, %14 : vector<32x128xf32>
      %c0_14 = arith.constant 0 : index
      %c0_15 = arith.constant 0 : index
      %16 = vector.load %arg6[%c0_14, %c0_15] : memref<32x128xbf16, #tpu.memory_space<vmem>>, vector<32x128xbf16>
      %17 = arith.extf %16 : vector<32x128xbf16> to vector<32x128xf32>
      %18 = arith.addf %15, %17 : vector<32x128xf32>
      %19 = arith.truncf %18 : vector<32x128xf32> to vector<32x128xbf16>
      %c0_16 = arith.constant 0 : index
      %c0_17 = arith.constant 0 : index
      %20 = vector.load %arg7[%c0_16, %c0_17] : memref<32x128xbf16, #tpu.memory_space<vmem>>, vector<32x128xbf16>
      tpu.vector_store %arg7[%c0_16, %c0_17], %19 {strides = array<i32>} : memref<32x128xbf16, #tpu.memory_space<vmem>>, vector<32x128xbf16>,
    } else {
    }
    return
  }
  func.func @transform_0(%arg0: i32, %arg1: i32, %arg2: i32) -> (i32, i32) {
    %c0_i32 = arith.constant 0 : i32
    return %arg0, %arg2 : i32, i32
  }
  func.func @transform_1(%arg0: i32, %arg1: i32, %arg2: i32) -> (i32, i32) {
    %c0_i32 = arith.constant 0 : i32
    return %arg2, %arg1 : i32, i32
  }
  func.func @transform_2(%arg0: i32, %arg1: i32, %arg2: i32) -> (i32, i32) {
    %c0_i32 = arith.constant 0 : i32
    %c0_i32_0 = arith.constant 0 : i32
    return %c0_i32, %arg1 : i32, i32
  }
  func.func @transform_3(%arg0: i32, %arg1: i32, %arg2: i32) -> (i32, i32) {
    %c0_i32 = arith.constant 0 : i32
    return %arg0, %arg1 : i32, i32
  }
  func.func @transform_4(%arg0: i32, %arg1: i32, %arg2: i32) -> (i32, i32) {
    %c0_i32 = arith.constant 0 : i32
    return %arg0, %arg1 : i32, i32
  }
}

module attributes {stable_mosaic.version = 11 : i64} {
  func.func @_ln_dense_kernel(%arg0: i32, %arg1: i32, %arg2: memref<32x128xbf16, #tpu.memory_space<vmem>>, %arg3: memref<1x128xf32, #tpu.memory_space<vmem>>, %arg4: memref<1x128xf32, #tpu.memory_space<vmem>>, %arg5: memref<128x512xbf16, #tpu.memory_space<vmem>>, %arg6: memref<1x512xf32, #tpu.memory_space<vmem>>, %arg7: memref<32x512xbf16, #tpu.memory_space<vmem>>, %arg8: memref<32x128xbf16, #tpu.memory_space<vmem>>) attributes {dimension_semantics = [#tpu.dimension_semantics<parallel>, #tpu.dimension_semantics<arbitrary>], iteration_bounds = array<i64: 1, 1>, scalar_prefetch = 0 : i64, scratch_operands = 1 : i64, tpu.core_type = #tpu.core_type<tc>, window_params = [{transform_indices = @transform_0, window_bounds = array<i64: 32, 128>}, {pipeline_mode = #tpu.pipeline_mode<synchronous>, transform_indices = @transform_1, window_bounds = array<i64: 1, 128>}, {pipeline_mode = #tpu.pipeline_mode<synchronous>, transform_indices = @transform_2, window_bounds = array<i64: 1, 128>}, {transform_indices = @transform_3, window_bounds = array<i64: 128, 512>}, {transform_indices = @transform_4, window_bounds = array<i64: 1, 512>}, {transform_indices = @transform_5, window_bounds = array<i64: 32, 512>}]} {
    %c0_i32 = arith.constant 0 : i32
    %0 = arith.cmpi eq, %arg1, %c0_i32 : i32
    %1 = arith.extui %0 : i1 to i32
    %c0_i32_0 = arith.constant 0 : i32
    %2 = arith.cmpi ne, %1, %c0_i32_0 : i32
    scf.if %2 {
      %c0_12 = arith.constant 0 : index
      %c0_13 = arith.constant 0 : index
      %24 = vector.load %arg2[%c0_12, %c0_13] : memref<32x128xbf16, #tpu.memory_space<vmem>>, vector<32x128xbf16>
      %25 = arith.extf %24 : vector<32x128xbf16> to vector<32x128xf32>
      %cst_14 = arith.constant dense<0.000000e+00> : vector<32xf32>
      %26 = vector.multi_reduction <add>, %25, %cst_14 [1] : vector<32x128xf32> to vector<32xf32>
      %27 = vector.shape_cast %26 : vector<32xf32> to vector<32x1xf32>
      %cst_15 = arith.constant 1.280000e+02 : f32
      %28 = vector.broadcast %cst_15 : f32 to vector<32x1xf32>
      %29 = arith.divf %27, %28 : vector<32x1xf32>
      %30 = vector.broadcast %29 : vector<32x1xf32> to vector<32x128xf32>
      %31 = arith.subf %25, %30 : vector<32x128xf32>
      %32 = arith.mulf %31, %31 : vector<32x128xf32>
      %cst_16 = arith.constant dense<0.000000e+00> : vector<32xf32>
      %33 = vector.multi_reduction <add>, %32, %cst_16 [1] : vector<32x128xf32> to vector<32xf32>
      %34 = vector.shape_cast %33 : vector<32xf32> to vector<32x1xf32>
      %cst_17 = arith.constant 1.280000e+02 : f32
      %35 = vector.broadcast %cst_17 : f32 to vector<32x1xf32>
      %36 = arith.divf %34, %35 : vector<32x1xf32>
      %37 = vector.broadcast %29 : vector<32x1xf32> to vector<32x128xf32>
      %38 = arith.subf %25, %37 : vector<32x128xf32>
      %cst_18 = arith.constant 9.99999974E-6 : f32
      %39 = vector.broadcast %cst_18 : f32 to vector<32x1xf32>
      %40 = arith.addf %36, %39 : vector<32x1xf32>
      %41 = math.rsqrt %40 : vector<32x1xf32>
      %42 = vector.broadcast %41 : vector<32x1xf32> to vector<32x128xf32>
      %43 = arith.mulf %38, %42 : vector<32x128xf32>
      %c0_19 = arith.constant 0 : index
      %c0_20 = arith.constant 0 : index
      %44 = vector.load %arg3[%c0_19, %c0_20] : memref<1x128xf32, #tpu.memory_space<vmem>>, vector<1x128xf32>
      %45 = vector.broadcast %44 : vector<1x128xf32> to vector<32x128xf32>
      %46 = arith.mulf %43, %45 : vector<32x128xf32>
      %c0_21 = arith.constant 0 : index
      %c0_22 = arith.constant 0 : index
      %47 = vector.load %arg4[%c0_21, %c0_22] : memref<1x128xf32, #tpu.memory_space<vmem>>, vector<1x128xf32>
      %48 = vector.broadcast %47 : vector<1x128xf32> to vector<32x128xf32>
      %49 = arith.addf %46, %48 : vector<32x128xf32>
      %50 = arith.truncf %49 : vector<32x128xf32> to vector<32x128xbf16>
      %c0_23 = arith.constant 0 : index
      %c0_24 = arith.constant 0 : index
      %51 = vector.load %arg8[%c0_23, %c0_24] : memref<32x128xbf16, #tpu.memory_space<vmem>>, vector<32x128xbf16>
      tpu.vector_store %arg8[%c0_23, %c0_24], %50 {strides = array<i32>} : memref<32x128xbf16, #tpu.memory_space<vmem>>, vector<32x128xbf16>,
    } else {
    }
    %c0 = arith.constant 0 : index
    %c0_1 = arith.constant 0 : index
    %3 = vector.load %arg8[%c0, %c0_1] : memref<32x128xbf16, #tpu.memory_space<vmem>>, vector<32x128xbf16>
    %c0_2 = arith.constant 0 : index
    %c0_3 = arith.constant 0 : index
    %4 = vector.load %arg5[%c0_2, %c0_3] : memref<128x512xbf16, #tpu.memory_space<vmem>>, vector<128x512xbf16>
    %cst = arith.constant dense<0.000000e+00> : vector<32x512xf32>
    %5 = tpu.matmul %3, %4, %cst {dimension_numbers = #tpu.dot_dimension_numbers<[1], [0], [0], [1], [0, 0, 1, 1], [], []>} : vector<32x128xbf16>, vector<128x512xbf16>, vector<32x512xf32> -> vector<32x512xf32>
    %c0_4 = arith.constant 0 : index
    %c0_5 = arith.constant 0 : index
    %6 = vector.load %arg6[%c0_4, %c0_5] : memref<1x512xf32, #tpu.memory_space<vmem>>, vector<1x512xf32>
    %7 = vector.broadcast %6 : vector<1x512xf32> to vector<32x512xf32>
    %8 = arith.addf %5, %7 : vector<32x512xf32>
    %9 = arith.mulf %8, %8 : vector<32x512xf32>
    %10 = arith.mulf %8, %9 : vector<32x512xf32>
    %cst_6 = arith.constant 4.471500e-02 : f32
    %11 = vector.broadcast %cst_6 : f32 to vector<32x512xf32>
    %12 = arith.mulf %11, %10 : vector<32x512xf32>
    %13 = arith.addf %8, %12 : vector<32x512xf32>
    %cst_7 = arith.constant 0.797884583 : f32
    %14 = vector.broadcast %cst_7 : f32 to vector<32x512xf32>
    %15 = arith.mulf %14, %13 : vector<32x512xf32>
    %16 = math.tanh %15 : vector<32x512xf32>
    %cst_8 = arith.constant 1.000000e+00 : f32
    %17 = vector.broadcast %cst_8 : f32 to vector<32x512xf32>
    %18 = arith.addf %17, %16 : vector<32x512xf32>
    %cst_9 = arith.constant 5.000000e-01 : f32
    %19 = vector.broadcast %cst_9 : f32 to vector<32x512xf32>
    %20 = arith.mulf %19, %18 : vector<32x512xf32>
    %21 = arith.mulf %8, %20 : vector<32x512xf32>
    %22 = arith.truncf %21 : vector<32x512xf32> to vector<32x512xbf16>
    %c0_10 = arith.constant 0 : index
    %c0_11 = arith.constant 0 : index
    %23 = vector.load %arg7[%c0_10, %c0_11] : memref<32x512xbf16, #tpu.memory_space<vmem>>, vector<32x512xbf16>
    tpu.vector_store %arg7[%c0_10, %c0_11], %22 {strides = array<i32>} : memref<32x512xbf16, #tpu.memory_space<vmem>>, vector<32x512xbf16>,
    return
  }
  func.func @transform_0(%arg0: i32, %arg1: i32) -> (i32, i32) {
    %c0_i32 = arith.constant 0 : i32
    %c0_i32_0 = arith.constant 0 : i32
    return %arg0, %c0_i32 : i32, i32
  }
  func.func @transform_1(%arg0: i32, %arg1: i32) -> (i32, i32) {
    %c0_i32 = arith.constant 0 : i32
    %c0_i32_0 = arith.constant 0 : i32
    %c0_i32_1 = arith.constant 0 : i32
    return %c0_i32, %c0_i32_0 : i32, i32
  }
  func.func @transform_2(%arg0: i32, %arg1: i32) -> (i32, i32) {
    %c0_i32 = arith.constant 0 : i32
    %c0_i32_0 = arith.constant 0 : i32
    %c0_i32_1 = arith.constant 0 : i32
    return %c0_i32, %c0_i32_0 : i32, i32
  }
  func.func @transform_3(%arg0: i32, %arg1: i32) -> (i32, i32) {
    %c0_i32 = arith.constant 0 : i32
    %c0_i32_0 = arith.constant 0 : i32
    return %c0_i32, %arg1 : i32, i32
  }
  func.func @transform_4(%arg0: i32, %arg1: i32) -> (i32, i32) {
    %c0_i32 = arith.constant 0 : i32
    %c0_i32_0 = arith.constant 0 : i32
    return %c0_i32, %arg1 : i32, i32
  }
  func.func @transform_5(%arg0: i32, %arg1: i32) -> (i32, i32) {
    %c0_i32 = arith.constant 0 : i32
    return %arg0, %arg1 : i32, i32
  }
}

module attributes {stable_mosaic.version = 11 : i64} {
  func.func @_dense_kernel(%arg0: i32, %arg1: i32, %arg2: i32, %arg3: memref<32x512xbf16, #tpu.memory_space<vmem>>, %arg4: memref<512x128xbf16, #tpu.memory_space<vmem>>, %arg5: memref<1x128xf32, #tpu.memory_space<vmem>>, %arg6: memref<32x128xbf16, #tpu.memory_space<vmem>>, %arg7: memref<32x128xbf16, #tpu.memory_space<vmem>>, %arg8: memref<32x128xf32, #tpu.memory_space<vmem>>) attributes {dimension_semantics = [#tpu.dimension_semantics<parallel>, #tpu.dimension_semantics<parallel>, #tpu.dimension_semantics<arbitrary>], iteration_bounds = array<i64: 1, 1, 1>, scalar_prefetch = 0 : i64, scratch_operands = 1 : i64, tpu.core_type = #tpu.core_type<tc>, window_params = [{transform_indices = @transform_0, window_bounds = array<i64: 32, 512>}, {transform_indices = @transform_1, window_bounds = array<i64: 512, 128>}, {transform_indices = @transform_2, window_bounds = array<i64: 1, 128>}, {transform_indices = @transform_3, window_bounds = array<i64: 32, 128>}, {transform_indices = @transform_4, window_bounds = array<i64: 32, 128>}]} {
    %c0_i32 = arith.constant 0 : i32
    %0 = arith.cmpi eq, %arg2, %c0_i32 : i32
    %1 = arith.extui %0 : i1 to i32
    %c0_i32_0 = arith.constant 0 : i32
    %2 = arith.cmpi ne, %1, %c0_i32_0 : i32
    scf.if %2 {
      %cst_10 = arith.constant 0.000000e+00 : f32
      %12 = vector.broadcast %cst_10 : f32 to vector<32x128xf32>
      %c0_11 = arith.constant 0 : index
      %c0_12 = arith.constant 0 : index
      %13 = vector.load %arg8[%c0_11, %c0_12] : memref<32x128xf32, #tpu.memory_space<vmem>>, vector<32x128xf32>
      tpu.vector_store %arg8[%c0_11, %c0_12], %12 {strides = array<i32>} : memref<32x128xf32, #tpu.memory_space<vmem>>, vector<32x128xf32>,
    } else {
    }
    %c0 = arith.constant 0 : index
    %c0_1 = arith.constant 0 : index
    %3 = vector.load %arg8[%c0, %c0_1] : memref<32x128xf32, #tpu.memory_space<vmem>>, vector<32x128xf32>
    %c0_2 = arith.constant 0 : index
    %c0_3 = arith.constant 0 : index
    %4 = vector.load %arg3[%c0_2, %c0_3] : memref<32x512xbf16, #tpu.memory_space<vmem>>, vector<32x512xbf16>
    %c0_4 = arith.constant 0 : index
    %c0_5 = arith.constant 0 : index
    %5 = vector.load %arg4[%c0_4, %c0_5] : memref<512x128xbf16, #tpu.memory_space<vmem>>, vector<512x128xbf16>
    %cst = arith.constant dense<0.000000e+00> : vector<32x128xf32>
    %6 = tpu.matmul %4, %5, %cst {dimension_numbers = #tpu.dot_dimension_numbers<[1], [0], [0], [1], [0, 0, 1, 1], [], []>} : vector<32x512xbf16>, vector<512x128xbf16>, vector<32x128xf32> -> vector<32x128xf32>
    %7 = arith.addf %3, %6 : vector<32x128xf32>
    %c0_6 = arith.constant 0 : index
    %c0_7 = arith.constant 0 : index
    %8 = vector.load %arg8[%c0_6, %c0_7] : memref<32x128xf32, #tpu.memory_space<vmem>>, vector<32x128xf32>
    tpu.vector_store %arg8[%c0_6, %c0_7], %7 {strides = array<i32>} : memref<32x128xf32, #tpu.memory_space<vmem>>, vector<32x128xf32>,
    %c0_i32_8 = arith.constant 0 : i32
    %9 = arith.cmpi eq, %arg2, %c0_i32_8 : i32
    %10 = arith.extui %9 : i1 to i32
    %c0_i32_9 = arith.constant 0 : i32
    %11 = arith.cmpi ne, %10, %c0_i32_9 : i32
    scf.if %11 {
      %c0_10 = arith.constant 0 : index
      %c0_11 = arith.constant 0 : index
      %12 = vector.load %arg8[%c0_10, %c0_11] : memref<32x128xf32, #tpu.memory_space<vmem>>, vector<32x128xf32>
      %c0_12 = arith.constant 0 : index
      %c0_13 = arith.constant 0 : index
      %13 = vector.load %arg5[%c0_12, %c0_13] : memref<1x128xf32, #tpu.memory_space<vmem>>, vector<1x128xf32>
      %14 = vector.broadcast %13 : vector<1x128xf32> to vector<32x128xf32>
      %15 = arith.addf %12, %14 : vector<32x128xf32>
      %c0_14 = arith.constant 0 : index
      %c0_15 = arith.constant 0 : index
      %16 = vector.load %arg6[%c0_14, %c0_15] : memref<32x128xbf16, #tpu.memory_space<vmem>>, vector<32x128xbf16>
      %17 = arith.extf %16 : vector<32x128xbf16> to vector<32x128xf32>
      %18 = arith.addf %15, %17 : vector<32x128xf32>
      %19 = arith.truncf %18 : vector<32x128xf32> to vector<32x128xbf16>
      %c0_16 = arith.constant 0 : index
      %c0_17 = arith.constant 0 : index
      %20 = vector.load %arg7[%c0_16, %c0_17] : memref<32x128xbf16, #tpu.memory_space<vmem>>, vector<32x128xbf16>
      tpu.vector_store %arg7[%c0_16, %c0_17], %19 {strides = array<i32>} : memref<32x128xbf16, #tpu.memory_space<vmem>>, vector<32x128xbf16>,
    } else {
    }
    return
  }
  func.func @transform_0(%arg0: i32, %arg1: i32, %arg2: i32) -> (i32, i32) {
    %c0_i32 = arith.constant 0 : i32
    return %arg0, %arg2 : i32, i32
  }
  func.func @transform_1(%arg0: i32, %arg1: i32, %arg2: i32) -> (i32, i32) {
    %c0_i32 = arith.constant 0 : i32
    return %arg2, %arg1 : i32, i32
  }
  func.func @transform_2(%arg0: i32, %arg1: i32, %arg2: i32) -> (i32, i32) {
    %c0_i32 = arith.constant 0 : i32
    %c0_i32_0 = arith.constant 0 : i32
    return %c0_i32, %arg1 : i32, i32
  }
  func.func @transform_3(%arg0: i32, %arg1: i32, %arg2: i32) -> (i32, i32) {
    %c0_i32 = arith.constant 0 : i32
    return %arg0, %arg1 : i32, i32
  }
  func.func @transform_4(%arg0: i32, %arg1: i32, %arg2: i32) -> (i32, i32) {
    %c0_i32 = arith.constant 0 : i32
    return %arg0, %arg1 : i32, i32
  }
}

module attributes {stable_mosaic.version = 11 : i64} {
  func.func @_dense_kernel(%arg0: i32, %arg1: i32, %arg2: i32, %arg3: memref<32x16xbf16, #tpu.memory_space<vmem>>, %arg4: memref<16x128xbf16, #tpu.memory_space<vmem>>, %arg5: memref<1x128xf32, #tpu.memory_space<vmem>>, %arg6: memref<32x128xbf16, #tpu.memory_space<vmem>>, %arg7: memref<32x128xf32, #tpu.memory_space<vmem>>) attributes {dimension_semantics = [#tpu.dimension_semantics<parallel>, #tpu.dimension_semantics<parallel>, #tpu.dimension_semantics<arbitrary>], iteration_bounds = array<i64: 1, 1, 1>, scalar_prefetch = 0 : i64, scratch_operands = 1 : i64, tpu.core_type = #tpu.core_type<tc>, window_params = [{transform_indices = @transform_0, window_bounds = array<i64: 32, 16>}, {transform_indices = @transform_1, window_bounds = array<i64: 16, 128>}, {transform_indices = @transform_2, window_bounds = array<i64: 1, 128>}, {transform_indices = @transform_3, window_bounds = array<i64: 32, 128>}]} {
    %c0_i32 = arith.constant 0 : i32
    %0 = arith.cmpi eq, %arg2, %c0_i32 : i32
    %1 = arith.extui %0 : i1 to i32
    %c0_i32_0 = arith.constant 0 : i32
    %2 = arith.cmpi ne, %1, %c0_i32_0 : i32
    scf.if %2 {
      %cst_10 = arith.constant 0.000000e+00 : f32
      %12 = vector.broadcast %cst_10 : f32 to vector<32x128xf32>
      %c0_11 = arith.constant 0 : index
      %c0_12 = arith.constant 0 : index
      %13 = vector.load %arg7[%c0_11, %c0_12] : memref<32x128xf32, #tpu.memory_space<vmem>>, vector<32x128xf32>
      tpu.vector_store %arg7[%c0_11, %c0_12], %12 {strides = array<i32>} : memref<32x128xf32, #tpu.memory_space<vmem>>, vector<32x128xf32>,
    } else {
    }
    %c0 = arith.constant 0 : index
    %c0_1 = arith.constant 0 : index
    %3 = vector.load %arg7[%c0, %c0_1] : memref<32x128xf32, #tpu.memory_space<vmem>>, vector<32x128xf32>
    %c0_2 = arith.constant 0 : index
    %c0_3 = arith.constant 0 : index
    %4 = vector.load %arg3[%c0_2, %c0_3] : memref<32x16xbf16, #tpu.memory_space<vmem>>, vector<32x16xbf16>
    %c0_4 = arith.constant 0 : index
    %c0_5 = arith.constant 0 : index
    %5 = vector.load %arg4[%c0_4, %c0_5] : memref<16x128xbf16, #tpu.memory_space<vmem>>, vector<16x128xbf16>
    %cst = arith.constant dense<0.000000e+00> : vector<32x128xf32>
    %6 = tpu.matmul %4, %5, %cst {dimension_numbers = #tpu.dot_dimension_numbers<[1], [0], [0], [1], [0, 0, 1, 1], [], []>} : vector<32x16xbf16>, vector<16x128xbf16>, vector<32x128xf32> -> vector<32x128xf32>
    %7 = arith.addf %3, %6 : vector<32x128xf32>
    %c0_6 = arith.constant 0 : index
    %c0_7 = arith.constant 0 : index
    %8 = vector.load %arg7[%c0_6, %c0_7] : memref<32x128xf32, #tpu.memory_space<vmem>>, vector<32x128xf32>
    tpu.vector_store %arg7[%c0_6, %c0_7], %7 {strides = array<i32>} : memref<32x128xf32, #tpu.memory_space<vmem>>, vector<32x128xf32>,
    %c0_i32_8 = arith.constant 0 : i32
    %9 = arith.cmpi eq, %arg2, %c0_i32_8 : i32
    %10 = arith.extui %9 : i1 to i32
    %c0_i32_9 = arith.constant 0 : i32
    %11 = arith.cmpi ne, %10, %c0_i32_9 : i32
    scf.if %11 {
      %c0_10 = arith.constant 0 : index
      %c0_11 = arith.constant 0 : index
      %12 = vector.load %arg7[%c0_10, %c0_11] : memref<32x128xf32, #tpu.memory_space<vmem>>, vector<32x128xf32>
      %c0_12 = arith.constant 0 : index
      %c0_13 = arith.constant 0 : index
      %13 = vector.load %arg5[%c0_12, %c0_13] : memref<1x128xf32, #tpu.memory_space<vmem>>, vector<1x128xf32>
      %14 = vector.broadcast %13 : vector<1x128xf32> to vector<32x128xf32>
      %15 = arith.addf %12, %14 : vector<32x128xf32>
      %16 = arith.truncf %15 : vector<32x128xf32> to vector<32x128xbf16>
      %c0_14 = arith.constant 0 : index
      %c0_15 = arith.constant 0 : index
      %17 = vector.load %arg6[%c0_14, %c0_15] : memref<32x128xbf16, #tpu.memory_space<vmem>>, vector<32x128xbf16>
      tpu.vector_store %arg6[%c0_14, %c0_15], %16 {strides = array<i32>} : memref<32x128xbf16, #tpu.memory_space<vmem>>, vector<32x128xbf16>,
    } else {
    }
    return
  }
  func.func @transform_0(%arg0: i32, %arg1: i32, %arg2: i32) -> (i32, i32) {
    %c0_i32 = arith.constant 0 : i32
    return %arg0, %arg2 : i32, i32
  }
  func.func @transform_1(%arg0: i32, %arg1: i32, %arg2: i32) -> (i32, i32) {
    %c0_i32 = arith.constant 0 : i32
    return %arg2, %arg1 : i32, i32
  }
  func.func @transform_2(%arg0: i32, %arg1: i32, %arg2: i32) -> (i32, i32) {
    %c0_i32 = arith.constant 0 : i32
    %c0_i32_0 = arith.constant 0 : i32
    return %c0_i32, %arg1 : i32, i32
  }
  func.func @transform_3(%arg0: i32, %arg1: i32, %arg2: i32) -> (i32, i32) {
    %c0_i32 = arith.constant 0 : i32
    return %arg0, %arg1 : i32, i32
  }
}

module attributes {stable_mosaic.version = 11 : i64} {
  func.func @_ln_dense_kernel(%arg0: i32, %arg1: i32, %arg2: memref<32x128xbf16, #tpu.memory_space<vmem>>, %arg3: memref<1x128xf32, #tpu.memory_space<vmem>>, %arg4: memref<1x128xf32, #tpu.memory_space<vmem>>, %arg5: memref<128x384xbf16, #tpu.memory_space<vmem>>, %arg6: memref<1x384xf32, #tpu.memory_space<vmem>>, %arg7: memref<32x384xbf16, #tpu.memory_space<vmem>>, %arg8: memref<32x128xbf16, #tpu.memory_space<vmem>>) attributes {dimension_semantics = [#tpu.dimension_semantics<parallel>, #tpu.dimension_semantics<arbitrary>], iteration_bounds = array<i64: 1, 1>, scalar_prefetch = 0 : i64, scratch_operands = 1 : i64, tpu.core_type = #tpu.core_type<tc>, window_params = [{transform_indices = @transform_0, window_bounds = array<i64: 32, 128>}, {pipeline_mode = #tpu.pipeline_mode<synchronous>, transform_indices = @transform_1, window_bounds = array<i64: 1, 128>}, {pipeline_mode = #tpu.pipeline_mode<synchronous>, transform_indices = @transform_2, window_bounds = array<i64: 1, 128>}, {transform_indices = @transform_3, window_bounds = array<i64: 128, 384>}, {transform_indices = @transform_4, window_bounds = array<i64: 1, 384>}, {transform_indices = @transform_5, window_bounds = array<i64: 32, 384>}]} {
    %c0_i32 = arith.constant 0 : i32
    %0 = arith.cmpi eq, %arg1, %c0_i32 : i32
    %1 = arith.extui %0 : i1 to i32
    %c0_i32_0 = arith.constant 0 : i32
    %2 = arith.cmpi ne, %1, %c0_i32_0 : i32
    scf.if %2 {
      %c0_8 = arith.constant 0 : index
      %c0_9 = arith.constant 0 : index
      %11 = vector.load %arg2[%c0_8, %c0_9] : memref<32x128xbf16, #tpu.memory_space<vmem>>, vector<32x128xbf16>
      %12 = arith.extf %11 : vector<32x128xbf16> to vector<32x128xf32>
      %cst_10 = arith.constant dense<0.000000e+00> : vector<32xf32>
      %13 = vector.multi_reduction <add>, %12, %cst_10 [1] : vector<32x128xf32> to vector<32xf32>
      %14 = vector.shape_cast %13 : vector<32xf32> to vector<32x1xf32>
      %cst_11 = arith.constant 1.280000e+02 : f32
      %15 = vector.broadcast %cst_11 : f32 to vector<32x1xf32>
      %16 = arith.divf %14, %15 : vector<32x1xf32>
      %17 = vector.broadcast %16 : vector<32x1xf32> to vector<32x128xf32>
      %18 = arith.subf %12, %17 : vector<32x128xf32>
      %19 = arith.mulf %18, %18 : vector<32x128xf32>
      %cst_12 = arith.constant dense<0.000000e+00> : vector<32xf32>
      %20 = vector.multi_reduction <add>, %19, %cst_12 [1] : vector<32x128xf32> to vector<32xf32>
      %21 = vector.shape_cast %20 : vector<32xf32> to vector<32x1xf32>
      %cst_13 = arith.constant 1.280000e+02 : f32
      %22 = vector.broadcast %cst_13 : f32 to vector<32x1xf32>
      %23 = arith.divf %21, %22 : vector<32x1xf32>
      %24 = vector.broadcast %16 : vector<32x1xf32> to vector<32x128xf32>
      %25 = arith.subf %12, %24 : vector<32x128xf32>
      %cst_14 = arith.constant 9.99999974E-6 : f32
      %26 = vector.broadcast %cst_14 : f32 to vector<32x1xf32>
      %27 = arith.addf %23, %26 : vector<32x1xf32>
      %28 = math.rsqrt %27 : vector<32x1xf32>
      %29 = vector.broadcast %28 : vector<32x1xf32> to vector<32x128xf32>
      %30 = arith.mulf %25, %29 : vector<32x128xf32>
      %c0_15 = arith.constant 0 : index
      %c0_16 = arith.constant 0 : index
      %31 = vector.load %arg3[%c0_15, %c0_16] : memref<1x128xf32, #tpu.memory_space<vmem>>, vector<1x128xf32>
      %32 = vector.broadcast %31 : vector<1x128xf32> to vector<32x128xf32>
      %33 = arith.mulf %30, %32 : vector<32x128xf32>
      %c0_17 = arith.constant 0 : index
      %c0_18 = arith.constant 0 : index
      %34 = vector.load %arg4[%c0_17, %c0_18] : memref<1x128xf32, #tpu.memory_space<vmem>>, vector<1x128xf32>
      %35 = vector.broadcast %34 : vector<1x128xf32> to vector<32x128xf32>
      %36 = arith.addf %33, %35 : vector<32x128xf32>
      %37 = arith.truncf %36 : vector<32x128xf32> to vector<32x128xbf16>
      %c0_19 = arith.constant 0 : index
      %c0_20 = arith.constant 0 : index
      %38 = vector.load %arg8[%c0_19, %c0_20] : memref<32x128xbf16, #tpu.memory_space<vmem>>, vector<32x128xbf16>
      tpu.vector_store %arg8[%c0_19, %c0_20], %37 {strides = array<i32>} : memref<32x128xbf16, #tpu.memory_space<vmem>>, vector<32x128xbf16>,
    } else {
    }
    %c0 = arith.constant 0 : index
    %c0_1 = arith.constant 0 : index
    %3 = vector.load %arg8[%c0, %c0_1] : memref<32x128xbf16, #tpu.memory_space<vmem>>, vector<32x128xbf16>
    %c0_2 = arith.constant 0 : index
    %c0_3 = arith.constant 0 : index
    %4 = vector.load %arg5[%c0_2, %c0_3] : memref<128x384xbf16, #tpu.memory_space<vmem>>, vector<128x384xbf16>
    %cst = arith.constant dense<0.000000e+00> : vector<32x384xf32>
    %5 = tpu.matmul %3, %4, %cst {dimension_numbers = #tpu.dot_dimension_numbers<[1], [0], [0], [1], [0, 0, 1, 1], [], []>} : vector<32x128xbf16>, vector<128x384xbf16>, vector<32x384xf32> -> vector<32x384xf32>
    %c0_4 = arith.constant 0 : index
    %c0_5 = arith.constant 0 : index
    %6 = vector.load %arg6[%c0_4, %c0_5] : memref<1x384xf32, #tpu.memory_space<vmem>>, vector<1x384xf32>
    %7 = vector.broadcast %6 : vector<1x384xf32> to vector<32x384xf32>
    %8 = arith.addf %5, %7 : vector<32x384xf32>
    %9 = arith.truncf %8 : vector<32x384xf32> to vector<32x384xbf16>
    %c0_6 = arith.constant 0 : index
    %c0_7 = arith.constant 0 : index
    %10 = vector.load %arg7[%c0_6, %c0_7] : memref<32x384xbf16, #tpu.memory_space<vmem>>, vector<32x384xbf16>
    tpu.vector_store %arg7[%c0_6, %c0_7], %9 {strides = array<i32>} : memref<32x384xbf16, #tpu.memory_space<vmem>>, vector<32x384xbf16>,
    return
  }
  func.func @transform_0(%arg0: i32, %arg1: i32) -> (i32, i32) {
    %c0_i32 = arith.constant 0 : i32
    %c0_i32_0 = arith.constant 0 : i32
    return %arg0, %c0_i32 : i32, i32
  }
  func.func @transform_1(%arg0: i32, %arg1: i32) -> (i32, i32) {
    %c0_i32 = arith.constant 0 : i32
    %c0_i32_0 = arith.constant 0 : i32
    %c0_i32_1 = arith.constant 0 : i32
    return %c0_i32, %c0_i32_0 : i32, i32
  }
  func.func @transform_2(%arg0: i32, %arg1: i32) -> (i32, i32) {
    %c0_i32 = arith.constant 0 : i32
    %c0_i32_0 = arith.constant 0 : i32
    %c0_i32_1 = arith.constant 0 : i32
    return %c0_i32, %c0_i32_0 : i32, i32
  }
  func.func @transform_3(%arg0: i32, %arg1: i32) -> (i32, i32) {
    %c0_i32 = arith.constant 0 : i32
    %c0_i32_0 = arith.constant 0 : i32
    return %c0_i32, %arg1 : i32, i32
  }
  func.func @transform_4(%arg0: i32, %arg1: i32) -> (i32, i32) {
    %c0_i32 = arith.constant 0 : i32
    %c0_i32_0 = arith.constant 0 : i32
    return %c0_i32, %arg1 : i32, i32
  }
  func.func @transform_5(%arg0: i32, %arg1: i32) -> (i32, i32) {
    %c0_i32 = arith.constant 0 : i32
    return %arg0, %arg1 : i32, i32
  }
}

module attributes {stable_mosaic.version = 11 : i64} {
  func.func @_dense_kernel(%arg0: i32, %arg1: i32, %arg2: i32, %arg3: memref<32x128xbf16, #tpu.memory_space<vmem>>, %arg4: memref<128x128xbf16, #tpu.memory_space<vmem>>, %arg5: memref<1x128xf32, #tpu.memory_space<vmem>>, %arg6: memref<32x128xbf16, #tpu.memory_space<vmem>>, %arg7: memref<32x128xbf16, #tpu.memory_space<vmem>>, %arg8: memref<32x128xf32, #tpu.memory_space<vmem>>) attributes {dimension_semantics = [#tpu.dimension_semantics<parallel>, #tpu.dimension_semantics<parallel>, #tpu.dimension_semantics<arbitrary>], iteration_bounds = array<i64: 1, 1, 1>, scalar_prefetch = 0 : i64, scratch_operands = 1 : i64, tpu.core_type = #tpu.core_type<tc>, window_params = [{transform_indices = @transform_0, window_bounds = array<i64: 32, 128>}, {transform_indices = @transform_1, window_bounds = array<i64: 128, 128>}, {transform_indices = @transform_2, window_bounds = array<i64: 1, 128>}, {transform_indices = @transform_3, window_bounds = array<i64: 32, 128>}, {transform_indices = @transform_4, window_bounds = array<i64: 32, 128>}]} {
    %c0_i32 = arith.constant 0 : i32
    %0 = arith.cmpi eq, %arg2, %c0_i32 : i32
    %1 = arith.extui %0 : i1 to i32
    %c0_i32_0 = arith.constant 0 : i32
    %2 = arith.cmpi ne, %1, %c0_i32_0 : i32
    scf.if %2 {
      %cst_10 = arith.constant 0.000000e+00 : f32
      %12 = vector.broadcast %cst_10 : f32 to vector<32x128xf32>
      %c0_11 = arith.constant 0 : index
      %c0_12 = arith.constant 0 : index
      %13 = vector.load %arg8[%c0_11, %c0_12] : memref<32x128xf32, #tpu.memory_space<vmem>>, vector<32x128xf32>
      tpu.vector_store %arg8[%c0_11, %c0_12], %12 {strides = array<i32>} : memref<32x128xf32, #tpu.memory_space<vmem>>, vector<32x128xf32>,
    } else {
    }
    %c0 = arith.constant 0 : index
    %c0_1 = arith.constant 0 : index
    %3 = vector.load %arg8[%c0, %c0_1] : memref<32x128xf32, #tpu.memory_space<vmem>>, vector<32x128xf32>
    %c0_2 = arith.constant 0 : index
    %c0_3 = arith.constant 0 : index
    %4 = vector.load %arg3[%c0_2, %c0_3] : memref<32x128xbf16, #tpu.memory_space<vmem>>, vector<32x128xbf16>
    %c0_4 = arith.constant 0 : index
    %c0_5 = arith.constant 0 : index
    %5 = vector.load %arg4[%c0_4, %c0_5] : memref<128x128xbf16, #tpu.memory_space<vmem>>, vector<128x128xbf16>
    %cst = arith.constant dense<0.000000e+00> : vector<32x128xf32>
    %6 = tpu.matmul %4, %5, %cst {dimension_numbers = #tpu.dot_dimension_numbers<[1], [0], [0], [1], [0, 0, 1, 1], [], []>} : vector<32x128xbf16>, vector<128x128xbf16>, vector<32x128xf32> -> vector<32x128xf32>
    %7 = arith.addf %3, %6 : vector<32x128xf32>
    %c0_6 = arith.constant 0 : index
    %c0_7 = arith.constant 0 : index
    %8 = vector.load %arg8[%c0_6, %c0_7] : memref<32x128xf32, #tpu.memory_space<vmem>>, vector<32x128xf32>
    tpu.vector_store %arg8[%c0_6, %c0_7], %7 {strides = array<i32>} : memref<32x128xf32, #tpu.memory_space<vmem>>, vector<32x128xf32>,
    %c0_i32_8 = arith.constant 0 : i32
    %9 = arith.cmpi eq, %arg2, %c0_i32_8 : i32
    %10 = arith.extui %9 : i1 to i32
    %c0_i32_9 = arith.constant 0 : i32
    %11 = arith.cmpi ne, %10, %c0_i32_9 : i32
    scf.if %11 {
      %c0_10 = arith.constant 0 : index
      %c0_11 = arith.constant 0 : index
      %12 = vector.load %arg8[%c0_10, %c0_11] : memref<32x128xf32, #tpu.memory_space<vmem>>, vector<32x128xf32>
      %c0_12 = arith.constant 0 : index
      %c0_13 = arith.constant 0 : index
      %13 = vector.load %arg5[%c0_12, %c0_13] : memref<1x128xf32, #tpu.memory_space<vmem>>, vector<1x128xf32>
      %14 = vector.broadcast %13 : vector<1x128xf32> to vector<32x128xf32>
      %15 = arith.addf %12, %14 : vector<32x128xf32>
      %c0_14 = arith.constant 0 : index
      %c0_15 = arith.constant 0 : index
      %16 = vector.load %arg6[%c0_14, %c0_15] : memref<32x128xbf16, #tpu.memory_space<vmem>>, vector<32x128xbf16>
      %17 = arith.extf %16 : vector<32x128xbf16> to vector<32x128xf32>
      %18 = arith.addf %15, %17 : vector<32x128xf32>
      %19 = arith.truncf %18 : vector<32x128xf32> to vector<32x128xbf16>
      %c0_16 = arith.constant 0 : index
      %c0_17 = arith.constant 0 : index
      %20 = vector.load %arg7[%c0_16, %c0_17] : memref<32x128xbf16, #tpu.memory_space<vmem>>, vector<32x128xbf16>
      tpu.vector_store %arg7[%c0_16, %c0_17], %19 {strides = array<i32>} : memref<32x128xbf16, #tpu.memory_space<vmem>>, vector<32x128xbf16>,
    } else {
    }
    return
  }
  func.func @transform_0(%arg0: i32, %arg1: i32, %arg2: i32) -> (i32, i32) {
    %c0_i32 = arith.constant 0 : i32
    return %arg0, %arg2 : i32, i32
  }
  func.func @transform_1(%arg0: i32, %arg1: i32, %arg2: i32) -> (i32, i32) {
    %c0_i32 = arith.constant 0 : i32
    return %arg2, %arg1 : i32, i32
  }
  func.func @transform_2(%arg0: i32, %arg1: i32, %arg2: i32) -> (i32, i32) {
    %c0_i32 = arith.constant 0 : i32
    %c0_i32_0 = arith.constant 0 : i32
    return %c0_i32, %arg1 : i32, i32
  }
  func.func @transform_3(%arg0: i32, %arg1: i32, %arg2: i32) -> (i32, i32) {
    %c0_i32 = arith.constant 0 : i32
    return %arg0, %arg1 : i32, i32
  }
  func.func @transform_4(%arg0: i32, %arg1: i32, %arg2: i32) -> (i32, i32) {
    %c0_i32 = arith.constant 0 : i32
    return %arg0, %arg1 : i32, i32
  }
}

module attributes {stable_mosaic.version = 11 : i64} {
  func.func @_ln_dense_kernel(%arg0: i32, %arg1: i32, %arg2: memref<64x128xbf16, #tpu.memory_space<vmem>>, %arg3: memref<1x128xf32, #tpu.memory_space<vmem>>, %arg4: memref<1x128xf32, #tpu.memory_space<vmem>>, %arg5: memref<128x256xbf16, #tpu.memory_space<vmem>>, %arg6: memref<1x256xf32, #tpu.memory_space<vmem>>, %arg7: memref<64x256xbf16, #tpu.memory_space<vmem>>, %arg8: memref<64x128xbf16, #tpu.memory_space<vmem>>) attributes {dimension_semantics = [#tpu.dimension_semantics<parallel>, #tpu.dimension_semantics<arbitrary>], iteration_bounds = array<i64: 1, 1>, scalar_prefetch = 0 : i64, scratch_operands = 1 : i64, tpu.core_type = #tpu.core_type<tc>, window_params = [{transform_indices = @transform_0, window_bounds = array<i64: 64, 128>}, {pipeline_mode = #tpu.pipeline_mode<synchronous>, transform_indices = @transform_1, window_bounds = array<i64: 1, 128>}, {pipeline_mode = #tpu.pipeline_mode<synchronous>, transform_indices = @transform_2, window_bounds = array<i64: 1, 128>}, {transform_indices = @transform_3, window_bounds = array<i64: 128, 256>}, {transform_indices = @transform_4, window_bounds = array<i64: 1, 256>}, {transform_indices = @transform_5, window_bounds = array<i64: 64, 256>}]} {
    %c0_i32 = arith.constant 0 : i32
    %0 = arith.cmpi eq, %arg1, %c0_i32 : i32
    %1 = arith.extui %0 : i1 to i32
    %c0_i32_0 = arith.constant 0 : i32
    %2 = arith.cmpi ne, %1, %c0_i32_0 : i32
    scf.if %2 {
      %c0_8 = arith.constant 0 : index
      %c0_9 = arith.constant 0 : index
      %11 = vector.load %arg2[%c0_8, %c0_9] : memref<64x128xbf16, #tpu.memory_space<vmem>>, vector<64x128xbf16>
      %12 = arith.extf %11 : vector<64x128xbf16> to vector<64x128xf32>
      %cst_10 = arith.constant dense<0.000000e+00> : vector<64xf32>
      %13 = vector.multi_reduction <add>, %12, %cst_10 [1] : vector<64x128xf32> to vector<64xf32>
      %14 = vector.shape_cast %13 : vector<64xf32> to vector<64x1xf32>
      %cst_11 = arith.constant 1.280000e+02 : f32
      %15 = vector.broadcast %cst_11 : f32 to vector<64x1xf32>
      %16 = arith.divf %14, %15 : vector<64x1xf32>
      %17 = vector.broadcast %16 : vector<64x1xf32> to vector<64x128xf32>
      %18 = arith.subf %12, %17 : vector<64x128xf32>
      %19 = arith.mulf %18, %18 : vector<64x128xf32>
      %cst_12 = arith.constant dense<0.000000e+00> : vector<64xf32>
      %20 = vector.multi_reduction <add>, %19, %cst_12 [1] : vector<64x128xf32> to vector<64xf32>
      %21 = vector.shape_cast %20 : vector<64xf32> to vector<64x1xf32>
      %cst_13 = arith.constant 1.280000e+02 : f32
      %22 = vector.broadcast %cst_13 : f32 to vector<64x1xf32>
      %23 = arith.divf %21, %22 : vector<64x1xf32>
      %24 = vector.broadcast %16 : vector<64x1xf32> to vector<64x128xf32>
      %25 = arith.subf %12, %24 : vector<64x128xf32>
      %cst_14 = arith.constant 9.99999974E-6 : f32
      %26 = vector.broadcast %cst_14 : f32 to vector<64x1xf32>
      %27 = arith.addf %23, %26 : vector<64x1xf32>
      %28 = math.rsqrt %27 : vector<64x1xf32>
      %29 = vector.broadcast %28 : vector<64x1xf32> to vector<64x128xf32>
      %30 = arith.mulf %25, %29 : vector<64x128xf32>
      %c0_15 = arith.constant 0 : index
      %c0_16 = arith.constant 0 : index
      %31 = vector.load %arg3[%c0_15, %c0_16] : memref<1x128xf32, #tpu.memory_space<vmem>>, vector<1x128xf32>
      %32 = vector.broadcast %31 : vector<1x128xf32> to vector<64x128xf32>
      %33 = arith.mulf %30, %32 : vector<64x128xf32>
      %c0_17 = arith.constant 0 : index
      %c0_18 = arith.constant 0 : index
      %34 = vector.load %arg4[%c0_17, %c0_18] : memref<1x128xf32, #tpu.memory_space<vmem>>, vector<1x128xf32>
      %35 = vector.broadcast %34 : vector<1x128xf32> to vector<64x128xf32>
      %36 = arith.addf %33, %35 : vector<64x128xf32>
      %37 = arith.truncf %36 : vector<64x128xf32> to vector<64x128xbf16>
      %c0_19 = arith.constant 0 : index
      %c0_20 = arith.constant 0 : index
      %38 = vector.load %arg8[%c0_19, %c0_20] : memref<64x128xbf16, #tpu.memory_space<vmem>>, vector<64x128xbf16>
      tpu.vector_store %arg8[%c0_19, %c0_20], %37 {strides = array<i32>} : memref<64x128xbf16, #tpu.memory_space<vmem>>, vector<64x128xbf16>,
    } else {
    }
    %c0 = arith.constant 0 : index
    %c0_1 = arith.constant 0 : index
    %3 = vector.load %arg8[%c0, %c0_1] : memref<64x128xbf16, #tpu.memory_space<vmem>>, vector<64x128xbf16>
    %c0_2 = arith.constant 0 : index
    %c0_3 = arith.constant 0 : index
    %4 = vector.load %arg5[%c0_2, %c0_3] : memref<128x256xbf16, #tpu.memory_space<vmem>>, vector<128x256xbf16>
    %cst = arith.constant dense<0.000000e+00> : vector<64x256xf32>
    %5 = tpu.matmul %3, %4, %cst {dimension_numbers = #tpu.dot_dimension_numbers<[1], [0], [0], [1], [0, 0, 1, 1], [], []>} : vector<64x128xbf16>, vector<128x256xbf16>, vector<64x256xf32> -> vector<64x256xf32>
    %c0_4 = arith.constant 0 : index
    %c0_5 = arith.constant 0 : index
    %6 = vector.load %arg6[%c0_4, %c0_5] : memref<1x256xf32, #tpu.memory_space<vmem>>, vector<1x256xf32>
    %7 = vector.broadcast %6 : vector<1x256xf32> to vector<64x256xf32>
    %8 = arith.addf %5, %7 : vector<64x256xf32>
    %9 = arith.truncf %8 : vector<64x256xf32> to vector<64x256xbf16>
    %c0_6 = arith.constant 0 : index
    %c0_7 = arith.constant 0 : index
    %10 = vector.load %arg7[%c0_6, %c0_7] : memref<64x256xbf16, #tpu.memory_space<vmem>>, vector<64x256xbf16>
    tpu.vector_store %arg7[%c0_6, %c0_7], %9 {strides = array<i32>} : memref<64x256xbf16, #tpu.memory_space<vmem>>, vector<64x256xbf16>,
    return
  }
  func.func @transform_0(%arg0: i32, %arg1: i32) -> (i32, i32) {
    %c0_i32 = arith.constant 0 : i32
    %c0_i32_0 = arith.constant 0 : i32
    return %arg0, %c0_i32 : i32, i32
  }
  func.func @transform_1(%arg0: i32, %arg1: i32) -> (i32, i32) {
    %c0_i32 = arith.constant 0 : i32
    %c0_i32_0 = arith.constant 0 : i32
    %c0_i32_1 = arith.constant 0 : i32
    return %c0_i32, %c0_i32_0 : i32, i32
  }
  func.func @transform_2(%arg0: i32, %arg1: i32) -> (i32, i32) {
    %c0_i32 = arith.constant 0 : i32
    %c0_i32_0 = arith.constant 0 : i32
    %c0_i32_1 = arith.constant 0 : i32
    return %c0_i32, %c0_i32_0 : i32, i32
  }
  func.func @transform_3(%arg0: i32, %arg1: i32) -> (i32, i32) {
    %c0_i32 = arith.constant 0 : i32
    %c0_i32_0 = arith.constant 0 : i32
    return %c0_i32, %arg1 : i32, i32
  }
  func.func @transform_4(%arg0: i32, %arg1: i32) -> (i32, i32) {
    %c0_i32 = arith.constant 0 : i32
    %c0_i32_0 = arith.constant 0 : i32
    return %c0_i32, %arg1 : i32, i32
  }
  func.func @transform_5(%arg0: i32, %arg1: i32) -> (i32, i32) {
    %c0_i32 = arith.constant 0 : i32
    return %arg0, %arg1 : i32, i32
  }
}

module attributes {stable_mosaic.version = 11 : i64} {
  func.func @_ln_dense_kernel(%arg0: i32, %arg1: i32, %arg2: memref<64x128xbf16, #tpu.memory_space<vmem>>, %arg3: memref<1x128xf32, #tpu.memory_space<vmem>>, %arg4: memref<1x128xf32, #tpu.memory_space<vmem>>, %arg5: memref<128x128xbf16, #tpu.memory_space<vmem>>, %arg6: memref<1x128xf32, #tpu.memory_space<vmem>>, %arg7: memref<64x128xbf16, #tpu.memory_space<vmem>>, %arg8: memref<64x128xbf16, #tpu.memory_space<vmem>>) attributes {dimension_semantics = [#tpu.dimension_semantics<parallel>, #tpu.dimension_semantics<arbitrary>], iteration_bounds = array<i64: 1, 1>, scalar_prefetch = 0 : i64, scratch_operands = 1 : i64, tpu.core_type = #tpu.core_type<tc>, window_params = [{transform_indices = @transform_0, window_bounds = array<i64: 64, 128>}, {pipeline_mode = #tpu.pipeline_mode<synchronous>, transform_indices = @transform_1, window_bounds = array<i64: 1, 128>}, {pipeline_mode = #tpu.pipeline_mode<synchronous>, transform_indices = @transform_2, window_bounds = array<i64: 1, 128>}, {transform_indices = @transform_3, window_bounds = array<i64: 128, 128>}, {transform_indices = @transform_4, window_bounds = array<i64: 1, 128>}, {transform_indices = @transform_5, window_bounds = array<i64: 64, 128>}]} {
    %c0_i32 = arith.constant 0 : i32
    %0 = arith.cmpi eq, %arg1, %c0_i32 : i32
    %1 = arith.extui %0 : i1 to i32
    %c0_i32_0 = arith.constant 0 : i32
    %2 = arith.cmpi ne, %1, %c0_i32_0 : i32
    scf.if %2 {
      %c0_8 = arith.constant 0 : index
      %c0_9 = arith.constant 0 : index
      %11 = vector.load %arg2[%c0_8, %c0_9] : memref<64x128xbf16, #tpu.memory_space<vmem>>, vector<64x128xbf16>
      %12 = arith.extf %11 : vector<64x128xbf16> to vector<64x128xf32>
      %cst_10 = arith.constant dense<0.000000e+00> : vector<64xf32>
      %13 = vector.multi_reduction <add>, %12, %cst_10 [1] : vector<64x128xf32> to vector<64xf32>
      %14 = vector.shape_cast %13 : vector<64xf32> to vector<64x1xf32>
      %cst_11 = arith.constant 1.280000e+02 : f32
      %15 = vector.broadcast %cst_11 : f32 to vector<64x1xf32>
      %16 = arith.divf %14, %15 : vector<64x1xf32>
      %17 = vector.broadcast %16 : vector<64x1xf32> to vector<64x128xf32>
      %18 = arith.subf %12, %17 : vector<64x128xf32>
      %19 = arith.mulf %18, %18 : vector<64x128xf32>
      %cst_12 = arith.constant dense<0.000000e+00> : vector<64xf32>
      %20 = vector.multi_reduction <add>, %19, %cst_12 [1] : vector<64x128xf32> to vector<64xf32>
      %21 = vector.shape_cast %20 : vector<64xf32> to vector<64x1xf32>
      %cst_13 = arith.constant 1.280000e+02 : f32
      %22 = vector.broadcast %cst_13 : f32 to vector<64x1xf32>
      %23 = arith.divf %21, %22 : vector<64x1xf32>
      %24 = vector.broadcast %16 : vector<64x1xf32> to vector<64x128xf32>
      %25 = arith.subf %12, %24 : vector<64x128xf32>
      %cst_14 = arith.constant 9.99999974E-6 : f32
      %26 = vector.broadcast %cst_14 : f32 to vector<64x1xf32>
      %27 = arith.addf %23, %26 : vector<64x1xf32>
      %28 = math.rsqrt %27 : vector<64x1xf32>
      %29 = vector.broadcast %28 : vector<64x1xf32> to vector<64x128xf32>
      %30 = arith.mulf %25, %29 : vector<64x128xf32>
      %c0_15 = arith.constant 0 : index
      %c0_16 = arith.constant 0 : index
      %31 = vector.load %arg3[%c0_15, %c0_16] : memref<1x128xf32, #tpu.memory_space<vmem>>, vector<1x128xf32>
      %32 = vector.broadcast %31 : vector<1x128xf32> to vector<64x128xf32>
      %33 = arith.mulf %30, %32 : vector<64x128xf32>
      %c0_17 = arith.constant 0 : index
      %c0_18 = arith.constant 0 : index
      %34 = vector.load %arg4[%c0_17, %c0_18] : memref<1x128xf32, #tpu.memory_space<vmem>>, vector<1x128xf32>
      %35 = vector.broadcast %34 : vector<1x128xf32> to vector<64x128xf32>
      %36 = arith.addf %33, %35 : vector<64x128xf32>
      %37 = arith.truncf %36 : vector<64x128xf32> to vector<64x128xbf16>
      %c0_19 = arith.constant 0 : index
      %c0_20 = arith.constant 0 : index
      %38 = vector.load %arg8[%c0_19, %c0_20] : memref<64x128xbf16, #tpu.memory_space<vmem>>, vector<64x128xbf16>
      tpu.vector_store %arg8[%c0_19, %c0_20], %37 {strides = array<i32>} : memref<64x128xbf16, #tpu.memory_space<vmem>>, vector<64x128xbf16>,
    } else {
    }
    %c0 = arith.constant 0 : index
    %c0_1 = arith.constant 0 : index
    %3 = vector.load %arg8[%c0, %c0_1] : memref<64x128xbf16, #tpu.memory_space<vmem>>, vector<64x128xbf16>
    %c0_2 = arith.constant 0 : index
    %c0_3 = arith.constant 0 : index
    %4 = vector.load %arg5[%c0_2, %c0_3] : memref<128x128xbf16, #tpu.memory_space<vmem>>, vector<128x128xbf16>
    %cst = arith.constant dense<0.000000e+00> : vector<64x128xf32>
    %5 = tpu.matmul %3, %4, %cst {dimension_numbers = #tpu.dot_dimension_numbers<[1], [0], [0], [1], [0, 0, 1, 1], [], []>} : vector<64x128xbf16>, vector<128x128xbf16>, vector<64x128xf32> -> vector<64x128xf32>
    %c0_4 = arith.constant 0 : index
    %c0_5 = arith.constant 0 : index
    %6 = vector.load %arg6[%c0_4, %c0_5] : memref<1x128xf32, #tpu.memory_space<vmem>>, vector<1x128xf32>
    %7 = vector.broadcast %6 : vector<1x128xf32> to vector<64x128xf32>
    %8 = arith.addf %5, %7 : vector<64x128xf32>
    %9 = arith.truncf %8 : vector<64x128xf32> to vector<64x128xbf16>
    %c0_6 = arith.constant 0 : index
    %c0_7 = arith.constant 0 : index
    %10 = vector.load %arg7[%c0_6, %c0_7] : memref<64x128xbf16, #tpu.memory_space<vmem>>, vector<64x128xbf16>
    tpu.vector_store %arg7[%c0_6, %c0_7], %9 {strides = array<i32>} : memref<64x128xbf16, #tpu.memory_space<vmem>>, vector<64x128xbf16>,
    return
  }
  func.func @transform_0(%arg0: i32, %arg1: i32) -> (i32, i32) {
    %c0_i32 = arith.constant 0 : i32
    %c0_i32_0 = arith.constant 0 : i32
    return %arg0, %c0_i32 : i32, i32
  }
  func.func @transform_1(%arg0: i32, %arg1: i32) -> (i32, i32) {
    %c0_i32 = arith.constant 0 : i32
    %c0_i32_0 = arith.constant 0 : i32
    %c0_i32_1 = arith.constant 0 : i32
    return %c0_i32, %c0_i32_0 : i32, i32
  }
  func.func @transform_2(%arg0: i32, %arg1: i32) -> (i32, i32) {
    %c0_i32 = arith.constant 0 : i32
    %c0_i32_0 = arith.constant 0 : i32
    %c0_i32_1 = arith.constant 0 : i32
    return %c0_i32, %c0_i32_0 : i32, i32
  }
  func.func @transform_3(%arg0: i32, %arg1: i32) -> (i32, i32) {
    %c0_i32 = arith.constant 0 : i32
    %c0_i32_0 = arith.constant 0 : i32
    return %c0_i32, %arg1 : i32, i32
  }
  func.func @transform_4(%arg0: i32, %arg1: i32) -> (i32, i32) {
    %c0_i32 = arith.constant 0 : i32
    %c0_i32_0 = arith.constant 0 : i32
    return %c0_i32, %arg1 : i32, i32
  }
  func.func @transform_5(%arg0: i32, %arg1: i32) -> (i32, i32) {
    %c0_i32 = arith.constant 0 : i32
    return %arg0, %arg1 : i32, i32
  }
}

module attributes {stable_mosaic.version = 11 : i64} {
  func.func @_flash_attn_kernel(%arg0: i32, %arg1: i32, %arg2: i32, %arg3: memref<1x32x128xbf16, #tpu.memory_space<vmem>>, %arg4: memref<1x32x128xbf16, #tpu.memory_space<vmem>>, %arg5: memref<1x32x128xbf16, #tpu.memory_space<vmem>>, %arg6: memref<1x32x128xbf16, #tpu.memory_space<vmem>>, %arg7: memref<32x4xf32, #tpu.memory_space<vmem>>, %arg8: memref<32x4xf32, #tpu.memory_space<vmem>>, %arg9: memref<32x128xf32, #tpu.memory_space<vmem>>) attributes {dimension_semantics = [#tpu.dimension_semantics<parallel>, #tpu.dimension_semantics<parallel>, #tpu.dimension_semantics<arbitrary>], iteration_bounds = array<i64: 2, 1, 1>, scalar_prefetch = 0 : i64, scratch_operands = 3 : i64, tpu.core_type = #tpu.core_type<tc>, window_params = [{transform_indices = @transform_0, window_bounds = array<i64: 1, 32, 128>}, {transform_indices = @transform_1, window_bounds = array<i64: 1, 32, 128>}, {transform_indices = @transform_2, window_bounds = array<i64: 1, 32, 128>}, {transform_indices = @transform_3, window_bounds = array<i64: 1, 32, 128>}]} {
    %c0_i32 = arith.constant 0 : i32
    %0 = arith.cmpi eq, %arg2, %c0_i32 : i32
    %c0_i32_0 = arith.constant 0 : i32
    %1 = arith.cmpi eq, %arg2, %c0_i32_0 : i32
    %2 = arith.extui %1 : i1 to i32
    %c0_i32_1 = arith.constant 0 : i32
    %3 = arith.cmpi ne, %2, %c0_i32_1 : i32
    scf.if %3 {
      %cst_102 = arith.constant 0xFF800000 : f32
      %140 = vector.broadcast %cst_102 : f32 to vector<32x4xf32>
      %c0_103 = arith.constant 0 : index
      %c0_104 = arith.constant 0 : index
      %141 = vector.load %arg7[%c0_103, %c0_104] : memref<32x4xf32, #tpu.memory_space<vmem>>, vector<32x4xf32>
      tpu.vector_store %arg7[%c0_103, %c0_104], %140 {strides = array<i32>} : memref<32x4xf32, #tpu.memory_space<vmem>>, vector<32x4xf32>,
      %cst_105 = arith.constant 0.000000e+00 : f32
      %142 = vector.broadcast %cst_105 : f32 to vector<32x4xf32>
      %c0_106 = arith.constant 0 : index
      %c0_107 = arith.constant 0 : index
      %143 = vector.load %arg8[%c0_106, %c0_107] : memref<32x4xf32, #tpu.memory_space<vmem>>, vector<32x4xf32>
      tpu.vector_store %arg8[%c0_106, %c0_107], %142 {strides = array<i32>} : memref<32x4xf32, #tpu.memory_space<vmem>>, vector<32x4xf32>,
      %cst_108 = arith.constant 0.000000e+00 : f32
      %144 = vector.broadcast %cst_108 : f32 to vector<32x128xf32>
      %c0_109 = arith.constant 0 : index
      %c0_110 = arith.constant 0 : index
      %145 = vector.load %arg9[%c0_109, %c0_110] : memref<32x128xf32, #tpu.memory_space<vmem>>, vector<32x128xf32>
      tpu.vector_store %arg9[%c0_109, %c0_110], %144 {strides = array<i32>} : memref<32x128xf32, #tpu.memory_space<vmem>>, vector<32x128xf32>,
    } else {
    }
    %c0 = arith.constant 0 : index
    %c0_2 = arith.constant 0 : index
    %c0_3 = arith.constant 0 : index
    %4 = vector.load %arg3[%c0, %c0_2, %c0_3] : memref<1x32x128xbf16, #tpu.memory_space<vmem>>, vector<1x32x32xbf16>
    %5 = vector.shape_cast %4 : vector<1x32x32xbf16> to vector<32x32xbf16>
    %c0_4 = arith.constant 0 : index
    %c0_5 = arith.constant 0 : index
    %c0_6 = arith.constant 0 : index
    %6 = vector.load %arg4[%c0_4, %c0_5, %c0_6] : memref<1x32x128xbf16, #tpu.memory_space<vmem>>, vector<1x32x32xbf16>
    %7 = vector.shape_cast %6 : vector<1x32x32xbf16> to vector<32x32xbf16>
    %c0_7 = arith.constant 0 : index
    %c0_8 = arith.constant 0 : index
    %c0_9 = arith.constant 0 : index
    %8 = vector.load %arg5[%c0_7, %c0_8, %c0_9] : memref<1x32x128xbf16, #tpu.memory_space<vmem>>, vector<1x32x32xbf16>
    %9 = vector.shape_cast %8 : vector<1x32x32xbf16> to vector<32x32xbf16>
    %cst = arith.constant dense<0.000000e+00> : vector<32x32xf32>
    %10 = tpu.matmul %5, %7, %cst {dimension_numbers = #tpu.dot_dimension_numbers<[1], [1], [0], [0], [0, 0, 1, 0], [], []>} : vector<32x32xbf16>, vector<32x32xbf16>, vector<32x32xf32> -> vector<32x32xf32>
    %cst_10 = arith.constant 0.176776692 : f32
    %11 = vector.broadcast %cst_10 : f32 to vector<32x32xf32>
    %12 = arith.mulf %10, %11 : vector<32x32xf32>
    %c0_11 = arith.constant 0 : index
    %c0_12 = arith.constant 0 : index
    %13 = vector.load %arg7[%c0_11, %c0_12] : memref<32x4xf32, #tpu.memory_space<vmem>>, vector<32x1xf32>
    %c0_13 = arith.constant 0 : index
    %c0_14 = arith.constant 0 : index
    %14 = vector.load %arg8[%c0_13, %c0_14] : memref<32x4xf32, #tpu.memory_space<vmem>>, vector<32x1xf32>
    %cst_15 = arith.constant dense<0xFF800000> : vector<32xf32>
    %15 = vector.multi_reduction <maximumf>, %12, %cst_15 [1] : vector<32x32xf32> to vector<32xf32>
    %16 = vector.shape_cast %15 : vector<32xf32> to vector<32x1xf32>
    %17 = arith.maximumf %13, %16 : vector<32x1xf32>
    %18 = arith.subf %13, %17 : vector<32x1xf32>
    %19 = math.exp %18 : vector<32x1xf32>
    %20 = vector.broadcast %17 : vector<32x1xf32> to vector<32x32xf32>
    %21 = arith.subf %12, %20 : vector<32x32xf32>
    %22 = math.exp %21 : vector<32x32xf32>
    %23 = arith.mulf %19, %14 : vector<32x1xf32>
    %cst_16 = arith.constant dense<0.000000e+00> : vector<32xf32>
    %24 = vector.multi_reduction <add>, %22, %cst_16 [1] : vector<32x32xf32> to vector<32xf32>
    %25 = vector.shape_cast %24 : vector<32xf32> to vector<32x1xf32>
    %26 = arith.addf %23, %25 : vector<32x1xf32>
    %c0_17 = arith.constant 0 : index
    %c0_18 = arith.constant 0 : index
    %27 = vector.load %arg9[%c0_17, %c0_18] : memref<32x128xf32, #tpu.memory_space<vmem>>, vector<32x32xf32>
    %28 = vector.broadcast %19 : vector<32x1xf32> to vector<32x32xf32>
    %29 = arith.mulf %28, %27 : vector<32x32xf32>
    %30 = arith.truncf %22 : vector<32x32xf32> to vector<32x32xbf16>
    %cst_19 = arith.constant dense<0.000000e+00> : vector<32x32xf32>
    %31 = tpu.matmul %30, %9, %cst_19 {dimension_numbers = #tpu.dot_dimension_numbers<[1], [0], [0], [1], [0, 0, 1, 1], [], []>} : vector<32x32xbf16>, vector<32x32xbf16>, vector<32x32xf32> -> vector<32x32xf32>
    %32 = arith.addf %29, %31 : vector<32x32xf32>
    %c0_20 = arith.constant 0 : index
    %c0_21 = arith.constant 0 : index
    %33 = vector.load %arg7[%c0_20, %c0_21] : memref<32x4xf32, #tpu.memory_space<vmem>>, vector<32x1xf32>
    tpu.vector_store %arg7[%c0_20, %c0_21], %17 {strides = array<i32>} : memref<32x4xf32, #tpu.memory_space<vmem>>, vector<32x1xf32>,
    %c0_22 = arith.constant 0 : index
    %c0_23 = arith.constant 0 : index
    %34 = vector.load %arg8[%c0_22, %c0_23] : memref<32x4xf32, #tpu.memory_space<vmem>>, vector<32x1xf32>
    tpu.vector_store %arg8[%c0_22, %c0_23], %26 {strides = array<i32>} : memref<32x4xf32, #tpu.memory_space<vmem>>, vector<32x1xf32>,
    %c0_24 = arith.constant 0 : index
    %c0_25 = arith.constant 0 : index
    %35 = vector.load %arg9[%c0_24, %c0_25] : memref<32x128xf32, #tpu.memory_space<vmem>>, vector<32x32xf32>
    tpu.vector_store %arg9[%c0_24, %c0_25], %32 {strides = array<i32>} : memref<32x128xf32, #tpu.memory_space<vmem>>, vector<32x32xf32>,
    %36 = arith.extui %0 : i1 to i32
    %c0_i32_26 = arith.constant 0 : i32
    %37 = arith.cmpi ne, %36, %c0_i32_26 : i32
    scf.if %37 {
      %140 = tpu.reciprocal %26 {approx = true} : vector<32x1xf32> -> vector<32x1xf32>
      %141 = vector.broadcast %140 : vector<32x1xf32> to vector<32x32xf32>
      %142 = arith.mulf %32, %141 : vector<32x32xf32>
      %143 = arith.truncf %142 : vector<32x32xf32> to vector<32x32xbf16>
      %c0_102 = arith.constant 0 : index
      %c0_103 = arith.constant 0 : index
      %c0_104 = arith.constant 0 : index
      %144 = vector.load %arg6[%c0_102, %c0_103, %c0_104] : memref<1x32x128xbf16, #tpu.memory_space<vmem>>, vector<1x32x32xbf16>
      %145 = vector.shape_cast %144 : vector<1x32x32xbf16> to vector<32x32xbf16>
      %146 = vector.shape_cast %143 : vector<32x32xbf16> to vector<1x32x32xbf16>
      tpu.vector_store %arg6[%c0_102, %c0_103, %c0_104], %146 {strides = array<i32>} : memref<1x32x128xbf16, #tpu.memory_space<vmem>>, vector<1x32x32xbf16>,
    } else {
    }
    %c0_27 = arith.constant 0 : index
    %c0_28 = arith.constant 0 : index
    %c32 = arith.constant 32 : index
    %38 = vector.load %arg3[%c0_27, %c0_28, %c32] : memref<1x32x128xbf16, #tpu.memory_space<vmem>>, vector<1x32x32xbf16>
    %39 = vector.shape_cast %38 : vector<1x32x32xbf16> to vector<32x32xbf16>
    %c0_29 = arith.constant 0 : index
    %c0_30 = arith.constant 0 : index
    %c32_31 = arith.constant 32 : index
    %40 = vector.load %arg4[%c0_29, %c0_30, %c32_31] : memref<1x32x128xbf16, #tpu.memory_space<vmem>>, vector<1x32x32xbf16>
    %41 = vector.shape_cast %40 : vector<1x32x32xbf16> to vector<32x32xbf16>
    %c0_32 = arith.constant 0 : index
    %c0_33 = arith.constant 0 : index
    %c32_34 = arith.constant 32 : index
    %42 = vector.load %arg5[%c0_32, %c0_33, %c32_34] : memref<1x32x128xbf16, #tpu.memory_space<vmem>>, vector<1x32x32xbf16>
    %43 = vector.shape_cast %42 : vector<1x32x32xbf16> to vector<32x32xbf16>
    %cst_35 = arith.constant dense<0.000000e+00> : vector<32x32xf32>
    %44 = tpu.matmul %39, %41, %cst_35 {dimension_numbers = #tpu.dot_dimension_numbers<[1], [1], [0], [0], [0, 0, 1, 0], [], []>} : vector<32x32xbf16>, vector<32x32xbf16>, vector<32x32xf32> -> vector<32x32xf32>
    %cst_36 = arith.constant 0.176776692 : f32
    %45 = vector.broadcast %cst_36 : f32 to vector<32x32xf32>
    %46 = arith.mulf %44, %45 : vector<32x32xf32>
    %c0_37 = arith.constant 0 : index
    %c1 = arith.constant 1 : index
    %47 = vector.load %arg7[%c0_37, %c1] : memref<32x4xf32, #tpu.memory_space<vmem>>, vector<32x1xf32>
    %c0_38 = arith.constant 0 : index
    %c1_39 = arith.constant 1 : index
    %48 = vector.load %arg8[%c0_38, %c1_39] : memref<32x4xf32, #tpu.memory_space<vmem>>, vector<32x1xf32>
    %cst_40 = arith.constant dense<0xFF800000> : vector<32xf32>
    %49 = vector.multi_reduction <maximumf>, %46, %cst_40 [1] : vector<32x32xf32> to vector<32xf32>
    %50 = vector.shape_cast %49 : vector<32xf32> to vector<32x1xf32>
    %51 = arith.maximumf %47, %50 : vector<32x1xf32>
    %52 = arith.subf %47, %51 : vector<32x1xf32>
    %53 = math.exp %52 : vector<32x1xf32>
    %54 = vector.broadcast %51 : vector<32x1xf32> to vector<32x32xf32>
    %55 = arith.subf %46, %54 : vector<32x32xf32>
    %56 = math.exp %55 : vector<32x32xf32>
    %57 = arith.mulf %53, %48 : vector<32x1xf32>
    %cst_41 = arith.constant dense<0.000000e+00> : vector<32xf32>
    %58 = vector.multi_reduction <add>, %56, %cst_41 [1] : vector<32x32xf32> to vector<32xf32>
    %59 = vector.shape_cast %58 : vector<32xf32> to vector<32x1xf32>
    %60 = arith.addf %57, %59 : vector<32x1xf32>
    %c0_42 = arith.constant 0 : index
    %c32_43 = arith.constant 32 : index
    %61 = vector.load %arg9[%c0_42, %c32_43] : memref<32x128xf32, #tpu.memory_space<vmem>>, vector<32x32xf32>
    %62 = vector.broadcast %53 : vector<32x1xf32> to vector<32x32xf32>
    %63 = arith.mulf %62, %61 : vector<32x32xf32>
    %64 = arith.truncf %56 : vector<32x32xf32> to vector<32x32xbf16>
    %cst_44 = arith.constant dense<0.000000e+00> : vector<32x32xf32>
    %65 = tpu.matmul %64, %43, %cst_44 {dimension_numbers = #tpu.dot_dimension_numbers<[1], [0], [0], [1], [0, 0, 1, 1], [], []>} : vector<32x32xbf16>, vector<32x32xbf16>, vector<32x32xf32> -> vector<32x32xf32>
    %66 = arith.addf %63, %65 : vector<32x32xf32>
    %c0_45 = arith.constant 0 : index
    %c1_46 = arith.constant 1 : index
    %67 = vector.load %arg7[%c0_45, %c1_46] : memref<32x4xf32, #tpu.memory_space<vmem>>, vector<32x1xf32>
    tpu.vector_store %arg7[%c0_45, %c1_46], %51 {strides = array<i32>} : memref<32x4xf32, #tpu.memory_space<vmem>>, vector<32x1xf32>,
    %c0_47 = arith.constant 0 : index
    %c1_48 = arith.constant 1 : index
    %68 = vector.load %arg8[%c0_47, %c1_48] : memref<32x4xf32, #tpu.memory_space<vmem>>, vector<32x1xf32>
    tpu.vector_store %arg8[%c0_47, %c1_48], %60 {strides = array<i32>} : memref<32x4xf32, #tpu.memory_space<vmem>>, vector<32x1xf32>,
    %c0_49 = arith.constant 0 : index
    %c32_50 = arith.constant 32 : index
    %69 = vector.load %arg9[%c0_49, %c32_50] : memref<32x128xf32, #tpu.memory_space<vmem>>, vector<32x32xf32>
    tpu.vector_store %arg9[%c0_49, %c32_50], %66 {strides = array<i32>} : memref<32x128xf32, #tpu.memory_space<vmem>>, vector<32x32xf32>,
    %70 = arith.extui %0 : i1 to i32
    %c0_i32_51 = arith.constant 0 : i32
    %71 = arith.cmpi ne, %70, %c0_i32_51 : i32
    scf.if %71 {
      %140 = tpu.reciprocal %60 {approx = true} : vector<32x1xf32> -> vector<32x1xf32>
      %141 = vector.broadcast %140 : vector<32x1xf32> to vector<32x32xf32>
      %142 = arith.mulf %66, %141 : vector<32x32xf32>
      %143 = arith.truncf %142 : vector<32x32xf32> to vector<32x32xbf16>
      %c0_102 = arith.constant 0 : index
      %c0_103 = arith.constant 0 : index
      %c32_104 = arith.constant 32 : index
      %144 = vector.load %arg6[%c0_102, %c0_103, %c32_104] : memref<1x32x128xbf16, #tpu.memory_space<vmem>>, vector<1x32x32xbf16>
      %145 = vector.shape_cast %144 : vector<1x32x32xbf16> to vector<32x32xbf16>
      %146 = vector.shape_cast %143 : vector<32x32xbf16> to vector<1x32x32xbf16>
      tpu.vector_store %arg6[%c0_102, %c0_103, %c32_104], %146 {strides = array<i32>} : memref<1x32x128xbf16, #tpu.memory_space<vmem>>, vector<1x32x32xbf16>,
    } else {
    }
    %c0_52 = arith.constant 0 : index
    %c0_53 = arith.constant 0 : index
    %c64 = arith.constant 64 : index
    %72 = vector.load %arg3[%c0_52, %c0_53, %c64] : memref<1x32x128xbf16, #tpu.memory_space<vmem>>, vector<1x32x32xbf16>
    %73 = vector.shape_cast %72 : vector<1x32x32xbf16> to vector<32x32xbf16>
    %c0_54 = arith.constant 0 : index
    %c0_55 = arith.constant 0 : index
    %c64_56 = arith.constant 64 : index
    %74 = vector.load %arg4[%c0_54, %c0_55, %c64_56] : memref<1x32x128xbf16, #tpu.memory_space<vmem>>, vector<1x32x32xbf16>
    %75 = vector.shape_cast %74 : vector<1x32x32xbf16> to vector<32x32xbf16>
    %c0_57 = arith.constant 0 : index
    %c0_58 = arith.constant 0 : index
    %c64_59 = arith.constant 64 : index
    %76 = vector.load %arg5[%c0_57, %c0_58, %c64_59] : memref<1x32x128xbf16, #tpu.memory_space<vmem>>, vector<1x32x32xbf16>
    %77 = vector.shape_cast %76 : vector<1x32x32xbf16> to vector<32x32xbf16>
    %cst_60 = arith.constant dense<0.000000e+00> : vector<32x32xf32>
    %78 = tpu.matmul %73, %75, %cst_60 {dimension_numbers = #tpu.dot_dimension_numbers<[1], [1], [0], [0], [0, 0, 1, 0], [], []>} : vector<32x32xbf16>, vector<32x32xbf16>, vector<32x32xf32> -> vector<32x32xf32>
    %cst_61 = arith.constant 0.176776692 : f32
    %79 = vector.broadcast %cst_61 : f32 to vector<32x32xf32>
    %80 = arith.mulf %78, %79 : vector<32x32xf32>
    %c0_62 = arith.constant 0 : index
    %c2 = arith.constant 2 : index
    %81 = vector.load %arg7[%c0_62, %c2] : memref<32x4xf32, #tpu.memory_space<vmem>>, vector<32x1xf32>
    %c0_63 = arith.constant 0 : index
    %c2_64 = arith.constant 2 : index
    %82 = vector.load %arg8[%c0_63, %c2_64] : memref<32x4xf32, #tpu.memory_space<vmem>>, vector<32x1xf32>
    %cst_65 = arith.constant dense<0xFF800000> : vector<32xf32>
    %83 = vector.multi_reduction <maximumf>, %80, %cst_65 [1] : vector<32x32xf32> to vector<32xf32>
    %84 = vector.shape_cast %83 : vector<32xf32> to vector<32x1xf32>
    %85 = arith.maximumf %81, %84 : vector<32x1xf32>
    %86 = arith.subf %81, %85 : vector<32x1xf32>
    %87 = math.exp %86 : vector<32x1xf32>
    %88 = vector.broadcast %85 : vector<32x1xf32> to vector<32x32xf32>
    %89 = arith.subf %80, %88 : vector<32x32xf32>
    %90 = math.exp %89 : vector<32x32xf32>
    %91 = arith.mulf %87, %82 : vector<32x1xf32>
    %cst_66 = arith.constant dense<0.000000e+00> : vector<32xf32>
    %92 = vector.multi_reduction <add>, %90, %cst_66 [1] : vector<32x32xf32> to vector<32xf32>
    %93 = vector.shape_cast %92 : vector<32xf32> to vector<32x1xf32>
    %94 = arith.addf %91, %93 : vector<32x1xf32>
    %c0_67 = arith.constant 0 : index
    %c64_68 = arith.constant 64 : index
    %95 = vector.load %arg9[%c0_67, %c64_68] : memref<32x128xf32, #tpu.memory_space<vmem>>, vector<32x32xf32>
    %96 = vector.broadcast %87 : vector<32x1xf32> to vector<32x32xf32>
    %97 = arith.mulf %96, %95 : vector<32x32xf32>
    %98 = arith.truncf %90 : vector<32x32xf32> to vector<32x32xbf16>
    %cst_69 = arith.constant dense<0.000000e+00> : vector<32x32xf32>
    %99 = tpu.matmul %98, %77, %cst_69 {dimension_numbers = #tpu.dot_dimension_numbers<[1], [0], [0], [1], [0, 0, 1, 1], [], []>} : vector<32x32xbf16>, vector<32x32xbf16>, vector<32x32xf32> -> vector<32x32xf32>
    %100 = arith.addf %97, %99 : vector<32x32xf32>
    %c0_70 = arith.constant 0 : index
    %c2_71 = arith.constant 2 : index
    %101 = vector.load %arg7[%c0_70, %c2_71] : memref<32x4xf32, #tpu.memory_space<vmem>>, vector<32x1xf32>
    tpu.vector_store %arg7[%c0_70, %c2_71], %85 {strides = array<i32>} : memref<32x4xf32, #tpu.memory_space<vmem>>, vector<32x1xf32>,
    %c0_72 = arith.constant 0 : index
    %c2_73 = arith.constant 2 : index
    %102 = vector.load %arg8[%c0_72, %c2_73] : memref<32x4xf32, #tpu.memory_space<vmem>>, vector<32x1xf32>
    tpu.vector_store %arg8[%c0_72, %c2_73], %94 {strides = array<i32>} : memref<32x4xf32, #tpu.memory_space<vmem>>, vector<32x1xf32>,
    %c0_74 = arith.constant 0 : index
    %c64_75 = arith.constant 64 : index
    %103 = vector.load %arg9[%c0_74, %c64_75] : memref<32x128xf32, #tpu.memory_space<vmem>>, vector<32x32xf32>
    tpu.vector_store %arg9[%c0_74, %c64_75], %100 {strides = array<i32>} : memref<32x128xf32, #tpu.memory_space<vmem>>, vector<32x32xf32>,
    %104 = arith.extui %0 : i1 to i32
    %c0_i32_76 = arith.constant 0 : i32
    %105 = arith.cmpi ne, %104, %c0_i32_76 : i32
    scf.if %105 {
      %140 = tpu.reciprocal %94 {approx = true} : vector<32x1xf32> -> vector<32x1xf32>
      %141 = vector.broadcast %140 : vector<32x1xf32> to vector<32x32xf32>
      %142 = arith.mulf %100, %141 : vector<32x32xf32>
      %143 = arith.truncf %142 : vector<32x32xf32> to vector<32x32xbf16>
      %c0_102 = arith.constant 0 : index
      %c0_103 = arith.constant 0 : index
      %c64_104 = arith.constant 64 : index
      %144 = vector.load %arg6[%c0_102, %c0_103, %c64_104] : memref<1x32x128xbf16, #tpu.memory_space<vmem>>, vector<1x32x32xbf16>
      %145 = vector.shape_cast %144 : vector<1x32x32xbf16> to vector<32x32xbf16>
      %146 = vector.shape_cast %143 : vector<32x32xbf16> to vector<1x32x32xbf16>
      tpu.vector_store %arg6[%c0_102, %c0_103, %c64_104], %146 {strides = array<i32>} : memref<1x32x128xbf16, #tpu.memory_space<vmem>>, vector<1x32x32xbf16>,
    } else {
    }
    %c0_77 = arith.constant 0 : index
    %c0_78 = arith.constant 0 : index
    %c96 = arith.constant 96 : index
    %106 = vector.load %arg3[%c0_77, %c0_78, %c96] : memref<1x32x128xbf16, #tpu.memory_space<vmem>>, vector<1x32x32xbf16>
    %107 = vector.shape_cast %106 : vector<1x32x32xbf16> to vector<32x32xbf16>
    %c0_79 = arith.constant 0 : index
    %c0_80 = arith.constant 0 : index
    %c96_81 = arith.constant 96 : index
    %108 = vector.load %arg4[%c0_79, %c0_80, %c96_81] : memref<1x32x128xbf16, #tpu.memory_space<vmem>>, vector<1x32x32xbf16>
    %109 = vector.shape_cast %108 : vector<1x32x32xbf16> to vector<32x32xbf16>
    %c0_82 = arith.constant 0 : index
    %c0_83 = arith.constant 0 : index
    %c96_84 = arith.constant 96 : index
    %110 = vector.load %arg5[%c0_82, %c0_83, %c96_84] : memref<1x32x128xbf16, #tpu.memory_space<vmem>>, vector<1x32x32xbf16>
    %111 = vector.shape_cast %110 : vector<1x32x32xbf16> to vector<32x32xbf16>
    %cst_85 = arith.constant dense<0.000000e+00> : vector<32x32xf32>
    %112 = tpu.matmul %107, %109, %cst_85 {dimension_numbers = #tpu.dot_dimension_numbers<[1], [1], [0], [0], [0, 0, 1, 0], [], []>} : vector<32x32xbf16>, vector<32x32xbf16>, vector<32x32xf32> -> vector<32x32xf32>
    %cst_86 = arith.constant 0.176776692 : f32
    %113 = vector.broadcast %cst_86 : f32 to vector<32x32xf32>
    %114 = arith.mulf %112, %113 : vector<32x32xf32>
    %c0_87 = arith.constant 0 : index
    %c3 = arith.constant 3 : index
    %115 = vector.load %arg7[%c0_87, %c3] : memref<32x4xf32, #tpu.memory_space<vmem>>, vector<32x1xf32>
    %c0_88 = arith.constant 0 : index
    %c3_89 = arith.constant 3 : index
    %116 = vector.load %arg8[%c0_88, %c3_89] : memref<32x4xf32, #tpu.memory_space<vmem>>, vector<32x1xf32>
    %cst_90 = arith.constant dense<0xFF800000> : vector<32xf32>
    %117 = vector.multi_reduction <maximumf>, %114, %cst_90 [1] : vector<32x32xf32> to vector<32xf32>
    %118 = vector.shape_cast %117 : vector<32xf32> to vector<32x1xf32>
    %119 = arith.maximumf %115, %118 : vector<32x1xf32>
    %120 = arith.subf %115, %119 : vector<32x1xf32>
    %121 = math.exp %120 : vector<32x1xf32>
    %122 = vector.broadcast %119 : vector<32x1xf32> to vector<32x32xf32>
    %123 = arith.subf %114, %122 : vector<32x32xf32>
    %124 = math.exp %123 : vector<32x32xf32>
    %125 = arith.mulf %121, %116 : vector<32x1xf32>
    %cst_91 = arith.constant dense<0.000000e+00> : vector<32xf32>
    %126 = vector.multi_reduction <add>, %124, %cst_91 [1] : vector<32x32xf32> to vector<32xf32>
    %127 = vector.shape_cast %126 : vector<32xf32> to vector<32x1xf32>
    %128 = arith.addf %125, %127 : vector<32x1xf32>
    %c0_92 = arith.constant 0 : index
    %c96_93 = arith.constant 96 : index
    %129 = vector.load %arg9[%c0_92, %c96_93] : memref<32x128xf32, #tpu.memory_space<vmem>>, vector<32x32xf32>
    %130 = vector.broadcast %121 : vector<32x1xf32> to vector<32x32xf32>
    %131 = arith.mulf %130, %129 : vector<32x32xf32>
    %132 = arith.truncf %124 : vector<32x32xf32> to vector<32x32xbf16>
    %cst_94 = arith.constant dense<0.000000e+00> : vector<32x32xf32>
    %133 = tpu.matmul %132, %111, %cst_94 {dimension_numbers = #tpu.dot_dimension_numbers<[1], [0], [0], [1], [0, 0, 1, 1], [], []>} : vector<32x32xbf16>, vector<32x32xbf16>, vector<32x32xf32> -> vector<32x32xf32>
    %134 = arith.addf %131, %133 : vector<32x32xf32>
    %c0_95 = arith.constant 0 : index
    %c3_96 = arith.constant 3 : index
    %135 = vector.load %arg7[%c0_95, %c3_96] : memref<32x4xf32, #tpu.memory_space<vmem>>, vector<32x1xf32>
    tpu.vector_store %arg7[%c0_95, %c3_96], %119 {strides = array<i32>} : memref<32x4xf32, #tpu.memory_space<vmem>>, vector<32x1xf32>,
    %c0_97 = arith.constant 0 : index
    %c3_98 = arith.constant 3 : index
    %136 = vector.load %arg8[%c0_97, %c3_98] : memref<32x4xf32, #tpu.memory_space<vmem>>, vector<32x1xf32>
    tpu.vector_store %arg8[%c0_97, %c3_98], %128 {strides = array<i32>} : memref<32x4xf32, #tpu.memory_space<vmem>>, vector<32x1xf32>,
    %c0_99 = arith.constant 0 : index
    %c96_100 = arith.constant 96 : index
    %137 = vector.load %arg9[%c0_99, %c96_100] : memref<32x128xf32, #tpu.memory_space<vmem>>, vector<32x32xf32>
    tpu.vector_store %arg9[%c0_99, %c96_100], %134 {strides = array<i32>} : memref<32x128xf32, #tpu.memory_space<vmem>>, vector<32x32xf32>,
    %138 = arith.extui %0 : i1 to i32
    %c0_i32_101 = arith.constant 0 : i32
    %139 = arith.cmpi ne, %138, %c0_i32_101 : i32
    scf.if %139 {
      %140 = tpu.reciprocal %128 {approx = true} : vector<32x1xf32> -> vector<32x1xf32>
      %141 = vector.broadcast %140 : vector<32x1xf32> to vector<32x32xf32>
      %142 = arith.mulf %134, %141 : vector<32x32xf32>
      %143 = arith.truncf %142 : vector<32x32xf32> to vector<32x32xbf16>
      %c0_102 = arith.constant 0 : index
      %c0_103 = arith.constant 0 : index
      %c96_104 = arith.constant 96 : index
      %144 = vector.load %arg6[%c0_102, %c0_103, %c96_104] : memref<1x32x128xbf16, #tpu.memory_space<vmem>>, vector<1x32x32xbf16>
      %145 = vector.shape_cast %144 : vector<1x32x32xbf16> to vector<32x32xbf16>
      %146 = vector.shape_cast %143 : vector<32x32xbf16> to vector<1x32x32xbf16>
      tpu.vector_store %arg6[%c0_102, %c0_103, %c96_104], %146 {strides = array<i32>} : memref<1x32x128xbf16, #tpu.memory_space<vmem>>, vector<1x32x32xbf16>,
    } else {
    }
    return
  }
  func.func @transform_0(%arg0: i32, %arg1: i32, %arg2: i32) -> (i32, i32, i32) {
    %c0_i32 = arith.constant 0 : i32
    %c0_i32_0 = arith.constant 0 : i32
    return %arg0, %arg1, %c0_i32 : i32, i32, i32
  }
  func.func @transform_1(%arg0: i32, %arg1: i32, %arg2: i32) -> (i32, i32, i32) {
    %c0_i32 = arith.constant 0 : i32
    %c0_i32_0 = arith.constant 0 : i32
    return %arg0, %arg2, %c0_i32 : i32, i32, i32
  }
  func.func @transform_2(%arg0: i32, %arg1: i32, %arg2: i32) -> (i32, i32, i32) {
    %c1_i32 = arith.constant 1 : i32
    %c0_i32 = arith.constant 0 : i32
    return %arg0, %arg2, %c1_i32 : i32, i32, i32
  }
  func.func @transform_3(%arg0: i32, %arg1: i32, %arg2: i32) -> (i32, i32, i32) {
    %c0_i32 = arith.constant 0 : i32
    %c0_i32_0 = arith.constant 0 : i32
    return %arg0, %arg1, %c0_i32 : i32, i32, i32
  }
}

module attributes {stable_mosaic.version = 11 : i64} {
  func.func @_dense_kernel(%arg0: i32, %arg1: i32, %arg2: i32, %arg3: memref<64x128xbf16, #tpu.memory_space<vmem>>, %arg4: memref<128x128xbf16, #tpu.memory_space<vmem>>, %arg5: memref<1x128xf32, #tpu.memory_space<vmem>>, %arg6: memref<64x128xbf16, #tpu.memory_space<vmem>>, %arg7: memref<64x128xbf16, #tpu.memory_space<vmem>>, %arg8: memref<64x128xf32, #tpu.memory_space<vmem>>) attributes {dimension_semantics = [#tpu.dimension_semantics<parallel>, #tpu.dimension_semantics<parallel>, #tpu.dimension_semantics<arbitrary>], iteration_bounds = array<i64: 1, 1, 1>, scalar_prefetch = 0 : i64, scratch_operands = 1 : i64, tpu.core_type = #tpu.core_type<tc>, window_params = [{transform_indices = @transform_0, window_bounds = array<i64: 64, 128>}, {transform_indices = @transform_1, window_bounds = array<i64: 128, 128>}, {transform_indices = @transform_2, window_bounds = array<i64: 1, 128>}, {transform_indices = @transform_3, window_bounds = array<i64: 64, 128>}, {transform_indices = @transform_4, window_bounds = array<i64: 64, 128>}]} {
    %c0_i32 = arith.constant 0 : i32
    %0 = arith.cmpi eq, %arg2, %c0_i32 : i32
    %1 = arith.extui %0 : i1 to i32
    %c0_i32_0 = arith.constant 0 : i32
    %2 = arith.cmpi ne, %1, %c0_i32_0 : i32
    scf.if %2 {
      %cst_10 = arith.constant 0.000000e+00 : f32
      %12 = vector.broadcast %cst_10 : f32 to vector<64x128xf32>
      %c0_11 = arith.constant 0 : index
      %c0_12 = arith.constant 0 : index
      %13 = vector.load %arg8[%c0_11, %c0_12] : memref<64x128xf32, #tpu.memory_space<vmem>>, vector<64x128xf32>
      tpu.vector_store %arg8[%c0_11, %c0_12], %12 {strides = array<i32>} : memref<64x128xf32, #tpu.memory_space<vmem>>, vector<64x128xf32>,
    } else {
    }
    %c0 = arith.constant 0 : index
    %c0_1 = arith.constant 0 : index
    %3 = vector.load %arg8[%c0, %c0_1] : memref<64x128xf32, #tpu.memory_space<vmem>>, vector<64x128xf32>
    %c0_2 = arith.constant 0 : index
    %c0_3 = arith.constant 0 : index
    %4 = vector.load %arg3[%c0_2, %c0_3] : memref<64x128xbf16, #tpu.memory_space<vmem>>, vector<64x128xbf16>
    %c0_4 = arith.constant 0 : index
    %c0_5 = arith.constant 0 : index
    %5 = vector.load %arg4[%c0_4, %c0_5] : memref<128x128xbf16, #tpu.memory_space<vmem>>, vector<128x128xbf16>
    %cst = arith.constant dense<0.000000e+00> : vector<64x128xf32>
    %6 = tpu.matmul %4, %5, %cst {dimension_numbers = #tpu.dot_dimension_numbers<[1], [0], [0], [1], [0, 0, 1, 1], [], []>} : vector<64x128xbf16>, vector<128x128xbf16>, vector<64x128xf32> -> vector<64x128xf32>
    %7 = arith.addf %3, %6 : vector<64x128xf32>
    %c0_6 = arith.constant 0 : index
    %c0_7 = arith.constant 0 : index
    %8 = vector.load %arg8[%c0_6, %c0_7] : memref<64x128xf32, #tpu.memory_space<vmem>>, vector<64x128xf32>
    tpu.vector_store %arg8[%c0_6, %c0_7], %7 {strides = array<i32>} : memref<64x128xf32, #tpu.memory_space<vmem>>, vector<64x128xf32>,
    %c0_i32_8 = arith.constant 0 : i32
    %9 = arith.cmpi eq, %arg2, %c0_i32_8 : i32
    %10 = arith.extui %9 : i1 to i32
    %c0_i32_9 = arith.constant 0 : i32
    %11 = arith.cmpi ne, %10, %c0_i32_9 : i32
    scf.if %11 {
      %c0_10 = arith.constant 0 : index
      %c0_11 = arith.constant 0 : index
      %12 = vector.load %arg8[%c0_10, %c0_11] : memref<64x128xf32, #tpu.memory_space<vmem>>, vector<64x128xf32>
      %c0_12 = arith.constant 0 : index
      %c0_13 = arith.constant 0 : index
      %13 = vector.load %arg5[%c0_12, %c0_13] : memref<1x128xf32, #tpu.memory_space<vmem>>, vector<1x128xf32>
      %14 = vector.broadcast %13 : vector<1x128xf32> to vector<64x128xf32>
      %15 = arith.addf %12, %14 : vector<64x128xf32>
      %c0_14 = arith.constant 0 : index
      %c0_15 = arith.constant 0 : index
      %16 = vector.load %arg6[%c0_14, %c0_15] : memref<64x128xbf16, #tpu.memory_space<vmem>>, vector<64x128xbf16>
      %17 = arith.extf %16 : vector<64x128xbf16> to vector<64x128xf32>
      %18 = arith.addf %15, %17 : vector<64x128xf32>
      %19 = arith.truncf %18 : vector<64x128xf32> to vector<64x128xbf16>
      %c0_16 = arith.constant 0 : index
      %c0_17 = arith.constant 0 : index
      %20 = vector.load %arg7[%c0_16, %c0_17] : memref<64x128xbf16, #tpu.memory_space<vmem>>, vector<64x128xbf16>
      tpu.vector_store %arg7[%c0_16, %c0_17], %19 {strides = array<i32>} : memref<64x128xbf16, #tpu.memory_space<vmem>>, vector<64x128xbf16>,
    } else {
    }
    return
  }
  func.func @transform_0(%arg0: i32, %arg1: i32, %arg2: i32) -> (i32, i32) {
    %c0_i32 = arith.constant 0 : i32
    return %arg0, %arg2 : i32, i32
  }
  func.func @transform_1(%arg0: i32, %arg1: i32, %arg2: i32) -> (i32, i32) {
    %c0_i32 = arith.constant 0 : i32
    return %arg2, %arg1 : i32, i32
  }
  func.func @transform_2(%arg0: i32, %arg1: i32, %arg2: i32) -> (i32, i32) {
    %c0_i32 = arith.constant 0 : i32
    %c0_i32_0 = arith.constant 0 : i32
    return %c0_i32, %arg1 : i32, i32
  }
  func.func @transform_3(%arg0: i32, %arg1: i32, %arg2: i32) -> (i32, i32) {
    %c0_i32 = arith.constant 0 : i32
    return %arg0, %arg1 : i32, i32
  }
  func.func @transform_4(%arg0: i32, %arg1: i32, %arg2: i32) -> (i32, i32) {
    %c0_i32 = arith.constant 0 : i32
    return %arg0, %arg1 : i32, i32
  }
}

module attributes {stable_mosaic.version = 11 : i64} {
  func.func @_ln_dense_kernel(%arg0: i32, %arg1: i32, %arg2: memref<64x128xbf16, #tpu.memory_space<vmem>>, %arg3: memref<1x128xf32, #tpu.memory_space<vmem>>, %arg4: memref<1x128xf32, #tpu.memory_space<vmem>>, %arg5: memref<128x128xbf16, #tpu.memory_space<vmem>>, %arg6: memref<1x128xf32, #tpu.memory_space<vmem>>, %arg7: memref<64x128xbf16, #tpu.memory_space<vmem>>, %arg8: memref<64x128xbf16, #tpu.memory_space<vmem>>) attributes {dimension_semantics = [#tpu.dimension_semantics<parallel>, #tpu.dimension_semantics<arbitrary>], iteration_bounds = array<i64: 1, 1>, scalar_prefetch = 0 : i64, scratch_operands = 1 : i64, tpu.core_type = #tpu.core_type<tc>, window_params = [{transform_indices = @transform_0, window_bounds = array<i64: 64, 128>}, {pipeline_mode = #tpu.pipeline_mode<synchronous>, transform_indices = @transform_1, window_bounds = array<i64: 1, 128>}, {pipeline_mode = #tpu.pipeline_mode<synchronous>, transform_indices = @transform_2, window_bounds = array<i64: 1, 128>}, {transform_indices = @transform_3, window_bounds = array<i64: 128, 128>}, {transform_indices = @transform_4, window_bounds = array<i64: 1, 128>}, {transform_indices = @transform_5, window_bounds = array<i64: 64, 128>}]} {
    %c0_i32 = arith.constant 0 : i32
    %0 = arith.cmpi eq, %arg1, %c0_i32 : i32
    %1 = arith.extui %0 : i1 to i32
    %c0_i32_0 = arith.constant 0 : i32
    %2 = arith.cmpi ne, %1, %c0_i32_0 : i32
    scf.if %2 {
      %c0_12 = arith.constant 0 : index
      %c0_13 = arith.constant 0 : index
      %24 = vector.load %arg2[%c0_12, %c0_13] : memref<64x128xbf16, #tpu.memory_space<vmem>>, vector<64x128xbf16>
      %25 = arith.extf %24 : vector<64x128xbf16> to vector<64x128xf32>
      %cst_14 = arith.constant dense<0.000000e+00> : vector<64xf32>
      %26 = vector.multi_reduction <add>, %25, %cst_14 [1] : vector<64x128xf32> to vector<64xf32>
      %27 = vector.shape_cast %26 : vector<64xf32> to vector<64x1xf32>
      %cst_15 = arith.constant 1.280000e+02 : f32
      %28 = vector.broadcast %cst_15 : f32 to vector<64x1xf32>
      %29 = arith.divf %27, %28 : vector<64x1xf32>
      %30 = vector.broadcast %29 : vector<64x1xf32> to vector<64x128xf32>
      %31 = arith.subf %25, %30 : vector<64x128xf32>
      %32 = arith.mulf %31, %31 : vector<64x128xf32>
      %cst_16 = arith.constant dense<0.000000e+00> : vector<64xf32>
      %33 = vector.multi_reduction <add>, %32, %cst_16 [1] : vector<64x128xf32> to vector<64xf32>
      %34 = vector.shape_cast %33 : vector<64xf32> to vector<64x1xf32>
      %cst_17 = arith.constant 1.280000e+02 : f32
      %35 = vector.broadcast %cst_17 : f32 to vector<64x1xf32>
      %36 = arith.divf %34, %35 : vector<64x1xf32>
      %37 = vector.broadcast %29 : vector<64x1xf32> to vector<64x128xf32>
      %38 = arith.subf %25, %37 : vector<64x128xf32>
      %cst_18 = arith.constant 9.99999974E-6 : f32
      %39 = vector.broadcast %cst_18 : f32 to vector<64x1xf32>
      %40 = arith.addf %36, %39 : vector<64x1xf32>
      %41 = math.rsqrt %40 : vector<64x1xf32>
      %42 = vector.broadcast %41 : vector<64x1xf32> to vector<64x128xf32>
      %43 = arith.mulf %38, %42 : vector<64x128xf32>
      %c0_19 = arith.constant 0 : index
      %c0_20 = arith.constant 0 : index
      %44 = vector.load %arg3[%c0_19, %c0_20] : memref<1x128xf32, #tpu.memory_space<vmem>>, vector<1x128xf32>
      %45 = vector.broadcast %44 : vector<1x128xf32> to vector<64x128xf32>
      %46 = arith.mulf %43, %45 : vector<64x128xf32>
      %c0_21 = arith.constant 0 : index
      %c0_22 = arith.constant 0 : index
      %47 = vector.load %arg4[%c0_21, %c0_22] : memref<1x128xf32, #tpu.memory_space<vmem>>, vector<1x128xf32>
      %48 = vector.broadcast %47 : vector<1x128xf32> to vector<64x128xf32>
      %49 = arith.addf %46, %48 : vector<64x128xf32>
      %50 = arith.truncf %49 : vector<64x128xf32> to vector<64x128xbf16>
      %c0_23 = arith.constant 0 : index
      %c0_24 = arith.constant 0 : index
      %51 = vector.load %arg8[%c0_23, %c0_24] : memref<64x128xbf16, #tpu.memory_space<vmem>>, vector<64x128xbf16>
      tpu.vector_store %arg8[%c0_23, %c0_24], %50 {strides = array<i32>} : memref<64x128xbf16, #tpu.memory_space<vmem>>, vector<64x128xbf16>,
    } else {
    }
    %c0 = arith.constant 0 : index
    %c0_1 = arith.constant 0 : index
    %3 = vector.load %arg8[%c0, %c0_1] : memref<64x128xbf16, #tpu.memory_space<vmem>>, vector<64x128xbf16>
    %c0_2 = arith.constant 0 : index
    %c0_3 = arith.constant 0 : index
    %4 = vector.load %arg5[%c0_2, %c0_3] : memref<128x128xbf16, #tpu.memory_space<vmem>>, vector<128x128xbf16>
    %cst = arith.constant dense<0.000000e+00> : vector<64x128xf32>
    %5 = tpu.matmul %3, %4, %cst {dimension_numbers = #tpu.dot_dimension_numbers<[1], [0], [0], [1], [0, 0, 1, 1], [], []>} : vector<64x128xbf16>, vector<128x128xbf16>, vector<64x128xf32> -> vector<64x128xf32>
    %c0_4 = arith.constant 0 : index
    %c0_5 = arith.constant 0 : index
    %6 = vector.load %arg6[%c0_4, %c0_5] : memref<1x128xf32, #tpu.memory_space<vmem>>, vector<1x128xf32>
    %7 = vector.broadcast %6 : vector<1x128xf32> to vector<64x128xf32>
    %8 = arith.addf %5, %7 : vector<64x128xf32>
    %9 = arith.mulf %8, %8 : vector<64x128xf32>
    %10 = arith.mulf %8, %9 : vector<64x128xf32>
    %cst_6 = arith.constant 4.471500e-02 : f32
    %11 = vector.broadcast %cst_6 : f32 to vector<64x128xf32>
    %12 = arith.mulf %11, %10 : vector<64x128xf32>
    %13 = arith.addf %8, %12 : vector<64x128xf32>
    %cst_7 = arith.constant 0.797884583 : f32
    %14 = vector.broadcast %cst_7 : f32 to vector<64x128xf32>
    %15 = arith.mulf %14, %13 : vector<64x128xf32>
    %16 = math.tanh %15 : vector<64x128xf32>
    %cst_8 = arith.constant 1.000000e+00 : f32
    %17 = vector.broadcast %cst_8 : f32 to vector<64x128xf32>
    %18 = arith.addf %17, %16 : vector<64x128xf32>
    %cst_9 = arith.constant 5.000000e-01 : f32
    %19 = vector.broadcast %cst_9 : f32 to vector<64x128xf32>
    %20 = arith.mulf %19, %18 : vector<64x128xf32>
    %21 = arith.mulf %8, %20 : vector<64x128xf32>
    %22 = arith.truncf %21 : vector<64x128xf32> to vector<64x128xbf16>
    %c0_10 = arith.constant 0 : index
    %c0_11 = arith.constant 0 : index
    %23 = vector.load %arg7[%c0_10, %c0_11] : memref<64x128xbf16, #tpu.memory_space<vmem>>, vector<64x128xbf16>
    tpu.vector_store %arg7[%c0_10, %c0_11], %22 {strides = array<i32>} : memref<64x128xbf16, #tpu.memory_space<vmem>>, vector<64x128xbf16>,
    return
  }
  func.func @transform_0(%arg0: i32, %arg1: i32) -> (i32, i32) {
    %c0_i32 = arith.constant 0 : i32
    %c0_i32_0 = arith.constant 0 : i32
    return %arg0, %c0_i32 : i32, i32
  }
  func.func @transform_1(%arg0: i32, %arg1: i32) -> (i32, i32) {
    %c0_i32 = arith.constant 0 : i32
    %c0_i32_0 = arith.constant 0 : i32
    %c0_i32_1 = arith.constant 0 : i32
    return %c0_i32, %c0_i32_0 : i32, i32
  }
  func.func @transform_2(%arg0: i32, %arg1: i32) -> (i32, i32) {
    %c0_i32 = arith.constant 0 : i32
    %c0_i32_0 = arith.constant 0 : i32
    %c0_i32_1 = arith.constant 0 : i32
    return %c0_i32, %c0_i32_0 : i32, i32
  }
  func.func @transform_3(%arg0: i32, %arg1: i32) -> (i32, i32) {
    %c0_i32 = arith.constant 0 : i32
    %c0_i32_0 = arith.constant 0 : i32
    return %c0_i32, %arg1 : i32, i32
  }
  func.func @transform_4(%arg0: i32, %arg1: i32) -> (i32, i32) {
    %c0_i32 = arith.constant 0 : i32
    %c0_i32_0 = arith.constant 0 : i32
    return %c0_i32, %arg1 : i32, i32
  }
  func.func @transform_5(%arg0: i32, %arg1: i32) -> (i32, i32) {
    %c0_i32 = arith.constant 0 : i32
    return %arg0, %arg1 : i32, i32
  }
}

module attributes {stable_mosaic.version = 11 : i64} {
  func.func @_ln_dense_kernel(%arg0: i32, %arg1: i32, %arg2: memref<64x128xbf16, #tpu.memory_space<vmem>>, %arg3: memref<1x128xf32, #tpu.memory_space<vmem>>, %arg4: memref<1x128xf32, #tpu.memory_space<vmem>>, %arg5: memref<128x128xbf16, #tpu.memory_space<vmem>>, %arg6: memref<1x128xf32, #tpu.memory_space<vmem>>, %arg7: memref<64x128xbf16, #tpu.memory_space<vmem>>, %arg8: memref<64x128xbf16, #tpu.memory_space<vmem>>) attributes {dimension_semantics = [#tpu.dimension_semantics<parallel>, #tpu.dimension_semantics<arbitrary>], iteration_bounds = array<i64: 1, 1>, scalar_prefetch = 0 : i64, scratch_operands = 1 : i64, tpu.core_type = #tpu.core_type<tc>, window_params = [{transform_indices = @transform_0, window_bounds = array<i64: 64, 128>}, {pipeline_mode = #tpu.pipeline_mode<synchronous>, transform_indices = @transform_1, window_bounds = array<i64: 1, 128>}, {pipeline_mode = #tpu.pipeline_mode<synchronous>, transform_indices = @transform_2, window_bounds = array<i64: 1, 128>}, {transform_indices = @transform_3, window_bounds = array<i64: 128, 128>}, {transform_indices = @transform_4, window_bounds = array<i64: 1, 128>}, {transform_indices = @transform_5, window_bounds = array<i64: 64, 128>}]} {
    %c0_i32 = arith.constant 0 : i32
    %0 = arith.cmpi eq, %arg1, %c0_i32 : i32
    %1 = arith.extui %0 : i1 to i32
    %c0_i32_0 = arith.constant 0 : i32
    %2 = arith.cmpi ne, %1, %c0_i32_0 : i32
    scf.if %2 {
      %c0_8 = arith.constant 0 : index
      %c0_9 = arith.constant 0 : index
      %11 = vector.load %arg2[%c0_8, %c0_9] : memref<64x128xbf16, #tpu.memory_space<vmem>>, vector<64x128xbf16>
      %12 = arith.extf %11 : vector<64x128xbf16> to vector<64x128xf32>
      %cst_10 = arith.constant dense<0.000000e+00> : vector<64xf32>
      %13 = vector.multi_reduction <add>, %12, %cst_10 [1] : vector<64x128xf32> to vector<64xf32>
      %14 = vector.shape_cast %13 : vector<64xf32> to vector<64x1xf32>
      %cst_11 = arith.constant 1.280000e+02 : f32
      %15 = vector.broadcast %cst_11 : f32 to vector<64x1xf32>
      %16 = arith.divf %14, %15 : vector<64x1xf32>
      %17 = vector.broadcast %16 : vector<64x1xf32> to vector<64x128xf32>
      %18 = arith.subf %12, %17 : vector<64x128xf32>
      %19 = arith.mulf %18, %18 : vector<64x128xf32>
      %cst_12 = arith.constant dense<0.000000e+00> : vector<64xf32>
      %20 = vector.multi_reduction <add>, %19, %cst_12 [1] : vector<64x128xf32> to vector<64xf32>
      %21 = vector.shape_cast %20 : vector<64xf32> to vector<64x1xf32>
      %cst_13 = arith.constant 1.280000e+02 : f32
      %22 = vector.broadcast %cst_13 : f32 to vector<64x1xf32>
      %23 = arith.divf %21, %22 : vector<64x1xf32>
      %24 = vector.broadcast %16 : vector<64x1xf32> to vector<64x128xf32>
      %25 = arith.subf %12, %24 : vector<64x128xf32>
      %cst_14 = arith.constant 9.99999974E-6 : f32
      %26 = vector.broadcast %cst_14 : f32 to vector<64x1xf32>
      %27 = arith.addf %23, %26 : vector<64x1xf32>
      %28 = math.rsqrt %27 : vector<64x1xf32>
      %29 = vector.broadcast %28 : vector<64x1xf32> to vector<64x128xf32>
      %30 = arith.mulf %25, %29 : vector<64x128xf32>
      %c0_15 = arith.constant 0 : index
      %c0_16 = arith.constant 0 : index
      %31 = vector.load %arg3[%c0_15, %c0_16] : memref<1x128xf32, #tpu.memory_space<vmem>>, vector<1x128xf32>
      %32 = vector.broadcast %31 : vector<1x128xf32> to vector<64x128xf32>
      %33 = arith.mulf %30, %32 : vector<64x128xf32>
      %c0_17 = arith.constant 0 : index
      %c0_18 = arith.constant 0 : index
      %34 = vector.load %arg4[%c0_17, %c0_18] : memref<1x128xf32, #tpu.memory_space<vmem>>, vector<1x128xf32>
      %35 = vector.broadcast %34 : vector<1x128xf32> to vector<64x128xf32>
      %36 = arith.addf %33, %35 : vector<64x128xf32>
      %37 = arith.truncf %36 : vector<64x128xf32> to vector<64x128xbf16>
      %c0_19 = arith.constant 0 : index
      %c0_20 = arith.constant 0 : index
      %38 = vector.load %arg8[%c0_19, %c0_20] : memref<64x128xbf16, #tpu.memory_space<vmem>>, vector<64x128xbf16>
      tpu.vector_store %arg8[%c0_19, %c0_20], %37 {strides = array<i32>} : memref<64x128xbf16, #tpu.memory_space<vmem>>, vector<64x128xbf16>,
    } else {
    }
    %c0 = arith.constant 0 : index
    %c0_1 = arith.constant 0 : index
    %3 = vector.load %arg8[%c0, %c0_1] : memref<64x128xbf16, #tpu.memory_space<vmem>>, vector<64x128xbf16>
    %c0_2 = arith.constant 0 : index
    %c0_3 = arith.constant 0 : index
    %4 = vector.load %arg5[%c0_2, %c0_3] : memref<128x128xbf16, #tpu.memory_space<vmem>>, vector<128x128xbf16>
    %cst = arith.constant dense<0.000000e+00> : vector<64x128xf32>
    %5 = tpu.matmul %3, %4, %cst {dimension_numbers = #tpu.dot_dimension_numbers<[1], [0], [0], [1], [0, 0, 1, 1], [], []>} : vector<64x128xbf16>, vector<128x128xbf16>, vector<64x128xf32> -> vector<64x128xf32>
    %c0_4 = arith.constant 0 : index
    %c0_5 = arith.constant 0 : index
    %6 = vector.load %arg6[%c0_4, %c0_5] : memref<1x128xf32, #tpu.memory_space<vmem>>, vector<1x128xf32>
    %7 = vector.broadcast %6 : vector<1x128xf32> to vector<64x128xf32>
    %8 = arith.addf %5, %7 : vector<64x128xf32>
    %9 = arith.truncf %8 : vector<64x128xf32> to vector<64x128xbf16>
    %c0_6 = arith.constant 0 : index
    %c0_7 = arith.constant 0 : index
    %10 = vector.load %arg7[%c0_6, %c0_7] : memref<64x128xbf16, #tpu.memory_space<vmem>>, vector<64x128xbf16>
    tpu.vector_store %arg7[%c0_6, %c0_7], %9 {strides = array<i32>} : memref<64x128xbf16, #tpu.memory_space<vmem>>, vector<64x128xbf16>,
    return
  }
  func.func @transform_0(%arg0: i32, %arg1: i32) -> (i32, i32) {
    %c0_i32 = arith.constant 0 : i32
    %c0_i32_0 = arith.constant 0 : i32
    return %arg0, %c0_i32 : i32, i32
  }
  func.func @transform_1(%arg0: i32, %arg1: i32) -> (i32, i32) {
    %c0_i32 = arith.constant 0 : i32
    %c0_i32_0 = arith.constant 0 : i32
    %c0_i32_1 = arith.constant 0 : i32
    return %c0_i32, %c0_i32_0 : i32, i32
  }
  func.func @transform_2(%arg0: i32, %arg1: i32) -> (i32, i32) {
    %c0_i32 = arith.constant 0 : i32
    %c0_i32_0 = arith.constant 0 : i32
    %c0_i32_1 = arith.constant 0 : i32
    return %c0_i32, %c0_i32_0 : i32, i32
  }
  func.func @transform_3(%arg0: i32, %arg1: i32) -> (i32, i32) {
    %c0_i32 = arith.constant 0 : i32
    %c0_i32_0 = arith.constant 0 : i32
    return %c0_i32, %arg1 : i32, i32
  }
  func.func @transform_4(%arg0: i32, %arg1: i32) -> (i32, i32) {
    %c0_i32 = arith.constant 0 : i32
    %c0_i32_0 = arith.constant 0 : i32
    return %c0_i32, %arg1 : i32, i32
  }
  func.func @transform_5(%arg0: i32, %arg1: i32) -> (i32, i32) {
    %c0_i32 = arith.constant 0 : i32
    return %arg0, %arg1 : i32, i32
  }
}

module attributes {stable_mosaic.version = 11 : i64} {
  func.func @_regression_kernel(%arg0: memref<2x32x128xbf16, #tpu.memory_space<vmem>>, %arg1: memref<1x1x128xf32, #tpu.memory_space<vmem>>, %arg2: memref<1x1x128xf32, #tpu.memory_space<vmem>>, %arg3: memref<32x128xf32, #tpu.memory_space<vmem>>, %arg4: memref<1x128xf32, #tpu.memory_space<vmem>>, %arg5: memref<128x6xf32, #tpu.memory_space<vmem>>, %arg6: memref<1x6xf32, #tpu.memory_space<vmem>>, %arg7: memref<2x6xf32, #tpu.memory_space<vmem>>) attributes {dimension_semantics = [], scalar_prefetch = 0 : i64, scratch_operands = 0 : i64, tpu.core_type = #tpu.core_type<tc>} {
    %c0 = arith.constant 0 : index
    %c0_0 = arith.constant 0 : index
    %c0_1 = arith.constant 0 : index
    %0 = vector.load %arg0[%c0, %c0_0, %c0_1] : memref<2x32x128xbf16, #tpu.memory_space<vmem>>, vector<2x32x128xbf16>
    %1 = arith.extf %0 : vector<2x32x128xbf16> to vector<2x32x128xf32>
    %cst = arith.constant dense<0.000000e+00> : vector<2x32xf32>
    %2 = vector.multi_reduction <add>, %1, %cst [2] : vector<2x32x128xf32> to vector<2x32xf32>
    %3 = vector.shape_cast %2 : vector<2x32xf32> to vector<2x32x1xf32>
    %cst_2 = arith.constant 1.280000e+02 : f32
    %4 = vector.broadcast %cst_2 : f32 to vector<2x32x1xf32>
    %5 = arith.divf %3, %4 : vector<2x32x1xf32>
    %6 = vector.broadcast %5 : vector<2x32x1xf32> to vector<2x32x128xf32>
    %7 = arith.subf %1, %6 : vector<2x32x128xf32>
    %8 = arith.mulf %7, %7 : vector<2x32x128xf32>
    %cst_3 = arith.constant dense<0.000000e+00> : vector<2x32xf32>
    %9 = vector.multi_reduction <add>, %8, %cst_3 [2] : vector<2x32x128xf32> to vector<2x32xf32>
    %10 = vector.shape_cast %9 : vector<2x32xf32> to vector<2x32x1xf32>
    %cst_4 = arith.constant 1.280000e+02 : f32
    %11 = vector.broadcast %cst_4 : f32 to vector<2x32x1xf32>
    %12 = arith.divf %10, %11 : vector<2x32x1xf32>
    %13 = vector.broadcast %5 : vector<2x32x1xf32> to vector<2x32x128xf32>
    %14 = arith.subf %1, %13 : vector<2x32x128xf32>
    %cst_5 = arith.constant 9.99999974E-6 : f32
    %15 = vector.broadcast %cst_5 : f32 to vector<2x32x1xf32>
    %16 = arith.addf %12, %15 : vector<2x32x1xf32>
    %17 = math.rsqrt %16 : vector<2x32x1xf32>
    %18 = vector.broadcast %17 : vector<2x32x1xf32> to vector<2x32x128xf32>
    %19 = arith.mulf %14, %18 : vector<2x32x128xf32>
    %c0_6 = arith.constant 0 : index
    %c0_7 = arith.constant 0 : index
    %c0_8 = arith.constant 0 : index
    %20 = vector.load %arg1[%c0_6, %c0_7, %c0_8] : memref<1x1x128xf32, #tpu.memory_space<vmem>>, vector<1x1x128xf32>
    %21 = vector.broadcast %20 : vector<1x1x128xf32> to vector<2x32x128xf32>
    %22 = arith.mulf %19, %21 : vector<2x32x128xf32>
    %c0_9 = arith.constant 0 : index
    %c0_10 = arith.constant 0 : index
    %c0_11 = arith.constant 0 : index
    %23 = vector.load %arg2[%c0_9, %c0_10, %c0_11] : memref<1x1x128xf32, #tpu.memory_space<vmem>>, vector<1x1x128xf32>
    %24 = vector.broadcast %23 : vector<1x1x128xf32> to vector<2x32x128xf32>
    %25 = arith.addf %22, %24 : vector<2x32x128xf32>
    %cst_12 = arith.constant dense<0.000000e+00> : vector<2x32xf32>
    %26 = vector.multi_reduction <add>, %25, %cst_12 [2] : vector<2x32x128xf32> to vector<2x32xf32>
    %cst_13 = arith.constant 1.280000e+02 : f32
    %27 = vector.broadcast %cst_13 : f32 to vector<2x32xf32>
    %28 = arith.divf %26, %27 : vector<2x32xf32>
    %c0_14 = arith.constant 0 : index
    %c0_15 = arith.constant 0 : index
    %29 = vector.load %arg3[%c0_14, %c0_15] : memref<32x128xf32, #tpu.memory_space<vmem>>, vector<32x128xf32>
    %cst_16 = arith.constant dense<0.000000e+00> : vector<2x128xf32>
    %30 = tpu.matmul %28, %29, %cst_16 {dimension_numbers = #tpu.dot_dimension_numbers<[1], [0], [0], [1], [0, 0, 1, 1], [], []>} : vector<2x32xf32>, vector<32x128xf32>, vector<2x128xf32> -> vector<2x128xf32>
    %c0_17 = arith.constant 0 : index
    %c0_18 = arith.constant 0 : index
    %31 = vector.load %arg4[%c0_17, %c0_18] : memref<1x128xf32, #tpu.memory_space<vmem>>, vector<1x128xf32>
    %32 = vector.broadcast %31 : vector<1x128xf32> to vector<2x128xf32>
    %33 = arith.addf %30, %32 : vector<2x128xf32>
    %cst_19 = arith.constant 0.000000e+00 : f32
    %34 = vector.broadcast %cst_19 : f32 to vector<2x128xf32>
    %35 = arith.maximumf %33, %34 : vector<2x128xf32>
    %c0_20 = arith.constant 0 : index
    %c0_21 = arith.constant 0 : index
    %36 = vector.load %arg5[%c0_20, %c0_21] : memref<128x6xf32, #tpu.memory_space<vmem>>, vector<128x6xf32>
    %cst_22 = arith.constant dense<0.000000e+00> : vector<2x6xf32>
    %37 = tpu.matmul %35, %36, %cst_22 {dimension_numbers = #tpu.dot_dimension_numbers<[1], [0], [0], [1], [0, 0, 1, 1], [], []>} : vector<2x128xf32>, vector<128x6xf32>, vector<2x6xf32> -> vector<2x6xf32>
    %c0_23 = arith.constant 0 : index
    %c0_24 = arith.constant 0 : index
    %38 = vector.load %arg6[%c0_23, %c0_24] : memref<1x6xf32, #tpu.memory_space<vmem>>, vector<1x6xf32>
    %39 = vector.broadcast %38 : vector<1x6xf32> to vector<2x6xf32>
    %40 = arith.addf %37, %39 : vector<2x6xf32>
    %c0_25 = arith.constant 0 : index
    %c0_26 = arith.constant 0 : index
    %41 = vector.load %arg7[%c0_25, %c0_26] : memref<2x6xf32, #tpu.memory_space<vmem>>, vector<2x6xf32>
    tpu.vector_store %arg7[%c0_25, %c0_26], %40 {strides = array<i32>} : memref<2x6xf32, #tpu.memory_space<vmem>>, vector<2x6xf32>,
    return
  }
}

</mosaic_0001>

<llo_original>
// kernel: calibvit_v2_forward.27
$region0: #{calibvit_v2_forward.27}
  #allocation0 [shape = 'u32[]', space=smem, size = 0x4, offset = 0x4, fixed_abs, tag = 'smem constant byte address 0x4 - core index']
  #allocation1 [shape = 'u32[72,128]{1,0:T(1,128)}', space=vmem, size = 0x9000, scoped, tag = 'internal scratch']
  #allocation2 [shape = 'f32[32,128]{1,0:T(8,128)}', space=vmem, size = 0x4000, scoped, tag = 'scratch operand']
  %s0 = inlined_call_operand.vmem [shape: bf16[32,48], index: 0, kind: input, shape index: {}]
  %s1 = inlined_call_operand.vmem [shape: bf16[48,128], index: 1, kind: input, shape index: {}]
  %s2 = inlined_call_operand.vmem [shape: f32[1,128], index: 2, kind: input, shape index: {}]
  %s3 = inlined_call_operand.vmem [shape: bf16[32,128], index: 3, kind: output, shape index: {}]
  %s4 = sld [smem:[#allocation0]]
  $region30: #{calibvit_v2_forward.27} parent=0
    _
  %s6 = ssub.s32 1, %s4
  %s7 = scalar_select 0, %s6, %s4
  // Predicated region
  $region2: #{calibvit_v2_forward.27} parent=0 // pred_check
    _
  $region3: #{calibvit_v2_forward.27} parent=0 // pred_check_branch
    %9 = sbr.rel (0) target = $region5
  $region4: #{calibvit_v2_forward.27} parent=0 // pred_region
    _
  $region5: #{calibvit_v2_forward.27} parent=0 // pred_fallthru
    _
  // Predicated region
  $region6: #{calibvit_v2_forward.27} parent=0 // pred_check
    _
  $region7: #{calibvit_v2_forward.27} parent=0 // pred_check_branch
    %11 = sbr.rel (0) target = $region9
  $region8: #{calibvit_v2_forward.27} parent=0 // pred_region
    _
  $region9: #{calibvit_v2_forward.27} parent=0 // pred_fallthru
    _
  // Predicated region
  $region10: #{calibvit_v2_forward.27} parent=0 // pred_check
    _
  $region11: #{calibvit_v2_forward.27} parent=0 // pred_check_branch
    %13 = sbr.rel (0) target = $region13
  $region12: #{calibvit_v2_forward.27} parent=0 // pred_region
    _
  $region13: #{calibvit_v2_forward.27} parent=0 // pred_fallthru
    _
  %p15 = scmp.eq.s32.totalorder 0, 0
  // Predicated region
  $region14: #{calibvit_v2_forward.27} parent=0 // pred_check
    %p16 = pneg %p15
  $region15: #{calibvit_v2_forward.27} parent=0 // pred_check_branch
    %18 = sbr.rel (%p16) target = $region17
  $region16: #{calibvit_v2_forward.27} parent=0 // pred_region
    %19 = vst [vmem:[#allocation2] sm:$0xff] 0.0
    %20 = vst [vmem:[#allocation2 + $0x8] sm:$0xff] 0.0
    %21 = vst [vmem:[#allocation2 + $0x10] sm:$0xff] 0.0
    %22 = vst [vmem:[#allocation2 + $0x18] sm:$0xff] 0.0
  $region17: #{calibvit_v2_forward.27} parent=0 // pred_fallthru
    _
  %v23 = vld [vmem:[#allocation2] sm:$0xff]
  %v24 = vld [vmem:[#allocation2 + $0x8] sm:$0xff]
  %v25 = vld [vmem:[#allocation2 + $0x10] sm:$0xff]
  %v26 = vld [vmem:[#allocation2 + $0x18] sm:$0xff]
  %v27 = vld [vmem:[%s0] sm:$0xf]
  %v28 = vld [vmem:[%s0 + $0x4] sm:$0xf]
  %v29 = vld [vmem:[%s0 + $0x8] sm:$0xf]
  %v30 = vld [vmem:[%s0 + $0xc] sm:$0xf]
  %v31 = vld [vmem:[%s1] sm:$0xf]
  %v32 = vld [vmem:[%s1 + $0x4] sm:$0xf]
  %v33 = vld [vmem:[%s1 + $0x8] sm:$0xf]
  %v34 = vld [vmem:[%s1 + $0xc] sm:$0xf]
  %v35 = vld [vmem:[%s1 + $0x10] sm:$0xf]
  %v36 = vld [vmem:[%s1 + $0x14] sm:$0xf]
  %v41 = vunpack.c.l.b16 %v27
  %v42 = vunpack.c.l.b16 %v28
  %v43 = vunpack.c.l.b16 %v29
  %v44 = vunpack.c.l.b16 %v30
  %v45 = vpack.c.b16 %v42, %v41
  %v46 = vpack.c.b16 %v44, %v43
  %v53 = vunpack.c.l.b16 %v31
  %v54 = vunpack.c.l.b16 %v32
  %v55 = vunpack.c.l.b16 %v33
  %v56 = vunpack.c.l.b16 %v34
  %v57 = vunpack.c.l.b16 %v35
  %v58 = vunpack.c.l.b16 %v36
  %v59 = vpack.c.b16 %v54, %v53
  %v60 = vpack.c.b16 %v56, %v55
  %v61 = vpack.c.b16 %v58, %v57
  %vm65 = vcmask 392192
  %v67 = vsel %vm65, %v45, 0
  %v70 = vsel %vm65, %v46, 0
  %72 = vmatpush.bf16.msra.mxu0 0
  %73 = vmatpush.bf16.msra.mxu0 0
  %74 = vmatpush.bf16.msra.mxu0 0
  %75 = vmatpush.bf16.msra.mxu0 0
  %76 = vmatpush.bf16.msra.mxu0 0
  %77 = vmatpush.bf16.msra.mxu0 %v61
  %78 = vmatpush.bf16.msra.mxu0 %v60
  %79 = vmatpush.bf16.msra.mxu0 %v59
  %80 = vmatmul.bf16.gmra.mxu0 %v67
  %v81 = vpop.f32.mrf.mxu0
  %v82 = vadd.f32 0.0, %v81
  %v83 = vpop.f32.mrf.mxu0
  %v84 = vadd.f32 0.0, %v83
  %85 = vmatmul.bf16.gmra.mxu0 %v70
  %v86 = vpop.f32.mrf.mxu0
  %v87 = vadd.f32 0.0, %v86
  %v88 = vpop.f32.mrf.mxu0
  %v89 = vadd.f32 0.0, %v88
  %90 = vdwg.mxu0
  %v91 = vadd.f32 %v23, %v82
  %v92 = vadd.f32 %v24, %v84
  %v93 = vadd.f32 %v25, %v87
  %v94 = vadd.f32 %v26, %v89
  %95 = vst [vmem:[#allocation2] sm:$0xff] %v91
  %96 = vst [vmem:[#allocation2 + $0x8] sm:$0xff] %v92
  %97 = vst [vmem:[#allocation2 + $0x10] sm:$0xff] %v93
  %98 = vst [vmem:[#allocation2 + $0x18] sm:$0xff] %v94
  // Predicated region
  $region18: #{calibvit_v2_forward.27} parent=0 // pred_check
    %p99 = pneg %p15
  $region19: #{calibvit_v2_forward.27} parent=0 // pred_check_branch
    %101 = sbr.rel (%p99) target = $region21
  $region20: #{calibvit_v2_forward.27} parent=0 // pred_region
    %v102 = vld [vmem:[#allocation2] sm:$0xff]
    %v103 = vld [vmem:[#allocation2 + $0x8] sm:$0xff]
    %v104 = vld [vmem:[#allocation2 + $0x10] sm:$0xff]
    %v105 = vld [vmem:[#allocation2 + $0x18] sm:$0xff]
    %v106 = vld [vmem:[%s2] sm:$0x1]
    %v108 = vperm.slane %v106, 0
    %v110 = vadd.f32 %v102, %v108
    %v111 = vadd.f32 %v103, %v108
    %v112 = vadd.f32 %v104, %v108
    %v113 = vadd.f32 %v105, %v108
    %v114 = vpack.c.bf16 %v110, %v110
    %v115 = vpack.c.bf16 %v111, %v111
    %v116 = vpack.c.bf16 %v112, %v112
    %v117 = vpack.c.bf16 %v113, %v113
    %118 = vst [vmem:[%s3] sm:$0xf] %v114
    %119 = vst [vmem:[%s3 + $0x4] sm:$0xf] %v115
    %120 = vst [vmem:[%s3 + $0x8] sm:$0xf] %v116
    %121 = vst [vmem:[%s3 + $0xc] sm:$0xf] %v117
  $region21: #{calibvit_v2_forward.27} parent=0 // pred_fallthru
    _
  // Predicated region
  $region22: #{calibvit_v2_forward.27} parent=0 // pred_check
    _
  $region23: #{calibvit_v2_forward.27} parent=0 // pred_check_branch
    %123 = sbr.rel (0) target = $region25
  $region24: #{calibvit_v2_forward.27} parent=0 // pred_region
    _
  $region25: #{calibvit_v2_forward.27} parent=0 // pred_fallthru
    _
  // Predicated region
  $region26: #{calibvit_v2_forward.27} parent=0 // pred_check
    _
  $region27: #{calibvit_v2_forward.27} parent=0 // pred_check_branch
    %125 = sbr.rel (0) target = $region29
  $region28: #{calibvit_v2_forward.27} parent=0 // pred_region
    _
  $region29: #{calibvit_v2_forward.27} parent=0 // pred_fallthru
    _

// kernel: calibvit_v2_forward.28
$region0: #{calibvit_v2_forward.28}
  #allocation0 [shape = 'u32[]', space=smem, size = 0x4, offset = 0x4, fixed_abs, tag = 'smem constant byte address 0x4 - core index']
  #allocation1 [shape = 'u32[72,128]{1,0:T(1,128)}', space=vmem, size = 0x9000, scoped, tag = 'internal scratch']
  %s0 = inlined_call_operand.vmem [shape: bf16[32,128], index: 0, kind: input, shape index: {}]
  %s1 = inlined_call_operand.vmem [shape: f32[1,128], index: 1, kind: input, shape index: {}]
  %s2 = inlined_call_operand.vmem [shape: f32[1,128], index: 2, kind: input, shape index: {}]
  %s3 = inlined_call_operand.vmem [shape: bf16[32,128], index: 3, kind: output, shape index: {}]
  %s4 = sld [smem:[#allocation0]]
  $region22: #{calibvit_v2_forward.28} parent=0
    _
  %s6 = ssub.s32 1, %s4
  %s7 = scalar_select 0, %s6, %s4
  // Predicated region
  $region2: #{calibvit_v2_forward.28} parent=0 // pred_check
    _
  $region3: #{calibvit_v2_forward.28} parent=0 // pred_check_branch
    %9 = sbr.rel (0) target = $region5
  $region4: #{calibvit_v2_forward.28} parent=0 // pred_region
    _
  $region5: #{calibvit_v2_forward.28} parent=0 // pred_fallthru
    _
  // Predicated region
  $region6: #{calibvit_v2_forward.28} parent=0 // pred_check
    _
  $region7: #{calibvit_v2_forward.28} parent=0 // pred_check_branch
    %11 = sbr.rel (0) target = $region9
  $region8: #{calibvit_v2_forward.28} parent=0 // pred_region
    _
  $region9: #{calibvit_v2_forward.28} parent=0 // pred_fallthru
    _
  // Predicated region
  $region10: #{calibvit_v2_forward.28} parent=0 // pred_check
    _
  $region11: #{calibvit_v2_forward.28} parent=0 // pred_check_branch
    %13 = sbr.rel (0) target = $region13
  $region12: #{calibvit_v2_forward.28} parent=0 // pred_region
    _
  $region13: #{calibvit_v2_forward.28} parent=0 // pred_fallthru
    _
  %v14 = vld [vmem:[%s0] sm:$0xf]
  %v15 = vld [vmem:[%s0 + $0x4] sm:$0xf]
  %v16 = vld [vmem:[%s0 + $0x8] sm:$0xf]
  %v17 = vld [vmem:[%s0 + $0xc] sm:$0xf]
  %v18 = vunpack.c.l.bf16 %v14
  %v19 = vunpack.c.l.bf16 %v15
  %v20 = vunpack.c.l.bf16 %v16
  %v21 = vunpack.c.l.bf16 %v17
  %22 = vadd.xlane.f32.xlu0 %v18
  %v23 = vpop.xlane.xlu0 %22
  %24 = vadd.xlane.f32.xlu0 %v19
  %v25 = vpop.xlane.xlu0 %24
  %26 = vadd.xlane.f32.xlu0 %v20
  %v27 = vpop.xlane.xlu0 %26
  %28 = vadd.xlane.f32.xlu0 %v21
  %v29 = vpop.xlane.xlu0 %28
  %v30 = vrcp.pop 128.0
  %v31 = vmul.f32 128.0, %v30
  %v32 = vsub.f32 1.0, %v31
  %v33 = vmul.f32 %v30, %v32
  %v34 = vadd.f32 %v30, %v33
  %vm35 = vweird.f32 %v30
  %v36 = vsel %vm35, %v30, %v34
  %v37 = vmul.f32 %v23, %v36
  %v38 = vmul.f32 %v25, %v36
  %v39 = vmul.f32 %v27, %v36
  %v40 = vmul.f32 %v29, %v36
  %v41 = vsub.f32 %v18, %v37
  %v42 = vsub.f32 %v19, %v38
  %v43 = vsub.f32 %v20, %v39
  %v44 = vsub.f32 %v21, %v40
  %v45 = vmul.f32 %v41, %v41
  %v46 = vmul.f32 %v42, %v42
  %v47 = vmul.f32 %v43, %v43
  %v48 = vmul.f32 %v44, %v44
  %49 = vadd.xlane.f32.xlu0 %v45
  %v50 = vpop.xlane.xlu0 %49
  %51 = vadd.xlane.f32.xlu0 %v46
  %v52 = vpop.xlane.xlu0 %51
  %53 = vadd.xlane.f32.xlu0 %v47
  %v54 = vpop.xlane.xlu0 %53
  %55 = vadd.xlane.f32.xlu0 %v48
  %v56 = vpop.xlane.xlu0 %55
  %v57 = vmul.f32 %v50, %v36
  %v58 = vmul.f32 %v52, %v36
  %v59 = vmul.f32 %v54, %v36
  %v60 = vmul.f32 %v56, %v36
  %v61 = vadd.f32 %v57, 1e-05
  %v62 = vadd.f32 %v58, 1e-05
  %v63 = vadd.f32 %v59, 1e-05
  %v64 = vadd.f32 %v60, 1e-05
  %v65 = vrsqrt.pop %v61
  %v66 = vmul.f32 %v65, %v61
  %v67 = vmul.f32 %v66, %v65
  %v68 = vmul.f32 0.5, %v67
  %v69 = vsub.f32 1.5, %v68
  %v70 = vmul.f32 %v65, %v69
  %vm71 = vweird.f32 %v61
  %vm72 = vweird.f32 %v65
  %vm73 = vmor %vm71, %vm72
  %v74 = vsel %vm73, %v65, %v70
  %v75 = vrsqrt.pop %v62
  %v76 = vmul.f32 %v75, %v62
  %v77 = vmul.f32 %v76, %v75
  %v78 = vmul.f32 0.5, %v77
  %v79 = vsub.f32 1.5, %v78
  %v80 = vmul.f32 %v75, %v79
  %vm81 = vweird.f32 %v62
  %vm82 = vweird.f32 %v75
  %vm83 = vmor %vm81, %vm82
  %v84 = vsel %vm83, %v75, %v80
  %v85 = vrsqrt.pop %v63
  %v86 = vmul.f32 %v85, %v63
  %v87 = vmul.f32 %v86, %v85
  %v88 = vmul.f32 0.5, %v87
  %v89 = vsub.f32 1.5, %v88
  %v90 = vmul.f32 %v85, %v89
  %vm91 = vweird.f32 %v63
  %vm92 = vweird.f32 %v85
  %vm93 = vmor %vm91, %vm92
  %v94 = vsel %vm93, %v85, %v90
  %v95 = vrsqrt.pop %v64
  %v96 = vmul.f32 %v95, %v64
  %v97 = vmul.f32 %v96, %v95
  %v98 = vmul.f32 0.5, %v97
  %v99 = vsub.f32 1.5, %v98
  %v100 = vmul.f32 %v95, %v99
  %vm101 = vweird.f32 %v64
  %vm102 = vweird.f32 %v95
  %vm103 = vmor %vm101, %vm102
  %v104 = vsel %vm103, %v95, %v100
  %v105 = vmul.f32 %v41, %v74
  %v106 = vmul.f32 %v42, %v84
  %v107 = vmul.f32 %v43, %v94
  %v108 = vmul.f32 %v44, %v104
  %v109 = vld [vmem:[%s1] sm:$0x1]
  %v111 = vperm.slane %v109, 0
  %v113 = vmul.f32 %v105, %v111
  %v114 = vmul.f32 %v106, %v111
  %v115 = vmul.f32 %v107, %v111
  %v116 = vmul.f32 %v108, %v111
  %v117 = vld [vmem:[%s2] sm:$0x1]
  %v119 = vperm.slane %v117, 0
  %v121 = vadd.f32 %v113, %v119
  %v122 = vadd.f32 %v114, %v119
  %v123 = vadd.f32 %v115, %v119
  %v124 = vadd.f32 %v116, %v119
  %v125 = vpack.c.bf16 %v121, %v121
  %v126 = vpack.c.bf16 %v122, %v122
  %v127 = vpack.c.bf16 %v123, %v123
  %v128 = vpack.c.bf16 %v124, %v124
  %129 = vst [vmem:[%s3] sm:$0xf] %v125
  %130 = vst [vmem:[%s3 + $0x4] sm:$0xf] %v126
  %131 = vst [vmem:[%s3 + $0x8] sm:$0xf] %v127
  %132 = vst [vmem:[%s3 + $0xc] sm:$0xf] %v128
  // Predicated region
  $region14: #{calibvit_v2_forward.28} parent=0 // pred_check
    _
  $region15: #{calibvit_v2_forward.28} parent=0 // pred_check_branch
    %134 = sbr.rel (0) target = $region17
  $region16: #{calibvit_v2_forward.28} parent=0 // pred_region
    _
  $region17: #{calibvit_v2_forward.28} parent=0 // pred_fallthru
    _
  // Predicated region
  $region18: #{calibvit_v2_forward.28} parent=0 // pred_check
    _
  $region19: #{calibvit_v2_forward.28} parent=0 // pred_check_branch
    %136 = sbr.rel (0) target = $region21
  $region20: #{calibvit_v2_forward.28} parent=0 // pred_region
    _
  $region21: #{calibvit_v2_forward.28} parent=0 // pred_fallthru
    _

// kernel: calibvit_v2_forward.29
$region0: #{calibvit_v2_forward.29}
  #allocation0 [shape = 'u32[]', space=smem, size = 0x4, offset = 0x4, fixed_abs, tag = 'smem constant byte address 0x4 - core index']
  #allocation1 [shape = 'u32[72,128]{1,0:T(1,128)}', space=vmem, size = 0x9000, scoped, tag = 'internal scratch']
  #allocation2 [shape = 'bf16[32,128]{1,0:T(8,128)(2,1)}', space=vmem, size = 0x2000, scoped, tag = 'scratch operand']
  %s0 = inlined_call_operand.vmem [shape: bf16[32,128], index: 0, kind: input, shape index: {}]
  %s1 = inlined_call_operand.vmem [shape: f32[1,128], index: 1, kind: input, shape index: {}]
  %s2 = inlined_call_operand.vmem [shape: f32[1,128], index: 2, kind: input, shape index: {}]
  %s3 = inlined_call_operand.vmem [shape: bf16[128,384], index: 3, kind: input, shape index: {}]
  %s4 = inlined_call_operand.vmem [shape: f32[1,384], index: 4, kind: input, shape index: {}]
  %s5 = inlined_call_operand.vmem [shape: bf16[32,384], index: 5, kind: output, shape index: {}]
  %s6 = sld [smem:[#allocation0]]
  $region34: #{calibvit_v2_forward.29} parent=0
    _
  %s8 = ssub.s32 1, %s6
  %s9 = scalar_select 0, %s8, %s6
  // Predicated region
  $region2: #{calibvit_v2_forward.29} parent=0 // pred_check
    _
  $region3: #{calibvit_v2_forward.29} parent=0 // pred_check_branch
    %11 = sbr.rel (0) target = $region5
  $region4: #{calibvit_v2_forward.29} parent=0 // pred_region
    _
  $region5: #{calibvit_v2_forward.29} parent=0 // pred_fallthru
    _
  // Predicated region
  $region6: #{calibvit_v2_forward.29} parent=0 // pred_check
    _
  $region7: #{calibvit_v2_forward.29} parent=0 // pred_check_branch
    %13 = sbr.rel (0) target = $region9
  $region8: #{calibvit_v2_forward.29} parent=0 // pred_region
    _
  $region9: #{calibvit_v2_forward.29} parent=0 // pred_fallthru
    _
  // Predicated region
  $region10: #{calibvit_v2_forward.29} parent=0 // pred_check
    _
  $region11: #{calibvit_v2_forward.29} parent=0 // pred_check_branch
    %15 = sbr.rel (0) target = $region13
  $region12: #{calibvit_v2_forward.29} parent=0 // pred_region
    _
  $region13: #{calibvit_v2_forward.29} parent=0 // pred_fallthru
    _
  // Predicated region
  $region14: #{calibvit_v2_forward.29} parent=0 // pred_check
    _
  $region15: #{calibvit_v2_forward.29} parent=0 // pred_check_branch
    %17 = sbr.rel (0) target = $region17
  $region16: #{calibvit_v2_forward.29} parent=0 // pred_region
    _
  $region17: #{calibvit_v2_forward.29} parent=0 // pred_fallthru
    _
  // Predicated region
  $region18: #{calibvit_v2_forward.29} parent=0 // pred_check
    _
  $region19: #{calibvit_v2_forward.29} parent=0 // pred_check_branch
    %19 = sbr.rel (0) target = $region21
  $region20: #{calibvit_v2_forward.29} parent=0 // pred_region
    _
  $region21: #{calibvit_v2_forward.29} parent=0 // pred_fallthru
    _
  %p20 = scmp.eq.s32.totalorder 0, 0
  // Predicated region
  $region22: #{calibvit_v2_forward.29} parent=0 // pred_check
    %p21 = pneg %p20
  $region23: #{calibvit_v2_forward.29} parent=0 // pred_check_branch
    %23 = sbr.rel (%p21) target = $region25
  $region24: #{calibvit_v2_forward.29} parent=0 // pred_region
    %v24 = vld [vmem:[%s0] sm:$0xf]
    %v25 = vld [vmem:[%s0 + $0x4] sm:$0xf]
    %v26 = vld [vmem:[%s0 + $0x8] sm:$0xf]
    %v27 = vld [vmem:[%s0 + $0xc] sm:$0xf]
    %v28 = vunpack.c.l.bf16 %v24
    %v29 = vunpack.c.l.bf16 %v25
    %v30 = vunpack.c.l.bf16 %v26
    %v31 = vunpack.c.l.bf16 %v27
    %32 = vadd.xlane.f32.xlu0 %v28
    %v33 = vpop.xlane.xlu0 %32
    %34 = vadd.xlane.f32.xlu0 %v29
    %v35 = vpop.xlane.xlu0 %34
    %36 = vadd.xlane.f32.xlu0 %v30
    %v37 = vpop.xlane.xlu0 %36
    %38 = vadd.xlane.f32.xlu0 %v31
    %v39 = vpop.xlane.xlu0 %38
    %v40 = vrcp.pop 128.0
    %v41 = vmul.f32 128.0, %v40
    %v42 = vsub.f32 1.0, %v41
    %v43 = vmul.f32 %v40, %v42
    %v44 = vadd.f32 %v40, %v43
    %vm45 = vweird.f32 %v40
    %v46 = vsel %vm45, %v40, %v44
    %v47 = vmul.f32 %v33, %v46
    %v48 = vmul.f32 %v35, %v46
    %v49 = vmul.f32 %v37, %v46
    %v50 = vmul.f32 %v39, %v46
    %v51 = vsub.f32 %v28, %v47
    %v52 = vsub.f32 %v29, %v48
    %v53 = vsub.f32 %v30, %v49
    %v54 = vsub.f32 %v31, %v50
    %v55 = vmul.f32 %v51, %v51
    %v56 = vmul.f32 %v52, %v52
    %v57 = vmul.f32 %v53, %v53
    %v58 = vmul.f32 %v54, %v54
    %59 = vadd.xlane.f32.xlu0 %v55
    %v60 = vpop.xlane.xlu0 %59
    %61 = vadd.xlane.f32.xlu0 %v56
    %v62 = vpop.xlane.xlu0 %61
    %63 = vadd.xlane.f32.xlu0 %v57
    %v64 = vpop.xlane.xlu0 %63
    %65 = vadd.xlane.f32.xlu0 %v58
    %v66 = vpop.xlane.xlu0 %65
    %v67 = vmul.f32 %v60, %v46
    %v68 = vmul.f32 %v62, %v46
    %v69 = vmul.f32 %v64, %v46
    %v70 = vmul.f32 %v66, %v46
    %v71 = vadd.f32 %v67, 1e-05
    %v72 = vadd.f32 %v68, 1e-05
    %v73 = vadd.f32 %v69, 1e-05
    %v74 = vadd.f32 %v70, 1e-05
    %v75 = vrsqrt.pop %v71
    %v76 = vmul.f32 %v75, %v71
    %v77 = vmul.f32 %v76, %v75
    %v78 = vmul.f32 0.5, %v77
    %v79 = vsub.f32 1.5, %v78
    %v80 = vmul.f32 %v75, %v79
    %vm81 = vweird.f32 %v71
    %vm82 = vweird.f32 %v75
    %vm83 = vmor %vm81, %vm82
    %v84 = vsel %vm83, %v75, %v80
    %v85 = vrsqrt.pop %v72
    %v86 = vmul.f32 %v85, %v72
    %v87 = vmul.f32 %v86, %v85
    %v88 = vmul.f32 0.5, %v87
    %v89 = vsub.f32 1.5, %v88
    %v90 = vmul.f32 %v85, %v89
    %vm91 = vweird.f32 %v72
    %vm92 = vweird.f32 %v85
    %vm93 = vmor %vm91, %vm92
    %v94 = vsel %vm93, %v85, %v90
    %v95 = vrsqrt.pop %v73
    %v96 = vmul.f32 %v95, %v73
    %v97 = vmul.f32 %v96, %v95
    %v98 = vmul.f32 0.5, %v97
    %v99 = vsub.f32 1.5, %v98
    %v100 = vmul.f32 %v95, %v99
    %vm101 = vweird.f32 %v73
    %vm102 = vweird.f32 %v95
    %vm103 = vmor %vm101, %vm102
    %v104 = vsel %vm103, %v95, %v100
    %v105 = vrsqrt.pop %v74
    %v106 = vmul.f32 %v105, %v74
    %v107 = vmul.f32 %v106, %v105
    %v108 = vmul.f32 0.5, %v107
    %v109 = vsub.f32 1.5, %v108
    %v110 = vmul.f32 %v105, %v109
    %vm111 = vweird.f32 %v74
    %vm112 = vweird.f32 %v105
    %vm113 = vmor %vm111, %vm112
    %v114 = vsel %vm113, %v105, %v110
    %v115 = vmul.f32 %v51, %v84
    %v116 = vmul.f32 %v52, %v94
    %v117 = vmul.f32 %v53, %v104
    %v118 = vmul.f32 %v54, %v114
    %v119 = vld [vmem:[%s1] sm:$0x1]
    %v121 = vperm.slane %v119, 0
    %v123 = vmul.f32 %v115, %v121
    %v124 = vmul.f32 %v116, %v121
    %v125 = vmul.f32 %v117, %v121
    %v126 = vmul.f32 %v118, %v121
    %v127 = vld [vmem:[%s2] sm:$0x1]
    %v129 = vperm.slane %v127, 0
    %v131 = vadd.f32 %v123, %v129
    %v132 = vadd.f32 %v124, %v129
    %v133 = vadd.f32 %v125, %v129
    %v134 = vadd.f32 %v126, %v129
    %v135 = vpack.c.bf16 %v131, %v131
    %v136 = vpack.c.bf16 %v132, %v132
    %v137 = vpack.c.bf16 %v133, %v133
    %v138 = vpack.c.bf16 %v134, %v134
    %139 = vst [vmem:[#allocation2] sm:$0xf] %v135
    %140 = vst [vmem:[#allocation2 + $0x4] sm:$0xf] %v136
    %141 = vst [vmem:[#allocation2 + $0x8] sm:$0xf] %v137
    %142 = vst [vmem:[#allocation2 + $0xc] sm:$0xf] %v138
  $region25: #{calibvit_v2_forward.29} parent=0 // pred_fallthru
    _
  %v143 = vld [vmem:[#allocation2] sm:$0xf]
  %v144 = vld [vmem:[#allocation2 + $0x4] sm:$0xf]
  %v145 = vld [vmem:[#allocation2 + $0x8] sm:$0xf]
  %v146 = vld [vmem:[#allocation2 + $0xc] sm:$0xf]
  %v147 = vld [vmem:[%s3] sm:$0xff]
  %v148 = vld [vmem:[%s3 + $0x8] sm:$0xf]
  %v149 = vld [vmem:[%s3 + $0xc] sm:$0xff]
  %v150 = vld [vmem:[%s3 + $0x14] sm:$0xf]
  %v151 = vld [vmem:[%s3 + $0x18] sm:$0xff]
  %v152 = vld [vmem:[%s3 + $0x20] sm:$0xf]
  %v153 = vld [vmem:[%s3 + $0x24] sm:$0xff]
  %v154 = vld [vmem:[%s3 + $0x2c] sm:$0xf]
  %v155 = vld [vmem:[%s3 + $0x30] sm:$0xff]
  %v156 = vld [vmem:[%s3 + $0x38] sm:$0xf]
  %v157 = vld [vmem:[%s3 + $0x3c] sm:$0xff]
  %v158 = vld [vmem:[%s3 + $0x44] sm:$0xf]
  %v159 = vld [vmem:[%s3 + $0x48] sm:$0xff]
  %v160 = vld [vmem:[%s3 + $0x50] sm:$0xf]
  %v161 = vld [vmem:[%s3 + $0x54] sm:$0xff]
  %v162 = vld [vmem:[%s3 + $0x5c] sm:$0xf]
  %v163 = vld [vmem:[%s3 + $0x60] sm:$0xff]
  %v164 = vld [vmem:[%s3 + $0x68] sm:$0xf]
  %v165 = vld [vmem:[%s3 + $0x6c] sm:$0xff]
  %v166 = vld [vmem:[%s3 + $0x74] sm:$0xf]
  %v167 = vld [vmem:[%s3 + $0x78] sm:$0xff]
  %v168 = vld [vmem:[%s3 + $0x80] sm:$0xf]
  %v169 = vld [vmem:[%s3 + $0x84] sm:$0xff]
  %v170 = vld [vmem:[%s3 + $0x8c] sm:$0xf]
  %v171 = vld [vmem:[%s3 + $0x90] sm:$0xff]
  %v172 = vld [vmem:[%s3 + $0x98] sm:$0xf]
  %v173 = vld [vmem:[%s3 + $0x9c] sm:$0xff]
  %v174 = vld [vmem:[%s3 + $0xa4] sm:$0xf]
  %v175 = vld [vmem:[%s3 + $0xa8] sm:$0xff]
  %v176 = vld [vmem:[%s3 + $0xb0] sm:$0xf]
  %v177 = vld [vmem:[%s3 + $0xb4] sm:$0xff]
  %v178 = vld [vmem:[%s3 + $0xbc] sm:$0xf]
  %v179 = vld [vmem:[%s4] sm:$0x7]
  %v181 = vperm.slane %v179, 0
  %v182 = vperm.slane %v179, 1
  %v183 = vperm.slane %v179, 2
  %v191 = vunpack.c.l.b16 %v143
  %v192 = vunpack.c.l.b16 %v144
  %v193 = vunpack.c.l.b16 %v145
  %v194 = vunpack.c.l.b16 %v146
  %v195 = vpack.c.b16 %v192, %v191
  %v196 = vpack.c.b16 %v194, %v193
  %v231 = vunpack.c.l.b16 %v147
  %v232 = vunpack.c.h.b16 %v147
  %v233 = vunpack.c.l.b16 %v148
  %v234 = vunpack.c.l.b16 %v149
  %v235 = vunpack.c.h.b16 %v149
  %v236 = vunpack.c.l.b16 %v150
  %v237 = vunpack.c.l.b16 %v151
  %v238 = vunpack.c.h.b16 %v151
  %v239 = vunpack.c.l.b16 %v152
  %v240 = vunpack.c.l.b16 %v153
  %v241 = vunpack.c.h.b16 %v153
  %v242 = vunpack.c.l.b16 %v154
  %v243 = vunpack.c.l.b16 %v155
  %v244 = vunpack.c.h.b16 %v155
  %v245 = vunpack.c.l.b16 %v156
  %v246 = vunpack.c.l.b16 %v157
  %v247 = vunpack.c.h.b16 %v157
  %v248 = vunpack.c.l.b16 %v158
  %v249 = vunpack.c.l.b16 %v159
  %v250 = vunpack.c.h.b16 %v159
  %v251 = vunpack.c.l.b16 %v160
  %v252 = vunpack.c.l.b16 %v161
  %v253 = vunpack.c.h.b16 %v161
  %v254 = vunpack.c.l.b16 %v162
  %v255 = vunpack.c.l.b16 %v163
  %v256 = vunpack.c.h.b16 %v163
  %v257 = vunpack.c.l.b16 %v164
  %v258 = vunpack.c.l.b16 %v165
  %v259 = vunpack.c.h.b16 %v165
  %v260 = vunpack.c.l.b16 %v166
  %v261 = vunpack.c.l.b16 %v167
  %v262 = vunpack.c.h.b16 %v167
  %v263 = vunpack.c.l.b16 %v168
  %v264 = vunpack.c.l.b16 %v169
  %v265 = vunpack.c.h.b16 %v169
  %v266 = vunpack.c.l.b16 %v170
  %v267 = vunpack.c.l.b16 %v171
  %v268 = vunpack.c.h.b16 %v171
  %v269 = vunpack.c.l.b16 %v172
  %v270 = vunpack.c.l.b16 %v173
  %v271 = vunpack.c.h.b16 %v173
  %v272 = vunpack.c.l.b16 %v174
  %v273 = vunpack.c.l.b16 %v175
  %v274 = vunpack.c.h.b16 %v175
  %v275 = vunpack.c.l.b16 %v176
  %v276 = vunpack.c.l.b16 %v177
  %v277 = vunpack.c.h.b16 %v177
  %v278 = vunpack.c.l.b16 %v178
  %v279 = vpack.c.b16 %v234, %v231
  %v280 = vpack.c.b16 %v235, %v232
  %v281 = vpack.c.b16 %v236, %v233
  %v282 = vpack.c.b16 %v240, %v237
  %v283 = vpack.c.b16 %v241, %v238
  %v284 = vpack.c.b16 %v242, %v239
  %v285 = vpack.c.b16 %v246, %v243
  %v286 = vpack.c.b16 %v247, %v244
  %v287 = vpack.c.b16 %v248, %v245
  %v288 = vpack.c.b16 %v252, %v249
  %v289 = vpack.c.b16 %v253, %v250
  %v290 = vpack.c.b16 %v254, %v251
  %v291 = vpack.c.b16 %v258, %v255
  %v292 = vpack.c.b16 %v259, %v256
  %v293 = vpack.c.b16 %v260, %v257
  %v294 = vpack.c.b16 %v264, %v261
  %v295 = vpack.c.b16 %v265, %v262
  %v296 = vpack.c.b16 %v266, %v263
  %v297 = vpack.c.b16 %v270, %v267
  %v298 = vpack.c.b16 %v271, %v268
  %v299 = vpack.c.b16 %v272, %v269
  %v300 = vpack.c.b16 %v276, %v273
  %v301 = vpack.c.b16 %v277, %v274
  %v302 = vpack.c.b16 %v278, %v275
  %327 = vmatpush.bf16.msra.mxu0 %v300
  %328 = vmatpush.bf16.msra.mxu0 %v297
  %329 = vmatpush.bf16.msra.mxu0 %v294
  %330 = vmatpush.bf16.msra.mxu0 %v291
  %331 = vmatpush.bf16.msra.mxu0 %v288
  %332 = vmatpush.bf16.msra.mxu0 %v285
  %333 = vmatpush.bf16.msra.mxu0 %v282
  %334 = vmatpush.bf16.msra.mxu0 %v279
  %335 = vmatmul.bf16.gmra.mxu0 %v195
  %v336 = vpop.f32.mrf.mxu0
  %v337 = vadd.f32 %v181, %v336
  %v338 = vpop.f32.mrf.mxu0
  %v339 = vadd.f32 %v181, %v338
  %340 = vmatmul.bf16.gmra.mxu0 %v196
  %v341 = vpop.f32.mrf.mxu0
  %v342 = vadd.f32 %v181, %v341
  %v343 = vpop.f32.mrf.mxu0
  %v344 = vadd.f32 %v181, %v343
  %345 = vdwg.mxu0
  %346 = vmatpush.bf16.msra.mxu0 %v301
  %347 = vmatpush.bf16.msra.mxu0 %v298
  %348 = vmatpush.bf16.msra.mxu0 %v295
  %349 = vmatpush.bf16.msra.mxu0 %v292
  %350 = vmatpush.bf16.msra.mxu0 %v289
  %351 = vmatpush.bf16.msra.mxu0 %v286
  %352 = vmatpush.bf16.msra.mxu0 %v283
  %353 = vmatpush.bf16.msra.mxu0 %v280
  %354 = vmatmul.bf16.gmra.mxu0 %v195
  %v355 = vpop.f32.mrf.mxu0
  %v356 = vadd.f32 %v182, %v355
  %v357 = vpop.f32.mrf.mxu0
  %v358 = vadd.f32 %v182, %v357
  %359 = vmatmul.bf16.gmra.mxu0 %v196
  %v360 = vpop.f32.mrf.mxu0
  %v361 = vadd.f32 %v182, %v360
  %v362 = vpop.f32.mrf.mxu0
  %v363 = vadd.f32 %v182, %v362
  %364 = vdwg.mxu0
  %365 = vmatpush.bf16.msra.mxu0 %v302
  %366 = vmatpush.bf16.msra.mxu0 %v299
  %367 = vmatpush.bf16.msra.mxu0 %v296
  %368 = vmatpush.bf16.msra.mxu0 %v293
  %369 = vmatpush.bf16.msra.mxu0 %v290
  %370 = vmatpush.bf16.msra.mxu0 %v287
  %371 = vmatpush.bf16.msra.mxu0 %v284
  %372 = vmatpush.bf16.msra.mxu0 %v281
  %373 = vmatmul.bf16.gmra.mxu0 %v195
  %v374 = vpop.f32.mrf.mxu0
  %v375 = vadd.f32 %v183, %v374
  %v376 = vpop.f32.mrf.mxu0
  %v377 = vadd.f32 %v183, %v376
  %378 = vmatmul.bf16.gmra.mxu0 %v196
  %v379 = vpop.f32.mrf.mxu0
  %v380 = vadd.f32 %v183, %v379
  %v381 = vpop.f32.mrf.mxu0
  %v382 = vadd.f32 %v183, %v381
  %383 = vdwg.mxu0
  %v384 = vpack.c.bf16 %v356, %v337
  %v385 = vpack.c.bf16 %v375, %v375
  %v386 = vpack.c.bf16 %v358, %v339
  %v387 = vpack.c.bf16 %v377, %v377
  %v388 = vpack.c.bf16 %v361, %v342
  %v389 = vpack.c.bf16 %v380, %v380
  %v390 = vpack.c.bf16 %v363, %v344
  %v391 = vpack.c.bf16 %v382, %v382
  %392 = vst [vmem:[%s5] sm:$0xff] %v384
  %393 = vst [vmem:[%s5 + $0x8] sm:$0xf] %v385
  %394 = vst [vmem:[%s5 + $0xc] sm:$0xff] %v386
  %395 = vst [vmem:[%s5 + $0x14] sm:$0xf] %v387
  %396 = vst [vmem:[%s5 + $0x18] sm:$0xff] %v388
  %397 = vst [vmem:[%s5 + $0x20] sm:$0xf] %v389
  %398 = vst [vmem:[%s5 + $0x24] sm:$0xff] %v390
  %399 = vst [vmem:[%s5 + $0x2c] sm:$0xf] %v391
  // Predicated region
  $region26: #{calibvit_v2_forward.29} parent=0 // pred_check
    _
  $region27: #{calibvit_v2_forward.29} parent=0 // pred_check_branch
    %401 = sbr.rel (0) target = $region29
  $region28: #{calibvit_v2_forward.29} parent=0 // pred_region
    _
  $region29: #{calibvit_v2_forward.29} parent=0 // pred_fallthru
    _
  // Predicated region
  $region30: #{calibvit_v2_forward.29} parent=0 // pred_check
    _
  $region31: #{calibvit_v2_forward.29} parent=0 // pred_check_branch
    %403 = sbr.rel (0) target = $region33
  $region32: #{calibvit_v2_forward.29} parent=0 // pred_region
    _
  $region33: #{calibvit_v2_forward.29} parent=0 // pred_fallthru
    _

// kernel: calibvit_v2_forward.30
$region0: #{calibvit_v2_forward.30}
  #allocation0 [shape = 'u32[]', space=smem, size = 0x4, offset = 0x4, fixed_abs, tag = 'smem constant byte address 0x4 - core index']
  #allocation1 [shape = 'u32[72,128]{1,0:T(1,128)}', space=vmem, size = 0x9000, scoped, tag = 'internal scratch']
  #allocation2 [shape = 'f32[16,4]{1,0:T(8,128)}', space=vmem, size = 0x2000, scoped, tag = 'scratch operand']
  #allocation3 [shape = 'f32[16,4]{1,0:T(8,128)}', space=vmem, size = 0x2000, scoped, tag = 'scratch operand']
  #allocation4 [shape = 'f32[16,128]{1,0:T(8,128)}', space=vmem, size = 0x2000, scoped, tag = 'scratch operand']
  %s0 = inlined_call_operand.vmem [shape: bf16[2,16,384], index: 0, kind: input, shape index: {}, may-alias: {0,1,2}]
  %s1 = inlined_call_operand.vmem [shape: bf16[2,16,384], index: 1, kind: input, shape index: {}, may-alias: {0,1,2}]
  %s2 = inlined_call_operand.vmem [shape: bf16[2,16,384], index: 2, kind: input, shape index: {}, may-alias: {0,1,2}]
  %s3 = inlined_call_operand.vmem [shape: bf16[2,16,128], index: 3, kind: output, shape index: {}]
  %s4 = sld [smem:[#allocation0]]
  $region188: #{calibvit_v2_forward.30} parent=0
    _
  %s6 = ssub.s32 1, %s4
  %s7 = scalar_select 0, %s6, %s4
  $region1: #{calibvit_v2_forward.30} parent=0
    #allocation5 [shape = 'u8[8192]{0}', space=vmem, size = 0x2000, scoped, tag = 'input window, operand 0']
    #allocation6 [shape = 'u8[8192]{0}', space=vmem, size = 0x2000, scoped, tag = 'input window, operand 1']
    #allocation7 [shape = 'u8[8192]{0}', space=vmem, size = 0x2000, scoped, tag = 'input window, operand 2']
    loop: start=0, step=1, limit=4
    $region2: #{calibvit_v2_forward.30} parent=1 // loop_pre_header
      _
    $region3: #{calibvit_v2_forward.30} parent=1 // loop_header
      %s9 = sphi 0, %s13
      %p10 = scmp.ge.s32.totalorder %s9, 4
      %s16 = sphi 0, %s35
      %s17 = sphi 0, %s31
      %s18 = sphi 0, %s27
      %s19 = sphi 0, %s16
      %s20 = sphi 0, %s17
      %s21 = sphi 0, %s18
      %s22 = sphi 0, %s19
      %s23 = sphi 0, %s20
      %s24 = sphi 0, %s21
      %s40 = sphi 0, %s42
      %s43 = sphi 0, %s40
      %s44 = sphi 0, %s43
      %s60 = sphi 0, %s44
      %s68 = sphi 0, %s70
      %s71 = sphi 0, %s68
      %s72 = sphi 0, %s71
      %s88 = sphi 0, %s72
      %s96 = sphi 0, %s98
      %s99 = sphi 0, %s96
      %s100 = sphi 0, %s99
      %s116 = sphi 0, %s100
      %s124 = sphi 0, %s126
      %s127 = sphi 0, %s124
      %s128 = sphi 0, %s127
      %s144 = sphi 0, %s128
    $region4: #{calibvit_v2_forward.30} parent=1 // loop_header_branch
      %12 = sbr.rel (%p10) target = $region8
    $region5: #{calibvit_v2_forward.30} parent=1 // loop_body
      %s14 = ssub.s32 %s9, 1
      %s15 = ssub.s32 %s9, 2
      %s25 = sadd.s32 1, %s18
      %p26 = scmp.ge.s32.totalorder %s25, 1
      %s27 = scalar_select %p26, 0, %s25
      %s28 = sadd.s32 1, %s17
      %s29 = scalar_select %p26, %s28, %s17
      %p30 = scmp.ge.s32.totalorder %s29, 1
      %s31 = scalar_select %p30, 0, %s29
      %s32 = sadd.s32 1, %s16
      %s33 = scalar_select %p30, %s32, %s16
      %p34 = scmp.ge.s32.totalorder %s33, 2
      %s35 = scalar_select %p34, 0, %s33
      %s36 = ssub.s32 %s16, %s35
      %s37 = ssub.s32 %s17, %s31
      %s38 = sor.u32 %s36, %s37
      %p39 = scmp.eq.s32.totalorder %s38, 0
      %s41 = sadd.s32 %s40, 1
      %s42 = scalar_select %p39, %s40, %s41
      %p45 = pneg %p39
      %p46 = scmp.eq.s32.totalorder %s9, 1
      %p47 = por %p45, %p46
      %p48 = scmp.ne.s32.totalorder %s40, %s43
      %p49 = scmp.eq.s32.totalorder %s9, 0
      %p50 = por %p48, %p49
      %p51 = scmp.ne.s32.totalorder %s40, %s43
      %p52 = scmp.eq.s32.totalorder %s14, 1
      %p53 = por %p51, %p52
      %p54 = scmp.ne.s32.totalorder %s43, %s44
      %p55 = scmp.eq.s32.totalorder %s14, 0
      %p56 = por %p54, %p55
      %p57 = scmp.ne.s32.totalorder %s43, %s44
      %p58 = scmp.eq.s32.totalorder %s15, 1
      %p59 = por %p57, %p58
      %p61 = scmp.ne.s32.totalorder %s44, %s60
      %p62 = scmp.eq.s32.totalorder %s15, 0
      %p63 = por %p61, %p62
      %s64 = ssub.s32 %s16, %s35
      %s65 = ssub.s32 %s18, %s27
      %s66 = sor.u32 %s64, %s65
      %p67 = scmp.eq.s32.totalorder %s66, 0
      %s69 = sadd.s32 %s68, 1
      %s70 = scalar_select %p67, %s68, %s69
      %p73 = pneg %p67
      %p74 = scmp.eq.s32.totalorder %s9, 1
      %p75 = por %p73, %p74
      %p76 = scmp.ne.s32.totalorder %s68, %s71
      %p77 = scmp.eq.s32.totalorder %s9, 0
      %p78 = por %p76, %p77
      %p79 = scmp.ne.s32.totalorder %s68, %s71
      %p80 = scmp.eq.s32.totalorder %s14, 1
      %p81 = por %p79, %p80
      %p82 = scmp.ne.s32.totalorder %s71, %s72
      %p83 = scmp.eq.s32.totalorder %s14, 0
      %p84 = por %p82, %p83
      %p85 = scmp.ne.s32.totalorder %s71, %s72
      %p86 = scmp.eq.s32.totalorder %s15, 1
      %p87 = por %p85, %p86
      %p89 = scmp.ne.s32.totalorder %s72, %s88
      %p90 = scmp.eq.s32.totalorder %s15, 0
      %p91 = por %p89, %p90
      %s92 = ssub.s32 %s16, %s35
      %s93 = ssub.s32 %s18, %s27
      %s94 = sor.u32 %s92, %s93
      %p95 = scmp.eq.s32.totalorder %s94, 0
      %s97 = sadd.s32 %s96, 1
      %s98 = scalar_select %p95, %s96, %s97
      %p101 = pneg %p95
      %p102 = scmp.eq.s32.totalorder %s9, 1
      %p103 = por %p101, %p102
      %p104 = scmp.ne.s32.totalorder %s96, %s99
      %p105 = scmp.eq.s32.totalorder %s9, 0
      %p106 = por %p104, %p105
      %p107 = scmp.ne.s32.totalorder %s96, %s99
      %p108 = scmp.eq.s32.totalorder %s14, 1
      %p109 = por %p107, %p108
      %p110 = scmp.ne.s32.totalorder %s99, %s100
      %p111 = scmp.eq.s32.totalorder %s14, 0
      %p112 = por %p110, %p111
      %p113 = scmp.ne.s32.totalorder %s99, %s100
      %p114 = scmp.eq.s32.totalorder %s15, 1
      %p115 = por %p113, %p114
      %p117 = scmp.ne.s32.totalorder %s100, %s116
      %p118 = scmp.eq.s32.totalorder %s15, 0
      %p119 = por %p117, %p118
      %s120 = ssub.s32 %s16, %s35
      %s121 = ssub.s32 %s17, %s31
      %s122 = sor.u32 %s120, %s121
      %p123 = scmp.eq.s32.totalorder %s122, 0
      %s125 = sadd.s32 %s124, 1
      %s126 = scalar_select %p123, %s124, %s125
      %p129 = pneg %p123
      %p130 = scmp.eq.s32.totalorder %s9, 1
      %p131 = por %p129, %p130
      %p132 = scmp.ne.s32.totalorder %s124, %s127
      %p133 = scmp.eq.s32.totalorder %s9, 0
      %p134 = por %p132, %p133
      %p135 = scmp.ne.s32.totalorder %s124, %s127
      %p136 = scmp.eq.s32.totalorder %s14, 1
      %p137 = por %p135, %p136
      %p138 = scmp.ne.s32.totalorder %s127, %s128
      %p139 = scmp.eq.s32.totalorder %s14, 0
      %p140 = por %p138, %p139
      %p141 = scmp.ne.s32.totalorder %s127, %s128
      %p142 = scmp.eq.s32.totalorder %s15, 1
      %p143 = por %p141, %p142
      %p145 = scmp.ne.s32.totalorder %s128, %s144
      %p146 = scmp.eq.s32.totalorder %s15, 0
      %p147 = por %p145, %p146
      %p148 = scmp.le.s32.totalorder 1, %s9
      %p149 = scmp.lt.s32.totalorder %s9, 3
      %p150 = pnand %p148, %p149
      %p151 = pneg %p150
      // Predicated region
      $region9: #{calibvit_v2_forward.30} parent=5 // pred_check
        _
      $region10: #{calibvit_v2_forward.30} parent=5 // pred_check_branch
        %153 = sbr.rel (%p150) target = $region12
      $region11: #{calibvit_v2_forward.30} parent=5 // pred_region
        %s154 = ssub.s32 %s9, 1
      $region12: #{calibvit_v2_forward.30} parent=5 // pred_fallthru
        _
      %p155 = scmp.lt.s32.totalorder %s9, 2
      // Predicated region
      $region13: #{calibvit_v2_forward.30} parent=5 // pred_check
        %p156 = pneg %p155
      $region14: #{calibvit_v2_forward.30} parent=5 // pred_check_branch
        %158 = sbr.rel (%p156) target = $region16
      $region15: #{calibvit_v2_forward.30} parent=5 // pred_region
        // Predicated region
        $region17: #{calibvit_v2_forward.30} parent=15 // pred_check
          %p159 = pneg %p50
        $region18: #{calibvit_v2_forward.30} parent=15 // pred_check_branch
          %161 = sbr.rel (%p159) target = $region20
        $region19: #{calibvit_v2_forward.30} parent=15 // pred_region
          %s162 = sand.u32 %s40, 1
          %s163 = sand.u32 %s40, 1
          %s164 = smul.addr %s163, 8
          %s165 = scalar_lea.vmem [#allocation5], %s164
          %s166 = smul.u32 2, %s17
          %s167 = smul.addr %s166, 3
          %s168 = smul.addr %s16, 6
          %s169 = sadd.s32 %s167, %s168
          %s170 = smul.addr %s169, 4
          %s171 = scalar_lea.vmem %s0, %s170
          // Predicated region
          $region21: #{calibvit_v2_forward.30} parent=19 // pred_check
            _
          $region22: #{calibvit_v2_forward.30} parent=19 // pred_check_branch
            %173 = sbr.rel (0) target = $region24
          $region23: #{calibvit_v2_forward.30} parent=19 // pred_region
            // Predicated region
            $region25: #{calibvit_v2_forward.30} parent=23 // pred_check
              _
            $region26: #{calibvit_v2_forward.30} parent=23 // pred_check_branch
              %175 = sbr.rel target = $region28
            $region27: #{calibvit_v2_forward.30} parent=23 // pred_region
              // Predicated region
              $region40: #{calibvit_v2_forward.30} parent=27 // pred_check
                _
              $region41: #{calibvit_v2_forward.30} parent=27 // pred_check_branch
                %193 = sbr.rel (0) target = $region43
              $region42: #{calibvit_v2_forward.30} parent=27 // pred_region
                loop: start=0, step=1, limit=1
                $region44: #{calibvit_v2_forward.30} parent=42 // loop_pre_header
                  _
                $region45: #{calibvit_v2_forward.30} parent=42 // loop_header
                  %s195 = sphi 0, %s199
                  %p196 = scmp.ge.s32.totalorder %s195, 1
                  %s200 = sphi %s171, %s171
                  %s201 = sphi %s165, %s165
                $region46: #{calibvit_v2_forward.30} parent=42 // loop_header_branch
                  %198 = sbr.rel (%p196) target = $region50
                $region47: #{calibvit_v2_forward.30} parent=42 // loop_body
                  _
                $region48: #{calibvit_v2_forward.30} parent=42 // loop_footer
                  %s199 = sadd.s32 1, %s195
                $region49: #{calibvit_v2_forward.30} parent=42 // loop_footer_branch
                  %194 = sbr.rel target = $region45
                $region50: #{calibvit_v2_forward.30} parent=42 // loop_exit
                  _
                %s203 = ssub.s32 16, 1
                loop: start=0, step=1, limit=1
                $region51: #{calibvit_v2_forward.30} parent=42 // loop_pre_header
                  _
                $region52: #{calibvit_v2_forward.30} parent=42 // loop_header
                  %s205 = sphi 0, %s209
                  %p206 = scmp.ge.s32.totalorder %s205, 1
                  %s210 = sphi %s171, %s171
                  %s211 = sphi %s165, %s165
                $region53: #{calibvit_v2_forward.30} parent=42 // loop_header_branch
                  %208 = sbr.rel (%p206) target = $region57
                $region54: #{calibvit_v2_forward.30} parent=42 // loop_body
                  %v212 = vld [vmem:[%s210] sm:%s203]
                  %213 = vst [vmem:[%s211] sm:%s203] %v212
                  %v214 = vld [vmem:[%s210 + $0xc] sm:%s203]
                  %215 = vst [vmem:[%s211 + $0x4] sm:%s203] %v214
                $region55: #{calibvit_v2_forward.30} parent=42 // loop_footer
                  %s209 = sadd.s32 1, %s205
                $region56: #{calibvit_v2_forward.30} parent=42 // loop_footer_branch
                  %204 = sbr.rel target = $region52
                $region57: #{calibvit_v2_forward.30} parent=42 // loop_exit
                  _
              $region43: #{calibvit_v2_forward.30} parent=27 // pred_fallthru
                _
            $region28: #{calibvit_v2_forward.30} parent=23 // pred_fallthru
              _
            // Predicated region
            $region29: #{calibvit_v2_forward.30} parent=23 // pred_check
              _
            $region30: #{calibvit_v2_forward.30} parent=23 // pred_check_branch
              %177 = sbr.rel (0) target = $region32
            $region31: #{calibvit_v2_forward.30} parent=23 // pred_region
              %s179 = ssub.s32 16, 1
              loop: start=0, step=1, limit=1
              $region33: #{calibvit_v2_forward.30} parent=31 // loop_pre_header
                _
              $region34: #{calibvit_v2_forward.30} parent=31 // loop_header
                %s181 = sphi 0, %s185
                %p182 = scmp.ge.s32.totalorder %s181, 1
                %s186 = sphi %s171, %s171
                %s187 = sphi %s165, %s165
              $region35: #{calibvit_v2_forward.30} parent=31 // loop_header_branch
                %184 = sbr.rel (%p182) target = $region39
              $region36: #{calibvit_v2_forward.30} parent=31 // loop_body
                %v188 = vld [vmem:[%s186] sm:%s179]
                %189 = vst [vmem:[%s187] sm:%s179] %v188
                %v190 = vld [vmem:[%s186 + $0xc] sm:%s179]
                %191 = vst [vmem:[%s187 + $0x4] sm:%s179] %v190
              $region37: #{calibvit_v2_forward.30} parent=31 // loop_footer
                %s185 = sadd.s32 1, %s181
              $region38: #{calibvit_v2_forward.30} parent=31 // loop_footer_branch
                %180 = sbr.rel target = $region34
              $region39: #{calibvit_v2_forward.30} parent=31 // loop_exit
                _
            $region32: #{calibvit_v2_forward.30} parent=23 // pred_fallthru
              _
          $region24: #{calibvit_v2_forward.30} parent=19 // pred_fallthru
            _
          %216 = vnop
        $region20: #{calibvit_v2_forward.30} parent=15 // pred_fallthru
          _
        // Predicated region
        $region58: #{calibvit_v2_forward.30} parent=15 // pred_check
          %p217 = pneg %p78
        $region59: #{calibvit_v2_forward.30} parent=15 // pred_check_branch
          %219 = sbr.rel (%p217) target = $region61
        $region60: #{calibvit_v2_forward.30} parent=15 // pred_region
          %s220 = sand.u32 %s68, 1
          %s221 = sand.u32 %s68, 1
          %s222 = smul.addr %s221, 8
          %s223 = scalar_lea.vmem [#allocation6], %s222
          %s224 = smul.u32 2, %s18
          %s225 = smul.addr %s224, 3
          %s226 = sadd.s32 1, %s225
          %s227 = smul.addr %s16, 6
          %s228 = sadd.s32 %s226, %s227
          %s229 = smul.addr %s228, 4
          %s230 = scalar_lea.vmem %s1, %s229
          // Predicated region
          $region62: #{calibvit_v2_forward.30} parent=60 // pred_check
            _
          $region63: #{calibvit_v2_forward.30} parent=60 // pred_check_branch
            %232 = sbr.rel (0) target = $region65
          $region64: #{calibvit_v2_forward.30} parent=60 // pred_region
            // Predicated region
            $region66: #{calibvit_v2_forward.30} parent=64 // pred_check
              _
            $region67: #{calibvit_v2_forward.30} parent=64 // pred_check_branch
              %234 = sbr.rel target = $region69
            $region68: #{calibvit_v2_forward.30} parent=64 // pred_region
              // Predicated region
              $region81: #{calibvit_v2_forward.30} parent=68 // pred_check
                _
              $region82: #{calibvit_v2_forward.30} parent=68 // pred_check_branch
                %252 = sbr.rel (0) target = $region84
              $region83: #{calibvit_v2_forward.30} parent=68 // pred_region
                loop: start=0, step=1, limit=1
                $region85: #{calibvit_v2_forward.30} parent=83 // loop_pre_header
                  _
                $region86: #{calibvit_v2_forward.30} parent=83 // loop_header
                  %s254 = sphi 0, %s258
                  %p255 = scmp.ge.s32.totalorder %s254, 1
                  %s259 = sphi %s230, %s230
                  %s260 = sphi %s223, %s223
                $region87: #{calibvit_v2_forward.30} parent=83 // loop_header_branch
                  %257 = sbr.rel (%p255) target = $region91
                $region88: #{calibvit_v2_forward.30} parent=83 // loop_body
                  _
                $region89: #{calibvit_v2_forward.30} parent=83 // loop_footer
                  %s258 = sadd.s32 1, %s254
                $region90: #{calibvit_v2_forward.30} parent=83 // loop_footer_branch
                  %253 = sbr.rel target = $region86
                $region91: #{calibvit_v2_forward.30} parent=83 // loop_exit
                  _
                %s262 = ssub.s32 16, 1
                loop: start=0, step=1, limit=1
                $region92: #{calibvit_v2_forward.30} parent=83 // loop_pre_header
                  _
                $region93: #{calibvit_v2_forward.30} parent=83 // loop_header
                  %s264 = sphi 0, %s268
                  %p265 = scmp.ge.s32.totalorder %s264, 1
                  %s269 = sphi %s230, %s230
                  %s270 = sphi %s223, %s223
                $region94: #{calibvit_v2_forward.30} parent=83 // loop_header_branch
                  %267 = sbr.rel (%p265) target = $region98
                $region95: #{calibvit_v2_forward.30} parent=83 // loop_body
                  %v271 = vld [vmem:[%s269] sm:%s262]
                  %272 = vst [vmem:[%s270] sm:%s262] %v271
                  %v273 = vld [vmem:[%s269 + $0xc] sm:%s262]
                  %274 = vst [vmem:[%s270 + $0x4] sm:%s262] %v273
                $region96: #{calibvit_v2_forward.30} parent=83 // loop_footer
                  %s268 = sadd.s32 1, %s264
                $region97: #{calibvit_v2_forward.30} parent=83 // loop_footer_branch
                  %263 = sbr.rel target = $region93
                $region98: #{calibvit_v2_forward.30} parent=83 // loop_exit
                  _
              $region84: #{calibvit_v2_forward.30} parent=68 // pred_fallthru
                _
            $region69: #{calibvit_v2_forward.30} parent=64 // pred_fallthru
              _
            // Predicated region
            $region70: #{calibvit_v2_forward.30} parent=64 // pred_check
              _
            $region71: #{calibvit_v2_forward.30} parent=64 // pred_check_branch
              %236 = sbr.rel (0) target = $region73
            $region72: #{calibvit_v2_forward.30} parent=64 // pred_region
              %s238 = ssub.s32 16, 1
              loop: start=0, step=1, limit=1
              $region74: #{calibvit_v2_forward.30} parent=72 // loop_pre_header
                _
              $region75: #{calibvit_v2_forward.30} parent=72 // loop_header
                %s240 = sphi 0, %s244
                %p241 = scmp.ge.s32.totalorder %s240, 1
                %s245 = sphi %s230, %s230
                %s246 = sphi %s223, %s223
              $region76: #{calibvit_v2_forward.30} parent=72 // loop_header_branch
                %243 = sbr.rel (%p241) target = $region80
              $region77: #{calibvit_v2_forward.30} parent=72 // loop_body
                %v247 = vld [vmem:[%s245] sm:%s238]
                %248 = vst [vmem:[%s246] sm:%s238] %v247
                %v249 = vld [vmem:[%s245 + $0xc] sm:%s238]
                %250 = vst [vmem:[%s246 + $0x4] sm:%s238] %v249
              $region78: #{calibvit_v2_forward.30} parent=72 // loop_footer
                %s244 = sadd.s32 1, %s240
              $region79: #{calibvit_v2_forward.30} parent=72 // loop_footer_branch
                %239 = sbr.rel target = $region75
              $region80: #{calibvit_v2_forward.30} parent=72 // loop_exit
                _
            $region73: #{calibvit_v2_forward.30} parent=64 // pred_fallthru
              _
          $region65: #{calibvit_v2_forward.30} parent=60 // pred_fallthru
            _
          %275 = vnop
        $region61: #{calibvit_v2_forward.30} parent=15 // pred_fallthru
          _
        // Predicated region
        $region99: #{calibvit_v2_forward.30} parent=15 // pred_check
          %p276 = pneg %p106
        $region100: #{calibvit_v2_forward.30} parent=15 // pred_check_branch
          %278 = sbr.rel (%p276) target = $region102
        $region101: #{calibvit_v2_forward.30} parent=15 // pred_region
          %s279 = sand.u32 %s96, 1
          %s280 = sand.u32 %s96, 1
          %s281 = smul.addr %s280, 8
          %s282 = scalar_lea.vmem [#allocation7], %s281
          %s283 = smul.u32 2, %s18
          %s284 = smul.addr %s283, 3
          %s285 = sadd.s32 2, %s284
          %s286 = smul.addr %s16, 6
          %s287 = sadd.s32 %s285, %s286
          %s288 = smul.addr %s287, 4
          %s289 = scalar_lea.vmem %s2, %s288
          // Predicated region
          $region103: #{calibvit_v2_forward.30} parent=101 // pred_check
            _
          $region104: #{calibvit_v2_forward.30} parent=101 // pred_check_branch
            %291 = sbr.rel (0) target = $region106
          $region105: #{calibvit_v2_forward.30} parent=101 // pred_region
            // Predicated region
            $region107: #{calibvit_v2_forward.30} parent=105 // pred_check
              _
            $region108: #{calibvit_v2_forward.30} parent=105 // pred_check_branch
              %293 = sbr.rel target = $region110
            $region109: #{calibvit_v2_forward.30} parent=105 // pred_region
              // Predicated region
              $region122: #{calibvit_v2_forward.30} parent=109 // pred_check
                _
              $region123: #{calibvit_v2_forward.30} parent=109 // pred_check_branch
                %311 = sbr.rel (0) target = $region125
              $region124: #{calibvit_v2_forward.30} parent=109 // pred_region
                loop: start=0, step=1, limit=1
                $region126: #{calibvit_v2_forward.30} parent=124 // loop_pre_header
                  _
                $region127: #{calibvit_v2_forward.30} parent=124 // loop_header
                  %s313 = sphi 0, %s317
                  %p314 = scmp.ge.s32.totalorder %s313, 1
                  %s318 = sphi %s289, %s289
                  %s319 = sphi %s282, %s282
                $region128: #{calibvit_v2_forward.30} parent=124 // loop_header_branch
                  %316 = sbr.rel (%p314) target = $region132
                $region129: #{calibvit_v2_forward.30} parent=124 // loop_body
                  _
                $region130: #{calibvit_v2_forward.30} parent=124 // loop_footer
                  %s317 = sadd.s32 1, %s313
                $region131: #{calibvit_v2_forward.30} parent=124 // loop_footer_branch
                  %312 = sbr.rel target = $region127
                $region132: #{calibvit_v2_forward.30} parent=124 // loop_exit
                  _
                %s321 = ssub.s32 16, 1
                loop: start=0, step=1, limit=1
                $region133: #{calibvit_v2_forward.30} parent=124 // loop_pre_header
                  _
                $region134: #{calibvit_v2_forward.30} parent=124 // loop_header
                  %s323 = sphi 0, %s327
                  %p324 = scmp.ge.s32.totalorder %s323, 1
                  %s328 = sphi %s289, %s289
                  %s329 = sphi %s282, %s282
                $region135: #{calibvit_v2_forward.30} parent=124 // loop_header_branch
                  %326 = sbr.rel (%p324) target = $region139
                $region136: #{calibvit_v2_forward.30} parent=124 // loop_body
                  %v330 = vld [vmem:[%s328] sm:%s321]
                  %331 = vst [vmem:[%s329] sm:%s321] %v330
                  %v332 = vld [vmem:[%s328 + $0xc] sm:%s321]
                  %333 = vst [vmem:[%s329 + $0x4] sm:%s321] %v332
                $region137: #{calibvit_v2_forward.30} parent=124 // loop_footer
                  %s327 = sadd.s32 1, %s323
                $region138: #{calibvit_v2_forward.30} parent=124 // loop_footer_branch
                  %322 = sbr.rel target = $region134
                $region139: #{calibvit_v2_forward.30} parent=124 // loop_exit
                  _
              $region125: #{calibvit_v2_forward.30} parent=109 // pred_fallthru
                _
            $region110: #{calibvit_v2_forward.30} parent=105 // pred_fallthru
              _
            // Predicated region
            $region111: #{calibvit_v2_forward.30} parent=105 // pred_check
              _
            $region112: #{calibvit_v2_forward.30} parent=105 // pred_check_branch
              %295 = sbr.rel (0) target = $region114
            $region113: #{calibvit_v2_forward.30} parent=105 // pred_region
              %s297 = ssub.s32 16, 1
              loop: start=0, step=1, limit=1
              $region115: #{calibvit_v2_forward.30} parent=113 // loop_pre_header
                _
              $region116: #{calibvit_v2_forward.30} parent=113 // loop_header
                %s299 = sphi 0, %s303
                %p300 = scmp.ge.s32.totalorder %s299, 1
                %s304 = sphi %s289, %s289
                %s305 = sphi %s282, %s282
              $region117: #{calibvit_v2_forward.30} parent=113 // loop_header_branch
                %302 = sbr.rel (%p300) target = $region121
              $region118: #{calibvit_v2_forward.30} parent=113 // loop_body
                %v306 = vld [vmem:[%s304] sm:%s297]
                %307 = vst [vmem:[%s305] sm:%s297] %v306
                %v308 = vld [vmem:[%s304 + $0xc] sm:%s297]
                %309 = vst [vmem:[%s305 + $0x4] sm:%s297] %v308
              $region119: #{calibvit_v2_forward.30} parent=113 // loop_footer
                %s303 = sadd.s32 1, %s299
              $region120: #{calibvit_v2_forward.30} parent=113 // loop_footer_branch
                %298 = sbr.rel target = $region116
              $region121: #{calibvit_v2_forward.30} parent=113 // loop_exit
                _
            $region114: #{calibvit_v2_forward.30} parent=105 // pred_fallthru
              _
          $region106: #{calibvit_v2_forward.30} parent=101 // pred_fallthru
            _
          %334 = vnop
        $region102: #{calibvit_v2_forward.30} parent=15 // pred_fallthru
          _
      $region16: #{calibvit_v2_forward.30} parent=5 // pred_fallthru
        _
      %p335 = scmp.le.s32.totalorder 1, %s9
      %p336 = scmp.lt.s32.totalorder %s9, 3
      %p337 = pnand %p335, %p336
      %p338 = pneg %p337
      // Predicated region
      $region140: #{calibvit_v2_forward.30} parent=5 // pred_check
        _
      $region141: #{calibvit_v2_forward.30} parent=5 // pred_check_branch
        %340 = sbr.rel (%p337) target = $region143
      $region142: #{calibvit_v2_forward.30} parent=5 // pred_region
        %s341 = ssub.s32 %s9, 1
        %s342 = sand.u32 %s43, 1
        %s343 = sand.u32 %s43, 1
        %s344 = smul.addr %s343, 8
        %s345 = scalar_lea.vmem [#allocation5], %s344
        // Predicated region
        $region144: #{calibvit_v2_forward.30} parent=142 // pred_check
          %p346 = pneg %p56
        $region145: #{calibvit_v2_forward.30} parent=142 // pred_check_branch
          %348 = sbr.rel (%p346) target = $region147
        $region146: #{calibvit_v2_forward.30} parent=142 // pred_region
          _
        $region147: #{calibvit_v2_forward.30} parent=142 // pred_fallthru
          _
        %s349 = sand.u32 %s71, 1
        %s350 = sand.u32 %s71, 1
        %s351 = smul.addr %s350, 8
        %s352 = scalar_lea.vmem [#allocation6], %s351
        // Predicated region
        $region148: #{calibvit_v2_forward.30} parent=142 // pred_check
          %p353 = pneg %p84
        $region149: #{calibvit_v2_forward.30} parent=142 // pred_check_branch
          %355 = sbr.rel (%p353) target = $region151
        $region150: #{calibvit_v2_forward.30} parent=142 // pred_region
          _
        $region151: #{calibvit_v2_forward.30} parent=142 // pred_fallthru
          _
        %s356 = sand.u32 %s99, 1
        %s357 = sand.u32 %s99, 1
        %s358 = smul.addr %s357, 8
        %s359 = scalar_lea.vmem [#allocation7], %s358
        // Predicated region
        $region152: #{calibvit_v2_forward.30} parent=142 // pred_check
          %p360 = pneg %p112
        $region153: #{calibvit_v2_forward.30} parent=142 // pred_check_branch
          %362 = sbr.rel (%p360) target = $region155
        $region154: #{calibvit_v2_forward.30} parent=142 // pred_region
          _
        $region155: #{calibvit_v2_forward.30} parent=142 // pred_fallthru
          _
        %s363 = sand.u32 %s43, 1
        %s364 = sand.u32 %s43, 1
        %s365 = smul.addr %s364, 8
        %s366 = scalar_lea.vmem [#allocation5], %s365
        %p367 = pneg %p56
        %p368 = pneg %p53
        %s369 = sand.u32 %s71, 1
        %s370 = sand.u32 %s71, 1
        %s371 = smul.addr %s370, 8
        %s372 = scalar_lea.vmem [#allocation6], %s371
        %p373 = pneg %p84
        %p374 = pneg %p81
        %s375 = sand.u32 %s99, 1
        %s376 = sand.u32 %s99, 1
        %s377 = smul.addr %s376, 8
        %s378 = scalar_lea.vmem [#allocation7], %s377
        %p379 = pneg %p112
        %p380 = pneg %p109
        %p381 = pneg %p140
        %p382 = pneg %p137
        %s383 = smul.u32 2, %s20
        %p384 = scmp.lt.s32.totalorder %s19, 1
        %s385 = scalar_select %p384, %s19, 1
        %p386 = scmp.lt.s32.totalorder %s383, 1
        %s387 = scalar_select %p386, %s383, 1
        %s388 = smul.addr %s385, 2
        %s389 = sadd.s32 %s387, %s388
        %s390 = smul.addr %s389, 4
        %s391 = scalar_lea.vmem %s3, %s390
        %s392 = smul.u32 2, %s20
        %s393 = smul.u32 2, %s21
        %s394 = smul.u32 2, %s21
        %s395 = smul.u32 2, %s20
        %p396 = scmp.lt.s32.totalorder %s19, 1
        %s397 = scalar_select %p396, %s19, 1
        %p398 = scmp.lt.s32.totalorder %s395, 1
        %s399 = scalar_select %p398, %s395, 1
        %s400 = smul.addr %s397, 2
        %s401 = sadd.s32 %s399, %s400
        %s402 = smul.addr %s401, 4
        %s403 = scalar_lea.vmem %s3, %s402
        %s404 = smul.u32 2, %s20
        %p406 = scmp.eq.s32.totalorder %s21, 0
        // Predicated region
        $region156: #{calibvit_v2_forward.30} parent=142 // pred_check
          %p407 = pneg %p406
        $region157: #{calibvit_v2_forward.30} parent=142 // pred_check_branch
          %409 = sbr.rel (%p407) target = $region159
        $region158: #{calibvit_v2_forward.30} parent=142 // pred_region
          %vm410 = vcmask 31744
          %411 = vst.msk [vmem:[#allocation2] sm:$0xff] %vm410, -inf
          %412 = vst.msk [vmem:[#allocation2 + $0x8] sm:$0xff] %vm410, -inf
          %413 = vst.msk [vmem:[#allocation3] sm:$0xff] %vm410, 0.0
          %414 = vst.msk [vmem:[#allocation3 + $0x8] sm:$0xff] %vm410, 0.0
          %415 = vst [vmem:[#allocation4] sm:$0xff] 0.0
          %416 = vst [vmem:[#allocation4 + $0x8] sm:$0xff] 0.0
        $region159: #{calibvit_v2_forward.30} parent=142 // pred_fallthru
          _
        %v417 = vld [vmem:[%s345] sm:$0xf]
        %v418 = vld [vmem:[%s345 + $0x4] sm:$0xf]
        %v419 = vld [vmem:[%s352] sm:$0xf]
        %v420 = vld [vmem:[%s352 + $0x4] sm:$0xf]
        %v421 = vld [vmem:[%s359] sm:$0xf]
        %v422 = vld [vmem:[%s359 + $0x4] sm:$0xf]
        %v425 = vunpack.c.l.b16 %v417
        %v426 = vunpack.c.l.b16 %v418
        %v427 = vpack.c.b16 %v426, %v425
        %v430 = vunpack.c.l.b16 %v419
        %v431 = vunpack.c.l.b16 %v420
        %v432 = vpack.c.b16 %v431, %v430
        %vm433 = vcmask 261120
        %v435 = vsel %vm433, %v427, 0
        %v438 = vsel %vm433, %v432, 0
        %440 = vmatpush.bf16.xpose.msra.mxu0 0
        %441 = vmatpush.bf16.xpose.msra.mxu0 0
        %442 = vmatpush.bf16.xpose.msra.mxu0 0
        %443 = vmatpush.bf16.xpose.msra.mxu0 0
        %444 = vmatpush.bf16.xpose.msra.mxu0 0
        %445 = vmatpush.bf16.xpose.msra.mxu0 0
        %446 = vmatpush.bf16.xpose.msra.mxu0 0
        %447 = vmatpush.bf16.xpose.msra.mxu0 %v438
        %448 = vmatmul.bf16.gmra.mxu0 %v435
        %v449 = vpop.f32.mrf.mxu0
        %v450 = vadd.f32 0.0, %v449
        %v451 = vpop.f32.mrf.mxu0
        %v452 = vadd.f32 0.0, %v451
        %453 = vdwg.mxu0
        %v454 = vmul.f32 %v450, 0.17677669
        %v455 = vmul.f32 %v452, 0.17677669
        %v456 = vld [vmem:[#allocation2] sm:$0xff]
        %v457 = vld [vmem:[#allocation2 + $0x8] sm:$0xff]
        %v458 = vld [vmem:[#allocation3] sm:$0xff]
        %v459 = vld [vmem:[#allocation3 + $0x8] sm:$0xff]
        %vm460 = vcmask 130048
        %v461 = vsel %vm460, %v454, -inf
        %462 = vmax.xlane.f32.xlu0 %v461
        %v463 = vpop.xlane.xlu0 %462
        %v464 = vsel %vm460, %v455, -inf
        %465 = vmax.xlane.f32.xlu0 %v464
        %v466 = vpop.xlane.xlu0 %465
        %v467 = vmax.f32 %v456, %v463
        %v468 = vmax.f32 %v457, %v466
        %v469 = vsub.f32 %v456, %v467
        %v470 = vsub.f32 %v457, %v468
        %v471 = vmul.f32 %v469, 1.442695
        %v472 = vpow.pop %v471
        %v473 = vmul.f32 %v470, 1.442695
        %v474 = vpow.pop %v473
        %476 = vset.pattern.permute.xlu0 0
        %477 = vperm.xlu0 %476, %v467
        %v478 = vpop.permute.xlu0 %477
        %481 = vset.pattern.permute.xlu0 0
        %482 = vperm.xlu0 %481, %v468
        %v483 = vpop.permute.xlu0 %482
        %v485 = vsub.f32 %v454, %v478
        %v486 = vsub.f32 %v455, %v483
        %v487 = vmul.f32 %v485, 1.442695
        %v488 = vpow.pop %v487
        %v489 = vmul.f32 %v486, 1.442695
        %v490 = vpow.pop %v489
        %v491 = vmul.f32 %v472, %v458
        %v492 = vmul.f32 %v474, %v459
        %v493 = vsel %vm460, %v488, 0.0
        %494 = vadd.xlane.f32.xlu0 %v493
        %v495 = vpop.xlane.xlu0 %494
        %v496 = vsel %vm460, %v490, 0.0
        %497 = vadd.xlane.f32.xlu0 %v496
        %v498 = vpop.xlane.xlu0 %497
        %v499 = vadd.f32 %v491, %v495
        %v500 = vadd.f32 %v492, %v498
        %v501 = vld [vmem:[#allocation4] sm:$0xff]
        %v502 = vld [vmem:[#allocation4 + $0x8] sm:$0xff]
        %504 = vset.pattern.permute.xlu0 0
        %505 = vperm.xlu0 %504, %v472
        %v506 = vpop.permute.xlu0 %505
        %509 = vset.pattern.permute.xlu0 0
        %510 = vperm.xlu0 %509, %v474
        %v511 = vpop.permute.xlu0 %510
        %v513 = vmul.f32 %v506, %v501
        %v514 = vmul.f32 %v511, %v502
        %v515 = vpack.c.bf16 %v490, %v488
        %v518 = vunpack.c.l.b16 %v421
        %v519 = vunpack.c.l.b16 %v422
        %v520 = vpack.c.b16 %v519, %v518
        %v523 = vsel %vm460, %v515, 0
        %525 = vmatpush.bf16.msra.mxu0 0
        %526 = vmatpush.bf16.msra.mxu0 0
        %527 = vmatpush.bf16.msra.mxu0 0
        %528 = vmatpush.bf16.msra.mxu0 0
        %529 = vmatpush.bf16.msra.mxu0 0
        %530 = vmatpush.bf16.msra.mxu0 0
        %531 = vmatpush.bf16.msra.mxu0 0
        %532 = vmatpush.bf16.msra.mxu0 %v520
        %533 = vmatmul.bf16.gmra.mxu0 %v523
        %v534 = vpop.f32.mrf.mxu0
        %v535 = vadd.f32 0.0, %v534
        %v536 = vpop.f32.mrf.mxu0
        %v537 = vadd.f32 0.0, %v536
        %538 = vdwg.mxu0
        %v539 = vadd.f32 %v513, %v535
        %v540 = vadd.f32 %v514, %v537
        %vm541 = vcmask 7168
        %542 = vst.msk [vmem:[#allocation2] sm:$0xff] %vm541, %v467
        %543 = vst.msk [vmem:[#allocation2 + $0x8] sm:$0xff] %vm541, %v468
        %544 = vst.msk [vmem:[#allocation3] sm:$0xff] %vm541, %v499
        %545 = vst.msk [vmem:[#allocation3 + $0x8] sm:$0xff] %vm541, %v500
        %546 = vst.msk [vmem:[#allocation4] sm:$0xff] %vm433, %v539
        %547 = vst.msk [vmem:[#allocation4 + $0x8] sm:$0xff] %vm433, %v540
        // Predicated region
        $region160: #{calibvit_v2_forward.30} parent=142 // pred_check
          %p548 = pneg %p406
        $region161: #{calibvit_v2_forward.30} parent=142 // pred_check_branch
          %550 = sbr.rel (%p548) target = $region163
        $region162: #{calibvit_v2_forward.30} parent=142 // pred_region
          %v551 = vrcp.pop %v499
          %v552 = vrcp.pop %v500
          %554 = vset.pattern.permute.xlu0 0
          %555 = vperm.xlu0 %554, %v551
          %v556 = vpop.permute.xlu0 %555
          %559 = vset.pattern.permute.xlu0 0
          %560 = vperm.xlu0 %559, %v552
          %v561 = vpop.permute.xlu0 %560
          %v563 = vmul.f32 %v539, %v556
          %v564 = vmul.f32 %v540, %v561
          %v565 = vpack.c.bf16 %v563, %v563
          %v566 = vpack.c.bf16 %v564, %v564
          %vm567 = vcmask 257024
          %568 = vst.msk [vmem:[%s403] sm:$0xf] %vm567, %v565
          %569 = vst.msk [vmem:[%s403 + $0x4] sm:$0xf] %vm567, %v566
        $region163: #{calibvit_v2_forward.30} parent=142 // pred_fallthru
          _
        %v570 = vld [vmem:[%s345] sm:$0xf]
        %v571 = vld [vmem:[%s345 + $0x4] sm:$0xf]
        %v572 = vld [vmem:[%s352] sm:$0xf]
        %v573 = vld [vmem:[%s352 + $0x4] sm:$0xf]
        %v574 = vld [vmem:[%s359] sm:$0xf]
        %v575 = vld [vmem:[%s359 + $0x4] sm:$0xf]
        %v578 = vunpack.c.l.b16 %v570
        %v579 = vunpack.c.l.b16 %v571
        %v580 = vpack.c.b16 %v579, %v578
        %581 = vrot.lane.b32.xlu0 %v580, 96
        %v582 = vpop.permute.xlu0 %581
        %v585 = vunpack.c.l.b16 %v572
        %v586 = vunpack.c.l.b16 %v573
        %v587 = vpack.c.b16 %v586, %v585
        %588 = vrot.lane.b32.xlu0 %v587, 96
        %v589 = vpop.permute.xlu0 %588
        %v591 = vsel %vm433, %v582, 0
        %v594 = vsel %vm433, %v589, 0
        %596 = vmatpush.bf16.xpose.msra.mxu0 0
        %597 = vmatpush.bf16.xpose.msra.mxu0 0
        %598 = vmatpush.bf16.xpose.msra.mxu0 0
        %599 = vmatpush.bf16.xpose.msra.mxu0 0
        %600 = vmatpush.bf16.xpose.msra.mxu0 0
        %601 = vmatpush.bf16.xpose.msra.mxu0 0
        %602 = vmatpush.bf16.xpose.msra.mxu0 0
        %603 = vmatpush.bf16.xpose.msra.mxu0 %v594
        %604 = vmatmul.bf16.gmra.mxu0 %v591
        %v605 = vpop.f32.mrf.mxu0
        %v606 = vadd.f32 0.0, %v605
        %v607 = vpop.f32.mrf.mxu0
        %v608 = vadd.f32 0.0, %v607
        %609 = vdwg.mxu0
        %v610 = vmul.f32 %v606, 0.17677669
        %v611 = vmul.f32 %v608, 0.17677669
        %v612 = vld [vmem:[#allocation2] sm:$0xff]
        %v613 = vld [vmem:[#allocation2 + $0x8] sm:$0xff]
        %v614 = vld [vmem:[#allocation3] sm:$0xff]
        %v615 = vld [vmem:[#allocation3 + $0x8] sm:$0xff]
        %v616 = vsel %vm460, %v610, -inf
        %617 = vmax.xlane.f32.xlu0 %v616
        %v618 = vpop.xlane.xlu0 %617
        %v619 = vsel %vm460, %v611, -inf
        %620 = vmax.xlane.f32.xlu0 %v619
        %v621 = vpop.xlane.xlu0 %620
        %v622 = vmax.f32 %v612, %v618
        %v623 = vmax.f32 %v613, %v621
        %v624 = vsub.f32 %v612, %v622
        %v625 = vsub.f32 %v613, %v623
        %v626 = vmul.f32 %v624, 1.442695
        %v627 = vpow.pop %v626
        %v628 = vmul.f32 %v625, 1.442695
        %v629 = vpow.pop %v628
        %631 = vset.pattern.permute.xlu0 1
        %632 = vperm.xlu0 %631, %v622
        %v633 = vpop.permute.xlu0 %632
        %636 = vset.pattern.permute.xlu0 1
        %637 = vperm.xlu0 %636, %v623
        %v638 = vpop.permute.xlu0 %637
        %v640 = vsub.f32 %v610, %v633
        %v641 = vsub.f32 %v611, %v638
        %v642 = vmul.f32 %v640, 1.442695
        %v643 = vpow.pop %v642
        %v644 = vmul.f32 %v641, 1.442695
        %v645 = vpow.pop %v644
        %v646 = vmul.f32 %v627, %v614
        %v647 = vmul.f32 %v629, %v615
        %v648 = vsel %vm460, %v643, 0.0
        %649 = vadd.xlane.f32.xlu0 %v648
        %v650 = vpop.xlane.xlu0 %649
        %v651 = vsel %vm460, %v645, 0.0
        %652 = vadd.xlane.f32.xlu0 %v651
        %v653 = vpop.xlane.xlu0 %652
        %v654 = vadd.f32 %v646, %v650
        %v655 = vadd.f32 %v647, %v653
        %v656 = vld [vmem:[#allocation4] sm:$0xff]
        %v657 = vld [vmem:[#allocation4 + $0x8] sm:$0xff]
        %659 = vset.pattern.permute.xlu0 1
        %660 = vperm.xlu0 %659, %v627
        %v661 = vpop.permute.xlu0 %660
        %664 = vset.pattern.permute.xlu0 1
        %665 = vperm.xlu0 %664, %v629
        %v666 = vpop.permute.xlu0 %665
        %v668 = vmul.f32 %v661, %v656
        %v669 = vmul.f32 %v666, %v657
        %v670 = vpack.c.bf16 %v645, %v643
        %v673 = vunpack.c.l.b16 %v574
        %v674 = vunpack.c.l.b16 %v575
        %v675 = vpack.c.b16 %v674, %v673
        %676 = vrot.lane.b32.xlu0 %v675, 96
        %v677 = vpop.permute.xlu0 %676
        %v680 = vsel %vm460, %v670, 0
        %682 = vmatpush.bf16.msra.mxu0 0
        %683 = vmatpush.bf16.msra.mxu0 0
        %684 = vmatpush.bf16.msra.mxu0 0
        %685 = vmatpush.bf16.msra.mxu0 0
        %686 = vmatpush.bf16.msra.mxu0 0
        %687 = vmatpush.bf16.msra.mxu0 0
        %688 = vmatpush.bf16.msra.mxu0 0
        %689 = vmatpush.bf16.msra.mxu0 %v677
        %690 = vmatmul.bf16.gmra.mxu0 %v680
        %v691 = vpop.f32.mrf.mxu0
        %v692 = vadd.f32 0.0, %v691
        %v693 = vpop.f32.mrf.mxu0
        %v694 = vadd.f32 0.0, %v693
        %695 = vdwg.mxu0
        %698 = vrot.lane.b32.xlu0 %v692, 32
        %v699 = vpop.permute.xlu0 %698
        %700 = vrot.lane.b32.xlu0 %v694, 32
        %v701 = vpop.permute.xlu0 %700
        %v704 = vadd.f32 %v668, %v699
        %v705 = vadd.f32 %v669, %v701
        %vm706 = vcmask 15368
        %707 = vst.msk [vmem:[#allocation2] sm:$0xff] %vm706, %v622
        %708 = vst.msk [vmem:[#allocation2 + $0x8] sm:$0xff] %vm706, %v623
        %709 = vst.msk [vmem:[#allocation3] sm:$0xff] %vm706, %v654
        %710 = vst.msk [vmem:[#allocation3 + $0x8] sm:$0xff] %vm706, %v655
        %vm711 = vcmask 523520
        %712 = vst.msk [vmem:[#allocation4] sm:$0xff] %vm711, %v704
        %713 = vst.msk [vmem:[#allocation4 + $0x8] sm:$0xff] %vm711, %v705
        // Predicated region
        $region164: #{calibvit_v2_forward.30} parent=142 // pred_check
          %p714 = pneg %p406
        $region165: #{calibvit_v2_forward.30} parent=142 // pred_check_branch
          %716 = sbr.rel (%p714) target = $region167
        $region166: #{calibvit_v2_forward.30} parent=142 // pred_region
          %v717 = vrcp.pop %v654
          %v718 = vrcp.pop %v655
          %720 = vset.pattern.permute.xlu0 1
          %721 = vperm.xlu0 %720, %v717
          %v722 = vpop.permute.xlu0 %721
          %725 = vset.pattern.permute.xlu0 1
          %726 = vperm.xlu0 %725, %v718
          %v727 = vpop.permute.xlu0 %726
          %v729 = vmul.f32 %v704, %v722
          %v730 = vmul.f32 %v705, %v727
          %v731 = vpack.c.bf16 %v729, %v729
          %v732 = vpack.c.bf16 %v730, %v730
          %vm733 = vcmask 519424
          %734 = vst.msk [vmem:[%s403] sm:$0xf] %vm733, %v731
          %735 = vst.msk [vmem:[%s403 + $0x4] sm:$0xf] %vm733, %v732
        $region167: #{calibvit_v2_forward.30} parent=142 // pred_fallthru
          _
        %v736 = vld [vmem:[%s345] sm:$0xf]
        %v737 = vld [vmem:[%s345 + $0x4] sm:$0xf]
        %v738 = vld [vmem:[%s352] sm:$0xf]
        %v739 = vld [vmem:[%s352 + $0x4] sm:$0xf]
        %v740 = vld [vmem:[%s359] sm:$0xf]
        %v741 = vld [vmem:[%s359 + $0x4] sm:$0xf]
        %v744 = vunpack.c.l.b16 %v736
        %v745 = vunpack.c.l.b16 %v737
        %v746 = vpack.c.b16 %v745, %v744
        %747 = vrot.lane.b32.xlu0 %v746, 64
        %v748 = vpop.permute.xlu0 %747
        %v751 = vunpack.c.l.b16 %v738
        %v752 = vunpack.c.l.b16 %v739
        %v753 = vpack.c.b16 %v752, %v751
        %754 = vrot.lane.b32.xlu0 %v753, 64
        %v755 = vpop.permute.xlu0 %754
        %v757 = vsel %vm433, %v748, 0
        %v760 = vsel %vm433, %v755, 0
        %762 = vmatpush.bf16.xpose.msra.mxu0 0
        %763 = vmatpush.bf16.xpose.msra.mxu0 0
        %764 = vmatpush.bf16.xpose.msra.mxu0 0
        %765 = vmatpush.bf16.xpose.msra.mxu0 0
        %766 = vmatpush.bf16.xpose.msra.mxu0 0
        %767 = vmatpush.bf16.xpose.msra.mxu0 0
        %768 = vmatpush.bf16.xpose.msra.mxu0 0
        %769 = vmatpush.bf16.xpose.msra.mxu0 %v760
        %770 = vmatmul.bf16.gmra.mxu0 %v757
        %v771 = vpop.f32.mrf.mxu0
        %v772 = vadd.f32 0.0, %v771
        %v773 = vpop.f32.mrf.mxu0
        %v774 = vadd.f32 0.0, %v773
        %775 = vdwg.mxu0
        %v776 = vmul.f32 %v772, 0.17677669
        %v777 = vmul.f32 %v774, 0.17677669
        %v778 = vld [vmem:[#allocation2] sm:$0xff]
        %v779 = vld [vmem:[#allocation2 + $0x8] sm:$0xff]
        %v780 = vld [vmem:[#allocation3] sm:$0xff]
        %v781 = vld [vmem:[#allocation3 + $0x8] sm:$0xff]
        %v782 = vsel %vm460, %v776, -inf
        %783 = vmax.xlane.f32.xlu0 %v782
        %v784 = vpop.xlane.xlu0 %783
        %v785 = vsel %vm460, %v777, -inf
        %786 = vmax.xlane.f32.xlu0 %v785
        %v787 = vpop.xlane.xlu0 %786
        %v788 = vmax.f32 %v778, %v784
        %v789 = vmax.f32 %v779, %v787
        %v790 = vsub.f32 %v778, %v788
        %v791 = vsub.f32 %v779, %v789
        %v792 = vmul.f32 %v790, 1.442695
        %v793 = vpow.pop %v792
        %v794 = vmul.f32 %v791, 1.442695
        %v795 = vpow.pop %v794
        %797 = vset.pattern.permute.xlu0 2
        %798 = vperm.xlu0 %797, %v788
        %v799 = vpop.permute.xlu0 %798
        %802 = vset.pattern.permute.xlu0 2
        %803 = vperm.xlu0 %802, %v789
        %v804 = vpop.permute.xlu0 %803
        %v806 = vsub.f32 %v776, %v799
        %v807 = vsub.f32 %v777, %v804
        %v808 = vmul.f32 %v806, 1.442695
        %v809 = vpow.pop %v808
        %v810 = vmul.f32 %v807, 1.442695
        %v811 = vpow.pop %v810
        %v812 = vmul.f32 %v793, %v780
        %v813 = vmul.f32 %v795, %v781
        %v814 = vsel %vm460, %v809, 0.0
        %815 = vadd.xlane.f32.xlu0 %v814
        %v816 = vpop.xlane.xlu0 %815
        %v817 = vsel %vm460, %v811, 0.0
        %818 = vadd.xlane.f32.xlu0 %v817
        %v819 = vpop.xlane.xlu0 %818
        %v820 = vadd.f32 %v812, %v816
        %v821 = vadd.f32 %v813, %v819
        %v822 = vld [vmem:[#allocation4] sm:$0xff]
        %v823 = vld [vmem:[#allocation4 + $0x8] sm:$0xff]
        %825 = vset.pattern.permute.xlu0 2
        %826 = vperm.xlu0 %825, %v793
        %v827 = vpop.permute.xlu0 %826
        %830 = vset.pattern.permute.xlu0 2
        %831 = vperm.xlu0 %830, %v795
        %v832 = vpop.permute.xlu0 %831
        %v834 = vmul.f32 %v827, %v822
        %v835 = vmul.f32 %v832, %v823
        %v836 = vpack.c.bf16 %v811, %v809
        %v839 = vunpack.c.l.b16 %v740
        %v840 = vunpack.c.l.b16 %v741
        %v841 = vpack.c.b16 %v840, %v839
        %842 = vrot.lane.b32.xlu0 %v841, 64
        %v843 = vpop.permute.xlu0 %842
        %v846 = vsel %vm460, %v836, 0
        %848 = vmatpush.bf16.msra.mxu0 0
        %849 = vmatpush.bf16.msra.mxu0 0
        %850 = vmatpush.bf16.msra.mxu0 0
        %851 = vmatpush.bf16.msra.mxu0 0
        %852 = vmatpush.bf16.msra.mxu0 0
        %853 = vmatpush.bf16.msra.mxu0 0
        %854 = vmatpush.bf16.msra.mxu0 0
        %855 = vmatpush.bf16.msra.mxu0 %v843
        %856 = vmatmul.bf16.gmra.mxu0 %v846
        %v857 = vpop.f32.mrf.mxu0
        %v858 = vadd.f32 0.0, %v857
        %v859 = vpop.f32.mrf.mxu0
        %v860 = vadd.f32 0.0, %v859
        %861 = vdwg.mxu0
        %864 = vrot.lane.b32.xlu0 %v858, 64
        %v865 = vpop.permute.xlu0 %864
        %866 = vrot.lane.b32.xlu0 %v860, 64
        %v867 = vpop.permute.xlu0 %866
        %v870 = vadd.f32 %v834, %v865
        %v871 = vadd.f32 %v835, %v867
        %vm872 = vcmask 23568
        %873 = vst.msk [vmem:[#allocation2] sm:$0xff] %vm872, %v788
        %874 = vst.msk [vmem:[#allocation2 + $0x8] sm:$0xff] %vm872, %v789
        %875 = vst.msk [vmem:[#allocation3] sm:$0xff] %vm872, %v820
        %876 = vst.msk [vmem:[#allocation3 + $0x8] sm:$0xff] %vm872, %v821
        %vm877 = vcmask 785920
        %878 = vst.msk [vmem:[#allocation4] sm:$0xff] %vm877, %v870
        %879 = vst.msk [vmem:[#allocation4 + $0x8] sm:$0xff] %vm877, %v871
        // Predicated region
        $region168: #{calibvit_v2_forward.30} parent=142 // pred_check
          %p880 = pneg %p406
        $region169: #{calibvit_v2_forward.30} parent=142 // pred_check_branch
          %882 = sbr.rel (%p880) target = $region171
        $region170: #{calibvit_v2_forward.30} parent=142 // pred_region
          %v883 = vrcp.pop %v820
          %v884 = vrcp.pop %v821
          %886 = vset.pattern.permute.xlu0 2
          %887 = vperm.xlu0 %886, %v883
          %v888 = vpop.permute.xlu0 %887
          %891 = vset.pattern.permute.xlu0 2
          %892 = vperm.xlu0 %891, %v884
          %v893 = vpop.permute.xlu0 %892
          %v895 = vmul.f32 %v870, %v888
          %v896 = vmul.f32 %v871, %v893
          %v897 = vpack.c.bf16 %v895, %v895
          %v898 = vpack.c.bf16 %v896, %v896
          %vm899 = vcmask 781824
          %900 = vst.msk [vmem:[%s403] sm:$0xf] %vm899, %v897
          %901 = vst.msk [vmem:[%s403 + $0x4] sm:$0xf] %vm899, %v898
        $region171: #{calibvit_v2_forward.30} parent=142 // pred_fallthru
          _
        %v902 = vld [vmem:[%s345] sm:$0xf]
        %v903 = vld [vmem:[%s345 + $0x4] sm:$0xf]
        %v904 = vld [vmem:[%s352] sm:$0xf]
        %v905 = vld [vmem:[%s352 + $0x4] sm:$0xf]
        %v906 = vld [vmem:[%s359] sm:$0xf]
        %v907 = vld [vmem:[%s359 + $0x4] sm:$0xf]
        %v910 = vunpack.c.l.b16 %v902
        %v911 = vunpack.c.l.b16 %v903
        %v912 = vpack.c.b16 %v911, %v910
        %913 = vrot.lane.b32.xlu0 %v912, 32
        %v914 = vpop.permute.xlu0 %913
        %v917 = vunpack.c.l.b16 %v904
        %v918 = vunpack.c.l.b16 %v905
        %v919 = vpack.c.b16 %v918, %v917
        %920 = vrot.lane.b32.xlu0 %v919, 32
        %v921 = vpop.permute.xlu0 %920
        %v923 = vsel %vm433, %v914, 0
        %v926 = vsel %vm433, %v921, 0
        %928 = vmatpush.bf16.xpose.msra.mxu0 0
        %929 = vmatpush.bf16.xpose.msra.mxu0 0
        %930 = vmatpush.bf16.xpose.msra.mxu0 0
        %931 = vmatpush.bf16.xpose.msra.mxu0 0
        %932 = vmatpush.bf16.xpose.msra.mxu0 0
        %933 = vmatpush.bf16.xpose.msra.mxu0 0
        %934 = vmatpush.bf16.xpose.msra.mxu0 0
        %935 = vmatpush.bf16.xpose.msra.mxu0 %v926
        %936 = vmatmul.bf16.gmra.mxu0 %v923
        %v937 = vpop.f32.mrf.mxu0
        %v938 = vadd.f32 0.0, %v937
        %v939 = vpop.f32.mrf.mxu0
        %v940 = vadd.f32 0.0, %v939
        %941 = vdwg.mxu0
        %v942 = vmul.f32 %v938, 0.17677669
        %v943 = vmul.f32 %v940, 0.17677669
        %v944 = vld [vmem:[#allocation2] sm:$0xff]
        %v945 = vld [vmem:[#allocation2 + $0x8] sm:$0xff]
        %v946 = vld [vmem:[#allocation3] sm:$0xff]
        %v947 = vld [vmem:[#allocation3 + $0x8] sm:$0xff]
        %v948 = vsel %vm460, %v942, -inf
        %949 = vmax.xlane.f32.xlu0 %v948
        %v950 = vpop.xlane.xlu0 %949
        %v951 = vsel %vm460, %v943, -inf
        %952 = vmax.xlane.f32.xlu0 %v951
        %v953 = vpop.xlane.xlu0 %952
        %v954 = vmax.f32 %v944, %v950
        %v955 = vmax.f32 %v945, %v953
        %v956 = vsub.f32 %v944, %v954
        %v957 = vsub.f32 %v945, %v955
        %v958 = vmul.f32 %v956, 1.442695
        %v959 = vpow.pop %v958
        %v960 = vmul.f32 %v957, 1.442695
        %v961 = vpow.pop %v960
        %963 = vset.pattern.permute.xlu0 3
        %964 = vperm.xlu0 %963, %v954
        %v965 = vpop.permute.xlu0 %964
        %968 = vset.pattern.permute.xlu0 3
        %969 = vperm.xlu0 %968, %v955
        %v970 = vpop.permute.xlu0 %969
        %v972 = vsub.f32 %v942, %v965
        %v973 = vsub.f32 %v943, %v970
        %v974 = vmul.f32 %v972, 1.442695
        %v975 = vpow.pop %v974
        %v976 = vmul.f32 %v973, 1.442695
        %v977 = vpow.pop %v976
        %v978 = vmul.f32 %v959, %v946
        %v979 = vmul.f32 %v961, %v947
        %v980 = vsel %vm460, %v975, 0.0
        %981 = vadd.xlane.f32.xlu0 %v980
        %v982 = vpop.xlane.xlu0 %981
        %v983 = vsel %vm460, %v977, 0.0
        %984 = vadd.xlane.f32.xlu0 %v983
        %v985 = vpop.xlane.xlu0 %984
        %v986 = vadd.f32 %v978, %v982
        %v987 = vadd.f32 %v979, %v985
        %v988 = vld [vmem:[#allocation4] sm:$0xff]
        %v989 = vld [vmem:[#allocation4 + $0x8] sm:$0xff]
        %991 = vset.pattern.permute.xlu0 3
        %992 = vperm.xlu0 %991, %v959
        %v993 = vpop.permute.xlu0 %992
        %996 = vset.pattern.permute.xlu0 3
        %997 = vperm.xlu0 %996, %v961
        %v998 = vpop.permute.xlu0 %997
        %v1000 = vmul.f32 %v993, %v988
        %v1001 = vmul.f32 %v998, %v989
        %v1002 = vpack.c.bf16 %v977, %v975
        %v1005 = vunpack.c.l.b16 %v906
        %v1006 = vunpack.c.l.b16 %v907
        %v1007 = vpack.c.b16 %v1006, %v1005
        %1008 = vrot.lane.b32.xlu0 %v1007, 32
        %v1009 = vpop.permute.xlu0 %1008
        %v1012 = vsel %vm460, %v1002, 0
        %1014 = vmatpush.bf16.msra.mxu0 0
        %1015 = vmatpush.bf16.msra.mxu0 0
        %1016 = vmatpush.bf16.msra.mxu0 0
        %1017 = vmatpush.bf16.msra.mxu0 0
        %1018 = vmatpush.bf16.msra.mxu0 0
        %1019 = vmatpush.bf16.msra.mxu0 0
        %1020 = vmatpush.bf16.msra.mxu0 0
        %1021 = vmatpush.bf16.msra.mxu0 %v1009
        %1022 = vmatmul.bf16.gmra.mxu0 %v1012
        %v1023 = vpop.f32.mrf.mxu0
        %v1024 = vadd.f32 0.0, %v1023
        %v1025 = vpop.f32.mrf.mxu0
        %v1026 = vadd.f32 0.0, %v1025
        %1027 = vdwg.mxu0
        %1030 = vrot.lane.b32.xlu0 %v1024, 96
        %v1031 = vpop.permute.xlu0 %1030
        %1032 = vrot.lane.b32.xlu0 %v1026, 96
        %v1033 = vpop.permute.xlu0 %1032
        %v1036 = vadd.f32 %v1000, %v1031
        %v1037 = vadd.f32 %v1001, %v1033
        %vm1038 = vcmask 31768
        %1039 = vst.msk [vmem:[#allocation2] sm:$0xff] %vm1038, %v954
        %1040 = vst.msk [vmem:[#allocation2 + $0x8] sm:$0xff] %vm1038, %v955
        %1041 = vst.msk [vmem:[#allocation3] sm:$0xff] %vm1038, %v986
        %1042 = vst.msk [vmem:[#allocation3 + $0x8] sm:$0xff] %vm1038, %v987
        %vm1043 = vcmask 1048320
        %1044 = vst.msk [vmem:[#allocation4] sm:$0xff] %vm1043, %v1036
        %1045 = vst.msk [vmem:[#allocation4 + $0x8] sm:$0xff] %vm1043, %v1037
        // Predicated region
        $region172: #{calibvit_v2_forward.30} parent=142 // pred_check
          %p1046 = pneg %p406
        $region173: #{calibvit_v2_forward.30} parent=142 // pred_check_branch
          %1048 = sbr.rel (%p1046) target = $region175
        $region174: #{calibvit_v2_forward.30} parent=142 // pred_region
          %v1049 = vrcp.pop %v986
          %v1050 = vrcp.pop %v987
          %1052 = vset.pattern.permute.xlu0 3
          %1053 = vperm.xlu0 %1052, %v1049
          %v1054 = vpop.permute.xlu0 %1053
          %1057 = vset.pattern.permute.xlu0 3
          %1058 = vperm.xlu0 %1057, %v1050
          %v1059 = vpop.permute.xlu0 %1058
          %v1061 = vmul.f32 %v1036, %v1054
          %v1062 = vmul.f32 %v1037, %v1059
          %v1063 = vpack.c.bf16 %v1061, %v1061
          %v1064 = vpack.c.bf16 %v1062, %v1062
          %vm1065 = vcmask 1044224
          %1066 = vst.msk [vmem:[%s403] sm:$0xf] %vm1065, %v1063
          %1067 = vst.msk [vmem:[%s403 + $0x4] sm:$0xf] %vm1065, %v1064
        $region175: #{calibvit_v2_forward.30} parent=142 // pred_fallthru
          _
        %s1068 = smul.u32 2, %s20
        %p1069 = scmp.lt.s32.totalorder %s19, 1
        %s1070 = scalar_select %p1069, %s19, 1
        %p1071 = scmp.lt.s32.totalorder %s1068, 1
        %s1072 = scalar_select %p1071, %s1068, 1
        %s1073 = smul.addr %s1070, 2
        %s1074 = sadd.s32 %s1072, %s1073
        %s1075 = smul.addr %s1074, 4
        %s1076 = scalar_lea.vmem %s3, %s1075
        // Predicated region
        $region176: #{calibvit_v2_forward.30} parent=142 // pred_check
          %p1077 = pneg %p137
        $region177: #{calibvit_v2_forward.30} parent=142 // pred_check_branch
          %1079 = sbr.rel (%p1077) target = $region179
        $region178: #{calibvit_v2_forward.30} parent=142 // pred_region
          %s1080 = smul.u32 2, %s20
        $region179: #{calibvit_v2_forward.30} parent=142 // pred_fallthru
          _
      $region143: #{calibvit_v2_forward.30} parent=5 // pred_fallthru
        _
      %p1081 = scmp.le.s32.totalorder 2, %s9
      // Predicated region
      $region180: #{calibvit_v2_forward.30} parent=5 // pred_check
        %p1082 = pneg %p1081
      $region181: #{calibvit_v2_forward.30} parent=5 // pred_check_branch
        %1084 = sbr.rel (%p1082) target = $region183
      $region182: #{calibvit_v2_forward.30} parent=5 // pred_region
        %s1085 = ssub.s32 %s9, 2
        // Predicated region
        $region184: #{calibvit_v2_forward.30} parent=182 // pred_check
          %p1086 = pneg %p143
        $region185: #{calibvit_v2_forward.30} parent=182 // pred_check_branch
          %1088 = sbr.rel (%p1086) target = $region187
        $region186: #{calibvit_v2_forward.30} parent=182 // pred_region
          %s1089 = smul.u32 2, %s23
          %p1090 = scmp.lt.s32.totalorder %s22, 1
          %s1091 = scalar_select %p1090, %s22, 1
          %p1092 = scmp.lt.s32.totalorder %s1089, 1
          %s1093 = scalar_select %p1092, %s1089, 1
          %s1094 = smul.addr %s1091, 2
          %s1095 = sadd.s32 %s1093, %s1094
          %s1096 = smul.addr %s1095, 4
          %s1097 = scalar_lea.vmem %s3, %s1096
        $region187: #{calibvit_v2_forward.30} parent=182 // pred_fallthru
          _
      $region183: #{calibvit_v2_forward.30} parent=5 // pred_fallthru
        _
    $region6: #{calibvit_v2_forward.30} parent=1 // loop_footer
      %s13 = sadd.s32 1, %s9
    $region7: #{calibvit_v2_forward.30} parent=1 // loop_footer_branch
      %8 = sbr.rel target = $region3
    $region8: #{calibvit_v2_forward.30} parent=1 // loop_exit
      _

// kernel: calibvit_v2_forward.31
$region0: #{calibvit_v2_forward.31}
  #allocation0 [shape = 'u32[]', space=smem, size = 0x4, offset = 0x4, fixed_abs, tag = 'smem constant byte address 0x4 - core index']
  #allocation1 [shape = 'u32[72,128]{1,0:T(1,128)}', space=vmem, size = 0x9000, scoped, tag = 'internal scratch']
  #allocation2 [shape = 'f32[32,128]{1,0:T(8,128)}', space=vmem, size = 0x4000, scoped, tag = 'scratch operand']
  %s0 = inlined_call_operand.vmem [shape: bf16[32,128], index: 0, kind: input, shape index: {}]
  %s1 = inlined_call_operand.hbm [shape: bf16[128,128], index: 1, kind: input, shape index: {}]
  %s2 = inlined_call_operand.vmem [shape: f32[1,128], index: 2, kind: input, shape index: {}]
  %s3 = inlined_call_operand.vmem [shape: bf16[32,128], index: 3, kind: input, shape index: {}, may-alias: {3,4}]
  %s4 = inlined_call_operand.vmem [shape: bf16[32,128], index: 4, kind: output, shape index: {}, may-alias: {3,4}]
  %s5 = sld [smem:[#allocation0]]
  $region38: #{calibvit_v2_forward.31} parent=0
    _
  %s7 = ssub.s32 1, %s5
  %s8 = scalar_select 0, %s7, %s5
  $region1: #{calibvit_v2_forward.31} parent=0
    #allocation3 [shape = 'u8[32768]{0}', space=vmem, size = 0x8000, scoped, tag = 'input window, operand 1, single buffered']
    #allocation4 [shape = 's32[1]{0}', space=sflag, size = 0x4, scoped, tag = 'scoped memory for calibvit_v2_forward.31']
    %9 = vsyncpa [#allocation4], 0
    // Predicated region
    $region2: #{calibvit_v2_forward.31} parent=1 // pred_check
      _
    $region3: #{calibvit_v2_forward.31} parent=1 // pred_check_branch
      %11 = sbr.rel (0) target = $region5
    $region4: #{calibvit_v2_forward.31} parent=1 // pred_region
      _
    $region5: #{calibvit_v2_forward.31} parent=1 // pred_fallthru
      _
    // Predicated region
    $region6: #{calibvit_v2_forward.31} parent=1 // pred_check
      _
    $region7: #{calibvit_v2_forward.31} parent=1 // pred_check_branch
      %13 = sbr.rel (0) target = $region9
    $region8: #{calibvit_v2_forward.31} parent=1 // pred_region
      %15 = vsyncadd [#allocation4], 0
      %s16 = sshll.u32 %s1, 4
      %s17 = int_to_ptr.hbm [resolvable:$true] %s16
      %s18 = sshll.u32 [#allocation3], 4
      %s19 = int_to_ptr.vmem [resolvable:$true] %s18
      %24 = dma.hbm_to_vmem [thread:$0]  %s17, 1024, %s19, [#allocation4], 64, 64, 4
    $region9: #{calibvit_v2_forward.31} parent=1 // pred_fallthru
      _
    // Predicated region
    $region10: #{calibvit_v2_forward.31} parent=1 // pred_check
      _
    $region11: #{calibvit_v2_forward.31} parent=1 // pred_check_branch
      %26 = sbr.rel (0) target = $region13
    $region12: #{calibvit_v2_forward.31} parent=1 // pred_region
      _
    $region13: #{calibvit_v2_forward.31} parent=1 // pred_fallthru
      _
    // Predicated region
    $region14: #{calibvit_v2_forward.31} parent=1 // pred_check
      _
    $region15: #{calibvit_v2_forward.31} parent=1 // pred_check_branch
      %28 = sbr.rel (0) target = $region17
    $region16: #{calibvit_v2_forward.31} parent=1 // pred_region
      _
    $region17: #{calibvit_v2_forward.31} parent=1 // pred_fallthru
      _
    // Predicated region
    $region18: #{calibvit_v2_forward.31} parent=1 // pred_check
      _
    $region19: #{calibvit_v2_forward.31} parent=1 // pred_check_branch
      %30 = sbr.rel (0) target = $region21
    $region20: #{calibvit_v2_forward.31} parent=1 // pred_region
      %32 = dma.done [#allocation4], 1024
    $region21: #{calibvit_v2_forward.31} parent=1 // pred_fallthru
      _
    %p33 = scmp.eq.s32.totalorder 0, 0
    // Predicated region
    $region22: #{calibvit_v2_forward.31} parent=1 // pred_check
      %p34 = pneg %p33
    $region23: #{calibvit_v2_forward.31} parent=1 // pred_check_branch
      %36 = sbr.rel (%p34) target = $region25
    $region24: #{calibvit_v2_forward.31} parent=1 // pred_region
      %37 = vst [vmem:[#allocation2] sm:$0xff] 0.0
      %38 = vst [vmem:[#allocation2 + $0x8] sm:$0xff] 0.0
      %39 = vst [vmem:[#allocation2 + $0x10] sm:$0xff] 0.0
      %40 = vst [vmem:[#allocation2 + $0x18] sm:$0xff] 0.0
    $region25: #{calibvit_v2_forward.31} parent=1 // pred_fallthru
      _
    %v41 = vld [vmem:[#allocation2] sm:$0xff]
    %v42 = vld [vmem:[#allocation2 + $0x8] sm:$0xff]
    %v43 = vld [vmem:[#allocation2 + $0x10] sm:$0xff]
    %v44 = vld [vmem:[#allocation2 + $0x18] sm:$0xff]
    %v45 = vld [vmem:[%s0] sm:$0xf]
    %v46 = vld [vmem:[%s0 + $0x4] sm:$0xf]
    %v47 = vld [vmem:[%s0 + $0x8] sm:$0xf]
    %v48 = vld [vmem:[%s0 + $0xc] sm:$0xf]
    %v49 = vld [vmem:[#allocation3] sm:$0xf]
    %v50 = vld [vmem:[#allocation3 + $0x4] sm:$0xf]
    %v51 = vld [vmem:[#allocation3 + $0x8] sm:$0xf]
    %v52 = vld [vmem:[#allocation3 + $0xc] sm:$0xf]
    %v53 = vld [vmem:[#allocation3 + $0x10] sm:$0xf]
    %v54 = vld [vmem:[#allocation3 + $0x14] sm:$0xf]
    %v55 = vld [vmem:[#allocation3 + $0x18] sm:$0xf]
    %v56 = vld [vmem:[#allocation3 + $0x1c] sm:$0xf]
    %v57 = vld [vmem:[#allocation3 + $0x20] sm:$0xf]
    %v58 = vld [vmem:[#allocation3 + $0x24] sm:$0xf]
    %v59 = vld [vmem:[#allocation3 + $0x28] sm:$0xf]
    %v60 = vld [vmem:[#allocation3 + $0x2c] sm:$0xf]
    %v61 = vld [vmem:[#allocation3 + $0x30] sm:$0xf]
    %v62 = vld [vmem:[#allocation3 + $0x34] sm:$0xf]
    %v63 = vld [vmem:[#allocation3 + $0x38] sm:$0xf]
    %v64 = vld [vmem:[#allocation3 + $0x3c] sm:$0xf]
    %v69 = vunpack.c.l.b16 %v45
    %v70 = vunpack.c.l.b16 %v46
    %v71 = vunpack.c.l.b16 %v47
    %v72 = vunpack.c.l.b16 %v48
    %v73 = vpack.c.b16 %v70, %v69
    %v74 = vpack.c.b16 %v72, %v71
    %v93 = vunpack.c.l.b16 %v49
    %v94 = vunpack.c.l.b16 %v50
    %v95 = vunpack.c.l.b16 %v51
    %v96 = vunpack.c.l.b16 %v52
    %v97 = vunpack.c.l.b16 %v53
    %v98 = vunpack.c.l.b16 %v54
    %v99 = vunpack.c.l.b16 %v55
    %v100 = vunpack.c.l.b16 %v56
    %v101 = vunpack.c.l.b16 %v57
    %v102 = vunpack.c.l.b16 %v58
    %v103 = vunpack.c.l.b16 %v59
    %v104 = vunpack.c.l.b16 %v60
    %v105 = vunpack.c.l.b16 %v61
    %v106 = vunpack.c.l.b16 %v62
    %v107 = vunpack.c.l.b16 %v63
    %v108 = vunpack.c.l.b16 %v64
    %v109 = vpack.c.b16 %v94, %v93
    %v110 = vpack.c.b16 %v96, %v95
    %v111 = vpack.c.b16 %v98, %v97
    %v112 = vpack.c.b16 %v100, %v99
    %v113 = vpack.c.b16 %v102, %v101
    %v114 = vpack.c.b16 %v104, %v103
    %v115 = vpack.c.b16 %v106, %v105
    %v116 = vpack.c.b16 %v108, %v107
    %125 = vmatpush.bf16.msra.mxu0 %v116
    %126 = vmatpush.bf16.msra.mxu0 %v115
    %127 = vmatpush.bf16.msra.mxu0 %v114
    %128 = vmatpush.bf16.msra.mxu0 %v113
    %129 = vmatpush.bf16.msra.mxu0 %v112
    %130 = vmatpush.bf16.msra.mxu0 %v111
    %131 = vmatpush.bf16.msra.mxu0 %v110
    %132 = vmatpush.bf16.msra.mxu0 %v109
    %133 = vmatmul.bf16.gmra.mxu0 %v73
    %v134 = vpop.f32.mrf.mxu0
    %v135 = vadd.f32 0.0, %v134
    %v136 = vpop.f32.mrf.mxu0
    %v137 = vadd.f32 0.0, %v136
    %138 = vmatmul.bf16.gmra.mxu0 %v74
    %v139 = vpop.f32.mrf.mxu0
    %v140 = vadd.f32 0.0, %v139
    %v141 = vpop.f32.mrf.mxu0
    %v142 = vadd.f32 0.0, %v141
    %143 = vdwg.mxu0
    %v144 = vadd.f32 %v41, %v135
    %v145 = vadd.f32 %v42, %v137
    %v146 = vadd.f32 %v43, %v140
    %v147 = vadd.f32 %v44, %v142
    %148 = vst [vmem:[#allocation2] sm:$0xff] %v144
    %149 = vst [vmem:[#allocation2 + $0x8] sm:$0xff] %v145
    %150 = vst [vmem:[#allocation2 + $0x10] sm:$0xff] %v146
    %151 = vst [vmem:[#allocation2 + $0x18] sm:$0xff] %v147
    // Predicated region
    $region26: #{calibvit_v2_forward.31} parent=1 // pred_check
      %p152 = pneg %p33
    $region27: #{calibvit_v2_forward.31} parent=1 // pred_check_branch
      %154 = sbr.rel (%p152) target = $region29
    $region28: #{calibvit_v2_forward.31} parent=1 // pred_region
      %v155 = vld [vmem:[#allocation2] sm:$0xff]
      %v156 = vld [vmem:[#allocation2 + $0x8] sm:$0xff]
      %v157 = vld [vmem:[#allocation2 + $0x10] sm:$0xff]
      %v158 = vld [vmem:[#allocation2 + $0x18] sm:$0xff]
      %v159 = vld [vmem:[%s2] sm:$0x1]
      %v161 = vperm.slane %v159, 0
      %v163 = vadd.f32 %v155, %v161
      %v164 = vadd.f32 %v156, %v161
      %v165 = vadd.f32 %v157, %v161
      %v166 = vadd.f32 %v158, %v161
      %v167 = vld [vmem:[%s3] sm:$0xf]
      %v168 = vld [vmem:[%s3 + $0x4] sm:$0xf]
      %v169 = vld [vmem:[%s3 + $0x8] sm:$0xf]
      %v170 = vld [vmem:[%s3 + $0xc] sm:$0xf]
      %v171 = vunpack.c.l.bf16 %v167
      %v172 = vunpack.c.l.bf16 %v168
      %v173 = vunpack.c.l.bf16 %v169
      %v174 = vunpack.c.l.bf16 %v170
      %v175 = vadd.f32 %v163, %v171
      %v176 = vadd.f32 %v164, %v172
      %v177 = vadd.f32 %v165, %v173
      %v178 = vadd.f32 %v166, %v174
      %v179 = vpack.c.bf16 %v175, %v175
      %v180 = vpack.c.bf16 %v176, %v176
      %v181 = vpack.c.bf16 %v177, %v177
      %v182 = vpack.c.bf16 %v178, %v178
      %183 = vst [vmem:[%s4] sm:$0xf] %v179
      %184 = vst [vmem:[%s4 + $0x4] sm:$0xf] %v180
      %185 = vst [vmem:[%s4 + $0x8] sm:$0xf] %v181
      %186 = vst [vmem:[%s4 + $0xc] sm:$0xf] %v182
    $region29: #{calibvit_v2_forward.31} parent=1 // pred_fallthru
      _
    // Predicated region
    $region30: #{calibvit_v2_forward.31} parent=1 // pred_check
      _
    $region31: #{calibvit_v2_forward.31} parent=1 // pred_check_branch
      %188 = sbr.rel (0) target = $region33
    $region32: #{calibvit_v2_forward.31} parent=1 // pred_region
      _
    $region33: #{calibvit_v2_forward.31} parent=1 // pred_fallthru
      _
    // Predicated region
    $region34: #{calibvit_v2_forward.31} parent=1 // pred_check
      _
    $region35: #{calibvit_v2_forward.31} parent=1 // pred_check_branch
      %190 = sbr.rel (0) target = $region37
    $region36: #{calibvit_v2_forward.31} parent=1 // pred_region
      _
    $region37: #{calibvit_v2_forward.31} parent=1 // pred_fallthru
      _
    %191 = vsyncpa [#allocation4], 1

// kernel: calibvit_v2_forward.32
$region0: #{calibvit_v2_forward.32}
  #allocation0 [shape = 'u32[]', space=smem, size = 0x4, offset = 0x4, fixed_abs, tag = 'smem constant byte address 0x4 - core index']
  #allocation1 [shape = 'u32[72,128]{1,0:T(1,128)}', space=vmem, size = 0x9000, scoped, tag = 'internal scratch']
  #allocation2 [shape = 'bf16[32,128]{1,0:T(8,128)(2,1)}', space=vmem, size = 0x2000, scoped, tag = 'scratch operand']
  %s0 = inlined_call_operand.vmem [shape: bf16[32,128], index: 0, kind: input, shape index: {}]
  %s1 = inlined_call_operand.vmem [shape: f32[1,128], index: 1, kind: input, shape index: {}]
  %s2 = inlined_call_operand.vmem [shape: f32[1,128], index: 2, kind: input, shape index: {}]
  %s3 = inlined_call_operand.vmem [shape: bf16[128,512], index: 3, kind: input, shape index: {}]
  %s4 = inlined_call_operand.vmem [shape: f32[1,512], index: 4, kind: input, shape index: {}]
  %s5 = inlined_call_operand.vmem [shape: bf16[32,512], index: 5, kind: output, shape index: {}]
  %s6 = sld [smem:[#allocation0]]
  $region34: #{calibvit_v2_forward.32} parent=0
    _
  %s8 = ssub.s32 1, %s6
  %s9 = scalar_select 0, %s8, %s6
  // Predicated region
  $region2: #{calibvit_v2_forward.32} parent=0 // pred_check
    _
  $region3: #{calibvit_v2_forward.32} parent=0 // pred_check_branch
    %11 = sbr.rel (0) target = $region5
  $region4: #{calibvit_v2_forward.32} parent=0 // pred_region
    _
  $region5: #{calibvit_v2_forward.32} parent=0 // pred_fallthru
    _
  // Predicated region
  $region6: #{calibvit_v2_forward.32} parent=0 // pred_check
    _
  $region7: #{calibvit_v2_forward.32} parent=0 // pred_check_branch
    %13 = sbr.rel (0) target = $region9
  $region8: #{calibvit_v2_forward.32} parent=0 // pred_region
    _
  $region9: #{calibvit_v2_forward.32} parent=0 // pred_fallthru
    _
  // Predicated region
  $region10: #{calibvit_v2_forward.32} parent=0 // pred_check
    _
  $region11: #{calibvit_v2_forward.32} parent=0 // pred_check_branch
    %15 = sbr.rel (0) target = $region13
  $region12: #{calibvit_v2_forward.32} parent=0 // pred_region
    _
  $region13: #{calibvit_v2_forward.32} parent=0 // pred_fallthru
    _
  // Predicated region
  $region14: #{calibvit_v2_forward.32} parent=0 // pred_check
    _
  $region15: #{calibvit_v2_forward.32} parent=0 // pred_check_branch
    %17 = sbr.rel (0) target = $region17
  $region16: #{calibvit_v2_forward.32} parent=0 // pred_region
    _
  $region17: #{calibvit_v2_forward.32} parent=0 // pred_fallthru
    _
  // Predicated region
  $region18: #{calibvit_v2_forward.32} parent=0 // pred_check
    _
  $region19: #{calibvit_v2_forward.32} parent=0 // pred_check_branch
    %19 = sbr.rel (0) target = $region21
  $region20: #{calibvit_v2_forward.32} parent=0 // pred_region
    _
  $region21: #{calibvit_v2_forward.32} parent=0 // pred_fallthru
    _
  %p20 = scmp.eq.s32.totalorder 0, 0
  // Predicated region
  $region22: #{calibvit_v2_forward.32} parent=0 // pred_check
    %p21 = pneg %p20
  $region23: #{calibvit_v2_forward.32} parent=0 // pred_check_branch
    %23 = sbr.rel (%p21) target = $region25
  $region24: #{calibvit_v2_forward.32} parent=0 // pred_region
    %v24 = vld [vmem:[%s0] sm:$0xf]
    %v25 = vld [vmem:[%s0 + $0x4] sm:$0xf]
    %v26 = vld [vmem:[%s0 + $0x8] sm:$0xf]
    %v27 = vld [vmem:[%s0 + $0xc] sm:$0xf]
    %v28 = vunpack.c.l.bf16 %v24
    %v29 = vunpack.c.l.bf16 %v25
    %v30 = vunpack.c.l.bf16 %v26
    %v31 = vunpack.c.l.bf16 %v27
    %32 = vadd.xlane.f32.xlu0 %v28
    %v33 = vpop.xlane.xlu0 %32
    %34 = vadd.xlane.f32.xlu0 %v29
    %v35 = vpop.xlane.xlu0 %34
    %36 = vadd.xlane.f32.xlu0 %v30
    %v37 = vpop.xlane.xlu0 %36
    %38 = vadd.xlane.f32.xlu0 %v31
    %v39 = vpop.xlane.xlu0 %38
    %v40 = vrcp.pop 128.0
    %v41 = vmul.f32 128.0, %v40
    %v42 = vsub.f32 1.0, %v41
    %v43 = vmul.f32 %v40, %v42
    %v44 = vadd.f32 %v40, %v43
    %vm45 = vweird.f32 %v40
    %v46 = vsel %vm45, %v40, %v44
    %v47 = vmul.f32 %v33, %v46
    %v48 = vmul.f32 %v35, %v46
    %v49 = vmul.f32 %v37, %v46
    %v50 = vmul.f32 %v39, %v46
    %v51 = vsub.f32 %v28, %v47
    %v52 = vsub.f32 %v29, %v48
    %v53 = vsub.f32 %v30, %v49
    %v54 = vsub.f32 %v31, %v50
    %v55 = vmul.f32 %v51, %v51
    %v56 = vmul.f32 %v52, %v52
    %v57 = vmul.f32 %v53, %v53
    %v58 = vmul.f32 %v54, %v54
    %59 = vadd.xlane.f32.xlu0 %v55
    %v60 = vpop.xlane.xlu0 %59
    %61 = vadd.xlane.f32.xlu0 %v56
    %v62 = vpop.xlane.xlu0 %61
    %63 = vadd.xlane.f32.xlu0 %v57
    %v64 = vpop.xlane.xlu0 %63
    %65 = vadd.xlane.f32.xlu0 %v58
    %v66 = vpop.xlane.xlu0 %65
    %v67 = vmul.f32 %v60, %v46
    %v68 = vmul.f32 %v62, %v46
    %v69 = vmul.f32 %v64, %v46
    %v70 = vmul.f32 %v66, %v46
    %v71 = vadd.f32 %v67, 1e-05
    %v72 = vadd.f32 %v68, 1e-05
    %v73 = vadd.f32 %v69, 1e-05
    %v74 = vadd.f32 %v70, 1e-05
    %v75 = vrsqrt.pop %v71
    %v76 = vmul.f32 %v75, %v71
    %v77 = vmul.f32 %v76, %v75
    %v78 = vmul.f32 0.5, %v77
    %v79 = vsub.f32 1.5, %v78
    %v80 = vmul.f32 %v75, %v79
    %vm81 = vweird.f32 %v71
    %vm82 = vweird.f32 %v75
    %vm83 = vmor %vm81, %vm82
    %v84 = vsel %vm83, %v75, %v80
    %v85 = vrsqrt.pop %v72
    %v86 = vmul.f32 %v85, %v72
    %v87 = vmul.f32 %v86, %v85
    %v88 = vmul.f32 0.5, %v87
    %v89 = vsub.f32 1.5, %v88
    %v90 = vmul.f32 %v85, %v89
    %vm91 = vweird.f32 %v72
    %vm92 = vweird.f32 %v85
    %vm93 = vmor %vm91, %vm92
    %v94 = vsel %vm93, %v85, %v90
    %v95 = vrsqrt.pop %v73
    %v96 = vmul.f32 %v95, %v73
    %v97 = vmul.f32 %v96, %v95
    %v98 = vmul.f32 0.5, %v97
    %v99 = vsub.f32 1.5, %v98
    %v100 = vmul.f32 %v95, %v99
    %vm101 = vweird.f32 %v73
    %vm102 = vweird.f32 %v95
    %vm103 = vmor %vm101, %vm102
    %v104 = vsel %vm103, %v95, %v100
    %v105 = vrsqrt.pop %v74
    %v106 = vmul.f32 %v105, %v74
    %v107 = vmul.f32 %v106, %v105
    %v108 = vmul.f32 0.5, %v107
    %v109 = vsub.f32 1.5, %v108
    %v110 = vmul.f32 %v105, %v109
    %vm111 = vweird.f32 %v74
    %vm112 = vweird.f32 %v105
    %vm113 = vmor %vm111, %vm112
    %v114 = vsel %vm113, %v105, %v110
    %v115 = vmul.f32 %v51, %v84
    %v116 = vmul.f32 %v52, %v94
    %v117 = vmul.f32 %v53, %v104
    %v118 = vmul.f32 %v54, %v114
    %v119 = vld [vmem:[%s1] sm:$0x1]
    %v121 = vperm.slane %v119, 0
    %v123 = vmul.f32 %v115, %v121
    %v124 = vmul.f32 %v116, %v121
    %v125 = vmul.f32 %v117, %v121
    %v126 = vmul.f32 %v118, %v121
    %v127 = vld [vmem:[%s2] sm:$0x1]
    %v129 = vperm.slane %v127, 0
    %v131 = vadd.f32 %v123, %v129
    %v132 = vadd.f32 %v124, %v129
    %v133 = vadd.f32 %v125, %v129
    %v134 = vadd.f32 %v126, %v129
    %v135 = vpack.c.bf16 %v131, %v131
    %v136 = vpack.c.bf16 %v132, %v132
    %v137 = vpack.c.bf16 %v133, %v133
    %v138 = vpack.c.bf16 %v134, %v134
    %139 = vst [vmem:[#allocation2] sm:$0xf] %v135
    %140 = vst [vmem:[#allocation2 + $0x4] sm:$0xf] %v136
    %141 = vst [vmem:[#allocation2 + $0x8] sm:$0xf] %v137
    %142 = vst [vmem:[#allocation2 + $0xc] sm:$0xf] %v138
  $region25: #{calibvit_v2_forward.32} parent=0 // pred_fallthru
    _
  %v143 = vld [vmem:[#allocation2] sm:$0xf]
  %v144 = vld [vmem:[#allocation2 + $0x4] sm:$0xf]
  %v145 = vld [vmem:[#allocation2 + $0x8] sm:$0xf]
  %v146 = vld [vmem:[#allocation2 + $0xc] sm:$0xf]
  %v147 = vld [vmem:[%s3] sm:$0xff]
  %v148 = vld [vmem:[%s3 + $0x8] sm:$0xff]
  %v149 = vld [vmem:[%s3 + $0x10] sm:$0xff]
  %v150 = vld [vmem:[%s3 + $0x18] sm:$0xff]
  %v151 = vld [vmem:[%s3 + $0x20] sm:$0xff]
  %v152 = vld [vmem:[%s3 + $0x28] sm:$0xff]
  %v153 = vld [vmem:[%s3 + $0x30] sm:$0xff]
  %v154 = vld [vmem:[%s3 + $0x38] sm:$0xff]
  %v155 = vld [vmem:[%s3 + $0x40] sm:$0xff]
  %v156 = vld [vmem:[%s3 + $0x48] sm:$0xff]
  %v157 = vld [vmem:[%s3 + $0x50] sm:$0xff]
  %v158 = vld [vmem:[%s3 + $0x58] sm:$0xff]
  %v159 = vld [vmem:[%s3 + $0x60] sm:$0xff]
  %v160 = vld [vmem:[%s3 + $0x68] sm:$0xff]
  %v161 = vld [vmem:[%s3 + $0x70] sm:$0xff]
  %v162 = vld [vmem:[%s3 + $0x78] sm:$0xff]
  %v163 = vld [vmem:[%s3 + $0x80] sm:$0xff]
  %v164 = vld [vmem:[%s3 + $0x88] sm:$0xff]
  %v165 = vld [vmem:[%s3 + $0x90] sm:$0xff]
  %v166 = vld [vmem:[%s3 + $0x98] sm:$0xff]
  %v167 = vld [vmem:[%s3 + $0xa0] sm:$0xff]
  %v168 = vld [vmem:[%s3 + $0xa8] sm:$0xff]
  %v169 = vld [vmem:[%s3 + $0xb0] sm:$0xff]
  %v170 = vld [vmem:[%s3 + $0xb8] sm:$0xff]
  %v171 = vld [vmem:[%s3 + $0xc0] sm:$0xff]
  %v172 = vld [vmem:[%s3 + $0xc8] sm:$0xff]
  %v173 = vld [vmem:[%s3 + $0xd0] sm:$0xff]
  %v174 = vld [vmem:[%s3 + $0xd8] sm:$0xff]
  %v175 = vld [vmem:[%s3 + $0xe0] sm:$0xff]
  %v176 = vld [vmem:[%s3 + $0xe8] sm:$0xff]
  %v177 = vld [vmem:[%s3 + $0xf0] sm:$0xff]
  %v178 = vld [vmem:[%s3 + $0xf8] sm:$0xff]
  %v179 = vld [vmem:[%s4] sm:$0xf]
  %v181 = vperm.slane %v179, 0
  %v182 = vperm.slane %v179, 1
  %v183 = vperm.slane %v179, 2
  %v184 = vperm.slane %v179, 3
  %v193 = vunpack.c.l.b16 %v143
  %v194 = vunpack.c.l.b16 %v144
  %v195 = vunpack.c.l.b16 %v145
  %v196 = vunpack.c.l.b16 %v146
  %v197 = vpack.c.b16 %v194, %v193
  %v198 = vpack.c.b16 %v196, %v195
  %v233 = vunpack.c.l.b16 %v147
  %v234 = vunpack.c.h.b16 %v147
  %v235 = vunpack.c.l.b16 %v148
  %v236 = vunpack.c.h.b16 %v148
  %v237 = vunpack.c.l.b16 %v149
  %v238 = vunpack.c.h.b16 %v149
  %v239 = vunpack.c.l.b16 %v150
  %v240 = vunpack.c.h.b16 %v150
  %v241 = vunpack.c.l.b16 %v151
  %v242 = vunpack.c.h.b16 %v151
  %v243 = vunpack.c.l.b16 %v152
  %v244 = vunpack.c.h.b16 %v152
  %v245 = vunpack.c.l.b16 %v153
  %v246 = vunpack.c.h.b16 %v153
  %v247 = vunpack.c.l.b16 %v154
  %v248 = vunpack.c.h.b16 %v154
  %v249 = vunpack.c.l.b16 %v155
  %v250 = vunpack.c.h.b16 %v155
  %v251 = vunpack.c.l.b16 %v156
  %v252 = vunpack.c.h.b16 %v156
  %v253 = vunpack.c.l.b16 %v157
  %v254 = vunpack.c.h.b16 %v157
  %v255 = vunpack.c.l.b16 %v158
  %v256 = vunpack.c.h.b16 %v158
  %v257 = vunpack.c.l.b16 %v159
  %v258 = vunpack.c.h.b16 %v159
  %v259 = vunpack.c.l.b16 %v160
  %v260 = vunpack.c.h.b16 %v160
  %v261 = vunpack.c.l.b16 %v161
  %v262 = vunpack.c.h.b16 %v161
  %v263 = vunpack.c.l.b16 %v162
  %v264 = vunpack.c.h.b16 %v162
  %v265 = vunpack.c.l.b16 %v163
  %v266 = vunpack.c.h.b16 %v163
  %v267 = vunpack.c.l.b16 %v164
  %v268 = vunpack.c.h.b16 %v164
  %v269 = vunpack.c.l.b16 %v165
  %v270 = vunpack.c.h.b16 %v165
  %v271 = vunpack.c.l.b16 %v166
  %v272 = vunpack.c.h.b16 %v166
  %v273 = vunpack.c.l.b16 %v167
  %v274 = vunpack.c.h.b16 %v167
  %v275 = vunpack.c.l.b16 %v168
  %v276 = vunpack.c.h.b16 %v168
  %v277 = vunpack.c.l.b16 %v169
  %v278 = vunpack.c.h.b16 %v169
  %v279 = vunpack.c.l.b16 %v170
  %v280 = vunpack.c.h.b16 %v170
  %v281 = vunpack.c.l.b16 %v171
  %v282 = vunpack.c.h.b16 %v171
  %v283 = vunpack.c.l.b16 %v172
  %v284 = vunpack.c.h.b16 %v172
  %v285 = vunpack.c.l.b16 %v173
  %v286 = vunpack.c.h.b16 %v173
  %v287 = vunpack.c.l.b16 %v174
  %v288 = vunpack.c.h.b16 %v174
  %v289 = vunpack.c.l.b16 %v175
  %v290 = vunpack.c.h.b16 %v175
  %v291 = vunpack.c.l.b16 %v176
  %v292 = vunpack.c.h.b16 %v176
  %v293 = vunpack.c.l.b16 %v177
  %v294 = vunpack.c.h.b16 %v177
  %v295 = vunpack.c.l.b16 %v178
  %v296 = vunpack.c.h.b16 %v178
  %v297 = vpack.c.b16 %v237, %v233
  %v298 = vpack.c.b16 %v238, %v234
  %v299 = vpack.c.b16 %v239, %v235
  %v300 = vpack.c.b16 %v240, %v236
  %v301 = vpack.c.b16 %v245, %v241
  %v302 = vpack.c.b16 %v246, %v242
  %v303 = vpack.c.b16 %v247, %v243
  %v304 = vpack.c.b16 %v248, %v244
  %v305 = vpack.c.b16 %v253, %v249
  %v306 = vpack.c.b16 %v254, %v250
  %v307 = vpack.c.b16 %v255, %v251
  %v308 = vpack.c.b16 %v256, %v252
  %v309 = vpack.c.b16 %v261, %v257
  %v310 = vpack.c.b16 %v262, %v258
  %v311 = vpack.c.b16 %v263, %v259
  %v312 = vpack.c.b16 %v264, %v260
  %v313 = vpack.c.b16 %v269, %v265
  %v314 = vpack.c.b16 %v270, %v266
  %v315 = vpack.c.b16 %v271, %v267
  %v316 = vpack.c.b16 %v272, %v268
  %v317 = vpack.c.b16 %v277, %v273
  %v318 = vpack.c.b16 %v278, %v274
  %v319 = vpack.c.b16 %v279, %v275
  %v320 = vpack.c.b16 %v280, %v276
  %v321 = vpack.c.b16 %v285, %v281
  %v322 = vpack.c.b16 %v286, %v282
  %v323 = vpack.c.b16 %v287, %v283
  %v324 = vpack.c.b16 %v288, %v284
  %v325 = vpack.c.b16 %v293, %v289
  %v326 = vpack.c.b16 %v294, %v290
  %v327 = vpack.c.b16 %v295, %v291
  %v328 = vpack.c.b16 %v296, %v292
  %361 = vmatpush.bf16.msra.mxu0 %v325
  %362 = vmatpush.bf16.msra.mxu0 %v321
  %363 = vmatpush.bf16.msra.mxu0 %v317
  %364 = vmatpush.bf16.msra.mxu0 %v313
  %365 = vmatpush.bf16.msra.mxu0 %v309
  %366 = vmatpush.bf16.msra.mxu0 %v305
  %367 = vmatpush.bf16.msra.mxu0 %v301
  %368 = vmatpush.bf16.msra.mxu0 %v297
  %369 = vmatmul.bf16.gmra.mxu0 %v197
  %v370 = vpop.f32.mrf.mxu0
  %v371 = vadd.f32 %v181, %v370
  %v372 = vpop.f32.mrf.mxu0
  %v373 = vadd.f32 %v181, %v372
  %374 = vmatmul.bf16.gmra.mxu0 %v198
  %v375 = vpop.f32.mrf.mxu0
  %v376 = vadd.f32 %v181, %v375
  %v377 = vpop.f32.mrf.mxu0
  %v378 = vadd.f32 %v181, %v377
  %379 = vdwg.mxu0
  %380 = vmatpush.bf16.msra.mxu0 %v326
  %381 = vmatpush.bf16.msra.mxu0 %v322
  %382 = vmatpush.bf16.msra.mxu0 %v318
  %383 = vmatpush.bf16.msra.mxu0 %v314
  %384 = vmatpush.bf16.msra.mxu0 %v310
  %385 = vmatpush.bf16.msra.mxu0 %v306
  %386 = vmatpush.bf16.msra.mxu0 %v302
  %387 = vmatpush.bf16.msra.mxu0 %v298
  %388 = vmatmul.bf16.gmra.mxu0 %v197
  %v389 = vpop.f32.mrf.mxu0
  %v390 = vadd.f32 %v182, %v389
  %v391 = vpop.f32.mrf.mxu0
  %v392 = vadd.f32 %v182, %v391
  %393 = vmatmul.bf16.gmra.mxu0 %v198
  %v394 = vpop.f32.mrf.mxu0
  %v395 = vadd.f32 %v182, %v394
  %v396 = vpop.f32.mrf.mxu0
  %v397 = vadd.f32 %v182, %v396
  %398 = vdwg.mxu0
  %399 = vmatpush.bf16.msra.mxu0 %v327
  %400 = vmatpush.bf16.msra.mxu0 %v323
  %401 = vmatpush.bf16.msra.mxu0 %v319
  %402 = vmatpush.bf16.msra.mxu0 %v315
  %403 = vmatpush.bf16.msra.mxu0 %v311
  %404 = vmatpush.bf16.msra.mxu0 %v307
  %405 = vmatpush.bf16.msra.mxu0 %v303
  %406 = vmatpush.bf16.msra.mxu0 %v299
  %407 = vmatmul.bf16.gmra.mxu0 %v197
  %v408 = vpop.f32.mrf.mxu0
  %v409 = vadd.f32 %v183, %v408
  %v410 = vpop.f32.mrf.mxu0
  %v411 = vadd.f32 %v183, %v410
  %412 = vmatmul.bf16.gmra.mxu0 %v198
  %v413 = vpop.f32.mrf.mxu0
  %v414 = vadd.f32 %v183, %v413
  %v415 = vpop.f32.mrf.mxu0
  %v416 = vadd.f32 %v183, %v415
  %417 = vdwg.mxu0
  %418 = vmatpush.bf16.msra.mxu0 %v328
  %419 = vmatpush.bf16.msra.mxu0 %v324
  %420 = vmatpush.bf16.msra.mxu0 %v320
  %421 = vmatpush.bf16.msra.mxu0 %v316
  %422 = vmatpush.bf16.msra.mxu0 %v312
  %423 = vmatpush.bf16.msra.mxu0 %v308
  %424 = vmatpush.bf16.msra.mxu0 %v304
  %425 = vmatpush.bf16.msra.mxu0 %v300
  %426 = vmatmul.bf16.gmra.mxu0 %v197
  %v427 = vpop.f32.mrf.mxu0
  %v428 = vadd.f32 %v184, %v427
  %v429 = vpop.f32.mrf.mxu0
  %v430 = vadd.f32 %v184, %v429
  %431 = vmatmul.bf16.gmra.mxu0 %v198
  %v432 = vpop.f32.mrf.mxu0
  %v433 = vadd.f32 %v184, %v432
  %v434 = vpop.f32.mrf.mxu0
  %v435 = vadd.f32 %v184, %v434
  %436 = vdwg.mxu0
  %v437 = vmul.f32 %v371, %v371
  %v438 = vmul.f32 %v390, %v390
  %v439 = vmul.f32 %v409, %v409
  %v440 = vmul.f32 %v428, %v428
  %v441 = vmul.f32 %v373, %v373
  %v442 = vmul.f32 %v392, %v392
  %v443 = vmul.f32 %v411, %v411
  %v444 = vmul.f32 %v430, %v430
  %v445 = vmul.f32 %v376, %v376
  %v446 = vmul.f32 %v395, %v395
  %v447 = vmul.f32 %v414, %v414
  %v448 = vmul.f32 %v433, %v433
  %v449 = vmul.f32 %v378, %v378
  %v450 = vmul.f32 %v397, %v397
  %v451 = vmul.f32 %v416, %v416
  %v452 = vmul.f32 %v435, %v435
  %v453 = vmul.f32 %v371, %v437
  %v454 = vmul.f32 %v390, %v438
  %v455 = vmul.f32 %v409, %v439
  %v456 = vmul.f32 %v428, %v440
  %v457 = vmul.f32 %v373, %v441
  %v458 = vmul.f32 %v392, %v442
  %v459 = vmul.f32 %v411, %v443
  %v460 = vmul.f32 %v430, %v444
  %v461 = vmul.f32 %v376, %v445
  %v462 = vmul.f32 %v395, %v446
  %v463 = vmul.f32 %v414, %v447
  %v464 = vmul.f32 %v433, %v448
  %v465 = vmul.f32 %v378, %v449
  %v466 = vmul.f32 %v397, %v450
  %v467 = vmul.f32 %v416, %v451
  %v468 = vmul.f32 %v435, %v452
  %v469 = vmul.f32 %v453, 0.044715
  %v470 = vmul.f32 %v454, 0.044715
  %v471 = vmul.f32 %v455, 0.044715
  %v472 = vmul.f32 %v456, 0.044715
  %v473 = vmul.f32 %v457, 0.044715
  %v474 = vmul.f32 %v458, 0.044715
  %v475 = vmul.f32 %v459, 0.044715
  %v476 = vmul.f32 %v460, 0.044715
  %v477 = vmul.f32 %v461, 0.044715
  %v478 = vmul.f32 %v462, 0.044715
  %v479 = vmul.f32 %v463, 0.044715
  %v480 = vmul.f32 %v464, 0.044715
  %v481 = vmul.f32 %v465, 0.044715
  %v482 = vmul.f32 %v466, 0.044715
  %v483 = vmul.f32 %v467, 0.044715
  %v484 = vmul.f32 %v468, 0.044715
  %v485 = vadd.f32 %v371, %v469
  %v486 = vadd.f32 %v390, %v470
  %v487 = vadd.f32 %v409, %v471
  %v488 = vadd.f32 %v428, %v472
  %v489 = vadd.f32 %v373, %v473
  %v490 = vadd.f32 %v392, %v474
  %v491 = vadd.f32 %v411, %v475
  %v492 = vadd.f32 %v430, %v476
  %v493 = vadd.f32 %v376, %v477
  %v494 = vadd.f32 %v395, %v478
  %v495 = vadd.f32 %v414, %v479
  %v496 = vadd.f32 %v433, %v480
  %v497 = vadd.f32 %v378, %v481
  %v498 = vadd.f32 %v397, %v482
  %v499 = vadd.f32 %v416, %v483
  %v500 = vadd.f32 %v435, %v484
  %v501 = vmul.f32 %v485, 0.7978846
  %v502 = vmul.f32 %v486, 0.7978846
  %v503 = vmul.f32 %v487, 0.7978846
  %v504 = vmul.f32 %v488, 0.7978846
  %v505 = vmul.f32 %v489, 0.7978846
  %v506 = vmul.f32 %v490, 0.7978846
  %v507 = vmul.f32 %v491, 0.7978846
  %v508 = vmul.f32 %v492, 0.7978846
  %v509 = vmul.f32 %v493, 0.7978846
  %v510 = vmul.f32 %v494, 0.7978846
  %v511 = vmul.f32 %v495, 0.7978846
  %v512 = vmul.f32 %v496, 0.7978846
  %v513 = vmul.f32 %v497, 0.7978846
  %v514 = vmul.f32 %v498, 0.7978846
  %v515 = vmul.f32 %v499, 0.7978846
  %v516 = vmul.f32 %v500, 0.7978846
  %v517 = vtanh.pop %v501
  %v518 = vtanh.pop %v502
  %v519 = vtanh.pop %v503
  %v520 = vtanh.pop %v504
  %v521 = vtanh.pop %v505
  %v522 = vtanh.pop %v506
  %v523 = vtanh.pop %v507
  %v524 = vtanh.pop %v508
  %v525 = vtanh.pop %v509
  %v526 = vtanh.pop %v510
  %v527 = vtanh.pop %v511
  %v528 = vtanh.pop %v512
  %v529 = vtanh.pop %v513
  %v530 = vtanh.pop %v514
  %v531 = vtanh.pop %v515
  %v532 = vtanh.pop %v516
  %v533 = vadd.f32 %v517, 1.0
  %v534 = vadd.f32 %v518, 1.0
  %v535 = vadd.f32 %v519, 1.0
  %v536 = vadd.f32 %v520, 1.0
  %v537 = vadd.f32 %v521, 1.0
  %v538 = vadd.f32 %v522, 1.0
  %v539 = vadd.f32 %v523, 1.0
  %v540 = vadd.f32 %v524, 1.0
  %v541 = vadd.f32 %v525, 1.0
  %v542 = vadd.f32 %v526, 1.0
  %v543 = vadd.f32 %v527, 1.0
  %v544 = vadd.f32 %v528, 1.0
  %v545 = vadd.f32 %v529, 1.0
  %v546 = vadd.f32 %v530, 1.0
  %v547 = vadd.f32 %v531, 1.0
  %v548 = vadd.f32 %v532, 1.0
  %v549 = vmul.f32 %v533, 0.5
  %v550 = vmul.f32 %v534, 0.5
  %v551 = vmul.f32 %v535, 0.5
  %v552 = vmul.f32 %v536, 0.5
  %v553 = vmul.f32 %v537, 0.5
  %v554 = vmul.f32 %v538, 0.5
  %v555 = vmul.f32 %v539, 0.5
  %v556 = vmul.f32 %v540, 0.5
  %v557 = vmul.f32 %v541, 0.5
  %v558 = vmul.f32 %v542, 0.5
  %v559 = vmul.f32 %v543, 0.5
  %v560 = vmul.f32 %v544, 0.5
  %v561 = vmul.f32 %v545, 0.5
  %v562 = vmul.f32 %v546, 0.5
  %v563 = vmul.f32 %v547, 0.5
  %v564 = vmul.f32 %v548, 0.5
  %v565 = vmul.f32 %v371, %v549
  %v566 = vmul.f32 %v390, %v550
  %v567 = vmul.f32 %v409, %v551
  %v568 = vmul.f32 %v428, %v552
  %v569 = vmul.f32 %v373, %v553
  %v570 = vmul.f32 %v392, %v554
  %v571 = vmul.f32 %v411, %v555
  %v572 = vmul.f32 %v430, %v556
  %v573 = vmul.f32 %v376, %v557
  %v574 = vmul.f32 %v395, %v558
  %v575 = vmul.f32 %v414, %v559
  %v576 = vmul.f32 %v433, %v560
  %v577 = vmul.f32 %v378, %v561
  %v578 = vmul.f32 %v397, %v562
  %v579 = vmul.f32 %v416, %v563
  %v580 = vmul.f32 %v435, %v564
  %v581 = vpack.c.bf16 %v566, %v565
  %v582 = vpack.c.bf16 %v568, %v567
  %v583 = vpack.c.bf16 %v570, %v569
  %v584 = vpack.c.bf16 %v572, %v571
  %v585 = vpack.c.bf16 %v574, %v573
  %v586 = vpack.c.bf16 %v576, %v575
  %v587 = vpack.c.bf16 %v578, %v577
  %v588 = vpack.c.bf16 %v580, %v579
  %589 = vst [vmem:[%s5] sm:$0xff] %v581
  %590 = vst [vmem:[%s5 + $0x8] sm:$0xff] %v582
  %591 = vst [vmem:[%s5 + $0x10] sm:$0xff] %v583
  %592 = vst [vmem:[%s5 + $0x18] sm:$0xff] %v584
  %593 = vst [vmem:[%s5 + $0x20] sm:$0xff] %v585
  %594 = vst [vmem:[%s5 + $0x28] sm:$0xff] %v586
  %595 = vst [vmem:[%s5 + $0x30] sm:$0xff] %v587
  %596 = vst [vmem:[%s5 + $0x38] sm:$0xff] %v588
  // Predicated region
  $region26: #{calibvit_v2_forward.32} parent=0 // pred_check
    _
  $region27: #{calibvit_v2_forward.32} parent=0 // pred_check_branch
    %598 = sbr.rel (0) target = $region29
  $region28: #{calibvit_v2_forward.32} parent=0 // pred_region
    _
  $region29: #{calibvit_v2_forward.32} parent=0 // pred_fallthru
    _
  // Predicated region
  $region30: #{calibvit_v2_forward.32} parent=0 // pred_check
    _
  $region31: #{calibvit_v2_forward.32} parent=0 // pred_check_branch
    %600 = sbr.rel (0) target = $region33
  $region32: #{calibvit_v2_forward.32} parent=0 // pred_region
    _
  $region33: #{calibvit_v2_forward.32} parent=0 // pred_fallthru
    _

// kernel: calibvit_v2_forward.33
$region0: #{calibvit_v2_forward.33}
  #allocation0 [shape = 'u32[]', space=smem, size = 0x4, offset = 0x4, fixed_abs, tag = 'smem constant byte address 0x4 - core index']
  #allocation1 [shape = 'u32[72,128]{1,0:T(1,128)}', space=vmem, size = 0x9000, scoped, tag = 'internal scratch']
  #allocation2 [shape = 'f32[32,128]{1,0:T(8,128)}', space=vmem, size = 0x4000, scoped, tag = 'scratch operand']
  %s0 = inlined_call_operand.vmem [shape: bf16[32,512], index: 0, kind: input, shape index: {}]
  %s1 = inlined_call_operand.vmem [shape: bf16[512,128], index: 1, kind: input, shape index: {}]
  %s2 = inlined_call_operand.vmem [shape: f32[1,128], index: 2, kind: input, shape index: {}]
  %s3 = inlined_call_operand.vmem [shape: bf16[32,128], index: 3, kind: input, shape index: {}, may-alias: {3,4}]
  %s4 = inlined_call_operand.vmem [shape: bf16[32,128], index: 4, kind: output, shape index: {}, may-alias: {3,4}]
  %s5 = sld [smem:[#allocation0]]
  $region34: #{calibvit_v2_forward.33} parent=0
    _
  %s7 = ssub.s32 1, %s5
  %s8 = scalar_select 0, %s7, %s5
  // Predicated region
  $region2: #{calibvit_v2_forward.33} parent=0 // pred_check
    _
  $region3: #{calibvit_v2_forward.33} parent=0 // pred_check_branch
    %10 = sbr.rel (0) target = $region5
  $region4: #{calibvit_v2_forward.33} parent=0 // pred_region
    _
  $region5: #{calibvit_v2_forward.33} parent=0 // pred_fallthru
    _
  // Predicated region
  $region6: #{calibvit_v2_forward.33} parent=0 // pred_check
    _
  $region7: #{calibvit_v2_forward.33} parent=0 // pred_check_branch
    %12 = sbr.rel (0) target = $region9
  $region8: #{calibvit_v2_forward.33} parent=0 // pred_region
    _
  $region9: #{calibvit_v2_forward.33} parent=0 // pred_fallthru
    _
  // Predicated region
  $region10: #{calibvit_v2_forward.33} parent=0 // pred_check
    _
  $region11: #{calibvit_v2_forward.33} parent=0 // pred_check_branch
    %14 = sbr.rel (0) target = $region13
  $region12: #{calibvit_v2_forward.33} parent=0 // pred_region
    _
  $region13: #{calibvit_v2_forward.33} parent=0 // pred_fallthru
    _
  // Predicated region
  $region14: #{calibvit_v2_forward.33} parent=0 // pred_check
    _
  $region15: #{calibvit_v2_forward.33} parent=0 // pred_check_branch
    %16 = sbr.rel (0) target = $region17
  $region16: #{calibvit_v2_forward.33} parent=0 // pred_region
    _
  $region17: #{calibvit_v2_forward.33} parent=0 // pred_fallthru
    _
  %p17 = scmp.eq.s32.totalorder 0, 0
  // Predicated region
  $region18: #{calibvit_v2_forward.33} parent=0 // pred_check
    %p18 = pneg %p17
  $region19: #{calibvit_v2_forward.33} parent=0 // pred_check_branch
    %20 = sbr.rel (%p18) target = $region21
  $region20: #{calibvit_v2_forward.33} parent=0 // pred_region
    %21 = vst [vmem:[#allocation2] sm:$0xff] 0.0
    %22 = vst [vmem:[#allocation2 + $0x8] sm:$0xff] 0.0
    %23 = vst [vmem:[#allocation2 + $0x10] sm:$0xff] 0.0
    %24 = vst [vmem:[#allocation2 + $0x18] sm:$0xff] 0.0
  $region21: #{calibvit_v2_forward.33} parent=0 // pred_fallthru
    _
  %v25 = vld [vmem:[#allocation2] sm:$0xff]
  %v26 = vld [vmem:[#allocation2 + $0x8] sm:$0xff]
  %v27 = vld [vmem:[#allocation2 + $0x10] sm:$0xff]
  %v28 = vld [vmem:[#allocation2 + $0x18] sm:$0xff]
  %v29 = vld [vmem:[%s0] sm:$0xff]
  %v30 = vld [vmem:[%s0 + $0x8] sm:$0xff]
  %v31 = vld [vmem:[%s0 + $0x10] sm:$0xff]
  %v32 = vld [vmem:[%s0 + $0x18] sm:$0xff]
  %v33 = vld [vmem:[%s0 + $0x20] sm:$0xff]
  %v34 = vld [vmem:[%s0 + $0x28] sm:$0xff]
  %v35 = vld [vmem:[%s0 + $0x30] sm:$0xff]
  %v36 = vld [vmem:[%s0 + $0x38] sm:$0xff]
  %v37 = vld [vmem:[%s1] sm:$0xf]
  %v38 = vld [vmem:[%s1 + $0x4] sm:$0xf]
  %v39 = vld [vmem:[%s1 + $0x8] sm:$0xf]
  %v40 = vld [vmem:[%s1 + $0xc] sm:$0xf]
  %v41 = vld [vmem:[%s1 + $0x10] sm:$0xf]
  %v42 = vld [vmem:[%s1 + $0x14] sm:$0xf]
  %v43 = vld [vmem:[%s1 + $0x18] sm:$0xf]
  %v44 = vld [vmem:[%s1 + $0x1c] sm:$0xf]
  %v45 = vld [vmem:[%s1 + $0x20] sm:$0xf]
  %v46 = vld [vmem:[%s1 + $0x24] sm:$0xf]
  %v47 = vld [vmem:[%s1 + $0x28] sm:$0xf]
  %v48 = vld [vmem:[%s1 + $0x2c] sm:$0xf]
  %v49 = vld [vmem:[%s1 + $0x30] sm:$0xf]
  %v50 = vld [vmem:[%s1 + $0x34] sm:$0xf]
  %v51 = vld [vmem:[%s1 + $0x38] sm:$0xf]
  %v52 = vld [vmem:[%s1 + $0x3c] sm:$0xf]
  %v53 = vld [vmem:[%s1 + $0x40] sm:$0xf]
  %v54 = vld [vmem:[%s1 + $0x44] sm:$0xf]
  %v55 = vld [vmem:[%s1 + $0x48] sm:$0xf]
  %v56 = vld [vmem:[%s1 + $0x4c] sm:$0xf]
  %v57 = vld [vmem:[%s1 + $0x50] sm:$0xf]
  %v58 = vld [vmem:[%s1 + $0x54] sm:$0xf]
  %v59 = vld [vmem:[%s1 + $0x58] sm:$0xf]
  %v60 = vld [vmem:[%s1 + $0x5c] sm:$0xf]
  %v61 = vld [vmem:[%s1 + $0x60] sm:$0xf]
  %v62 = vld [vmem:[%s1 + $0x64] sm:$0xf]
  %v63 = vld [vmem:[%s1 + $0x68] sm:$0xf]
  %v64 = vld [vmem:[%s1 + $0x6c] sm:$0xf]
  %v65 = vld [vmem:[%s1 + $0x70] sm:$0xf]
  %v66 = vld [vmem:[%s1 + $0x74] sm:$0xf]
  %v67 = vld [vmem:[%s1 + $0x78] sm:$0xf]
  %v68 = vld [vmem:[%s1 + $0x7c] sm:$0xf]
  %v69 = vld [vmem:[%s1 + $0x80] sm:$0xf]
  %v70 = vld [vmem:[%s1 + $0x84] sm:$0xf]
  %v71 = vld [vmem:[%s1 + $0x88] sm:$0xf]
  %v72 = vld [vmem:[%s1 + $0x8c] sm:$0xf]
  %v73 = vld [vmem:[%s1 + $0x90] sm:$0xf]
  %v74 = vld [vmem:[%s1 + $0x94] sm:$0xf]
  %v75 = vld [vmem:[%s1 + $0x98] sm:$0xf]
  %v76 = vld [vmem:[%s1 + $0x9c] sm:$0xf]
  %v77 = vld [vmem:[%s1 + $0xa0] sm:$0xf]
  %v78 = vld [vmem:[%s1 + $0xa4] sm:$0xf]
  %v79 = vld [vmem:[%s1 + $0xa8] sm:$0xf]
  %v80 = vld [vmem:[%s1 + $0xac] sm:$0xf]
  %v81 = vld [vmem:[%s1 + $0xb0] sm:$0xf]
  %v82 = vld [vmem:[%s1 + $0xb4] sm:$0xf]
  %v83 = vld [vmem:[%s1 + $0xb8] sm:$0xf]
  %v84 = vld [vmem:[%s1 + $0xbc] sm:$0xf]
  %v85 = vld [vmem:[%s1 + $0xc0] sm:$0xf]
  %v86 = vld [vmem:[%s1 + $0xc4] sm:$0xf]
  %v87 = vld [vmem:[%s1 + $0xc8] sm:$0xf]
  %v88 = vld [vmem:[%s1 + $0xcc] sm:$0xf]
  %v89 = vld [vmem:[%s1 + $0xd0] sm:$0xf]
  %v90 = vld [vmem:[%s1 + $0xd4] sm:$0xf]
  %v91 = vld [vmem:[%s1 + $0xd8] sm:$0xf]
  %v92 = vld [vmem:[%s1 + $0xdc] sm:$0xf]
  %v93 = vld [vmem:[%s1 + $0xe0] sm:$0xf]
  %v94 = vld [vmem:[%s1 + $0xe4] sm:$0xf]
  %v95 = vld [vmem:[%s1 + $0xe8] sm:$0xf]
  %v96 = vld [vmem:[%s1 + $0xec] sm:$0xf]
  %v97 = vld [vmem:[%s1 + $0xf0] sm:$0xf]
  %v98 = vld [vmem:[%s1 + $0xf4] sm:$0xf]
  %v99 = vld [vmem:[%s1 + $0xf8] sm:$0xf]
  %v100 = vld [vmem:[%s1 + $0xfc] sm:$0xf]
  %v109 = vunpack.c.l.b16 %v29
  %v110 = vunpack.c.h.b16 %v29
  %v111 = vunpack.c.l.b16 %v30
  %v112 = vunpack.c.h.b16 %v30
  %v113 = vunpack.c.l.b16 %v31
  %v114 = vunpack.c.h.b16 %v31
  %v115 = vunpack.c.l.b16 %v32
  %v116 = vunpack.c.h.b16 %v32
  %v117 = vunpack.c.l.b16 %v33
  %v118 = vunpack.c.h.b16 %v33
  %v119 = vunpack.c.l.b16 %v34
  %v120 = vunpack.c.h.b16 %v34
  %v121 = vunpack.c.l.b16 %v35
  %v122 = vunpack.c.h.b16 %v35
  %v123 = vunpack.c.l.b16 %v36
  %v124 = vunpack.c.h.b16 %v36
  %v125 = vpack.c.b16 %v113, %v109
  %v126 = vpack.c.b16 %v114, %v110
  %v127 = vpack.c.b16 %v115, %v111
  %v128 = vpack.c.b16 %v116, %v112
  %v129 = vpack.c.b16 %v121, %v117
  %v130 = vpack.c.b16 %v122, %v118
  %v131 = vpack.c.b16 %v123, %v119
  %v132 = vpack.c.b16 %v124, %v120
  %v205 = vunpack.c.l.b16 %v37
  %v206 = vunpack.c.l.b16 %v38
  %v207 = vunpack.c.l.b16 %v39
  %v208 = vunpack.c.l.b16 %v40
  %v209 = vunpack.c.l.b16 %v41
  %v210 = vunpack.c.l.b16 %v42
  %v211 = vunpack.c.l.b16 %v43
  %v212 = vunpack.c.l.b16 %v44
  %v213 = vunpack.c.l.b16 %v45
  %v214 = vunpack.c.l.b16 %v46
  %v215 = vunpack.c.l.b16 %v47
  %v216 = vunpack.c.l.b16 %v48
  %v217 = vunpack.c.l.b16 %v49
  %v218 = vunpack.c.l.b16 %v50
  %v219 = vunpack.c.l.b16 %v51
  %v220 = vunpack.c.l.b16 %v52
  %v221 = vunpack.c.l.b16 %v53
  %v222 = vunpack.c.l.b16 %v54
  %v223 = vunpack.c.l.b16 %v55
  %v224 = vunpack.c.l.b16 %v56
  %v225 = vunpack.c.l.b16 %v57
  %v226 = vunpack.c.l.b16 %v58
  %v227 = vunpack.c.l.b16 %v59
  %v228 = vunpack.c.l.b16 %v60
  %v229 = vunpack.c.l.b16 %v61
  %v230 = vunpack.c.l.b16 %v62
  %v231 = vunpack.c.l.b16 %v63
  %v232 = vunpack.c.l.b16 %v64
  %v233 = vunpack.c.l.b16 %v65
  %v234 = vunpack.c.l.b16 %v66
  %v235 = vunpack.c.l.b16 %v67
  %v236 = vunpack.c.l.b16 %v68
  %v237 = vunpack.c.l.b16 %v69
  %v238 = vunpack.c.l.b16 %v70
  %v239 = vunpack.c.l.b16 %v71
  %v240 = vunpack.c.l.b16 %v72
  %v241 = vunpack.c.l.b16 %v73
  %v242 = vunpack.c.l.b16 %v74
  %v243 = vunpack.c.l.b16 %v75
  %v244 = vunpack.c.l.b16 %v76
  %v245 = vunpack.c.l.b16 %v77
  %v246 = vunpack.c.l.b16 %v78
  %v247 = vunpack.c.l.b16 %v79
  %v248 = vunpack.c.l.b16 %v80
  %v249 = vunpack.c.l.b16 %v81
  %v250 = vunpack.c.l.b16 %v82
  %v251 = vunpack.c.l.b16 %v83
  %v252 = vunpack.c.l.b16 %v84
  %v253 = vunpack.c.l.b16 %v85
  %v254 = vunpack.c.l.b16 %v86
  %v255 = vunpack.c.l.b16 %v87
  %v256 = vunpack.c.l.b16 %v88
  %v257 = vunpack.c.l.b16 %v89
  %v258 = vunpack.c.l.b16 %v90
  %v259 = vunpack.c.l.b16 %v91
  %v260 = vunpack.c.l.b16 %v92
  %v261 = vunpack.c.l.b16 %v93
  %v262 = vunpack.c.l.b16 %v94
  %v263 = vunpack.c.l.b16 %v95
  %v264 = vunpack.c.l.b16 %v96
  %v265 = vunpack.c.l.b16 %v97
  %v266 = vunpack.c.l.b16 %v98
  %v267 = vunpack.c.l.b16 %v99
  %v268 = vunpack.c.l.b16 %v100
  %v269 = vpack.c.b16 %v206, %v205
  %v270 = vpack.c.b16 %v208, %v207
  %v271 = vpack.c.b16 %v210, %v209
  %v272 = vpack.c.b16 %v212, %v211
  %v273 = vpack.c.b16 %v214, %v213
  %v274 = vpack.c.b16 %v216, %v215
  %v275 = vpack.c.b16 %v218, %v217
  %v276 = vpack.c.b16 %v220, %v219
  %v277 = vpack.c.b16 %v222, %v221
  %v278 = vpack.c.b16 %v224, %v223
  %v279 = vpack.c.b16 %v226, %v225
  %v280 = vpack.c.b16 %v228, %v227
  %v281 = vpack.c.b16 %v230, %v229
  %v282 = vpack.c.b16 %v232, %v231
  %v283 = vpack.c.b16 %v234, %v233
  %v284 = vpack.c.b16 %v236, %v235
  %v285 = vpack.c.b16 %v238, %v237
  %v286 = vpack.c.b16 %v240, %v239
  %v287 = vpack.c.b16 %v242, %v241
  %v288 = vpack.c.b16 %v244, %v243
  %v289 = vpack.c.b16 %v246, %v245
  %v290 = vpack.c.b16 %v248, %v247
  %v291 = vpack.c.b16 %v250, %v249
  %v292 = vpack.c.b16 %v252, %v251
  %v293 = vpack.c.b16 %v254, %v253
  %v294 = vpack.c.b16 %v256, %v255
  %v295 = vpack.c.b16 %v258, %v257
  %v296 = vpack.c.b16 %v260, %v259
  %v297 = vpack.c.b16 %v262, %v261
  %v298 = vpack.c.b16 %v264, %v263
  %v299 = vpack.c.b16 %v266, %v265
  %v300 = vpack.c.b16 %v268, %v267
  %333 = vmatpush.bf16.msra.mxu0 %v276
  %334 = vmatpush.bf16.msra.mxu0 %v275
  %335 = vmatpush.bf16.msra.mxu0 %v274
  %336 = vmatpush.bf16.msra.mxu0 %v273
  %337 = vmatpush.bf16.msra.mxu0 %v272
  %338 = vmatpush.bf16.msra.mxu0 %v271
  %339 = vmatpush.bf16.msra.mxu0 %v270
  %340 = vmatpush.bf16.msra.mxu0 %v269
  %341 = vmatmul.bf16.gmra.mxu0 %v125
  %v342 = vpop.f32.mrf.mxu0
  %v343 = vadd.f32 0.0, %v342
  %v344 = vpop.f32.mrf.mxu0
  %v345 = vadd.f32 0.0, %v344
  %346 = vmatmul.bf16.gmra.mxu0 %v129
  %v347 = vpop.f32.mrf.mxu0
  %v348 = vadd.f32 0.0, %v347
  %v349 = vpop.f32.mrf.mxu0
  %v350 = vadd.f32 0.0, %v349
  %351 = vdwg.mxu0
  %352 = vmatpush.bf16.msra.mxu0 %v284
  %353 = vmatpush.bf16.msra.mxu0 %v283
  %354 = vmatpush.bf16.msra.mxu0 %v282
  %355 = vmatpush.bf16.msra.mxu0 %v281
  %356 = vmatpush.bf16.msra.mxu0 %v280
  %357 = vmatpush.bf16.msra.mxu0 %v279
  %358 = vmatpush.bf16.msra.mxu0 %v278
  %359 = vmatpush.bf16.msra.mxu0 %v277
  %360 = vmatmul.bf16.gmra.mxu0 %v126
  %v361 = vpop.f32.mrf.mxu0
  %v362 = vadd.f32 %v343, %v361
  %v363 = vpop.f32.mrf.mxu0
  %v364 = vadd.f32 %v345, %v363
  %365 = vmatmul.bf16.gmra.mxu0 %v130
  %v366 = vpop.f32.mrf.mxu0
  %v367 = vadd.f32 %v348, %v366
  %v368 = vpop.f32.mrf.mxu0
  %v369 = vadd.f32 %v350, %v368
  %370 = vdwg.mxu0
  %371 = vmatpush.bf16.msra.mxu0 %v292
  %372 = vmatpush.bf16.msra.mxu0 %v291
  %373 = vmatpush.bf16.msra.mxu0 %v290
  %374 = vmatpush.bf16.msra.mxu0 %v289
  %375 = vmatpush.bf16.msra.mxu0 %v288
  %376 = vmatpush.bf16.msra.mxu0 %v287
  %377 = vmatpush.bf16.msra.mxu0 %v286
  %378 = vmatpush.bf16.msra.mxu0 %v285
  %379 = vmatmul.bf16.gmra.mxu0 %v127
  %v380 = vpop.f32.mrf.mxu0
  %v381 = vadd.f32 %v362, %v380
  %v382 = vpop.f32.mrf.mxu0
  %v383 = vadd.f32 %v364, %v382
  %384 = vmatmul.bf16.gmra.mxu0 %v131
  %v385 = vpop.f32.mrf.mxu0
  %v386 = vadd.f32 %v367, %v385
  %v387 = vpop.f32.mrf.mxu0
  %v388 = vadd.f32 %v369, %v387
  %389 = vdwg.mxu0
  %390 = vmatpush.bf16.msra.mxu0 %v300
  %391 = vmatpush.bf16.msra.mxu0 %v299
  %392 = vmatpush.bf16.msra.mxu0 %v298
  %393 = vmatpush.bf16.msra.mxu0 %v297
  %394 = vmatpush.bf16.msra.mxu0 %v296
  %395 = vmatpush.bf16.msra.mxu0 %v295
  %396 = vmatpush.bf16.msra.mxu0 %v294
  %397 = vmatpush.bf16.msra.mxu0 %v293
  %398 = vmatmul.bf16.gmra.mxu0 %v128
  %v399 = vpop.f32.mrf.mxu0
  %v400 = vadd.f32 %v381, %v399
  %v401 = vpop.f32.mrf.mxu0
  %v402 = vadd.f32 %v383, %v401
  %403 = vmatmul.bf16.gmra.mxu0 %v132
  %v404 = vpop.f32.mrf.mxu0
  %v405 = vadd.f32 %v386, %v404
  %v406 = vpop.f32.mrf.mxu0
  %v407 = vadd.f32 %v388, %v406
  %408 = vdwg.mxu0
  %v409 = vadd.f32 %v25, %v400
  %v410 = vadd.f32 %v26, %v402
  %v411 = vadd.f32 %v27, %v405
  %v412 = vadd.f32 %v28, %v407
  %413 = vst [vmem:[#allocation2] sm:$0xff] %v409
  %414 = vst [vmem:[#allocation2 + $0x8] sm:$0xff] %v410
  %415 = vst [vmem:[#allocation2 + $0x10] sm:$0xff] %v411
  %416 = vst [vmem:[#allocation2 + $0x18] sm:$0xff] %v412
  // Predicated region
  $region22: #{calibvit_v2_forward.33} parent=0 // pred_check
    %p417 = pneg %p17
  $region23: #{calibvit_v2_forward.33} parent=0 // pred_check_branch
    %419 = sbr.rel (%p417) target = $region25
  $region24: #{calibvit_v2_forward.33} parent=0 // pred_region
    %v420 = vld [vmem:[#allocation2] sm:$0xff]
    %v421 = vld [vmem:[#allocation2 + $0x8] sm:$0xff]
    %v422 = vld [vmem:[#allocation2 + $0x10] sm:$0xff]
    %v423 = vld [vmem:[#allocation2 + $0x18] sm:$0xff]
    %v424 = vld [vmem:[%s2] sm:$0x1]
    %v426 = vperm.slane %v424, 0
    %v428 = vadd.f32 %v420, %v426
    %v429 = vadd.f32 %v421, %v426
    %v430 = vadd.f32 %v422, %v426
    %v431 = vadd.f32 %v423, %v426
    %v432 = vld [vmem:[%s3] sm:$0xf]
    %v433 = vld [vmem:[%s3 + $0x4] sm:$0xf]
    %v434 = vld [vmem:[%s3 + $0x8] sm:$0xf]
    %v435 = vld [vmem:[%s3 + $0xc] sm:$0xf]
    %v436 = vunpack.c.l.bf16 %v432
    %v437 = vunpack.c.l.bf16 %v433
    %v438 = vunpack.c.l.bf16 %v434
    %v439 = vunpack.c.l.bf16 %v435
    %v440 = vadd.f32 %v428, %v436
    %v441 = vadd.f32 %v429, %v437
    %v442 = vadd.f32 %v430, %v438
    %v443 = vadd.f32 %v431, %v439
    %v444 = vpack.c.bf16 %v440, %v440
    %v445 = vpack.c.bf16 %v441, %v441
    %v446 = vpack.c.bf16 %v442, %v442
    %v447 = vpack.c.bf16 %v443, %v443
    %448 = vst [vmem:[%s4] sm:$0xf] %v444
    %449 = vst [vmem:[%s4 + $0x4] sm:$0xf] %v445
    %450 = vst [vmem:[%s4 + $0x8] sm:$0xf] %v446
    %451 = vst [vmem:[%s4 + $0xc] sm:$0xf] %v447
  $region25: #{calibvit_v2_forward.33} parent=0 // pred_fallthru
    _
  // Predicated region
  $region26: #{calibvit_v2_forward.33} parent=0 // pred_check
    _
  $region27: #{calibvit_v2_forward.33} parent=0 // pred_check_branch
    %453 = sbr.rel (0) target = $region29
  $region28: #{calibvit_v2_forward.33} parent=0 // pred_region
    _
  $region29: #{calibvit_v2_forward.33} parent=0 // pred_fallthru
    _
  // Predicated region
  $region30: #{calibvit_v2_forward.33} parent=0 // pred_check
    _
  $region31: #{calibvit_v2_forward.33} parent=0 // pred_check_branch
    %455 = sbr.rel (0) target = $region33
  $region32: #{calibvit_v2_forward.33} parent=0 // pred_region
    _
  $region33: #{calibvit_v2_forward.33} parent=0 // pred_fallthru
    _

// kernel: calibvit_v2_forward.34
$region0: #{calibvit_v2_forward.34}
  #allocation0 [shape = 'u32[]', space=smem, size = 0x4, offset = 0x4, fixed_abs, tag = 'smem constant byte address 0x4 - core index']
  #allocation1 [shape = 'u32[72,128]{1,0:T(1,128)}', space=vmem, size = 0x9000, scoped, tag = 'internal scratch']
  #allocation2 [shape = 'f32[32,128]{1,0:T(8,128)}', space=vmem, size = 0x4000, scoped, tag = 'scratch operand']
  %s0 = inlined_call_operand.vmem [shape: bf16[32,16], index: 0, kind: input, shape index: {}]
  %s1 = inlined_call_operand.vmem [shape: bf16[16,128], index: 1, kind: input, shape index: {}]
  %s2 = inlined_call_operand.vmem [shape: f32[1,128], index: 2, kind: input, shape index: {}]
  %s3 = inlined_call_operand.vmem [shape: bf16[32,128], index: 3, kind: output, shape index: {}]
  %s4 = sld [smem:[#allocation0]]
  $region30: #{calibvit_v2_forward.34} parent=0
    _
  %s6 = ssub.s32 1, %s4
  %s7 = scalar_select 0, %s6, %s4
  // Predicated region
  $region2: #{calibvit_v2_forward.34} parent=0 // pred_check
    _
  $region3: #{calibvit_v2_forward.34} parent=0 // pred_check_branch
    %9 = sbr.rel (0) target = $region5
  $region4: #{calibvit_v2_forward.34} parent=0 // pred_region
    _
  $region5: #{calibvit_v2_forward.34} parent=0 // pred_fallthru
    _
  // Predicated region
  $region6: #{calibvit_v2_forward.34} parent=0 // pred_check
    _
  $region7: #{calibvit_v2_forward.34} parent=0 // pred_check_branch
    %11 = sbr.rel (0) target = $region9
  $region8: #{calibvit_v2_forward.34} parent=0 // pred_region
    _
  $region9: #{calibvit_v2_forward.34} parent=0 // pred_fallthru
    _
  // Predicated region
  $region10: #{calibvit_v2_forward.34} parent=0 // pred_check
    _
  $region11: #{calibvit_v2_forward.34} parent=0 // pred_check_branch
    %13 = sbr.rel (0) target = $region13
  $region12: #{calibvit_v2_forward.34} parent=0 // pred_region
    _
  $region13: #{calibvit_v2_forward.34} parent=0 // pred_fallthru
    _
  %p15 = scmp.eq.s32.totalorder 0, 0
  // Predicated region
  $region14: #{calibvit_v2_forward.34} parent=0 // pred_check
    %p16 = pneg %p15
  $region15: #{calibvit_v2_forward.34} parent=0 // pred_check_branch
    %18 = sbr.rel (%p16) target = $region17
  $region16: #{calibvit_v2_forward.34} parent=0 // pred_region
    %19 = vst [vmem:[#allocation2] sm:$0xff] 0.0
    %20 = vst [vmem:[#allocation2 + $0x8] sm:$0xff] 0.0
    %21 = vst [vmem:[#allocation2 + $0x10] sm:$0xff] 0.0
    %22 = vst [vmem:[#allocation2 + $0x18] sm:$0xff] 0.0
  $region17: #{calibvit_v2_forward.34} parent=0 // pred_fallthru
    _
  %v23 = vld [vmem:[#allocation2] sm:$0xff]
  %v24 = vld [vmem:[#allocation2 + $0x8] sm:$0xff]
  %v25 = vld [vmem:[#allocation2 + $0x10] sm:$0xff]
  %v26 = vld [vmem:[#allocation2 + $0x18] sm:$0xff]
  %v27 = vld [vmem:[%s0] sm:$0xf]
  %v28 = vld [vmem:[%s0 + $0x4] sm:$0xf]
  %v29 = vld [vmem:[%s0 + $0x8] sm:$0xf]
  %v30 = vld [vmem:[%s0 + $0xc] sm:$0xf]
  %v31 = vld [vmem:[%s1] sm:$0xf]
  %v32 = vld [vmem:[%s1 + $0x4] sm:$0xf]
  %v37 = vunpack.c.l.b16 %v27
  %v38 = vunpack.c.l.b16 %v28
  %v39 = vunpack.c.l.b16 %v29
  %v40 = vunpack.c.l.b16 %v30
  %v41 = vpack.c.b16 %v38, %v37
  %v42 = vpack.c.b16 %v40, %v39
  %v45 = vunpack.c.l.b16 %v31
  %v46 = vunpack.c.l.b16 %v32
  %v47 = vpack.c.b16 %v46, %v45
  %vm49 = vcmask 130048
  %v51 = vsel %vm49, %v41, 0
  %v54 = vsel %vm49, %v42, 0
  %56 = vmatpush.bf16.msra.mxu0 0
  %57 = vmatpush.bf16.msra.mxu0 0
  %58 = vmatpush.bf16.msra.mxu0 0
  %59 = vmatpush.bf16.msra.mxu0 0
  %60 = vmatpush.bf16.msra.mxu0 0
  %61 = vmatpush.bf16.msra.mxu0 0
  %62 = vmatpush.bf16.msra.mxu0 0
  %63 = vmatpush.bf16.msra.mxu0 %v47
  %64 = vmatmul.bf16.gmra.mxu0 %v51
  %v65 = vpop.f32.mrf.mxu0
  %v66 = vadd.f32 0.0, %v65
  %v67 = vpop.f32.mrf.mxu0
  %v68 = vadd.f32 0.0, %v67
  %69 = vmatmul.bf16.gmra.mxu0 %v54
  %v70 = vpop.f32.mrf.mxu0
  %v71 = vadd.f32 0.0, %v70
  %v72 = vpop.f32.mrf.mxu0
  %v73 = vadd.f32 0.0, %v72
  %74 = vdwg.mxu0
  %v75 = vadd.f32 %v23, %v66
  %v76 = vadd.f32 %v24, %v68
  %v77 = vadd.f32 %v25, %v71
  %v78 = vadd.f32 %v26, %v73
  %79 = vst [vmem:[#allocation2] sm:$0xff] %v75
  %80 = vst [vmem:[#allocation2 + $0x8] sm:$0xff] %v76
  %81 = vst [vmem:[#allocation2 + $0x10] sm:$0xff] %v77
  %82 = vst [vmem:[#allocation2 + $0x18] sm:$0xff] %v78
  // Predicated region
  $region18: #{calibvit_v2_forward.34} parent=0 // pred_check
    %p83 = pneg %p15
  $region19: #{calibvit_v2_forward.34} parent=0 // pred_check_branch
    %85 = sbr.rel (%p83) target = $region21
  $region20: #{calibvit_v2_forward.34} parent=0 // pred_region
    %v86 = vld [vmem:[#allocation2] sm:$0xff]
    %v87 = vld [vmem:[#allocation2 + $0x8] sm:$0xff]
    %v88 = vld [vmem:[#allocation2 + $0x10] sm:$0xff]
    %v89 = vld [vmem:[#allocation2 + $0x18] sm:$0xff]
    %v90 = vld [vmem:[%s2] sm:$0x1]
    %v92 = vperm.slane %v90, 0
    %v94 = vadd.f32 %v86, %v92
    %v95 = vadd.f32 %v87, %v92
    %v96 = vadd.f32 %v88, %v92
    %v97 = vadd.f32 %v89, %v92
    %v98 = vpack.c.bf16 %v94, %v94
    %v99 = vpack.c.bf16 %v95, %v95
    %v100 = vpack.c.bf16 %v96, %v96
    %v101 = vpack.c.bf16 %v97, %v97
    %102 = vst [vmem:[%s3] sm:$0xf] %v98
    %103 = vst [vmem:[%s3 + $0x4] sm:$0xf] %v99
    %104 = vst [vmem:[%s3 + $0x8] sm:$0xf] %v100
    %105 = vst [vmem:[%s3 + $0xc] sm:$0xf] %v101
  $region21: #{calibvit_v2_forward.34} parent=0 // pred_fallthru
    _
  // Predicated region
  $region22: #{calibvit_v2_forward.34} parent=0 // pred_check
    _
  $region23: #{calibvit_v2_forward.34} parent=0 // pred_check_branch
    %107 = sbr.rel (0) target = $region25
  $region24: #{calibvit_v2_forward.34} parent=0 // pred_region
    _
  $region25: #{calibvit_v2_forward.34} parent=0 // pred_fallthru
    _
  // Predicated region
  $region26: #{calibvit_v2_forward.34} parent=0 // pred_check
    _
  $region27: #{calibvit_v2_forward.34} parent=0 // pred_check_branch
    %109 = sbr.rel (0) target = $region29
  $region28: #{calibvit_v2_forward.34} parent=0 // pred_region
    _
  $region29: #{calibvit_v2_forward.34} parent=0 // pred_fallthru
    _

// kernel: calibvit_v2_forward.38
$region0: #{calibvit_v2_forward.38}
  #allocation0 [shape = 'u32[]', space=smem, size = 0x4, offset = 0x4, fixed_abs, tag = 'smem constant byte address 0x4 - core index']
  #allocation1 [shape = 'u32[72,128]{1,0:T(1,128)}', space=vmem, size = 0x9000, scoped, tag = 'internal scratch']
  #allocation2 [shape = 'f32[32,128]{1,0:T(8,128)}', space=vmem, size = 0x4000, scoped, tag = 'scratch operand']
  %s0 = inlined_call_operand.vmem [shape: bf16[32,128], index: 0, kind: input, shape index: {}]
  %s1 = inlined_call_operand.vmem [shape: bf16[128,128], index: 1, kind: input, shape index: {}]
  %s2 = inlined_call_operand.vmem [shape: f32[1,128], index: 2, kind: input, shape index: {}]
  %s3 = inlined_call_operand.vmem [shape: bf16[32,128], index: 3, kind: input, shape index: {}, may-alias: {3,4}]
  %s4 = inlined_call_operand.vmem [shape: bf16[32,128], index: 4, kind: output, shape index: {}, may-alias: {3,4}]
  %s5 = sld [smem:[#allocation0]]
  $region34: #{calibvit_v2_forward.38} parent=0
    _
  %s7 = ssub.s32 1, %s5
  %s8 = scalar_select 0, %s7, %s5
  // Predicated region
  $region2: #{calibvit_v2_forward.38} parent=0 // pred_check
    _
  $region3: #{calibvit_v2_forward.38} parent=0 // pred_check_branch
    %10 = sbr.rel (0) target = $region5
  $region4: #{calibvit_v2_forward.38} parent=0 // pred_region
    _
  $region5: #{calibvit_v2_forward.38} parent=0 // pred_fallthru
    _
  // Predicated region
  $region6: #{calibvit_v2_forward.38} parent=0 // pred_check
    _
  $region7: #{calibvit_v2_forward.38} parent=0 // pred_check_branch
    %12 = sbr.rel (0) target = $region9
  $region8: #{calibvit_v2_forward.38} parent=0 // pred_region
    _
  $region9: #{calibvit_v2_forward.38} parent=0 // pred_fallthru
    _
  // Predicated region
  $region10: #{calibvit_v2_forward.38} parent=0 // pred_check
    _
  $region11: #{calibvit_v2_forward.38} parent=0 // pred_check_branch
    %14 = sbr.rel (0) target = $region13
  $region12: #{calibvit_v2_forward.38} parent=0 // pred_region
    _
  $region13: #{calibvit_v2_forward.38} parent=0 // pred_fallthru
    _
  // Predicated region
  $region14: #{calibvit_v2_forward.38} parent=0 // pred_check
    _
  $region15: #{calibvit_v2_forward.38} parent=0 // pred_check_branch
    %16 = sbr.rel (0) target = $region17
  $region16: #{calibvit_v2_forward.38} parent=0 // pred_region
    _
  $region17: #{calibvit_v2_forward.38} parent=0 // pred_fallthru
    _
  %p17 = scmp.eq.s32.totalorder 0, 0
  // Predicated region
  $region18: #{calibvit_v2_forward.38} parent=0 // pred_check
    %p18 = pneg %p17
  $region19: #{calibvit_v2_forward.38} parent=0 // pred_check_branch
    %20 = sbr.rel (%p18) target = $region21
  $region20: #{calibvit_v2_forward.38} parent=0 // pred_region
    %21 = vst [vmem:[#allocation2] sm:$0xff] 0.0
    %22 = vst [vmem:[#allocation2 + $0x8] sm:$0xff] 0.0
    %23 = vst [vmem:[#allocation2 + $0x10] sm:$0xff] 0.0
    %24 = vst [vmem:[#allocation2 + $0x18] sm:$0xff] 0.0
  $region21: #{calibvit_v2_forward.38} parent=0 // pred_fallthru
    _
  %v25 = vld [vmem:[#allocation2] sm:$0xff]
  %v26 = vld [vmem:[#allocation2 + $0x8] sm:$0xff]
  %v27 = vld [vmem:[#allocation2 + $0x10] sm:$0xff]
  %v28 = vld [vmem:[#allocation2 + $0x18] sm:$0xff]
  %v29 = vld [vmem:[%s0] sm:$0xf]
  %v30 = vld [vmem:[%s0 + $0x4] sm:$0xf]
  %v31 = vld [vmem:[%s0 + $0x8] sm:$0xf]
  %v32 = vld [vmem:[%s0 + $0xc] sm:$0xf]
  %v33 = vld [vmem:[%s1] sm:$0xf]
  %v34 = vld [vmem:[%s1 + $0x4] sm:$0xf]
  %v35 = vld [vmem:[%s1 + $0x8] sm:$0xf]
  %v36 = vld [vmem:[%s1 + $0xc] sm:$0xf]
  %v37 = vld [vmem:[%s1 + $0x10] sm:$0xf]
  %v38 = vld [vmem:[%s1 + $0x14] sm:$0xf]
  %v39 = vld [vmem:[%s1 + $0x18] sm:$0xf]
  %v40 = vld [vmem:[%s1 + $0x1c] sm:$0xf]
  %v41 = vld [vmem:[%s1 + $0x20] sm:$0xf]
  %v42 = vld [vmem:[%s1 + $0x24] sm:$0xf]
  %v43 = vld [vmem:[%s1 + $0x28] sm:$0xf]
  %v44 = vld [vmem:[%s1 + $0x2c] sm:$0xf]
  %v45 = vld [vmem:[%s1 + $0x30] sm:$0xf]
  %v46 = vld [vmem:[%s1 + $0x34] sm:$0xf]
  %v47 = vld [vmem:[%s1 + $0x38] sm:$0xf]
  %v48 = vld [vmem:[%s1 + $0x3c] sm:$0xf]
  %v53 = vunpack.c.l.b16 %v29
  %v54 = vunpack.c.l.b16 %v30
  %v55 = vunpack.c.l.b16 %v31
  %v56 = vunpack.c.l.b16 %v32
  %v57 = vpack.c.b16 %v54, %v53
  %v58 = vpack.c.b16 %v56, %v55
  %v77 = vunpack.c.l.b16 %v33
  %v78 = vunpack.c.l.b16 %v34
  %v79 = vunpack.c.l.b16 %v35
  %v80 = vunpack.c.l.b16 %v36
  %v81 = vunpack.c.l.b16 %v37
  %v82 = vunpack.c.l.b16 %v38
  %v83 = vunpack.c.l.b16 %v39
  %v84 = vunpack.c.l.b16 %v40
  %v85 = vunpack.c.l.b16 %v41
  %v86 = vunpack.c.l.b16 %v42
  %v87 = vunpack.c.l.b16 %v43
  %v88 = vunpack.c.l.b16 %v44
  %v89 = vunpack.c.l.b16 %v45
  %v90 = vunpack.c.l.b16 %v46
  %v91 = vunpack.c.l.b16 %v47
  %v92 = vunpack.c.l.b16 %v48
  %v93 = vpack.c.b16 %v78, %v77
  %v94 = vpack.c.b16 %v80, %v79
  %v95 = vpack.c.b16 %v82, %v81
  %v96 = vpack.c.b16 %v84, %v83
  %v97 = vpack.c.b16 %v86, %v85
  %v98 = vpack.c.b16 %v88, %v87
  %v99 = vpack.c.b16 %v90, %v89
  %v100 = vpack.c.b16 %v92, %v91
  %109 = vmatpush.bf16.msra.mxu0 %v100
  %110 = vmatpush.bf16.msra.mxu0 %v99
  %111 = vmatpush.bf16.msra.mxu0 %v98
  %112 = vmatpush.bf16.msra.mxu0 %v97
  %113 = vmatpush.bf16.msra.mxu0 %v96
  %114 = vmatpush.bf16.msra.mxu0 %v95
  %115 = vmatpush.bf16.msra.mxu0 %v94
  %116 = vmatpush.bf16.msra.mxu0 %v93
  %117 = vmatmul.bf16.gmra.mxu0 %v57
  %v118 = vpop.f32.mrf.mxu0
  %v119 = vadd.f32 0.0, %v118
  %v120 = vpop.f32.mrf.mxu0
  %v121 = vadd.f32 0.0, %v120
  %122 = vmatmul.bf16.gmra.mxu0 %v58
  %v123 = vpop.f32.mrf.mxu0
  %v124 = vadd.f32 0.0, %v123
  %v125 = vpop.f32.mrf.mxu0
  %v126 = vadd.f32 0.0, %v125
  %127 = vdwg.mxu0
  %v128 = vadd.f32 %v25, %v119
  %v129 = vadd.f32 %v26, %v121
  %v130 = vadd.f32 %v27, %v124
  %v131 = vadd.f32 %v28, %v126
  %132 = vst [vmem:[#allocation2] sm:$0xff] %v128
  %133 = vst [vmem:[#allocation2 + $0x8] sm:$0xff] %v129
  %134 = vst [vmem:[#allocation2 + $0x10] sm:$0xff] %v130
  %135 = vst [vmem:[#allocation2 + $0x18] sm:$0xff] %v131
  // Predicated region
  $region22: #{calibvit_v2_forward.38} parent=0 // pred_check
    %p136 = pneg %p17
  $region23: #{calibvit_v2_forward.38} parent=0 // pred_check_branch
    %138 = sbr.rel (%p136) target = $region25
  $region24: #{calibvit_v2_forward.38} parent=0 // pred_region
    %v139 = vld [vmem:[#allocation2] sm:$0xff]
    %v140 = vld [vmem:[#allocation2 + $0x8] sm:$0xff]
    %v141 = vld [vmem:[#allocation2 + $0x10] sm:$0xff]
    %v142 = vld [vmem:[#allocation2 + $0x18] sm:$0xff]
    %v143 = vld [vmem:[%s2] sm:$0x1]
    %v145 = vperm.slane %v143, 0
    %v147 = vadd.f32 %v139, %v145
    %v148 = vadd.f32 %v140, %v145
    %v149 = vadd.f32 %v141, %v145
    %v150 = vadd.f32 %v142, %v145
    %v151 = vld [vmem:[%s3] sm:$0xf]
    %v152 = vld [vmem:[%s3 + $0x4] sm:$0xf]
    %v153 = vld [vmem:[%s3 + $0x8] sm:$0xf]
    %v154 = vld [vmem:[%s3 + $0xc] sm:$0xf]
    %v155 = vunpack.c.l.bf16 %v151
    %v156 = vunpack.c.l.bf16 %v152
    %v157 = vunpack.c.l.bf16 %v153
    %v158 = vunpack.c.l.bf16 %v154
    %v159 = vadd.f32 %v147, %v155
    %v160 = vadd.f32 %v148, %v156
    %v161 = vadd.f32 %v149, %v157
    %v162 = vadd.f32 %v150, %v158
    %v163 = vpack.c.bf16 %v159, %v159
    %v164 = vpack.c.bf16 %v160, %v160
    %v165 = vpack.c.bf16 %v161, %v161
    %v166 = vpack.c.bf16 %v162, %v162
    %167 = vst [vmem:[%s4] sm:$0xf] %v163
    %168 = vst [vmem:[%s4 + $0x4] sm:$0xf] %v164
    %169 = vst [vmem:[%s4 + $0x8] sm:$0xf] %v165
    %170 = vst [vmem:[%s4 + $0xc] sm:$0xf] %v166
  $region25: #{calibvit_v2_forward.38} parent=0 // pred_fallthru
    _
  // Predicated region
  $region26: #{calibvit_v2_forward.38} parent=0 // pred_check
    _
  $region27: #{calibvit_v2_forward.38} parent=0 // pred_check_branch
    %172 = sbr.rel (0) target = $region29
  $region28: #{calibvit_v2_forward.38} parent=0 // pred_region
    _
  $region29: #{calibvit_v2_forward.38} parent=0 // pred_fallthru
    _
  // Predicated region
  $region30: #{calibvit_v2_forward.38} parent=0 // pred_check
    _
  $region31: #{calibvit_v2_forward.38} parent=0 // pred_check_branch
    %174 = sbr.rel (0) target = $region33
  $region32: #{calibvit_v2_forward.38} parent=0 // pred_region
    _
  $region33: #{calibvit_v2_forward.38} parent=0 // pred_fallthru
    _

// kernel: calibvit_v2_forward.36
$region0: #{calibvit_v2_forward.36}
  #allocation0 [shape = 'u32[]', space=smem, size = 0x4, offset = 0x4, fixed_abs, tag = 'smem constant byte address 0x4 - core index']
  #allocation1 [shape = 'u32[72,128]{1,0:T(1,128)}', space=vmem, size = 0x9000, scoped, tag = 'internal scratch']
  #allocation2 [shape = 'bf16[32,128]{1,0:T(8,128)(2,1)}', space=vmem, size = 0x2000, scoped, tag = 'scratch operand']
  %s0 = inlined_call_operand.vmem [shape: bf16[32,128], index: 0, kind: input, shape index: {}]
  %s1 = inlined_call_operand.vmem [shape: f32[1,128], index: 1, kind: input, shape index: {}]
  %s2 = inlined_call_operand.vmem [shape: f32[1,128], index: 2, kind: input, shape index: {}]
  %s3 = inlined_call_operand.hbm [shape: bf16[128,384], index: 3, kind: input, shape index: {}]
  %s4 = inlined_call_operand.vmem [shape: f32[1,384], index: 4, kind: input, shape index: {}]
  %s5 = inlined_call_operand.vmem [shape: bf16[32,384], index: 5, kind: output, shape index: {}]
  %s6 = sld [smem:[#allocation0]]
  $region38: #{calibvit_v2_forward.36} parent=0
    _
  %s8 = ssub.s32 1, %s6
  %s9 = scalar_select 0, %s8, %s6
  $region1: #{calibvit_v2_forward.36} parent=0
    #allocation3 [shape = 'u8[98304]{0}', space=vmem, size = 0x18000, scoped, tag = 'input window, operand 3, single buffered']
    #allocation4 [shape = 's32[1]{0}', space=sflag, size = 0x4, scoped, tag = 'scoped memory for calibvit_v2_forward.36']
    %10 = vsyncpa [#allocation4], 0
    // Predicated region
    $region2: #{calibvit_v2_forward.36} parent=1 // pred_check
      _
    $region3: #{calibvit_v2_forward.36} parent=1 // pred_check_branch
      %12 = sbr.rel (0) target = $region5
    $region4: #{calibvit_v2_forward.36} parent=1 // pred_region
      _
    $region5: #{calibvit_v2_forward.36} parent=1 // pred_fallthru
      _
    // Predicated region
    $region6: #{calibvit_v2_forward.36} parent=1 // pred_check
      _
    $region7: #{calibvit_v2_forward.36} parent=1 // pred_check_branch
      %14 = sbr.rel (0) target = $region9
    $region8: #{calibvit_v2_forward.36} parent=1 // pred_region
      _
    $region9: #{calibvit_v2_forward.36} parent=1 // pred_fallthru
      _
    // Predicated region
    $region10: #{calibvit_v2_forward.36} parent=1 // pred_check
      _
    $region11: #{calibvit_v2_forward.36} parent=1 // pred_check_branch
      %16 = sbr.rel (0) target = $region13
    $region12: #{calibvit_v2_forward.36} parent=1 // pred_region
      _
    $region13: #{calibvit_v2_forward.36} parent=1 // pred_fallthru
      _
    // Predicated region
    $region14: #{calibvit_v2_forward.36} parent=1 // pred_check
      _
    $region15: #{calibvit_v2_forward.36} parent=1 // pred_check_branch
      %18 = sbr.rel (0) target = $region17
    $region16: #{calibvit_v2_forward.36} parent=1 // pred_region
      %20 = vsyncadd [#allocation4], 0
      %s21 = sshll.u32 %s3, 4
      %s22 = int_to_ptr.hbm [resolvable:$true] %s21
      %s23 = sshll.u32 [#allocation3], 4
      %s24 = int_to_ptr.vmem [resolvable:$true] %s23
      %29 = dma.hbm_to_vmem [thread:$0]  %s22, 3072, %s24, [#allocation4], 192, 192, 12
    $region17: #{calibvit_v2_forward.36} parent=1 // pred_fallthru
      _
    // Predicated region
    $region18: #{calibvit_v2_forward.36} parent=1 // pred_check
      _
    $region19: #{calibvit_v2_forward.36} parent=1 // pred_check_branch
      %31 = sbr.rel (0) target = $region21
    $region20: #{calibvit_v2_forward.36} parent=1 // pred_region
      _
    $region21: #{calibvit_v2_forward.36} parent=1 // pred_fallthru
      _
    // Predicated region
    $region22: #{calibvit_v2_forward.36} parent=1 // pred_check
      _
    $region23: #{calibvit_v2_forward.36} parent=1 // pred_check_branch
      %33 = sbr.rel (0) target = $region25
    $region24: #{calibvit_v2_forward.36} parent=1 // pred_region
      %35 = dma.done [#allocation4], 3072
    $region25: #{calibvit_v2_forward.36} parent=1 // pred_fallthru
      _
    %p36 = scmp.eq.s32.totalorder 0, 0
    // Predicated region
    $region26: #{calibvit_v2_forward.36} parent=1 // pred_check
      %p37 = pneg %p36
    $region27: #{calibvit_v2_forward.36} parent=1 // pred_check_branch
      %39 = sbr.rel (%p37) target = $region29
    $region28: #{calibvit_v2_forward.36} parent=1 // pred_region
      %v40 = vld [vmem:[%s0] sm:$0xf]
      %v41 = vld [vmem:[%s0 + $0x4] sm:$0xf]
      %v42 = vld [vmem:[%s0 + $0x8] sm:$0xf]
      %v43 = vld [vmem:[%s0 + $0xc] sm:$0xf]
      %v44 = vunpack.c.l.bf16 %v40
      %v45 = vunpack.c.l.bf16 %v41
      %v46 = vunpack.c.l.bf16 %v42
      %v47 = vunpack.c.l.bf16 %v43
      %48 = vadd.xlane.f32.xlu0 %v44
      %v49 = vpop.xlane.xlu0 %48
      %50 = vadd.xlane.f32.xlu0 %v45
      %v51 = vpop.xlane.xlu0 %50
      %52 = vadd.xlane.f32.xlu0 %v46
      %v53 = vpop.xlane.xlu0 %52
      %54 = vadd.xlane.f32.xlu0 %v47
      %v55 = vpop.xlane.xlu0 %54
      %v56 = vrcp.pop 128.0
      %v57 = vmul.f32 128.0, %v56
      %v58 = vsub.f32 1.0, %v57
      %v59 = vmul.f32 %v56, %v58
      %v60 = vadd.f32 %v56, %v59
      %vm61 = vweird.f32 %v56
      %v62 = vsel %vm61, %v56, %v60
      %v63 = vmul.f32 %v49, %v62
      %v64 = vmul.f32 %v51, %v62
      %v65 = vmul.f32 %v53, %v62
      %v66 = vmul.f32 %v55, %v62
      %v67 = vsub.f32 %v44, %v63
      %v68 = vsub.f32 %v45, %v64
      %v69 = vsub.f32 %v46, %v65
      %v70 = vsub.f32 %v47, %v66
      %v71 = vmul.f32 %v67, %v67
      %v72 = vmul.f32 %v68, %v68
      %v73 = vmul.f32 %v69, %v69
      %v74 = vmul.f32 %v70, %v70
      %75 = vadd.xlane.f32.xlu0 %v71
      %v76 = vpop.xlane.xlu0 %75
      %77 = vadd.xlane.f32.xlu0 %v72
      %v78 = vpop.xlane.xlu0 %77
      %79 = vadd.xlane.f32.xlu0 %v73
      %v80 = vpop.xlane.xlu0 %79
      %81 = vadd.xlane.f32.xlu0 %v74
      %v82 = vpop.xlane.xlu0 %81
      %v83 = vmul.f32 %v76, %v62
      %v84 = vmul.f32 %v78, %v62
      %v85 = vmul.f32 %v80, %v62
      %v86 = vmul.f32 %v82, %v62
      %v87 = vadd.f32 %v83, 1e-05
      %v88 = vadd.f32 %v84, 1e-05
      %v89 = vadd.f32 %v85, 1e-05
      %v90 = vadd.f32 %v86, 1e-05
      %v91 = vrsqrt.pop %v87
      %v92 = vmul.f32 %v91, %v87
      %v93 = vmul.f32 %v92, %v91
      %v94 = vmul.f32 0.5, %v93
      %v95 = vsub.f32 1.5, %v94
      %v96 = vmul.f32 %v91, %v95
      %vm97 = vweird.f32 %v87
      %vm98 = vweird.f32 %v91
      %vm99 = vmor %vm97, %vm98
      %v100 = vsel %vm99, %v91, %v96
      %v101 = vrsqrt.pop %v88
      %v102 = vmul.f32 %v101, %v88
      %v103 = vmul.f32 %v102, %v101
      %v104 = vmul.f32 0.5, %v103
      %v105 = vsub.f32 1.5, %v104
      %v106 = vmul.f32 %v101, %v105
      %vm107 = vweird.f32 %v88
      %vm108 = vweird.f32 %v101
      %vm109 = vmor %vm107, %vm108
      %v110 = vsel %vm109, %v101, %v106
      %v111 = vrsqrt.pop %v89
      %v112 = vmul.f32 %v111, %v89
      %v113 = vmul.f32 %v112, %v111
      %v114 = vmul.f32 0.5, %v113
      %v115 = vsub.f32 1.5, %v114
      %v116 = vmul.f32 %v111, %v115
      %vm117 = vweird.f32 %v89
      %vm118 = vweird.f32 %v111
      %vm119 = vmor %vm117, %vm118
      %v120 = vsel %vm119, %v111, %v116
      %v121 = vrsqrt.pop %v90
      %v122 = vmul.f32 %v121, %v90
      %v123 = vmul.f32 %v122, %v121
      %v124 = vmul.f32 0.5, %v123
      %v125 = vsub.f32 1.5, %v124
      %v126 = vmul.f32 %v121, %v125
      %vm127 = vweird.f32 %v90
      %vm128 = vweird.f32 %v121
      %vm129 = vmor %vm127, %vm128
      %v130 = vsel %vm129, %v121, %v126
      %v131 = vmul.f32 %v67, %v100
      %v132 = vmul.f32 %v68, %v110
      %v133 = vmul.f32 %v69, %v120
      %v134 = vmul.f32 %v70, %v130
      %v135 = vld [vmem:[%s1] sm:$0x1]
      %v137 = vperm.slane %v135, 0
      %v139 = vmul.f32 %v131, %v137
      %v140 = vmul.f32 %v132, %v137
      %v141 = vmul.f32 %v133, %v137
      %v142 = vmul.f32 %v134, %v137
      %v143 = vld [vmem:[%s2] sm:$0x1]
      %v145 = vperm.slane %v143, 0
      %v147 = vadd.f32 %v139, %v145
      %v148 = vadd.f32 %v140, %v145
      %v149 = vadd.f32 %v141, %v145
      %v150 = vadd.f32 %v142, %v145
      %v151 = vpack.c.bf16 %v147, %v147
      %v152 = vpack.c.bf16 %v148, %v148
      %v153 = vpack.c.bf16 %v149, %v149
      %v154 = vpack.c.bf16 %v150, %v150
      %155 = vst [vmem:[#allocation2] sm:$0xf] %v151
      %156 = vst [vmem:[#allocation2 + $0x4] sm:$0xf] %v152
      %157 = vst [vmem:[#allocation2 + $0x8] sm:$0xf] %v153
      %158 = vst [vmem:[#allocation2 + $0xc] sm:$0xf] %v154
    $region29: #{calibvit_v2_forward.36} parent=1 // pred_fallthru
      _
    %v159 = vld [vmem:[#allocation2] sm:$0xf]
    %v160 = vld [vmem:[#allocation2 + $0x4] sm:$0xf]
    %v161 = vld [vmem:[#allocation2 + $0x8] sm:$0xf]
    %v162 = vld [vmem:[#allocation2 + $0xc] sm:$0xf]
    %v163 = vld [vmem:[#allocation3] sm:$0xff]
    %v164 = vld [vmem:[#allocation3 + $0x8] sm:$0xf]
    %v165 = vld [vmem:[#allocation3 + $0xc] sm:$0xff]
    %v166 = vld [vmem:[#allocation3 + $0x14] sm:$0xf]
    %v167 = vld [vmem:[#allocation3 + $0x18] sm:$0xff]
    %v168 = vld [vmem:[#allocation3 + $0x20] sm:$0xf]
    %v169 = vld [vmem:[#allocation3 + $0x24] sm:$0xff]
    %v170 = vld [vmem:[#allocation3 + $0x2c] sm:$0xf]
    %v171 = vld [vmem:[#allocation3 + $0x30] sm:$0xff]
    %v172 = vld [vmem:[#allocation3 + $0x38] sm:$0xf]
    %v173 = vld [vmem:[#allocation3 + $0x3c] sm:$0xff]
    %v174 = vld [vmem:[#allocation3 + $0x44] sm:$0xf]
    %v175 = vld [vmem:[#allocation3 + $0x48] sm:$0xff]
    %v176 = vld [vmem:[#allocation3 + $0x50] sm:$0xf]
    %v177 = vld [vmem:[#allocation3 + $0x54] sm:$0xff]
    %v178 = vld [vmem:[#allocation3 + $0x5c] sm:$0xf]
    %v179 = vld [vmem:[#allocation3 + $0x60] sm:$0xff]
    %v180 = vld [vmem:[#allocation3 + $0x68] sm:$0xf]
    %v181 = vld [vmem:[#allocation3 + $0x6c] sm:$0xff]
    %v182 = vld [vmem:[#allocation3 + $0x74] sm:$0xf]
    %v183 = vld [vmem:[#allocation3 + $0x78] sm:$0xff]
    %v184 = vld [vmem:[#allocation3 + $0x80] sm:$0xf]
    %v185 = vld [vmem:[#allocation3 + $0x84] sm:$0xff]
    %v186 = vld [vmem:[#allocation3 + $0x8c] sm:$0xf]
    %v187 = vld [vmem:[#allocation3 + $0x90] sm:$0xff]
    %v188 = vld [vmem:[#allocation3 + $0x98] sm:$0xf]
    %v189 = vld [vmem:[#allocation3 + $0x9c] sm:$0xff]
    %v190 = vld [vmem:[#allocation3 + $0xa4] sm:$0xf]
    %v191 = vld [vmem:[#allocation3 + $0xa8] sm:$0xff]
    %v192 = vld [vmem:[#allocation3 + $0xb0] sm:$0xf]
    %v193 = vld [vmem:[#allocation3 + $0xb4] sm:$0xff]
    %v194 = vld [vmem:[#allocation3 + $0xbc] sm:$0xf]
    %v195 = vld [vmem:[%s4] sm:$0x7]
    %v197 = vperm.slane %v195, 0
    %v198 = vperm.slane %v195, 1
    %v199 = vperm.slane %v195, 2
    %v207 = vunpack.c.l.b16 %v159
    %v208 = vunpack.c.l.b16 %v160
    %v209 = vunpack.c.l.b16 %v161
    %v210 = vunpack.c.l.b16 %v162
    %v211 = vpack.c.b16 %v208, %v207
    %v212 = vpack.c.b16 %v210, %v209
    %v247 = vunpack.c.l.b16 %v163
    %v248 = vunpack.c.h.b16 %v163
    %v249 = vunpack.c.l.b16 %v164
    %v250 = vunpack.c.l.b16 %v165
    %v251 = vunpack.c.h.b16 %v165
    %v252 = vunpack.c.l.b16 %v166
    %v253 = vunpack.c.l.b16 %v167
    %v254 = vunpack.c.h.b16 %v167
    %v255 = vunpack.c.l.b16 %v168
    %v256 = vunpack.c.l.b16 %v169
    %v257 = vunpack.c.h.b16 %v169
    %v258 = vunpack.c.l.b16 %v170
    %v259 = vunpack.c.l.b16 %v171
    %v260 = vunpack.c.h.b16 %v171
    %v261 = vunpack.c.l.b16 %v172
    %v262 = vunpack.c.l.b16 %v173
    %v263 = vunpack.c.h.b16 %v173
    %v264 = vunpack.c.l.b16 %v174
    %v265 = vunpack.c.l.b16 %v175
    %v266 = vunpack.c.h.b16 %v175
    %v267 = vunpack.c.l.b16 %v176
    %v268 = vunpack.c.l.b16 %v177
    %v269 = vunpack.c.h.b16 %v177
    %v270 = vunpack.c.l.b16 %v178
    %v271 = vunpack.c.l.b16 %v179
    %v272 = vunpack.c.h.b16 %v179
    %v273 = vunpack.c.l.b16 %v180
    %v274 = vunpack.c.l.b16 %v181
    %v275 = vunpack.c.h.b16 %v181
    %v276 = vunpack.c.l.b16 %v182
    %v277 = vunpack.c.l.b16 %v183
    %v278 = vunpack.c.h.b16 %v183
    %v279 = vunpack.c.l.b16 %v184
    %v280 = vunpack.c.l.b16 %v185
    %v281 = vunpack.c.h.b16 %v185
    %v282 = vunpack.c.l.b16 %v186
    %v283 = vunpack.c.l.b16 %v187
    %v284 = vunpack.c.h.b16 %v187
    %v285 = vunpack.c.l.b16 %v188
    %v286 = vunpack.c.l.b16 %v189
    %v287 = vunpack.c.h.b16 %v189
    %v288 = vunpack.c.l.b16 %v190
    %v289 = vunpack.c.l.b16 %v191
    %v290 = vunpack.c.h.b16 %v191
    %v291 = vunpack.c.l.b16 %v192
    %v292 = vunpack.c.l.b16 %v193
    %v293 = vunpack.c.h.b16 %v193
    %v294 = vunpack.c.l.b16 %v194
    %v295 = vpack.c.b16 %v250, %v247
    %v296 = vpack.c.b16 %v251, %v248
    %v297 = vpack.c.b16 %v252, %v249
    %v298 = vpack.c.b16 %v256, %v253
    %v299 = vpack.c.b16 %v257, %v254
    %v300 = vpack.c.b16 %v258, %v255
    %v301 = vpack.c.b16 %v262, %v259
    %v302 = vpack.c.b16 %v263, %v260
    %v303 = vpack.c.b16 %v264, %v261
    %v304 = vpack.c.b16 %v268, %v265
    %v305 = vpack.c.b16 %v269, %v266
    %v306 = vpack.c.b16 %v270, %v267
    %v307 = vpack.c.b16 %v274, %v271
    %v308 = vpack.c.b16 %v275, %v272
    %v309 = vpack.c.b16 %v276, %v273
    %v310 = vpack.c.b16 %v280, %v277
    %v311 = vpack.c.b16 %v281, %v278
    %v312 = vpack.c.b16 %v282, %v279
    %v313 = vpack.c.b16 %v286, %v283
    %v314 = vpack.c.b16 %v287, %v284
    %v315 = vpack.c.b16 %v288, %v285
    %v316 = vpack.c.b16 %v292, %v289
    %v317 = vpack.c.b16 %v293, %v290
    %v318 = vpack.c.b16 %v294, %v291
    %343 = vmatpush.bf16.msra.mxu0 %v316
    %344 = vmatpush.bf16.msra.mxu0 %v313
    %345 = vmatpush.bf16.msra.mxu0 %v310
    %346 = vmatpush.bf16.msra.mxu0 %v307
    %347 = vmatpush.bf16.msra.mxu0 %v304
    %348 = vmatpush.bf16.msra.mxu0 %v301
    %349 = vmatpush.bf16.msra.mxu0 %v298
    %350 = vmatpush.bf16.msra.mxu0 %v295
    %351 = vmatmul.bf16.gmra.mxu0 %v211
    %v352 = vpop.f32.mrf.mxu0
    %v353 = vadd.f32 %v197, %v352
    %v354 = vpop.f32.mrf.mxu0
    %v355 = vadd.f32 %v197, %v354
    %356 = vmatmul.bf16.gmra.mxu0 %v212
    %v357 = vpop.f32.mrf.mxu0
    %v358 = vadd.f32 %v197, %v357
    %v359 = vpop.f32.mrf.mxu0
    %v360 = vadd.f32 %v197, %v359
    %361 = vdwg.mxu0
    %362 = vmatpush.bf16.msra.mxu0 %v317
    %363 = vmatpush.bf16.msra.mxu0 %v314
    %364 = vmatpush.bf16.msra.mxu0 %v311
    %365 = vmatpush.bf16.msra.mxu0 %v308
    %366 = vmatpush.bf16.msra.mxu0 %v305
    %367 = vmatpush.bf16.msra.mxu0 %v302
    %368 = vmatpush.bf16.msra.mxu0 %v299
    %369 = vmatpush.bf16.msra.mxu0 %v296
    %370 = vmatmul.bf16.gmra.mxu0 %v211
    %v371 = vpop.f32.mrf.mxu0
    %v372 = vadd.f32 %v198, %v371
    %v373 = vpop.f32.mrf.mxu0
    %v374 = vadd.f32 %v198, %v373
    %375 = vmatmul.bf16.gmra.mxu0 %v212
    %v376 = vpop.f32.mrf.mxu0
    %v377 = vadd.f32 %v198, %v376
    %v378 = vpop.f32.mrf.mxu0
    %v379 = vadd.f32 %v198, %v378
    %380 = vdwg.mxu0
    %381 = vmatpush.bf16.msra.mxu0 %v318
    %382 = vmatpush.bf16.msra.mxu0 %v315
    %383 = vmatpush.bf16.msra.mxu0 %v312
    %384 = vmatpush.bf16.msra.mxu0 %v309
    %385 = vmatpush.bf16.msra.mxu0 %v306
    %386 = vmatpush.bf16.msra.mxu0 %v303
    %387 = vmatpush.bf16.msra.mxu0 %v300
    %388 = vmatpush.bf16.msra.mxu0 %v297
    %389 = vmatmul.bf16.gmra.mxu0 %v211
    %v390 = vpop.f32.mrf.mxu0
    %v391 = vadd.f32 %v199, %v390
    %v392 = vpop.f32.mrf.mxu0
    %v393 = vadd.f32 %v199, %v392
    %394 = vmatmul.bf16.gmra.mxu0 %v212
    %v395 = vpop.f32.mrf.mxu0
    %v396 = vadd.f32 %v199, %v395
    %v397 = vpop.f32.mrf.mxu0
    %v398 = vadd.f32 %v199, %v397
    %399 = vdwg.mxu0
    %v400 = vpack.c.bf16 %v372, %v353
    %v401 = vpack.c.bf16 %v391, %v391
    %v402 = vpack.c.bf16 %v374, %v355
    %v403 = vpack.c.bf16 %v393, %v393
    %v404 = vpack.c.bf16 %v377, %v358
    %v405 = vpack.c.bf16 %v396, %v396
    %v406 = vpack.c.bf16 %v379, %v360
    %v407 = vpack.c.bf16 %v398, %v398
    %408 = vst [vmem:[%s5] sm:$0xff] %v400
    %409 = vst [vmem:[%s5 + $0x8] sm:$0xf] %v401
    %410 = vst [vmem:[%s5 + $0xc] sm:$0xff] %v402
    %411 = vst [vmem:[%s5 + $0x14] sm:$0xf] %v403
    %412 = vst [vmem:[%s5 + $0x18] sm:$0xff] %v404
    %413 = vst [vmem:[%s5 + $0x20] sm:$0xf] %v405
    %414 = vst [vmem:[%s5 + $0x24] sm:$0xff] %v406
    %415 = vst [vmem:[%s5 + $0x2c] sm:$0xf] %v407
    // Predicated region
    $region30: #{calibvit_v2_forward.36} parent=1 // pred_check
      _
    $region31: #{calibvit_v2_forward.36} parent=1 // pred_check_branch
      %417 = sbr.rel (0) target = $region33
    $region32: #{calibvit_v2_forward.36} parent=1 // pred_region
      _
    $region33: #{calibvit_v2_forward.36} parent=1 // pred_fallthru
      _
    // Predicated region
    $region34: #{calibvit_v2_forward.36} parent=1 // pred_check
      _
    $region35: #{calibvit_v2_forward.36} parent=1 // pred_check_branch
      %419 = sbr.rel (0) target = $region37
    $region36: #{calibvit_v2_forward.36} parent=1 // pred_region
      _
    $region37: #{calibvit_v2_forward.36} parent=1 // pred_fallthru
      _
    %420 = vsyncpa [#allocation4], 1

// kernel: calibvit_v2_forward.42
$region0: #{calibvit_v2_forward.42}
  #allocation0 [shape = 'u32[]', space=smem, size = 0x4, offset = 0x4, fixed_abs, tag = 'smem constant byte address 0x4 - core index']
  #allocation1 [shape = 'u32[72,128]{1,0:T(1,128)}', space=vmem, size = 0x9000, scoped, tag = 'internal scratch']
  #allocation2 [shape = 'bf16[64,128]{1,0:T(8,128)(2,1)}', space=vmem, size = 0x4000, scoped, tag = 'scratch operand']
  %s0 = inlined_call_operand.vmem [shape: bf16[64,128], index: 0, kind: input, shape index: {}]
  %s1 = inlined_call_operand.vmem [shape: f32[1,128], index: 1, kind: input, shape index: {}]
  %s2 = inlined_call_operand.vmem [shape: f32[1,128], index: 2, kind: input, shape index: {}]
  %s3 = inlined_call_operand.hbm [shape: bf16[128,256], index: 3, kind: input, shape index: {}]
  %s4 = inlined_call_operand.vmem [shape: f32[1,256], index: 4, kind: input, shape index: {}]
  %s5 = inlined_call_operand.vmem [shape: bf16[64,256], index: 5, kind: output, shape index: {}]
  %s6 = sld [smem:[#allocation0]]
  $region38: #{calibvit_v2_forward.42} parent=0
    _
  %s8 = ssub.s32 1, %s6
  %s9 = scalar_select 0, %s8, %s6
  $region1: #{calibvit_v2_forward.42} parent=0
    #allocation3 [shape = 'u8[65536]{0}', space=vmem, size = 0x10000, scoped, tag = 'input window, operand 3, single buffered']
    #allocation4 [shape = 's32[1]{0}', space=sflag, size = 0x4, scoped, tag = 'scoped memory for calibvit_v2_forward.42']
    %10 = vsyncpa [#allocation4], 0
    // Predicated region
    $region2: #{calibvit_v2_forward.42} parent=1 // pred_check
      _
    $region3: #{calibvit_v2_forward.42} parent=1 // pred_check_branch
      %12 = sbr.rel (0) target = $region5
    $region4: #{calibvit_v2_forward.42} parent=1 // pred_region
      _
    $region5: #{calibvit_v2_forward.42} parent=1 // pred_fallthru
      _
    // Predicated region
    $region6: #{calibvit_v2_forward.42} parent=1 // pred_check
      _
    $region7: #{calibvit_v2_forward.42} parent=1 // pred_check_branch
      %14 = sbr.rel (0) target = $region9
    $region8: #{calibvit_v2_forward.42} parent=1 // pred_region
      _
    $region9: #{calibvit_v2_forward.42} parent=1 // pred_fallthru
      _
    // Predicated region
    $region10: #{calibvit_v2_forward.42} parent=1 // pred_check
      _
    $region11: #{calibvit_v2_forward.42} parent=1 // pred_check_branch
      %16 = sbr.rel (0) target = $region13
    $region12: #{calibvit_v2_forward.42} parent=1 // pred_region
      _
    $region13: #{calibvit_v2_forward.42} parent=1 // pred_fallthru
      _
    // Predicated region
    $region14: #{calibvit_v2_forward.42} parent=1 // pred_check
      _
    $region15: #{calibvit_v2_forward.42} parent=1 // pred_check_branch
      %18 = sbr.rel (0) target = $region17
    $region16: #{calibvit_v2_forward.42} parent=1 // pred_region
      %20 = vsyncadd [#allocation4], 0
      %s21 = sshll.u32 %s3, 4
      %s22 = int_to_ptr.hbm [resolvable:$true] %s21
      %s23 = sshll.u32 [#allocation3], 4
      %s24 = int_to_ptr.vmem [resolvable:$true] %s23
      %29 = dma.hbm_to_vmem [thread:$0]  %s22, 2048, %s24, [#allocation4], 128, 128, 8
    $region17: #{calibvit_v2_forward.42} parent=1 // pred_fallthru
      _
    // Predicated region
    $region18: #{calibvit_v2_forward.42} parent=1 // pred_check
      _
    $region19: #{calibvit_v2_forward.42} parent=1 // pred_check_branch
      %31 = sbr.rel (0) target = $region21
    $region20: #{calibvit_v2_forward.42} parent=1 // pred_region
      _
    $region21: #{calibvit_v2_forward.42} parent=1 // pred_fallthru
      _
    // Predicated region
    $region22: #{calibvit_v2_forward.42} parent=1 // pred_check
      _
    $region23: #{calibvit_v2_forward.42} parent=1 // pred_check_branch
      %33 = sbr.rel (0) target = $region25
    $region24: #{calibvit_v2_forward.42} parent=1 // pred_region
      %35 = dma.done [#allocation4], 2048
    $region25: #{calibvit_v2_forward.42} parent=1 // pred_fallthru
      _
    %p36 = scmp.eq.s32.totalorder 0, 0
    // Predicated region
    $region26: #{calibvit_v2_forward.42} parent=1 // pred_check
      %p37 = pneg %p36
    $region27: #{calibvit_v2_forward.42} parent=1 // pred_check_branch
      %39 = sbr.rel (%p37) target = $region29
    $region28: #{calibvit_v2_forward.42} parent=1 // pred_region
      %v40 = vld [vmem:[%s0] sm:$0xf]
      %v41 = vld [vmem:[%s0 + $0x4] sm:$0xf]
      %v42 = vld [vmem:[%s0 + $0x8] sm:$0xf]
      %v43 = vld [vmem:[%s0 + $0xc] sm:$0xf]
      %v44 = vld [vmem:[%s0 + $0x10] sm:$0xf]
      %v45 = vld [vmem:[%s0 + $0x14] sm:$0xf]
      %v46 = vld [vmem:[%s0 + $0x18] sm:$0xf]
      %v47 = vld [vmem:[%s0 + $0x1c] sm:$0xf]
      %v48 = vunpack.c.l.bf16 %v40
      %v49 = vunpack.c.l.bf16 %v41
      %v50 = vunpack.c.l.bf16 %v42
      %v51 = vunpack.c.l.bf16 %v43
      %v52 = vunpack.c.l.bf16 %v44
      %v53 = vunpack.c.l.bf16 %v45
      %v54 = vunpack.c.l.bf16 %v46
      %v55 = vunpack.c.l.bf16 %v47
      %56 = vadd.xlane.f32.xlu0 %v48
      %v57 = vpop.xlane.xlu0 %56
      %58 = vadd.xlane.f32.xlu0 %v49
      %v59 = vpop.xlane.xlu0 %58
      %60 = vadd.xlane.f32.xlu0 %v50
      %v61 = vpop.xlane.xlu0 %60
      %62 = vadd.xlane.f32.xlu0 %v51
      %v63 = vpop.xlane.xlu0 %62
      %64 = vadd.xlane.f32.xlu0 %v52
      %v65 = vpop.xlane.xlu0 %64
      %66 = vadd.xlane.f32.xlu0 %v53
      %v67 = vpop.xlane.xlu0 %66
      %68 = vadd.xlane.f32.xlu0 %v54
      %v69 = vpop.xlane.xlu0 %68
      %70 = vadd.xlane.f32.xlu0 %v55
      %v71 = vpop.xlane.xlu0 %70
      %v72 = vrcp.pop 128.0
      %v73 = vmul.f32 128.0, %v72
      %v74 = vsub.f32 1.0, %v73
      %v75 = vmul.f32 %v72, %v74
      %v76 = vadd.f32 %v72, %v75
      %vm77 = vweird.f32 %v72
      %v78 = vsel %vm77, %v72, %v76
      %v79 = vmul.f32 %v57, %v78
      %v80 = vmul.f32 %v59, %v78
      %v81 = vmul.f32 %v61, %v78
      %v82 = vmul.f32 %v63, %v78
      %v83 = vmul.f32 %v65, %v78
      %v84 = vmul.f32 %v67, %v78
      %v85 = vmul.f32 %v69, %v78
      %v86 = vmul.f32 %v71, %v78
      %v87 = vsub.f32 %v48, %v79
      %v88 = vsub.f32 %v49, %v80
      %v89 = vsub.f32 %v50, %v81
      %v90 = vsub.f32 %v51, %v82
      %v91 = vsub.f32 %v52, %v83
      %v92 = vsub.f32 %v53, %v84
      %v93 = vsub.f32 %v54, %v85
      %v94 = vsub.f32 %v55, %v86
      %v95 = vmul.f32 %v87, %v87
      %v96 = vmul.f32 %v88, %v88
      %v97 = vmul.f32 %v89, %v89
      %v98 = vmul.f32 %v90, %v90
      %v99 = vmul.f32 %v91, %v91
      %v100 = vmul.f32 %v92, %v92
      %v101 = vmul.f32 %v93, %v93
      %v102 = vmul.f32 %v94, %v94
      %103 = vadd.xlane.f32.xlu0 %v95
      %v104 = vpop.xlane.xlu0 %103
      %105 = vadd.xlane.f32.xlu0 %v96
      %v106 = vpop.xlane.xlu0 %105
      %107 = vadd.xlane.f32.xlu0 %v97
      %v108 = vpop.xlane.xlu0 %107
      %109 = vadd.xlane.f32.xlu0 %v98
      %v110 = vpop.xlane.xlu0 %109
      %111 = vadd.xlane.f32.xlu0 %v99
      %v112 = vpop.xlane.xlu0 %111
      %113 = vadd.xlane.f32.xlu0 %v100
      %v114 = vpop.xlane.xlu0 %113
      %115 = vadd.xlane.f32.xlu0 %v101
      %v116 = vpop.xlane.xlu0 %115
      %117 = vadd.xlane.f32.xlu0 %v102
      %v118 = vpop.xlane.xlu0 %117
      %v119 = vmul.f32 %v104, %v78
      %v120 = vmul.f32 %v106, %v78
      %v121 = vmul.f32 %v108, %v78
      %v122 = vmul.f32 %v110, %v78
      %v123 = vmul.f32 %v112, %v78
      %v124 = vmul.f32 %v114, %v78
      %v125 = vmul.f32 %v116, %v78
      %v126 = vmul.f32 %v118, %v78
      %v127 = vadd.f32 %v119, 1e-05
      %v128 = vadd.f32 %v120, 1e-05
      %v129 = vadd.f32 %v121, 1e-05
      %v130 = vadd.f32 %v122, 1e-05
      %v131 = vadd.f32 %v123, 1e-05
      %v132 = vadd.f32 %v124, 1e-05
      %v133 = vadd.f32 %v125, 1e-05
      %v134 = vadd.f32 %v126, 1e-05
      %v135 = vrsqrt.pop %v127
      %v136 = vmul.f32 %v135, %v127
      %v137 = vmul.f32 %v136, %v135
      %v138 = vmul.f32 0.5, %v137
      %v139 = vsub.f32 1.5, %v138
      %v140 = vmul.f32 %v135, %v139
      %vm141 = vweird.f32 %v127
      %vm142 = vweird.f32 %v135
      %vm143 = vmor %vm141, %vm142
      %v144 = vsel %vm143, %v135, %v140
      %v145 = vrsqrt.pop %v128
      %v146 = vmul.f32 %v145, %v128
      %v147 = vmul.f32 %v146, %v145
      %v148 = vmul.f32 0.5, %v147
      %v149 = vsub.f32 1.5, %v148
      %v150 = vmul.f32 %v145, %v149
      %vm151 = vweird.f32 %v128
      %vm152 = vweird.f32 %v145
      %vm153 = vmor %vm151, %vm152
      %v154 = vsel %vm153, %v145, %v150
      %v155 = vrsqrt.pop %v129
      %v156 = vmul.f32 %v155, %v129
      %v157 = vmul.f32 %v156, %v155
      %v158 = vmul.f32 0.5, %v157
      %v159 = vsub.f32 1.5, %v158
      %v160 = vmul.f32 %v155, %v159
      %vm161 = vweird.f32 %v129
      %vm162 = vweird.f32 %v155
      %vm163 = vmor %vm161, %vm162
      %v164 = vsel %vm163, %v155, %v160
      %v165 = vrsqrt.pop %v130
      %v166 = vmul.f32 %v165, %v130
      %v167 = vmul.f32 %v166, %v165
      %v168 = vmul.f32 0.5, %v167
      %v169 = vsub.f32 1.5, %v168
      %v170 = vmul.f32 %v165, %v169
      %vm171 = vweird.f32 %v130
      %vm172 = vweird.f32 %v165
      %vm173 = vmor %vm171, %vm172
      %v174 = vsel %vm173, %v165, %v170
      %v175 = vrsqrt.pop %v131
      %v176 = vmul.f32 %v175, %v131
      %v177 = vmul.f32 %v176, %v175
      %v178 = vmul.f32 0.5, %v177
      %v179 = vsub.f32 1.5, %v178
      %v180 = vmul.f32 %v175, %v179
      %vm181 = vweird.f32 %v131
      %vm182 = vweird.f32 %v175
      %vm183 = vmor %vm181, %vm182
      %v184 = vsel %vm183, %v175, %v180
      %v185 = vrsqrt.pop %v132
      %v186 = vmul.f32 %v185, %v132
      %v187 = vmul.f32 %v186, %v185
      %v188 = vmul.f32 0.5, %v187
      %v189 = vsub.f32 1.5, %v188
      %v190 = vmul.f32 %v185, %v189
      %vm191 = vweird.f32 %v132
      %vm192 = vweird.f32 %v185
      %vm193 = vmor %vm191, %vm192
      %v194 = vsel %vm193, %v185, %v190
      %v195 = vrsqrt.pop %v133
      %v196 = vmul.f32 %v195, %v133
      %v197 = vmul.f32 %v196, %v195
      %v198 = vmul.f32 0.5, %v197
      %v199 = vsub.f32 1.5, %v198
      %v200 = vmul.f32 %v195, %v199
      %vm201 = vweird.f32 %v133
      %vm202 = vweird.f32 %v195
      %vm203 = vmor %vm201, %vm202
      %v204 = vsel %vm203, %v195, %v200
      %v205 = vrsqrt.pop %v134
      %v206 = vmul.f32 %v205, %v134
      %v207 = vmul.f32 %v206, %v205
      %v208 = vmul.f32 0.5, %v207
      %v209 = vsub.f32 1.5, %v208
      %v210 = vmul.f32 %v205, %v209
      %vm211 = vweird.f32 %v134
      %vm212 = vweird.f32 %v205
      %vm213 = vmor %vm211, %vm212
      %v214 = vsel %vm213, %v205, %v210
      %v215 = vmul.f32 %v87, %v144
      %v216 = vmul.f32 %v88, %v154
      %v217 = vmul.f32 %v89, %v164
      %v218 = vmul.f32 %v90, %v174
      %v219 = vmul.f32 %v91, %v184
      %v220 = vmul.f32 %v92, %v194
      %v221 = vmul.f32 %v93, %v204
      %v222 = vmul.f32 %v94, %v214
      %v223 = vld [vmem:[%s1] sm:$0x1]
      %v225 = vperm.slane %v223, 0
      %v227 = vmul.f32 %v215, %v225
      %v228 = vmul.f32 %v216, %v225
      %v229 = vmul.f32 %v217, %v225
      %v230 = vmul.f32 %v218, %v225
      %v231 = vmul.f32 %v219, %v225
      %v232 = vmul.f32 %v220, %v225
      %v233 = vmul.f32 %v221, %v225
      %v234 = vmul.f32 %v222, %v225
      %v235 = vld [vmem:[%s2] sm:$0x1]
      %v237 = vperm.slane %v235, 0
      %v239 = vadd.f32 %v227, %v237
      %v240 = vadd.f32 %v228, %v237
      %v241 = vadd.f32 %v229, %v237
      %v242 = vadd.f32 %v230, %v237
      %v243 = vadd.f32 %v231, %v237
      %v244 = vadd.f32 %v232, %v237
      %v245 = vadd.f32 %v233, %v237
      %v246 = vadd.f32 %v234, %v237
      %v247 = vpack.c.bf16 %v239, %v239
      %v248 = vpack.c.bf16 %v240, %v240
      %v249 = vpack.c.bf16 %v241, %v241
      %v250 = vpack.c.bf16 %v242, %v242
      %v251 = vpack.c.bf16 %v243, %v243
      %v252 = vpack.c.bf16 %v244, %v244
      %v253 = vpack.c.bf16 %v245, %v245
      %v254 = vpack.c.bf16 %v246, %v246
      %255 = vst [vmem:[#allocation2] sm:$0xf] %v247
      %256 = vst [vmem:[#allocation2 + $0x4] sm:$0xf] %v248
      %257 = vst [vmem:[#allocation2 + $0x8] sm:$0xf] %v249
      %258 = vst [vmem:[#allocation2 + $0xc] sm:$0xf] %v250
      %259 = vst [vmem:[#allocation2 + $0x10] sm:$0xf] %v251
      %260 = vst [vmem:[#allocation2 + $0x14] sm:$0xf] %v252
      %261 = vst [vmem:[#allocation2 + $0x18] sm:$0xf] %v253
      %262 = vst [vmem:[#allocation2 + $0x1c] sm:$0xf] %v254
    $region29: #{calibvit_v2_forward.42} parent=1 // pred_fallthru
      _
    %v263 = vld [vmem:[#allocation2] sm:$0xf]
    %v264 = vld [vmem:[#allocation2 + $0x4] sm:$0xf]
    %v265 = vld [vmem:[#allocation2 + $0x8] sm:$0xf]
    %v266 = vld [vmem:[#allocation2 + $0xc] sm:$0xf]
    %v267 = vld [vmem:[#allocation2 + $0x10] sm:$0xf]
    %v268 = vld [vmem:[#allocation2 + $0x14] sm:$0xf]
    %v269 = vld [vmem:[#allocation2 + $0x18] sm:$0xf]
    %v270 = vld [vmem:[#allocation2 + $0x1c] sm:$0xf]
    %v271 = vld [vmem:[#allocation3] sm:$0xff]
    %v272 = vld [vmem:[#allocation3 + $0x8] sm:$0xff]
    %v273 = vld [vmem:[#allocation3 + $0x10] sm:$0xff]
    %v274 = vld [vmem:[#allocation3 + $0x18] sm:$0xff]
    %v275 = vld [vmem:[#allocation3 + $0x20] sm:$0xff]
    %v276 = vld [vmem:[#allocation3 + $0x28] sm:$0xff]
    %v277 = vld [vmem:[#allocation3 + $0x30] sm:$0xff]
    %v278 = vld [vmem:[#allocation3 + $0x38] sm:$0xff]
    %v279 = vld [vmem:[#allocation3 + $0x40] sm:$0xff]
    %v280 = vld [vmem:[#allocation3 + $0x48] sm:$0xff]
    %v281 = vld [vmem:[#allocation3 + $0x50] sm:$0xff]
    %v282 = vld [vmem:[#allocation3 + $0x58] sm:$0xff]
    %v283 = vld [vmem:[#allocation3 + $0x60] sm:$0xff]
    %v284 = vld [vmem:[#allocation3 + $0x68] sm:$0xff]
    %v285 = vld [vmem:[#allocation3 + $0x70] sm:$0xff]
    %v286 = vld [vmem:[#allocation3 + $0x78] sm:$0xff]
    %v287 = vld [vmem:[%s4] sm:$0x3]
    %v289 = vperm.slane %v287, 0
    %v290 = vperm.slane %v287, 1
    %v301 = vunpack.c.l.b16 %v263
    %v302 = vunpack.c.l.b16 %v264
    %v303 = vunpack.c.l.b16 %v265
    %v304 = vunpack.c.l.b16 %v266
    %v305 = vunpack.c.l.b16 %v267
    %v306 = vunpack.c.l.b16 %v268
    %v307 = vunpack.c.l.b16 %v269
    %v308 = vunpack.c.l.b16 %v270
    %v309 = vpack.c.b16 %v302, %v301
    %v310 = vpack.c.b16 %v304, %v303
    %v311 = vpack.c.b16 %v306, %v305
    %v312 = vpack.c.b16 %v308, %v307
    %v333 = vunpack.c.l.b16 %v271
    %v334 = vunpack.c.h.b16 %v271
    %v335 = vunpack.c.l.b16 %v272
    %v336 = vunpack.c.h.b16 %v272
    %v337 = vunpack.c.l.b16 %v273
    %v338 = vunpack.c.h.b16 %v273
    %v339 = vunpack.c.l.b16 %v274
    %v340 = vunpack.c.h.b16 %v274
    %v341 = vunpack.c.l.b16 %v275
    %v342 = vunpack.c.h.b16 %v275
    %v343 = vunpack.c.l.b16 %v276
    %v344 = vunpack.c.h.b16 %v276
    %v345 = vunpack.c.l.b16 %v277
    %v346 = vunpack.c.h.b16 %v277
    %v347 = vunpack.c.l.b16 %v278
    %v348 = vunpack.c.h.b16 %v278
    %v349 = vunpack.c.l.b16 %v279
    %v350 = vunpack.c.h.b16 %v279
    %v351 = vunpack.c.l.b16 %v280
    %v352 = vunpack.c.h.b16 %v280
    %v353 = vunpack.c.l.b16 %v281
    %v354 = vunpack.c.h.b16 %v281
    %v355 = vunpack.c.l.b16 %v282
    %v356 = vunpack.c.h.b16 %v282
    %v357 = vunpack.c.l.b16 %v283
    %v358 = vunpack.c.h.b16 %v283
    %v359 = vunpack.c.l.b16 %v284
    %v360 = vunpack.c.h.b16 %v284
    %v361 = vunpack.c.l.b16 %v285
    %v362 = vunpack.c.h.b16 %v285
    %v363 = vunpack.c.l.b16 %v286
    %v364 = vunpack.c.h.b16 %v286
    %v365 = vpack.c.b16 %v335, %v333
    %v366 = vpack.c.b16 %v336, %v334
    %v367 = vpack.c.b16 %v339, %v337
    %v368 = vpack.c.b16 %v340, %v338
    %v369 = vpack.c.b16 %v343, %v341
    %v370 = vpack.c.b16 %v344, %v342
    %v371 = vpack.c.b16 %v347, %v345
    %v372 = vpack.c.b16 %v348, %v346
    %v373 = vpack.c.b16 %v351, %v349
    %v374 = vpack.c.b16 %v352, %v350
    %v375 = vpack.c.b16 %v355, %v353
    %v376 = vpack.c.b16 %v356, %v354
    %v377 = vpack.c.b16 %v359, %v357
    %v378 = vpack.c.b16 %v360, %v358
    %v379 = vpack.c.b16 %v363, %v361
    %v380 = vpack.c.b16 %v364, %v362
    %397 = vmatpush.bf16.msra.mxu0 %v379
    %398 = vmatpush.bf16.msra.mxu0 %v377
    %399 = vmatpush.bf16.msra.mxu0 %v375
    %400 = vmatpush.bf16.msra.mxu0 %v373
    %401 = vmatpush.bf16.msra.mxu0 %v371
    %402 = vmatpush.bf16.msra.mxu0 %v369
    %403 = vmatpush.bf16.msra.mxu0 %v367
    %404 = vmatpush.bf16.msra.mxu0 %v365
    %405 = vmatmul.bf16.gmra.mxu0 %v309
    %v406 = vpop.f32.mrf.mxu0
    %v407 = vadd.f32 %v289, %v406
    %v408 = vpop.f32.mrf.mxu0
    %v409 = vadd.f32 %v289, %v408
    %410 = vmatmul.bf16.gmra.mxu0 %v310
    %v411 = vpop.f32.mrf.mxu0
    %v412 = vadd.f32 %v289, %v411
    %v413 = vpop.f32.mrf.mxu0
    %v414 = vadd.f32 %v289, %v413
    %415 = vmatmul.bf16.gmra.mxu0 %v311
    %v416 = vpop.f32.mrf.mxu0
    %v417 = vadd.f32 %v289, %v416
    %v418 = vpop.f32.mrf.mxu0
    %v419 = vadd.f32 %v289, %v418
    %420 = vmatmul.bf16.gmra.mxu0 %v312
    %v421 = vpop.f32.mrf.mxu0
    %v422 = vadd.f32 %v289, %v421
    %v423 = vpop.f32.mrf.mxu0
    %v424 = vadd.f32 %v289, %v423
    %425 = vdwg.mxu0
    %426 = vmatpush.bf16.msra.mxu0 %v380
    %427 = vmatpush.bf16.msra.mxu0 %v378
    %428 = vmatpush.bf16.msra.mxu0 %v376
    %429 = vmatpush.bf16.msra.mxu0 %v374
    %430 = vmatpush.bf16.msra.mxu0 %v372
    %431 = vmatpush.bf16.msra.mxu0 %v370
    %432 = vmatpush.bf16.msra.mxu0 %v368
    %433 = vmatpush.bf16.msra.mxu0 %v366
    %434 = vmatmul.bf16.gmra.mxu0 %v309
    %v435 = vpop.f32.mrf.mxu0
    %v436 = vadd.f32 %v290, %v435
    %v437 = vpop.f32.mrf.mxu0
    %v438 = vadd.f32 %v290, %v437
    %439 = vmatmul.bf16.gmra.mxu0 %v310
    %v440 = vpop.f32.mrf.mxu0
    %v441 = vadd.f32 %v290, %v440
    %v442 = vpop.f32.mrf.mxu0
    %v443 = vadd.f32 %v290, %v442
    %444 = vmatmul.bf16.gmra.mxu0 %v311
    %v445 = vpop.f32.mrf.mxu0
    %v446 = vadd.f32 %v290, %v445
    %v447 = vpop.f32.mrf.mxu0
    %v448 = vadd.f32 %v290, %v447
    %449 = vmatmul.bf16.gmra.mxu0 %v312
    %v450 = vpop.f32.mrf.mxu0
    %v451 = vadd.f32 %v290, %v450
    %v452 = vpop.f32.mrf.mxu0
    %v453 = vadd.f32 %v290, %v452
    %454 = vdwg.mxu0
    %v455 = vpack.c.bf16 %v436, %v407
    %v456 = vpack.c.bf16 %v438, %v409
    %v457 = vpack.c.bf16 %v441, %v412
    %v458 = vpack.c.bf16 %v443, %v414
    %v459 = vpack.c.bf16 %v446, %v417
    %v460 = vpack.c.bf16 %v448, %v419
    %v461 = vpack.c.bf16 %v451, %v422
    %v462 = vpack.c.bf16 %v453, %v424
    %463 = vst [vmem:[%s5] sm:$0xff] %v455
    %464 = vst [vmem:[%s5 + $0x8] sm:$0xff] %v456
    %465 = vst [vmem:[%s5 + $0x10] sm:$0xff] %v457
    %466 = vst [vmem:[%s5 + $0x18] sm:$0xff] %v458
    %467 = vst [vmem:[%s5 + $0x20] sm:$0xff] %v459
    %468 = vst [vmem:[%s5 + $0x28] sm:$0xff] %v460
    %469 = vst [vmem:[%s5 + $0x30] sm:$0xff] %v461
    %470 = vst [vmem:[%s5 + $0x38] sm:$0xff] %v462
    // Predicated region
    $region30: #{calibvit_v2_forward.42} parent=1 // pred_check
      _
    $region31: #{calibvit_v2_forward.42} parent=1 // pred_check_branch
      %472 = sbr.rel (0) target = $region33
    $region32: #{calibvit_v2_forward.42} parent=1 // pred_region
      _
    $region33: #{calibvit_v2_forward.42} parent=1 // pred_fallthru
      _
    // Predicated region
    $region34: #{calibvit_v2_forward.42} parent=1 // pred_check
      _
    $region35: #{calibvit_v2_forward.42} parent=1 // pred_check_branch
      %474 = sbr.rel (0) target = $region37
    $region36: #{calibvit_v2_forward.42} parent=1 // pred_region
      _
    $region37: #{calibvit_v2_forward.42} parent=1 // pred_fallthru
      _
    %475 = vsyncpa [#allocation4], 1

// kernel: calibvit_v2_forward.41
$region0: #{calibvit_v2_forward.41}
  #allocation0 [shape = 'u32[]', space=smem, size = 0x4, offset = 0x4, fixed_abs, tag = 'smem constant byte address 0x4 - core index']
  #allocation1 [shape = 'u32[72,128]{1,0:T(1,128)}', space=vmem, size = 0x9000, scoped, tag = 'internal scratch']
  #allocation2 [shape = 'bf16[64,128]{1,0:T(8,128)(2,1)}', space=vmem, size = 0x4000, scoped, tag = 'scratch operand']
  %s0 = inlined_call_operand.vmem [shape: bf16[64,128], index: 0, kind: input, shape index: {}]
  %s1 = inlined_call_operand.vmem [shape: f32[1,128], index: 1, kind: input, shape index: {}]
  %s2 = inlined_call_operand.vmem [shape: f32[1,128], index: 2, kind: input, shape index: {}]
  %s3 = inlined_call_operand.vmem [shape: bf16[128,128], index: 3, kind: input, shape index: {}]
  %s4 = inlined_call_operand.vmem [shape: f32[1,128], index: 4, kind: input, shape index: {}]
  %s5 = inlined_call_operand.vmem [shape: bf16[64,128], index: 5, kind: output, shape index: {}]
  %s6 = sld [smem:[#allocation0]]
  $region34: #{calibvit_v2_forward.41} parent=0
    _
  %s8 = ssub.s32 1, %s6
  %s9 = scalar_select 0, %s8, %s6
  // Predicated region
  $region2: #{calibvit_v2_forward.41} parent=0 // pred_check
    _
  $region3: #{calibvit_v2_forward.41} parent=0 // pred_check_branch
    %11 = sbr.rel (0) target = $region5
  $region4: #{calibvit_v2_forward.41} parent=0 // pred_region
    _
  $region5: #{calibvit_v2_forward.41} parent=0 // pred_fallthru
    _
  // Predicated region
  $region6: #{calibvit_v2_forward.41} parent=0 // pred_check
    _
  $region7: #{calibvit_v2_forward.41} parent=0 // pred_check_branch
    %13 = sbr.rel (0) target = $region9
  $region8: #{calibvit_v2_forward.41} parent=0 // pred_region
    _
  $region9: #{calibvit_v2_forward.41} parent=0 // pred_fallthru
    _
  // Predicated region
  $region10: #{calibvit_v2_forward.41} parent=0 // pred_check
    _
  $region11: #{calibvit_v2_forward.41} parent=0 // pred_check_branch
    %15 = sbr.rel (0) target = $region13
  $region12: #{calibvit_v2_forward.41} parent=0 // pred_region
    _
  $region13: #{calibvit_v2_forward.41} parent=0 // pred_fallthru
    _
  // Predicated region
  $region14: #{calibvit_v2_forward.41} parent=0 // pred_check
    _
  $region15: #{calibvit_v2_forward.41} parent=0 // pred_check_branch
    %17 = sbr.rel (0) target = $region17
  $region16: #{calibvit_v2_forward.41} parent=0 // pred_region
    _
  $region17: #{calibvit_v2_forward.41} parent=0 // pred_fallthru
    _
  // Predicated region
  $region18: #{calibvit_v2_forward.41} parent=0 // pred_check
    _
  $region19: #{calibvit_v2_forward.41} parent=0 // pred_check_branch
    %19 = sbr.rel (0) target = $region21
  $region20: #{calibvit_v2_forward.41} parent=0 // pred_region
    _
  $region21: #{calibvit_v2_forward.41} parent=0 // pred_fallthru
    _
  %p20 = scmp.eq.s32.totalorder 0, 0
  // Predicated region
  $region22: #{calibvit_v2_forward.41} parent=0 // pred_check
    %p21 = pneg %p20
  $region23: #{calibvit_v2_forward.41} parent=0 // pred_check_branch
    %23 = sbr.rel (%p21) target = $region25
  $region24: #{calibvit_v2_forward.41} parent=0 // pred_region
    %v24 = vld [vmem:[%s0] sm:$0xf]
    %v25 = vld [vmem:[%s0 + $0x4] sm:$0xf]
    %v26 = vld [vmem:[%s0 + $0x8] sm:$0xf]
    %v27 = vld [vmem:[%s0 + $0xc] sm:$0xf]
    %v28 = vld [vmem:[%s0 + $0x10] sm:$0xf]
    %v29 = vld [vmem:[%s0 + $0x14] sm:$0xf]
    %v30 = vld [vmem:[%s0 + $0x18] sm:$0xf]
    %v31 = vld [vmem:[%s0 + $0x1c] sm:$0xf]
    %v32 = vunpack.c.l.bf16 %v24
    %v33 = vunpack.c.l.bf16 %v25
    %v34 = vunpack.c.l.bf16 %v26
    %v35 = vunpack.c.l.bf16 %v27
    %v36 = vunpack.c.l.bf16 %v28
    %v37 = vunpack.c.l.bf16 %v29
    %v38 = vunpack.c.l.bf16 %v30
    %v39 = vunpack.c.l.bf16 %v31
    %40 = vadd.xlane.f32.xlu0 %v32
    %v41 = vpop.xlane.xlu0 %40
    %42 = vadd.xlane.f32.xlu0 %v33
    %v43 = vpop.xlane.xlu0 %42
    %44 = vadd.xlane.f32.xlu0 %v34
    %v45 = vpop.xlane.xlu0 %44
    %46 = vadd.xlane.f32.xlu0 %v35
    %v47 = vpop.xlane.xlu0 %46
    %48 = vadd.xlane.f32.xlu0 %v36
    %v49 = vpop.xlane.xlu0 %48
    %50 = vadd.xlane.f32.xlu0 %v37
    %v51 = vpop.xlane.xlu0 %50
    %52 = vadd.xlane.f32.xlu0 %v38
    %v53 = vpop.xlane.xlu0 %52
    %54 = vadd.xlane.f32.xlu0 %v39
    %v55 = vpop.xlane.xlu0 %54
    %v56 = vrcp.pop 128.0
    %v57 = vmul.f32 128.0, %v56
    %v58 = vsub.f32 1.0, %v57
    %v59 = vmul.f32 %v56, %v58
    %v60 = vadd.f32 %v56, %v59
    %vm61 = vweird.f32 %v56
    %v62 = vsel %vm61, %v56, %v60
    %v63 = vmul.f32 %v41, %v62
    %v64 = vmul.f32 %v43, %v62
    %v65 = vmul.f32 %v45, %v62
    %v66 = vmul.f32 %v47, %v62
    %v67 = vmul.f32 %v49, %v62
    %v68 = vmul.f32 %v51, %v62
    %v69 = vmul.f32 %v53, %v62
    %v70 = vmul.f32 %v55, %v62
    %v71 = vsub.f32 %v32, %v63
    %v72 = vsub.f32 %v33, %v64
    %v73 = vsub.f32 %v34, %v65
    %v74 = vsub.f32 %v35, %v66
    %v75 = vsub.f32 %v36, %v67
    %v76 = vsub.f32 %v37, %v68
    %v77 = vsub.f32 %v38, %v69
    %v78 = vsub.f32 %v39, %v70
    %v79 = vmul.f32 %v71, %v71
    %v80 = vmul.f32 %v72, %v72
    %v81 = vmul.f32 %v73, %v73
    %v82 = vmul.f32 %v74, %v74
    %v83 = vmul.f32 %v75, %v75
    %v84 = vmul.f32 %v76, %v76
    %v85 = vmul.f32 %v77, %v77
    %v86 = vmul.f32 %v78, %v78
    %87 = vadd.xlane.f32.xlu0 %v79
    %v88 = vpop.xlane.xlu0 %87
    %89 = vadd.xlane.f32.xlu0 %v80
    %v90 = vpop.xlane.xlu0 %89
    %91 = vadd.xlane.f32.xlu0 %v81
    %v92 = vpop.xlane.xlu0 %91
    %93 = vadd.xlane.f32.xlu0 %v82
    %v94 = vpop.xlane.xlu0 %93
    %95 = vadd.xlane.f32.xlu0 %v83
    %v96 = vpop.xlane.xlu0 %95
    %97 = vadd.xlane.f32.xlu0 %v84
    %v98 = vpop.xlane.xlu0 %97
    %99 = vadd.xlane.f32.xlu0 %v85
    %v100 = vpop.xlane.xlu0 %99
    %101 = vadd.xlane.f32.xlu0 %v86
    %v102 = vpop.xlane.xlu0 %101
    %v103 = vmul.f32 %v88, %v62
    %v104 = vmul.f32 %v90, %v62
    %v105 = vmul.f32 %v92, %v62
    %v106 = vmul.f32 %v94, %v62
    %v107 = vmul.f32 %v96, %v62
    %v108 = vmul.f32 %v98, %v62
    %v109 = vmul.f32 %v100, %v62
    %v110 = vmul.f32 %v102, %v62
    %v111 = vadd.f32 %v103, 1e-05
    %v112 = vadd.f32 %v104, 1e-05
    %v113 = vadd.f32 %v105, 1e-05
    %v114 = vadd.f32 %v106, 1e-05
    %v115 = vadd.f32 %v107, 1e-05
    %v116 = vadd.f32 %v108, 1e-05
    %v117 = vadd.f32 %v109, 1e-05
    %v118 = vadd.f32 %v110, 1e-05
    %v119 = vrsqrt.pop %v111
    %v120 = vmul.f32 %v119, %v111
    %v121 = vmul.f32 %v120, %v119
    %v122 = vmul.f32 0.5, %v121
    %v123 = vsub.f32 1.5, %v122
    %v124 = vmul.f32 %v119, %v123
    %vm125 = vweird.f32 %v111
    %vm126 = vweird.f32 %v119
    %vm127 = vmor %vm125, %vm126
    %v128 = vsel %vm127, %v119, %v124
    %v129 = vrsqrt.pop %v112
    %v130 = vmul.f32 %v129, %v112
    %v131 = vmul.f32 %v130, %v129
    %v132 = vmul.f32 0.5, %v131
    %v133 = vsub.f32 1.5, %v132
    %v134 = vmul.f32 %v129, %v133
    %vm135 = vweird.f32 %v112
    %vm136 = vweird.f32 %v129
    %vm137 = vmor %vm135, %vm136
    %v138 = vsel %vm137, %v129, %v134
    %v139 = vrsqrt.pop %v113
    %v140 = vmul.f32 %v139, %v113
    %v141 = vmul.f32 %v140, %v139
    %v142 = vmul.f32 0.5, %v141
    %v143 = vsub.f32 1.5, %v142
    %v144 = vmul.f32 %v139, %v143
    %vm145 = vweird.f32 %v113
    %vm146 = vweird.f32 %v139
    %vm147 = vmor %vm145, %vm146
    %v148 = vsel %vm147, %v139, %v144
    %v149 = vrsqrt.pop %v114
    %v150 = vmul.f32 %v149, %v114
    %v151 = vmul.f32 %v150, %v149
    %v152 = vmul.f32 0.5, %v151
    %v153 = vsub.f32 1.5, %v152
    %v154 = vmul.f32 %v149, %v153
    %vm155 = vweird.f32 %v114
    %vm156 = vweird.f32 %v149
    %vm157 = vmor %vm155, %vm156
    %v158 = vsel %vm157, %v149, %v154
    %v159 = vrsqrt.pop %v115
    %v160 = vmul.f32 %v159, %v115
    %v161 = vmul.f32 %v160, %v159
    %v162 = vmul.f32 0.5, %v161
    %v163 = vsub.f32 1.5, %v162
    %v164 = vmul.f32 %v159, %v163
    %vm165 = vweird.f32 %v115
    %vm166 = vweird.f32 %v159
    %vm167 = vmor %vm165, %vm166
    %v168 = vsel %vm167, %v159, %v164
    %v169 = vrsqrt.pop %v116
    %v170 = vmul.f32 %v169, %v116
    %v171 = vmul.f32 %v170, %v169
    %v172 = vmul.f32 0.5, %v171
    %v173 = vsub.f32 1.5, %v172
    %v174 = vmul.f32 %v169, %v173
    %vm175 = vweird.f32 %v116
    %vm176 = vweird.f32 %v169
    %vm177 = vmor %vm175, %vm176
    %v178 = vsel %vm177, %v169, %v174
    %v179 = vrsqrt.pop %v117
    %v180 = vmul.f32 %v179, %v117
    %v181 = vmul.f32 %v180, %v179
    %v182 = vmul.f32 0.5, %v181
    %v183 = vsub.f32 1.5, %v182
    %v184 = vmul.f32 %v179, %v183
    %vm185 = vweird.f32 %v117
    %vm186 = vweird.f32 %v179
    %vm187 = vmor %vm185, %vm186
    %v188 = vsel %vm187, %v179, %v184
    %v189 = vrsqrt.pop %v118
    %v190 = vmul.f32 %v189, %v118
    %v191 = vmul.f32 %v190, %v189
    %v192 = vmul.f32 0.5, %v191
    %v193 = vsub.f32 1.5, %v192
    %v194 = vmul.f32 %v189, %v193
    %vm195 = vweird.f32 %v118
    %vm196 = vweird.f32 %v189
    %vm197 = vmor %vm195, %vm196
    %v198 = vsel %vm197, %v189, %v194
    %v199 = vmul.f32 %v71, %v128
    %v200 = vmul.f32 %v72, %v138
    %v201 = vmul.f32 %v73, %v148
    %v202 = vmul.f32 %v74, %v158
    %v203 = vmul.f32 %v75, %v168
    %v204 = vmul.f32 %v76, %v178
    %v205 = vmul.f32 %v77, %v188
    %v206 = vmul.f32 %v78, %v198
    %v207 = vld [vmem:[%s1] sm:$0x1]
    %v209 = vperm.slane %v207, 0
    %v211 = vmul.f32 %v199, %v209
    %v212 = vmul.f32 %v200, %v209
    %v213 = vmul.f32 %v201, %v209
    %v214 = vmul.f32 %v202, %v209
    %v215 = vmul.f32 %v203, %v209
    %v216 = vmul.f32 %v204, %v209
    %v217 = vmul.f32 %v205, %v209
    %v218 = vmul.f32 %v206, %v209
    %v219 = vld [vmem:[%s2] sm:$0x1]
    %v221 = vperm.slane %v219, 0
    %v223 = vadd.f32 %v211, %v221
    %v224 = vadd.f32 %v212, %v221
    %v225 = vadd.f32 %v213, %v221
    %v226 = vadd.f32 %v214, %v221
    %v227 = vadd.f32 %v215, %v221
    %v228 = vadd.f32 %v216, %v221
    %v229 = vadd.f32 %v217, %v221
    %v230 = vadd.f32 %v218, %v221
    %v231 = vpack.c.bf16 %v223, %v223
    %v232 = vpack.c.bf16 %v224, %v224
    %v233 = vpack.c.bf16 %v225, %v225
    %v234 = vpack.c.bf16 %v226, %v226
    %v235 = vpack.c.bf16 %v227, %v227
    %v236 = vpack.c.bf16 %v228, %v228
    %v237 = vpack.c.bf16 %v229, %v229
    %v238 = vpack.c.bf16 %v230, %v230
    %239 = vst [vmem:[#allocation2] sm:$0xf] %v231
    %240 = vst [vmem:[#allocation2 + $0x4] sm:$0xf] %v232
    %241 = vst [vmem:[#allocation2 + $0x8] sm:$0xf] %v233
    %242 = vst [vmem:[#allocation2 + $0xc] sm:$0xf] %v234
    %243 = vst [vmem:[#allocation2 + $0x10] sm:$0xf] %v235
    %244 = vst [vmem:[#allocation2 + $0x14] sm:$0xf] %v236
    %245 = vst [vmem:[#allocation2 + $0x18] sm:$0xf] %v237
    %246 = vst [vmem:[#allocation2 + $0x1c] sm:$0xf] %v238
  $region25: #{calibvit_v2_forward.41} parent=0 // pred_fallthru
    _
  %v247 = vld [vmem:[#allocation2] sm:$0xf]
  %v248 = vld [vmem:[#allocation2 + $0x4] sm:$0xf]
  %v249 = vld [vmem:[#allocation2 + $0x8] sm:$0xf]
  %v250 = vld [vmem:[#allocation2 + $0xc] sm:$0xf]
  %v251 = vld [vmem:[#allocation2 + $0x10] sm:$0xf]
  %v252 = vld [vmem:[#allocation2 + $0x14] sm:$0xf]
  %v253 = vld [vmem:[#allocation2 + $0x18] sm:$0xf]
  %v254 = vld [vmem:[#allocation2 + $0x1c] sm:$0xf]
  %v255 = vld [vmem:[%s3] sm:$0xf]
  %v256 = vld [vmem:[%s3 + $0x4] sm:$0xf]
  %v257 = vld [vmem:[%s3 + $0x8] sm:$0xf]
  %v258 = vld [vmem:[%s3 + $0xc] sm:$0xf]
  %v259 = vld [vmem:[%s3 + $0x10] sm:$0xf]
  %v260 = vld [vmem:[%s3 + $0x14] sm:$0xf]
  %v261 = vld [vmem:[%s3 + $0x18] sm:$0xf]
  %v262 = vld [vmem:[%s3 + $0x1c] sm:$0xf]
  %v263 = vld [vmem:[%s3 + $0x20] sm:$0xf]
  %v264 = vld [vmem:[%s3 + $0x24] sm:$0xf]
  %v265 = vld [vmem:[%s3 + $0x28] sm:$0xf]
  %v266 = vld [vmem:[%s3 + $0x2c] sm:$0xf]
  %v267 = vld [vmem:[%s3 + $0x30] sm:$0xf]
  %v268 = vld [vmem:[%s3 + $0x34] sm:$0xf]
  %v269 = vld [vmem:[%s3 + $0x38] sm:$0xf]
  %v270 = vld [vmem:[%s3 + $0x3c] sm:$0xf]
  %v271 = vld [vmem:[%s4] sm:$0x1]
  %v273 = vperm.slane %v271, 0
  %v283 = vunpack.c.l.b16 %v247
  %v284 = vunpack.c.l.b16 %v248
  %v285 = vunpack.c.l.b16 %v249
  %v286 = vunpack.c.l.b16 %v250
  %v287 = vunpack.c.l.b16 %v251
  %v288 = vunpack.c.l.b16 %v252
  %v289 = vunpack.c.l.b16 %v253
  %v290 = vunpack.c.l.b16 %v254
  %v291 = vpack.c.b16 %v284, %v283
  %v292 = vpack.c.b16 %v286, %v285
  %v293 = vpack.c.b16 %v288, %v287
  %v294 = vpack.c.b16 %v290, %v289
  %v315 = vunpack.c.l.b16 %v255
  %v316 = vunpack.c.l.b16 %v256
  %v317 = vunpack.c.l.b16 %v257
  %v318 = vunpack.c.l.b16 %v258
  %v319 = vunpack.c.l.b16 %v259
  %v320 = vunpack.c.l.b16 %v260
  %v321 = vunpack.c.l.b16 %v261
  %v322 = vunpack.c.l.b16 %v262
  %v323 = vunpack.c.l.b16 %v263
  %v324 = vunpack.c.l.b16 %v264
  %v325 = vunpack.c.l.b16 %v265
  %v326 = vunpack.c.l.b16 %v266
  %v327 = vunpack.c.l.b16 %v267
  %v328 = vunpack.c.l.b16 %v268
  %v329 = vunpack.c.l.b16 %v269
  %v330 = vunpack.c.l.b16 %v270
  %v331 = vpack.c.b16 %v316, %v315
  %v332 = vpack.c.b16 %v318, %v317
  %v333 = vpack.c.b16 %v320, %v319
  %v334 = vpack.c.b16 %v322, %v321
  %v335 = vpack.c.b16 %v324, %v323
  %v336 = vpack.c.b16 %v326, %v325
  %v337 = vpack.c.b16 %v328, %v327
  %v338 = vpack.c.b16 %v330, %v329
  %347 = vmatpush.bf16.msra.mxu0 %v338
  %348 = vmatpush.bf16.msra.mxu0 %v337
  %349 = vmatpush.bf16.msra.mxu0 %v336
  %350 = vmatpush.bf16.msra.mxu0 %v335
  %351 = vmatpush.bf16.msra.mxu0 %v334
  %352 = vmatpush.bf16.msra.mxu0 %v333
  %353 = vmatpush.bf16.msra.mxu0 %v332
  %354 = vmatpush.bf16.msra.mxu0 %v331
  %355 = vmatmul.bf16.gmra.mxu0 %v291
  %v356 = vpop.f32.mrf.mxu0
  %v357 = vadd.f32 %v273, %v356
  %v358 = vpop.f32.mrf.mxu0
  %v359 = vadd.f32 %v273, %v358
  %360 = vmatmul.bf16.gmra.mxu0 %v292
  %v361 = vpop.f32.mrf.mxu0
  %v362 = vadd.f32 %v273, %v361
  %v363 = vpop.f32.mrf.mxu0
  %v364 = vadd.f32 %v273, %v363
  %365 = vmatmul.bf16.gmra.mxu0 %v293
  %v366 = vpop.f32.mrf.mxu0
  %v367 = vadd.f32 %v273, %v366
  %v368 = vpop.f32.mrf.mxu0
  %v369 = vadd.f32 %v273, %v368
  %370 = vmatmul.bf16.gmra.mxu0 %v294
  %v371 = vpop.f32.mrf.mxu0
  %v372 = vadd.f32 %v273, %v371
  %v373 = vpop.f32.mrf.mxu0
  %v374 = vadd.f32 %v273, %v373
  %375 = vdwg.mxu0
  %v376 = vpack.c.bf16 %v357, %v357
  %v377 = vpack.c.bf16 %v359, %v359
  %v378 = vpack.c.bf16 %v362, %v362
  %v379 = vpack.c.bf16 %v364, %v364
  %v380 = vpack.c.bf16 %v367, %v367
  %v381 = vpack.c.bf16 %v369, %v369
  %v382 = vpack.c.bf16 %v372, %v372
  %v383 = vpack.c.bf16 %v374, %v374
  %384 = vst [vmem:[%s5] sm:$0xf] %v376
  %385 = vst [vmem:[%s5 + $0x4] sm:$0xf] %v377
  %386 = vst [vmem:[%s5 + $0x8] sm:$0xf] %v378
  %387 = vst [vmem:[%s5 + $0xc] sm:$0xf] %v379
  %388 = vst [vmem:[%s5 + $0x10] sm:$0xf] %v380
  %389 = vst [vmem:[%s5 + $0x14] sm:$0xf] %v381
  %390 = vst [vmem:[%s5 + $0x18] sm:$0xf] %v382
  %391 = vst [vmem:[%s5 + $0x1c] sm:$0xf] %v383
  // Predicated region
  $region26: #{calibvit_v2_forward.41} parent=0 // pred_check
    _
  $region27: #{calibvit_v2_forward.41} parent=0 // pred_check_branch
    %393 = sbr.rel (0) target = $region29
  $region28: #{calibvit_v2_forward.41} parent=0 // pred_region
    _
  $region29: #{calibvit_v2_forward.41} parent=0 // pred_fallthru
    _
  // Predicated region
  $region30: #{calibvit_v2_forward.41} parent=0 // pred_check
    _
  $region31: #{calibvit_v2_forward.41} parent=0 // pred_check_branch
    %395 = sbr.rel (0) target = $region33
  $region32: #{calibvit_v2_forward.41} parent=0 // pred_region
    _
  $region33: #{calibvit_v2_forward.41} parent=0 // pred_fallthru
    _

// kernel: calibvit_v2_forward.44
$region0: #{calibvit_v2_forward.44}
  #allocation0 [shape = 'u32[]', space=smem, size = 0x4, offset = 0x4, fixed_abs, tag = 'smem constant byte address 0x4 - core index']
  #allocation1 [shape = 'u32[72,128]{1,0:T(1,128)}', space=vmem, size = 0x9000, scoped, tag = 'internal scratch']
  #allocation2 [shape = 'f32[64,128]{1,0:T(8,128)}', space=vmem, size = 0x8000, scoped, tag = 'scratch operand']
  %s0 = inlined_call_operand.vmem [shape: bf16[64,128], index: 0, kind: input, shape index: {}]
  %s1 = inlined_call_operand.hbm [shape: bf16[128,128], index: 1, kind: input, shape index: {}]
  %s2 = inlined_call_operand.vmem [shape: f32[1,128], index: 2, kind: input, shape index: {}]
  %s3 = inlined_call_operand.vmem [shape: bf16[64,128], index: 3, kind: input, shape index: {}, may-alias: {3,4}]
  %s4 = inlined_call_operand.vmem [shape: bf16[64,128], index: 4, kind: output, shape index: {}, may-alias: {3,4}]
  %s5 = sld [smem:[#allocation0]]
  $region38: #{calibvit_v2_forward.44} parent=0
    _
  %s7 = ssub.s32 1, %s5
  %s8 = scalar_select 0, %s7, %s5
  $region1: #{calibvit_v2_forward.44} parent=0
    #allocation3 [shape = 'u8[32768]{0}', space=vmem, size = 0x8000, scoped, tag = 'input window, operand 1, single buffered']
    #allocation4 [shape = 's32[1]{0}', space=sflag, size = 0x4, scoped, tag = 'scoped memory for calibvit_v2_forward.44']
    %9 = vsyncpa [#allocation4], 0
    // Predicated region
    $region2: #{calibvit_v2_forward.44} parent=1 // pred_check
      _
    $region3: #{calibvit_v2_forward.44} parent=1 // pred_check_branch
      %11 = sbr.rel (0) target = $region5
    $region4: #{calibvit_v2_forward.44} parent=1 // pred_region
      _
    $region5: #{calibvit_v2_forward.44} parent=1 // pred_fallthru
      _
    // Predicated region
    $region6: #{calibvit_v2_forward.44} parent=1 // pred_check
      _
    $region7: #{calibvit_v2_forward.44} parent=1 // pred_check_branch
      %13 = sbr.rel (0) target = $region9
    $region8: #{calibvit_v2_forward.44} parent=1 // pred_region
      %15 = vsyncadd [#allocation4], 0
      %s16 = sshll.u32 %s1, 4
      %s17 = int_to_ptr.hbm [resolvable:$true] %s16
      %s18 = sshll.u32 [#allocation3], 4
      %s19 = int_to_ptr.vmem [resolvable:$true] %s18
      %24 = dma.hbm_to_vmem [thread:$0]  %s17, 1024, %s19, [#allocation4], 64, 64, 4
    $region9: #{calibvit_v2_forward.44} parent=1 // pred_fallthru
      _
    // Predicated region
    $region10: #{calibvit_v2_forward.44} parent=1 // pred_check
      _
    $region11: #{calibvit_v2_forward.44} parent=1 // pred_check_branch
      %26 = sbr.rel (0) target = $region13
    $region12: #{calibvit_v2_forward.44} parent=1 // pred_region
      _
    $region13: #{calibvit_v2_forward.44} parent=1 // pred_fallthru
      _
    // Predicated region
    $region14: #{calibvit_v2_forward.44} parent=1 // pred_check
      _
    $region15: #{calibvit_v2_forward.44} parent=1 // pred_check_branch
      %28 = sbr.rel (0) target = $region17
    $region16: #{calibvit_v2_forward.44} parent=1 // pred_region
      _
    $region17: #{calibvit_v2_forward.44} parent=1 // pred_fallthru
      _
    // Predicated region
    $region18: #{calibvit_v2_forward.44} parent=1 // pred_check
      _
    $region19: #{calibvit_v2_forward.44} parent=1 // pred_check_branch
      %30 = sbr.rel (0) target = $region21
    $region20: #{calibvit_v2_forward.44} parent=1 // pred_region
      %32 = dma.done [#allocation4], 1024
    $region21: #{calibvit_v2_forward.44} parent=1 // pred_fallthru
      _
    %p33 = scmp.eq.s32.totalorder 0, 0
    // Predicated region
    $region22: #{calibvit_v2_forward.44} parent=1 // pred_check
      %p34 = pneg %p33
    $region23: #{calibvit_v2_forward.44} parent=1 // pred_check_branch
      %36 = sbr.rel (%p34) target = $region25
    $region24: #{calibvit_v2_forward.44} parent=1 // pred_region
      %37 = vst [vmem:[#allocation2] sm:$0xff] 0.0
      %38 = vst [vmem:[#allocation2 + $0x8] sm:$0xff] 0.0
      %39 = vst [vmem:[#allocation2 + $0x10] sm:$0xff] 0.0
      %40 = vst [vmem:[#allocation2 + $0x18] sm:$0xff] 0.0
      %41 = vst [vmem:[#allocation2 + $0x20] sm:$0xff] 0.0
      %42 = vst [vmem:[#allocation2 + $0x28] sm:$0xff] 0.0
      %43 = vst [vmem:[#allocation2 + $0x30] sm:$0xff] 0.0
      %44 = vst [vmem:[#allocation2 + $0x38] sm:$0xff] 0.0
    $region25: #{calibvit_v2_forward.44} parent=1 // pred_fallthru
      _
    %v45 = vld [vmem:[#allocation2] sm:$0xff]
    %v46 = vld [vmem:[#allocation2 + $0x8] sm:$0xff]
    %v47 = vld [vmem:[#allocation2 + $0x10] sm:$0xff]
    %v48 = vld [vmem:[#allocation2 + $0x18] sm:$0xff]
    %v49 = vld [vmem:[#allocation2 + $0x20] sm:$0xff]
    %v50 = vld [vmem:[#allocation2 + $0x28] sm:$0xff]
    %v51 = vld [vmem:[#allocation2 + $0x30] sm:$0xff]
    %v52 = vld [vmem:[#allocation2 + $0x38] sm:$0xff]
    %v53 = vld [vmem:[%s0] sm:$0xf]
    %v54 = vld [vmem:[%s0 + $0x4] sm:$0xf]
    %v55 = vld [vmem:[%s0 + $0x8] sm:$0xf]
    %v56 = vld [vmem:[%s0 + $0xc] sm:$0xf]
    %v57 = vld [vmem:[%s0 + $0x10] sm:$0xf]
    %v58 = vld [vmem:[%s0 + $0x14] sm:$0xf]
    %v59 = vld [vmem:[%s0 + $0x18] sm:$0xf]
    %v60 = vld [vmem:[%s0 + $0x1c] sm:$0xf]
    %v61 = vld [vmem:[#allocation3] sm:$0xf]
    %v62 = vld [vmem:[#allocation3 + $0x4] sm:$0xf]
    %v63 = vld [vmem:[#allocation3 + $0x8] sm:$0xf]
    %v64 = vld [vmem:[#allocation3 + $0xc] sm:$0xf]
    %v65 = vld [vmem:[#allocation3 + $0x10] sm:$0xf]
    %v66 = vld [vmem:[#allocation3 + $0x14] sm:$0xf]
    %v67 = vld [vmem:[#allocation3 + $0x18] sm:$0xf]
    %v68 = vld [vmem:[#allocation3 + $0x1c] sm:$0xf]
    %v69 = vld [vmem:[#allocation3 + $0x20] sm:$0xf]
    %v70 = vld [vmem:[#allocation3 + $0x24] sm:$0xf]
    %v71 = vld [vmem:[#allocation3 + $0x28] sm:$0xf]
    %v72 = vld [vmem:[#allocation3 + $0x2c] sm:$0xf]
    %v73 = vld [vmem:[#allocation3 + $0x30] sm:$0xf]
    %v74 = vld [vmem:[#allocation3 + $0x34] sm:$0xf]
    %v75 = vld [vmem:[#allocation3 + $0x38] sm:$0xf]
    %v76 = vld [vmem:[#allocation3 + $0x3c] sm:$0xf]
    %v85 = vunpack.c.l.b16 %v53
    %v86 = vunpack.c.l.b16 %v54
    %v87 = vunpack.c.l.b16 %v55
    %v88 = vunpack.c.l.b16 %v56
    %v89 = vunpack.c.l.b16 %v57
    %v90 = vunpack.c.l.b16 %v58
    %v91 = vunpack.c.l.b16 %v59
    %v92 = vunpack.c.l.b16 %v60
    %v93 = vpack.c.b16 %v86, %v85
    %v94 = vpack.c.b16 %v88, %v87
    %v95 = vpack.c.b16 %v90, %v89
    %v96 = vpack.c.b16 %v92, %v91
    %v117 = vunpack.c.l.b16 %v61
    %v118 = vunpack.c.l.b16 %v62
    %v119 = vunpack.c.l.b16 %v63
    %v120 = vunpack.c.l.b16 %v64
    %v121 = vunpack.c.l.b16 %v65
    %v122 = vunpack.c.l.b16 %v66
    %v123 = vunpack.c.l.b16 %v67
    %v124 = vunpack.c.l.b16 %v68
    %v125 = vunpack.c.l.b16 %v69
    %v126 = vunpack.c.l.b16 %v70
    %v127 = vunpack.c.l.b16 %v71
    %v128 = vunpack.c.l.b16 %v72
    %v129 = vunpack.c.l.b16 %v73
    %v130 = vunpack.c.l.b16 %v74
    %v131 = vunpack.c.l.b16 %v75
    %v132 = vunpack.c.l.b16 %v76
    %v133 = vpack.c.b16 %v118, %v117
    %v134 = vpack.c.b16 %v120, %v119
    %v135 = vpack.c.b16 %v122, %v121
    %v136 = vpack.c.b16 %v124, %v123
    %v137 = vpack.c.b16 %v126, %v125
    %v138 = vpack.c.b16 %v128, %v127
    %v139 = vpack.c.b16 %v130, %v129
    %v140 = vpack.c.b16 %v132, %v131
    %149 = vmatpush.bf16.msra.mxu0 %v140
    %150 = vmatpush.bf16.msra.mxu0 %v139
    %151 = vmatpush.bf16.msra.mxu0 %v138
    %152 = vmatpush.bf16.msra.mxu0 %v137
    %153 = vmatpush.bf16.msra.mxu0 %v136
    %154 = vmatpush.bf16.msra.mxu0 %v135
    %155 = vmatpush.bf16.msra.mxu0 %v134
    %156 = vmatpush.bf16.msra.mxu0 %v133
    %157 = vmatmul.bf16.gmra.mxu0 %v93
    %v158 = vpop.f32.mrf.mxu0
    %v159 = vadd.f32 0.0, %v158
    %v160 = vpop.f32.mrf.mxu0
    %v161 = vadd.f32 0.0, %v160
    %162 = vmatmul.bf16.gmra.mxu0 %v94
    %v163 = vpop.f32.mrf.mxu0
    %v164 = vadd.f32 0.0, %v163
    %v165 = vpop.f32.mrf.mxu0
    %v166 = vadd.f32 0.0, %v165
    %167 = vmatmul.bf16.gmra.mxu0 %v95
    %v168 = vpop.f32.mrf.mxu0
    %v169 = vadd.f32 0.0, %v168
    %v170 = vpop.f32.mrf.mxu0
    %v171 = vadd.f32 0.0, %v170
    %172 = vmatmul.bf16.gmra.mxu0 %v96
    %v173 = vpop.f32.mrf.mxu0
    %v174 = vadd.f32 0.0, %v173
    %v175 = vpop.f32.mrf.mxu0
    %v176 = vadd.f32 0.0, %v175
    %177 = vdwg.mxu0
    %v178 = vadd.f32 %v45, %v159
    %v179 = vadd.f32 %v46, %v161
    %v180 = vadd.f32 %v47, %v164
    %v181 = vadd.f32 %v48, %v166
    %v182 = vadd.f32 %v49, %v169
    %v183 = vadd.f32 %v50, %v171
    %v184 = vadd.f32 %v51, %v174
    %v185 = vadd.f32 %v52, %v176
    %186 = vst [vmem:[#allocation2] sm:$0xff] %v178
    %187 = vst [vmem:[#allocation2 + $0x8] sm:$0xff] %v179
    %188 = vst [vmem:[#allocation2 + $0x10] sm:$0xff] %v180
    %189 = vst [vmem:[#allocation2 + $0x18] sm:$0xff] %v181
    %190 = vst [vmem:[#allocation2 + $0x20] sm:$0xff] %v182
    %191 = vst [vmem:[#allocation2 + $0x28] sm:$0xff] %v183
    %192 = vst [vmem:[#allocation2 + $0x30] sm:$0xff] %v184
    %193 = vst [vmem:[#allocation2 + $0x38] sm:$0xff] %v185
    // Predicated region
    $region26: #{calibvit_v2_forward.44} parent=1 // pred_check
      %p194 = pneg %p33
    $region27: #{calibvit_v2_forward.44} parent=1 // pred_check_branch
      %196 = sbr.rel (%p194) target = $region29
    $region28: #{calibvit_v2_forward.44} parent=1 // pred_region
      %v197 = vld [vmem:[#allocation2] sm:$0xff]
      %v198 = vld [vmem:[#allocation2 + $0x8] sm:$0xff]
      %v199 = vld [vmem:[#allocation2 + $0x10] sm:$0xff]
      %v200 = vld [vmem:[#allocation2 + $0x18] sm:$0xff]
      %v201 = vld [vmem:[#allocation2 + $0x20] sm:$0xff]
      %v202 = vld [vmem:[#allocation2 + $0x28] sm:$0xff]
      %v203 = vld [vmem:[#allocation2 + $0x30] sm:$0xff]
      %v204 = vld [vmem:[#allocation2 + $0x38] sm:$0xff]
      %v205 = vld [vmem:[%s2] sm:$0x1]
      %v207 = vperm.slane %v205, 0
      %v209 = vadd.f32 %v197, %v207
      %v210 = vadd.f32 %v198, %v207
      %v211 = vadd.f32 %v199, %v207
      %v212 = vadd.f32 %v200, %v207
      %v213 = vadd.f32 %v201, %v207
      %v214 = vadd.f32 %v202, %v207
      %v215 = vadd.f32 %v203, %v207
      %v216 = vadd.f32 %v204, %v207
      %v217 = vld [vmem:[%s3] sm:$0xf]
      %v218 = vld [vmem:[%s3 + $0x4] sm:$0xf]
      %v219 = vld [vmem:[%s3 + $0x8] sm:$0xf]
      %v220 = vld [vmem:[%s3 + $0xc] sm:$0xf]
      %v221 = vld [vmem:[%s3 + $0x10] sm:$0xf]
      %v222 = vld [vmem:[%s3 + $0x14] sm:$0xf]
      %v223 = vld [vmem:[%s3 + $0x18] sm:$0xf]
      %v224 = vld [vmem:[%s3 + $0x1c] sm:$0xf]
      %v225 = vunpack.c.l.bf16 %v217
      %v226 = vunpack.c.l.bf16 %v218
      %v227 = vunpack.c.l.bf16 %v219
      %v228 = vunpack.c.l.bf16 %v220
      %v229 = vunpack.c.l.bf16 %v221
      %v230 = vunpack.c.l.bf16 %v222
      %v231 = vunpack.c.l.bf16 %v223
      %v232 = vunpack.c.l.bf16 %v224
      %v233 = vadd.f32 %v209, %v225
      %v234 = vadd.f32 %v210, %v226
      %v235 = vadd.f32 %v211, %v227
      %v236 = vadd.f32 %v212, %v228
      %v237 = vadd.f32 %v213, %v229
      %v238 = vadd.f32 %v214, %v230
      %v239 = vadd.f32 %v215, %v231
      %v240 = vadd.f32 %v216, %v232
      %v241 = vpack.c.bf16 %v233, %v233
      %v242 = vpack.c.bf16 %v234, %v234
      %v243 = vpack.c.bf16 %v235, %v235
      %v244 = vpack.c.bf16 %v236, %v236
      %v245 = vpack.c.bf16 %v237, %v237
      %v246 = vpack.c.bf16 %v238, %v238
      %v247 = vpack.c.bf16 %v239, %v239
      %v248 = vpack.c.bf16 %v240, %v240
      %249 = vst [vmem:[%s4] sm:$0xf] %v241
      %250 = vst [vmem:[%s4 + $0x4] sm:$0xf] %v242
      %251 = vst [vmem:[%s4 + $0x8] sm:$0xf] %v243
      %252 = vst [vmem:[%s4 + $0xc] sm:$0xf] %v244
      %253 = vst [vmem:[%s4 + $0x10] sm:$0xf] %v245
      %254 = vst [vmem:[%s4 + $0x14] sm:$0xf] %v246
      %255 = vst [vmem:[%s4 + $0x18] sm:$0xf] %v247
      %256 = vst [vmem:[%s4 + $0x1c] sm:$0xf] %v248
    $region29: #{calibvit_v2_forward.44} parent=1 // pred_fallthru
      _
    // Predicated region
    $region30: #{calibvit_v2_forward.44} parent=1 // pred_check
      _
    $region31: #{calibvit_v2_forward.44} parent=1 // pred_check_branch
      %258 = sbr.rel (0) target = $region33
    $region32: #{calibvit_v2_forward.44} parent=1 // pred_region
      _
    $region33: #{calibvit_v2_forward.44} parent=1 // pred_fallthru
      _
    // Predicated region
    $region34: #{calibvit_v2_forward.44} parent=1 // pred_check
      _
    $region35: #{calibvit_v2_forward.44} parent=1 // pred_check_branch
      %260 = sbr.rel (0) target = $region37
    $region36: #{calibvit_v2_forward.44} parent=1 // pred_region
      _
    $region37: #{calibvit_v2_forward.44} parent=1 // pred_fallthru
      _
    %261 = vsyncpa [#allocation4], 1

// kernel: calibvit_v2_forward.45
$region0: #{calibvit_v2_forward.45}
  #allocation0 [shape = 'u32[]', space=smem, size = 0x4, offset = 0x4, fixed_abs, tag = 'smem constant byte address 0x4 - core index']
  #allocation1 [shape = 'u32[72,128]{1,0:T(1,128)}', space=vmem, size = 0x9000, scoped, tag = 'internal scratch']
  #allocation2 [shape = 'bf16[64,128]{1,0:T(8,128)(2,1)}', space=vmem, size = 0x4000, scoped, tag = 'scratch operand']
  %s0 = inlined_call_operand.vmem [shape: bf16[64,128], index: 0, kind: input, shape index: {}]
  %s1 = inlined_call_operand.vmem [shape: f32[1,128], index: 1, kind: input, shape index: {}]
  %s2 = inlined_call_operand.vmem [shape: f32[1,128], index: 2, kind: input, shape index: {}]
  %s3 = inlined_call_operand.hbm [shape: bf16[128,128], index: 3, kind: input, shape index: {}]
  %s4 = inlined_call_operand.vmem [shape: f32[1,128], index: 4, kind: input, shape index: {}]
  %s5 = inlined_call_operand.vmem [shape: bf16[64,128], index: 5, kind: output, shape index: {}]
  %s6 = sld [smem:[#allocation0]]
  $region38: #{calibvit_v2_forward.45} parent=0
    _
  %s8 = ssub.s32 1, %s6
  %s9 = scalar_select 0, %s8, %s6
  $region1: #{calibvit_v2_forward.45} parent=0
    #allocation3 [shape = 'u8[32768]{0}', space=vmem, size = 0x8000, scoped, tag = 'input window, operand 3, single buffered']
    #allocation4 [shape = 's32[1]{0}', space=sflag, size = 0x4, scoped, tag = 'scoped memory for calibvit_v2_forward.45']
    %10 = vsyncpa [#allocation4], 0
    // Predicated region
    $region2: #{calibvit_v2_forward.45} parent=1 // pred_check
      _
    $region3: #{calibvit_v2_forward.45} parent=1 // pred_check_branch
      %12 = sbr.rel (0) target = $region5
    $region4: #{calibvit_v2_forward.45} parent=1 // pred_region
      _
    $region5: #{calibvit_v2_forward.45} parent=1 // pred_fallthru
      _
    // Predicated region
    $region6: #{calibvit_v2_forward.45} parent=1 // pred_check
      _
    $region7: #{calibvit_v2_forward.45} parent=1 // pred_check_branch
      %14 = sbr.rel (0) target = $region9
    $region8: #{calibvit_v2_forward.45} parent=1 // pred_region
      _
    $region9: #{calibvit_v2_forward.45} parent=1 // pred_fallthru
      _
    // Predicated region
    $region10: #{calibvit_v2_forward.45} parent=1 // pred_check
      _
    $region11: #{calibvit_v2_forward.45} parent=1 // pred_check_branch
      %16 = sbr.rel (0) target = $region13
    $region12: #{calibvit_v2_forward.45} parent=1 // pred_region
      _
    $region13: #{calibvit_v2_forward.45} parent=1 // pred_fallthru
      _
    // Predicated region
    $region14: #{calibvit_v2_forward.45} parent=1 // pred_check
      _
    $region15: #{calibvit_v2_forward.45} parent=1 // pred_check_branch
      %18 = sbr.rel (0) target = $region17
    $region16: #{calibvit_v2_forward.45} parent=1 // pred_region
      %20 = vsyncadd [#allocation4], 0
      %s21 = sshll.u32 %s3, 4
      %s22 = int_to_ptr.hbm [resolvable:$true] %s21
      %s23 = sshll.u32 [#allocation3], 4
      %s24 = int_to_ptr.vmem [resolvable:$true] %s23
      %29 = dma.hbm_to_vmem [thread:$0]  %s22, 1024, %s24, [#allocation4], 64, 64, 4
    $region17: #{calibvit_v2_forward.45} parent=1 // pred_fallthru
      _
    // Predicated region
    $region18: #{calibvit_v2_forward.45} parent=1 // pred_check
      _
    $region19: #{calibvit_v2_forward.45} parent=1 // pred_check_branch
      %31 = sbr.rel (0) target = $region21
    $region20: #{calibvit_v2_forward.45} parent=1 // pred_region
      _
    $region21: #{calibvit_v2_forward.45} parent=1 // pred_fallthru
      _
    // Predicated region
    $region22: #{calibvit_v2_forward.45} parent=1 // pred_check
      _
    $region23: #{calibvit_v2_forward.45} parent=1 // pred_check_branch
      %33 = sbr.rel (0) target = $region25
    $region24: #{calibvit_v2_forward.45} parent=1 // pred_region
      %35 = dma.done [#allocation4], 1024
    $region25: #{calibvit_v2_forward.45} parent=1 // pred_fallthru
      _
    %p36 = scmp.eq.s32.totalorder 0, 0
    // Predicated region
    $region26: #{calibvit_v2_forward.45} parent=1 // pred_check
      %p37 = pneg %p36
    $region27: #{calibvit_v2_forward.45} parent=1 // pred_check_branch
      %39 = sbr.rel (%p37) target = $region29
    $region28: #{calibvit_v2_forward.45} parent=1 // pred_region
      %v40 = vld [vmem:[%s0] sm:$0xf]
      %v41 = vld [vmem:[%s0 + $0x4] sm:$0xf]
      %v42 = vld [vmem:[%s0 + $0x8] sm:$0xf]
      %v43 = vld [vmem:[%s0 + $0xc] sm:$0xf]
      %v44 = vld [vmem:[%s0 + $0x10] sm:$0xf]
      %v45 = vld [vmem:[%s0 + $0x14] sm:$0xf]
      %v46 = vld [vmem:[%s0 + $0x18] sm:$0xf]
      %v47 = vld [vmem:[%s0 + $0x1c] sm:$0xf]
      %v48 = vunpack.c.l.bf16 %v40
      %v49 = vunpack.c.l.bf16 %v41
      %v50 = vunpack.c.l.bf16 %v42
      %v51 = vunpack.c.l.bf16 %v43
      %v52 = vunpack.c.l.bf16 %v44
      %v53 = vunpack.c.l.bf16 %v45
      %v54 = vunpack.c.l.bf16 %v46
      %v55 = vunpack.c.l.bf16 %v47
      %56 = vadd.xlane.f32.xlu0 %v48
      %v57 = vpop.xlane.xlu0 %56
      %58 = vadd.xlane.f32.xlu0 %v49
      %v59 = vpop.xlane.xlu0 %58
      %60 = vadd.xlane.f32.xlu0 %v50
      %v61 = vpop.xlane.xlu0 %60
      %62 = vadd.xlane.f32.xlu0 %v51
      %v63 = vpop.xlane.xlu0 %62
      %64 = vadd.xlane.f32.xlu0 %v52
      %v65 = vpop.xlane.xlu0 %64
      %66 = vadd.xlane.f32.xlu0 %v53
      %v67 = vpop.xlane.xlu0 %66
      %68 = vadd.xlane.f32.xlu0 %v54
      %v69 = vpop.xlane.xlu0 %68
      %70 = vadd.xlane.f32.xlu0 %v55
      %v71 = vpop.xlane.xlu0 %70
      %v72 = vrcp.pop 128.0
      %v73 = vmul.f32 128.0, %v72
      %v74 = vsub.f32 1.0, %v73
      %v75 = vmul.f32 %v72, %v74
      %v76 = vadd.f32 %v72, %v75
      %vm77 = vweird.f32 %v72
      %v78 = vsel %vm77, %v72, %v76
      %v79 = vmul.f32 %v57, %v78
      %v80 = vmul.f32 %v59, %v78
      %v81 = vmul.f32 %v61, %v78
      %v82 = vmul.f32 %v63, %v78
      %v83 = vmul.f32 %v65, %v78
      %v84 = vmul.f32 %v67, %v78
      %v85 = vmul.f32 %v69, %v78
      %v86 = vmul.f32 %v71, %v78
      %v87 = vsub.f32 %v48, %v79
      %v88 = vsub.f32 %v49, %v80
      %v89 = vsub.f32 %v50, %v81
      %v90 = vsub.f32 %v51, %v82
      %v91 = vsub.f32 %v52, %v83
      %v92 = vsub.f32 %v53, %v84
      %v93 = vsub.f32 %v54, %v85
      %v94 = vsub.f32 %v55, %v86
      %v95 = vmul.f32 %v87, %v87
      %v96 = vmul.f32 %v88, %v88
      %v97 = vmul.f32 %v89, %v89
      %v98 = vmul.f32 %v90, %v90
      %v99 = vmul.f32 %v91, %v91
      %v100 = vmul.f32 %v92, %v92
      %v101 = vmul.f32 %v93, %v93
      %v102 = vmul.f32 %v94, %v94
      %103 = vadd.xlane.f32.xlu0 %v95
      %v104 = vpop.xlane.xlu0 %103
      %105 = vadd.xlane.f32.xlu0 %v96
      %v106 = vpop.xlane.xlu0 %105
      %107 = vadd.xlane.f32.xlu0 %v97
      %v108 = vpop.xlane.xlu0 %107
      %109 = vadd.xlane.f32.xlu0 %v98
      %v110 = vpop.xlane.xlu0 %109
      %111 = vadd.xlane.f32.xlu0 %v99
      %v112 = vpop.xlane.xlu0 %111
      %113 = vadd.xlane.f32.xlu0 %v100
      %v114 = vpop.xlane.xlu0 %113
      %115 = vadd.xlane.f32.xlu0 %v101
      %v116 = vpop.xlane.xlu0 %115
      %117 = vadd.xlane.f32.xlu0 %v102
      %v118 = vpop.xlane.xlu0 %117
      %v119 = vmul.f32 %v104, %v78
      %v120 = vmul.f32 %v106, %v78
      %v121 = vmul.f32 %v108, %v78
      %v122 = vmul.f32 %v110, %v78
      %v123 = vmul.f32 %v112, %v78
      %v124 = vmul.f32 %v114, %v78
      %v125 = vmul.f32 %v116, %v78
      %v126 = vmul.f32 %v118, %v78
      %v127 = vadd.f32 %v119, 1e-05
      %v128 = vadd.f32 %v120, 1e-05
      %v129 = vadd.f32 %v121, 1e-05
      %v130 = vadd.f32 %v122, 1e-05
      %v131 = vadd.f32 %v123, 1e-05
      %v132 = vadd.f32 %v124, 1e-05
      %v133 = vadd.f32 %v125, 1e-05
      %v134 = vadd.f32 %v126, 1e-05
      %v135 = vrsqrt.pop %v127
      %v136 = vmul.f32 %v135, %v127
      %v137 = vmul.f32 %v136, %v135
      %v138 = vmul.f32 0.5, %v137
      %v139 = vsub.f32 1.5, %v138
      %v140 = vmul.f32 %v135, %v139
      %vm141 = vweird.f32 %v127
      %vm142 = vweird.f32 %v135
      %vm143 = vmor %vm141, %vm142
      %v144 = vsel %vm143, %v135, %v140
      %v145 = vrsqrt.pop %v128
      %v146 = vmul.f32 %v145, %v128
      %v147 = vmul.f32 %v146, %v145
      %v148 = vmul.f32 0.5, %v147
      %v149 = vsub.f32 1.5, %v148
      %v150 = vmul.f32 %v145, %v149
      %vm151 = vweird.f32 %v128
      %vm152 = vweird.f32 %v145
      %vm153 = vmor %vm151, %vm152
      %v154 = vsel %vm153, %v145, %v150
      %v155 = vrsqrt.pop %v129
      %v156 = vmul.f32 %v155, %v129
      %v157 = vmul.f32 %v156, %v155
      %v158 = vmul.f32 0.5, %v157
      %v159 = vsub.f32 1.5, %v158
      %v160 = vmul.f32 %v155, %v159
      %vm161 = vweird.f32 %v129
      %vm162 = vweird.f32 %v155
      %vm163 = vmor %vm161, %vm162
      %v164 = vsel %vm163, %v155, %v160
      %v165 = vrsqrt.pop %v130
      %v166 = vmul.f32 %v165, %v130
      %v167 = vmul.f32 %v166, %v165
      %v168 = vmul.f32 0.5, %v167
      %v169 = vsub.f32 1.5, %v168
      %v170 = vmul.f32 %v165, %v169
      %vm171 = vweird.f32 %v130
      %vm172 = vweird.f32 %v165
      %vm173 = vmor %vm171, %vm172
      %v174 = vsel %vm173, %v165, %v170
      %v175 = vrsqrt.pop %v131
      %v176 = vmul.f32 %v175, %v131
      %v177 = vmul.f32 %v176, %v175
      %v178 = vmul.f32 0.5, %v177
      %v179 = vsub.f32 1.5, %v178
      %v180 = vmul.f32 %v175, %v179
      %vm181 = vweird.f32 %v131
      %vm182 = vweird.f32 %v175
      %vm183 = vmor %vm181, %vm182
      %v184 = vsel %vm183, %v175, %v180
      %v185 = vrsqrt.pop %v132
      %v186 = vmul.f32 %v185, %v132
      %v187 = vmul.f32 %v186, %v185
      %v188 = vmul.f32 0.5, %v187
      %v189 = vsub.f32 1.5, %v188
      %v190 = vmul.f32 %v185, %v189
      %vm191 = vweird.f32 %v132
      %vm192 = vweird.f32 %v185
      %vm193 = vmor %vm191, %vm192
      %v194 = vsel %vm193, %v185, %v190
      %v195 = vrsqrt.pop %v133
      %v196 = vmul.f32 %v195, %v133
      %v197 = vmul.f32 %v196, %v195
      %v198 = vmul.f32 0.5, %v197
      %v199 = vsub.f32 1.5, %v198
      %v200 = vmul.f32 %v195, %v199
      %vm201 = vweird.f32 %v133
      %vm202 = vweird.f32 %v195
      %vm203 = vmor %vm201, %vm202
      %v204 = vsel %vm203, %v195, %v200
      %v205 = vrsqrt.pop %v134
      %v206 = vmul.f32 %v205, %v134
      %v207 = vmul.f32 %v206, %v205
      %v208 = vmul.f32 0.5, %v207
      %v209 = vsub.f32 1.5, %v208
      %v210 = vmul.f32 %v205, %v209
      %vm211 = vweird.f32 %v134
      %vm212 = vweird.f32 %v205
      %vm213 = vmor %vm211, %vm212
      %v214 = vsel %vm213, %v205, %v210
      %v215 = vmul.f32 %v87, %v144
      %v216 = vmul.f32 %v88, %v154
      %v217 = vmul.f32 %v89, %v164
      %v218 = vmul.f32 %v90, %v174
      %v219 = vmul.f32 %v91, %v184
      %v220 = vmul.f32 %v92, %v194
      %v221 = vmul.f32 %v93, %v204
      %v222 = vmul.f32 %v94, %v214
      %v223 = vld [vmem:[%s1] sm:$0x1]
      %v225 = vperm.slane %v223, 0
      %v227 = vmul.f32 %v215, %v225
      %v228 = vmul.f32 %v216, %v225
      %v229 = vmul.f32 %v217, %v225
      %v230 = vmul.f32 %v218, %v225
      %v231 = vmul.f32 %v219, %v225
      %v232 = vmul.f32 %v220, %v225
      %v233 = vmul.f32 %v221, %v225
      %v234 = vmul.f32 %v222, %v225
      %v235 = vld [vmem:[%s2] sm:$0x1]
      %v237 = vperm.slane %v235, 0
      %v239 = vadd.f32 %v227, %v237
      %v240 = vadd.f32 %v228, %v237
      %v241 = vadd.f32 %v229, %v237
      %v242 = vadd.f32 %v230, %v237
      %v243 = vadd.f32 %v231, %v237
      %v244 = vadd.f32 %v232, %v237
      %v245 = vadd.f32 %v233, %v237
      %v246 = vadd.f32 %v234, %v237
      %v247 = vpack.c.bf16 %v239, %v239
      %v248 = vpack.c.bf16 %v240, %v240
      %v249 = vpack.c.bf16 %v241, %v241
      %v250 = vpack.c.bf16 %v242, %v242
      %v251 = vpack.c.bf16 %v243, %v243
      %v252 = vpack.c.bf16 %v244, %v244
      %v253 = vpack.c.bf16 %v245, %v245
      %v254 = vpack.c.bf16 %v246, %v246
      %255 = vst [vmem:[#allocation2] sm:$0xf] %v247
      %256 = vst [vmem:[#allocation2 + $0x4] sm:$0xf] %v248
      %257 = vst [vmem:[#allocation2 + $0x8] sm:$0xf] %v249
      %258 = vst [vmem:[#allocation2 + $0xc] sm:$0xf] %v250
      %259 = vst [vmem:[#allocation2 + $0x10] sm:$0xf] %v251
      %260 = vst [vmem:[#allocation2 + $0x14] sm:$0xf] %v252
      %261 = vst [vmem:[#allocation2 + $0x18] sm:$0xf] %v253
      %262 = vst [vmem:[#allocation2 + $0x1c] sm:$0xf] %v254
    $region29: #{calibvit_v2_forward.45} parent=1 // pred_fallthru
      _
    %v263 = vld [vmem:[#allocation2] sm:$0xf]
    %v264 = vld [vmem:[#allocation2 + $0x4] sm:$0xf]
    %v265 = vld [vmem:[#allocation2 + $0x8] sm:$0xf]
    %v266 = vld [vmem:[#allocation2 + $0xc] sm:$0xf]
    %v267 = vld [vmem:[#allocation2 + $0x10] sm:$0xf]
    %v268 = vld [vmem:[#allocation2 + $0x14] sm:$0xf]
    %v269 = vld [vmem:[#allocation2 + $0x18] sm:$0xf]
    %v270 = vld [vmem:[#allocation2 + $0x1c] sm:$0xf]
    %v271 = vld [vmem:[#allocation3] sm:$0xf]
    %v272 = vld [vmem:[#allocation3 + $0x4] sm:$0xf]
    %v273 = vld [vmem:[#allocation3 + $0x8] sm:$0xf]
    %v274 = vld [vmem:[#allocation3 + $0xc] sm:$0xf]
    %v275 = vld [vmem:[#allocation3 + $0x10] sm:$0xf]
    %v276 = vld [vmem:[#allocation3 + $0x14] sm:$0xf]
    %v277 = vld [vmem:[#allocation3 + $0x18] sm:$0xf]
    %v278 = vld [vmem:[#allocation3 + $0x1c] sm:$0xf]
    %v279 = vld [vmem:[#allocation3 + $0x20] sm:$0xf]
    %v280 = vld [vmem:[#allocation3 + $0x24] sm:$0xf]
    %v281 = vld [vmem:[#allocation3 + $0x28] sm:$0xf]
    %v282 = vld [vmem:[#allocation3 + $0x2c] sm:$0xf]
    %v283 = vld [vmem:[#allocation3 + $0x30] sm:$0xf]
    %v284 = vld [vmem:[#allocation3 + $0x34] sm:$0xf]
    %v285 = vld [vmem:[#allocation3 + $0x38] sm:$0xf]
    %v286 = vld [vmem:[#allocation3 + $0x3c] sm:$0xf]
    %v287 = vld [vmem:[%s4] sm:$0x1]
    %v289 = vperm.slane %v287, 0
    %v299 = vunpack.c.l.b16 %v263
    %v300 = vunpack.c.l.b16 %v264
    %v301 = vunpack.c.l.b16 %v265
    %v302 = vunpack.c.l.b16 %v266
    %v303 = vunpack.c.l.b16 %v267
    %v304 = vunpack.c.l.b16 %v268
    %v305 = vunpack.c.l.b16 %v269
    %v306 = vunpack.c.l.b16 %v270
    %v307 = vpack.c.b16 %v300, %v299
    %v308 = vpack.c.b16 %v302, %v301
    %v309 = vpack.c.b16 %v304, %v303
    %v310 = vpack.c.b16 %v306, %v305
    %v331 = vunpack.c.l.b16 %v271
    %v332 = vunpack.c.l.b16 %v272
    %v333 = vunpack.c.l.b16 %v273
    %v334 = vunpack.c.l.b16 %v274
    %v335 = vunpack.c.l.b16 %v275
    %v336 = vunpack.c.l.b16 %v276
    %v337 = vunpack.c.l.b16 %v277
    %v338 = vunpack.c.l.b16 %v278
    %v339 = vunpack.c.l.b16 %v279
    %v340 = vunpack.c.l.b16 %v280
    %v341 = vunpack.c.l.b16 %v281
    %v342 = vunpack.c.l.b16 %v282
    %v343 = vunpack.c.l.b16 %v283
    %v344 = vunpack.c.l.b16 %v284
    %v345 = vunpack.c.l.b16 %v285
    %v346 = vunpack.c.l.b16 %v286
    %v347 = vpack.c.b16 %v332, %v331
    %v348 = vpack.c.b16 %v334, %v333
    %v349 = vpack.c.b16 %v336, %v335
    %v350 = vpack.c.b16 %v338, %v337
    %v351 = vpack.c.b16 %v340, %v339
    %v352 = vpack.c.b16 %v342, %v341
    %v353 = vpack.c.b16 %v344, %v343
    %v354 = vpack.c.b16 %v346, %v345
    %363 = vmatpush.bf16.msra.mxu0 %v354
    %364 = vmatpush.bf16.msra.mxu0 %v353
    %365 = vmatpush.bf16.msra.mxu0 %v352
    %366 = vmatpush.bf16.msra.mxu0 %v351
    %367 = vmatpush.bf16.msra.mxu0 %v350
    %368 = vmatpush.bf16.msra.mxu0 %v349
    %369 = vmatpush.bf16.msra.mxu0 %v348
    %370 = vmatpush.bf16.msra.mxu0 %v347
    %371 = vmatmul.bf16.gmra.mxu0 %v307
    %v372 = vpop.f32.mrf.mxu0
    %v373 = vadd.f32 %v289, %v372
    %v374 = vpop.f32.mrf.mxu0
    %v375 = vadd.f32 %v289, %v374
    %376 = vmatmul.bf16.gmra.mxu0 %v308
    %v377 = vpop.f32.mrf.mxu0
    %v378 = vadd.f32 %v289, %v377
    %v379 = vpop.f32.mrf.mxu0
    %v380 = vadd.f32 %v289, %v379
    %381 = vmatmul.bf16.gmra.mxu0 %v309
    %v382 = vpop.f32.mrf.mxu0
    %v383 = vadd.f32 %v289, %v382
    %v384 = vpop.f32.mrf.mxu0
    %v385 = vadd.f32 %v289, %v384
    %386 = vmatmul.bf16.gmra.mxu0 %v310
    %v387 = vpop.f32.mrf.mxu0
    %v388 = vadd.f32 %v289, %v387
    %v389 = vpop.f32.mrf.mxu0
    %v390 = vadd.f32 %v289, %v389
    %391 = vdwg.mxu0
    %v392 = vmul.f32 %v373, %v373
    %v393 = vmul.f32 %v375, %v375
    %v394 = vmul.f32 %v378, %v378
    %v395 = vmul.f32 %v380, %v380
    %v396 = vmul.f32 %v383, %v383
    %v397 = vmul.f32 %v385, %v385
    %v398 = vmul.f32 %v388, %v388
    %v399 = vmul.f32 %v390, %v390
    %v400 = vmul.f32 %v373, %v392
    %v401 = vmul.f32 %v375, %v393
    %v402 = vmul.f32 %v378, %v394
    %v403 = vmul.f32 %v380, %v395
    %v404 = vmul.f32 %v383, %v396
    %v405 = vmul.f32 %v385, %v397
    %v406 = vmul.f32 %v388, %v398
    %v407 = vmul.f32 %v390, %v399
    %v408 = vmul.f32 %v400, 0.044715
    %v409 = vmul.f32 %v401, 0.044715
    %v410 = vmul.f32 %v402, 0.044715
    %v411 = vmul.f32 %v403, 0.044715
    %v412 = vmul.f32 %v404, 0.044715
    %v413 = vmul.f32 %v405, 0.044715
    %v414 = vmul.f32 %v406, 0.044715
    %v415 = vmul.f32 %v407, 0.044715
    %v416 = vadd.f32 %v373, %v408
    %v417 = vadd.f32 %v375, %v409
    %v418 = vadd.f32 %v378, %v410
    %v419 = vadd.f32 %v380, %v411
    %v420 = vadd.f32 %v383, %v412
    %v421 = vadd.f32 %v385, %v413
    %v422 = vadd.f32 %v388, %v414
    %v423 = vadd.f32 %v390, %v415
    %v424 = vmul.f32 %v416, 0.7978846
    %v425 = vmul.f32 %v417, 0.7978846
    %v426 = vmul.f32 %v418, 0.7978846
    %v427 = vmul.f32 %v419, 0.7978846
    %v428 = vmul.f32 %v420, 0.7978846
    %v429 = vmul.f32 %v421, 0.7978846
    %v430 = vmul.f32 %v422, 0.7978846
    %v431 = vmul.f32 %v423, 0.7978846
    %v432 = vtanh.pop %v424
    %v433 = vtanh.pop %v425
    %v434 = vtanh.pop %v426
    %v435 = vtanh.pop %v427
    %v436 = vtanh.pop %v428
    %v437 = vtanh.pop %v429
    %v438 = vtanh.pop %v430
    %v439 = vtanh.pop %v431
    %v440 = vadd.f32 %v432, 1.0
    %v441 = vadd.f32 %v433, 1.0
    %v442 = vadd.f32 %v434, 1.0
    %v443 = vadd.f32 %v435, 1.0
    %v444 = vadd.f32 %v436, 1.0
    %v445 = vadd.f32 %v437, 1.0
    %v446 = vadd.f32 %v438, 1.0
    %v447 = vadd.f32 %v439, 1.0
    %v448 = vmul.f32 %v440, 0.5
    %v449 = vmul.f32 %v441, 0.5
    %v450 = vmul.f32 %v442, 0.5
    %v451 = vmul.f32 %v443, 0.5
    %v452 = vmul.f32 %v444, 0.5
    %v453 = vmul.f32 %v445, 0.5
    %v454 = vmul.f32 %v446, 0.5
    %v455 = vmul.f32 %v447, 0.5
    %v456 = vmul.f32 %v373, %v448
    %v457 = vmul.f32 %v375, %v449
    %v458 = vmul.f32 %v378, %v450
    %v459 = vmul.f32 %v380, %v451
    %v460 = vmul.f32 %v383, %v452
    %v461 = vmul.f32 %v385, %v453
    %v462 = vmul.f32 %v388, %v454
    %v463 = vmul.f32 %v390, %v455
    %v464 = vpack.c.bf16 %v456, %v456
    %v465 = vpack.c.bf16 %v457, %v457
    %v466 = vpack.c.bf16 %v458, %v458
    %v467 = vpack.c.bf16 %v459, %v459
    %v468 = vpack.c.bf16 %v460, %v460
    %v469 = vpack.c.bf16 %v461, %v461
    %v470 = vpack.c.bf16 %v462, %v462
    %v471 = vpack.c.bf16 %v463, %v463
    %472 = vst [vmem:[%s5] sm:$0xf] %v464
    %473 = vst [vmem:[%s5 + $0x4] sm:$0xf] %v465
    %474 = vst [vmem:[%s5 + $0x8] sm:$0xf] %v466
    %475 = vst [vmem:[%s5 + $0xc] sm:$0xf] %v467
    %476 = vst [vmem:[%s5 + $0x10] sm:$0xf] %v468
    %477 = vst [vmem:[%s5 + $0x14] sm:$0xf] %v469
    %478 = vst [vmem:[%s5 + $0x18] sm:$0xf] %v470
    %479 = vst [vmem:[%s5 + $0x1c] sm:$0xf] %v471
    // Predicated region
    $region30: #{calibvit_v2_forward.45} parent=1 // pred_check
      _
    $region31: #{calibvit_v2_forward.45} parent=1 // pred_check_branch
      %481 = sbr.rel (0) target = $region33
    $region32: #{calibvit_v2_forward.45} parent=1 // pred_region
      _
    $region33: #{calibvit_v2_forward.45} parent=1 // pred_fallthru
      _
    // Predicated region
    $region34: #{calibvit_v2_forward.45} parent=1 // pred_check
      _
    $region35: #{calibvit_v2_forward.45} parent=1 // pred_check_branch
      %483 = sbr.rel (0) target = $region37
    $region36: #{calibvit_v2_forward.45} parent=1 // pred_region
      _
    $region37: #{calibvit_v2_forward.45} parent=1 // pred_fallthru
      _
    %484 = vsyncpa [#allocation4], 1

// kernel: calibvit_v2_forward.43
$region0: #{calibvit_v2_forward.43}
  #allocation0 [shape = 'u32[]', space=smem, size = 0x4, offset = 0x4, fixed_abs, tag = 'smem constant byte address 0x4 - core index']
  #allocation1 [shape = 'u32[72,128]{1,0:T(1,128)}', space=vmem, size = 0x9000, scoped, tag = 'internal scratch']
  #allocation2 [shape = 'f32[32,4]{1,0:T(8,128)}', space=vmem, size = 0x4000, scoped, tag = 'scratch operand']
  #allocation3 [shape = 'f32[32,4]{1,0:T(8,128)}', space=vmem, size = 0x4000, scoped, tag = 'scratch operand']
  #allocation4 [shape = 'f32[32,128]{1,0:T(8,128)}', space=vmem, size = 0x4000, scoped, tag = 'scratch operand']
  %s0 = inlined_call_operand.vmem [shape: bf16[2,32,128], index: 0, kind: input, shape index: {}]
  %s1 = inlined_call_operand.vmem [shape: bf16[2,32,256], index: 1, kind: input, shape index: {}, may-alias: {1,2}]
  %s2 = inlined_call_operand.vmem [shape: bf16[2,32,256], index: 2, kind: input, shape index: {}, may-alias: {1,2}]
  %s3 = inlined_call_operand.vmem [shape: bf16[2,32,128], index: 3, kind: output, shape index: {}]
  %s4 = sld [smem:[#allocation0]]
  $region147: #{calibvit_v2_forward.43} parent=0
    _
  %s6 = ssub.s32 1, %s4
  %s7 = scalar_select 0, %s6, %s4
  $region1: #{calibvit_v2_forward.43} parent=0
    #allocation5 [shape = 'u8[16384]{0}', space=vmem, size = 0x4000, scoped, tag = 'input window, operand 1']
    #allocation6 [shape = 'u8[16384]{0}', space=vmem, size = 0x4000, scoped, tag = 'input window, operand 2']
    loop: start=0, step=1, limit=4
    $region2: #{calibvit_v2_forward.43} parent=1 // loop_pre_header
      _
    $region3: #{calibvit_v2_forward.43} parent=1 // loop_header
      %s9 = sphi 0, %s13
      %p10 = scmp.ge.s32.totalorder %s9, 4
      %s16 = sphi 0, %s35
      %s17 = sphi 0, %s31
      %s18 = sphi 0, %s27
      %s19 = sphi 0, %s16
      %s20 = sphi 0, %s17
      %s21 = sphi 0, %s18
      %s22 = sphi 0, %s19
      %s23 = sphi 0, %s20
      %s24 = sphi 0, %s21
      %s40 = sphi 0, %s42
      %s43 = sphi 0, %s40
      %s44 = sphi 0, %s43
      %s60 = sphi 0, %s44
      %s68 = sphi 0, %s70
      %s71 = sphi 0, %s68
      %s72 = sphi 0, %s71
      %s88 = sphi 0, %s72
      %s96 = sphi 0, %s98
      %s99 = sphi 0, %s96
      %s100 = sphi 0, %s99
      %s116 = sphi 0, %s100
      %s124 = sphi 0, %s126
      %s127 = sphi 0, %s124
      %s128 = sphi 0, %s127
      %s144 = sphi 0, %s128
    $region4: #{calibvit_v2_forward.43} parent=1 // loop_header_branch
      %12 = sbr.rel (%p10) target = $region8
    $region5: #{calibvit_v2_forward.43} parent=1 // loop_body
      %s14 = ssub.s32 %s9, 1
      %s15 = ssub.s32 %s9, 2
      %s25 = sadd.s32 1, %s18
      %p26 = scmp.ge.s32.totalorder %s25, 1
      %s27 = scalar_select %p26, 0, %s25
      %s28 = sadd.s32 1, %s17
      %s29 = scalar_select %p26, %s28, %s17
      %p30 = scmp.ge.s32.totalorder %s29, 1
      %s31 = scalar_select %p30, 0, %s29
      %s32 = sadd.s32 1, %s16
      %s33 = scalar_select %p30, %s32, %s16
      %p34 = scmp.ge.s32.totalorder %s33, 2
      %s35 = scalar_select %p34, 0, %s33
      %s36 = ssub.s32 %s16, %s35
      %s37 = ssub.s32 %s17, %s31
      %s38 = sor.u32 %s36, %s37
      %p39 = scmp.eq.s32.totalorder %s38, 0
      %s41 = sadd.s32 %s40, 1
      %s42 = scalar_select %p39, %s40, %s41
      %p45 = pneg %p39
      %p46 = scmp.eq.s32.totalorder %s9, 1
      %p47 = por %p45, %p46
      %p48 = scmp.ne.s32.totalorder %s40, %s43
      %p49 = scmp.eq.s32.totalorder %s9, 0
      %p50 = por %p48, %p49
      %p51 = scmp.ne.s32.totalorder %s40, %s43
      %p52 = scmp.eq.s32.totalorder %s14, 1
      %p53 = por %p51, %p52
      %p54 = scmp.ne.s32.totalorder %s43, %s44
      %p55 = scmp.eq.s32.totalorder %s14, 0
      %p56 = por %p54, %p55
      %p57 = scmp.ne.s32.totalorder %s43, %s44
      %p58 = scmp.eq.s32.totalorder %s15, 1
      %p59 = por %p57, %p58
      %p61 = scmp.ne.s32.totalorder %s44, %s60
      %p62 = scmp.eq.s32.totalorder %s15, 0
      %p63 = por %p61, %p62
      %s64 = ssub.s32 %s16, %s35
      %s65 = ssub.s32 %s18, %s27
      %s66 = sor.u32 %s64, %s65
      %p67 = scmp.eq.s32.totalorder %s66, 0
      %s69 = sadd.s32 %s68, 1
      %s70 = scalar_select %p67, %s68, %s69
      %p73 = pneg %p67
      %p74 = scmp.eq.s32.totalorder %s9, 1
      %p75 = por %p73, %p74
      %p76 = scmp.ne.s32.totalorder %s68, %s71
      %p77 = scmp.eq.s32.totalorder %s9, 0
      %p78 = por %p76, %p77
      %p79 = scmp.ne.s32.totalorder %s68, %s71
      %p80 = scmp.eq.s32.totalorder %s14, 1
      %p81 = por %p79, %p80
      %p82 = scmp.ne.s32.totalorder %s71, %s72
      %p83 = scmp.eq.s32.totalorder %s14, 0
      %p84 = por %p82, %p83
      %p85 = scmp.ne.s32.totalorder %s71, %s72
      %p86 = scmp.eq.s32.totalorder %s15, 1
      %p87 = por %p85, %p86
      %p89 = scmp.ne.s32.totalorder %s72, %s88
      %p90 = scmp.eq.s32.totalorder %s15, 0
      %p91 = por %p89, %p90
      %s92 = ssub.s32 %s16, %s35
      %s93 = ssub.s32 %s18, %s27
      %s94 = sor.u32 %s92, %s93
      %p95 = scmp.eq.s32.totalorder %s94, 0
      %s97 = sadd.s32 %s96, 1
      %s98 = scalar_select %p95, %s96, %s97
      %p101 = pneg %p95
      %p102 = scmp.eq.s32.totalorder %s9, 1
      %p103 = por %p101, %p102
      %p104 = scmp.ne.s32.totalorder %s96, %s99
      %p105 = scmp.eq.s32.totalorder %s9, 0
      %p106 = por %p104, %p105
      %p107 = scmp.ne.s32.totalorder %s96, %s99
      %p108 = scmp.eq.s32.totalorder %s14, 1
      %p109 = por %p107, %p108
      %p110 = scmp.ne.s32.totalorder %s99, %s100
      %p111 = scmp.eq.s32.totalorder %s14, 0
      %p112 = por %p110, %p111
      %p113 = scmp.ne.s32.totalorder %s99, %s100
      %p114 = scmp.eq.s32.totalorder %s15, 1
      %p115 = por %p113, %p114
      %p117 = scmp.ne.s32.totalorder %s100, %s116
      %p118 = scmp.eq.s32.totalorder %s15, 0
      %p119 = por %p117, %p118
      %s120 = ssub.s32 %s16, %s35
      %s121 = ssub.s32 %s17, %s31
      %s122 = sor.u32 %s120, %s121
      %p123 = scmp.eq.s32.totalorder %s122, 0
      %s125 = sadd.s32 %s124, 1
      %s126 = scalar_select %p123, %s124, %s125
      %p129 = pneg %p123
      %p130 = scmp.eq.s32.totalorder %s9, 1
      %p131 = por %p129, %p130
      %p132 = scmp.ne.s32.totalorder %s124, %s127
      %p133 = scmp.eq.s32.totalorder %s9, 0
      %p134 = por %p132, %p133
      %p135 = scmp.ne.s32.totalorder %s124, %s127
      %p136 = scmp.eq.s32.totalorder %s14, 1
      %p137 = por %p135, %p136
      %p138 = scmp.ne.s32.totalorder %s127, %s128
      %p139 = scmp.eq.s32.totalorder %s14, 0
      %p140 = por %p138, %p139
      %p141 = scmp.ne.s32.totalorder %s127, %s128
      %p142 = scmp.eq.s32.totalorder %s15, 1
      %p143 = por %p141, %p142
      %p145 = scmp.ne.s32.totalorder %s128, %s144
      %p146 = scmp.eq.s32.totalorder %s15, 0
      %p147 = por %p145, %p146
      %p148 = scmp.le.s32.totalorder 1, %s9
      %p149 = scmp.lt.s32.totalorder %s9, 3
      %p150 = pnand %p148, %p149
      %p151 = pneg %p150
      // Predicated region
      $region9: #{calibvit_v2_forward.43} parent=5 // pred_check
        _
      $region10: #{calibvit_v2_forward.43} parent=5 // pred_check_branch
        %153 = sbr.rel (%p150) target = $region12
      $region11: #{calibvit_v2_forward.43} parent=5 // pred_region
        %s154 = ssub.s32 %s9, 1
      $region12: #{calibvit_v2_forward.43} parent=5 // pred_fallthru
        _
      %p155 = scmp.lt.s32.totalorder %s9, 2
      // Predicated region
      $region13: #{calibvit_v2_forward.43} parent=5 // pred_check
        %p156 = pneg %p155
      $region14: #{calibvit_v2_forward.43} parent=5 // pred_check_branch
        %158 = sbr.rel (%p156) target = $region16
      $region15: #{calibvit_v2_forward.43} parent=5 // pred_region
        // Predicated region
        $region17: #{calibvit_v2_forward.43} parent=15 // pred_check
          %p159 = pneg %p50
        $region18: #{calibvit_v2_forward.43} parent=15 // pred_check_branch
          %161 = sbr.rel (%p159) target = $region20
        $region19: #{calibvit_v2_forward.43} parent=15 // pred_region
          %s162 = smul.u32 4, %s17
          %p163 = scmp.lt.s32.totalorder %s16, 1
          %s164 = scalar_select %p163, %s16, 1
          %p165 = scmp.lt.s32.totalorder %s162, 3
          %s166 = scalar_select %p165, %s162, 3
          %s167 = smul.addr %s164, 4
          %s168 = sadd.s32 %s166, %s167
          %s169 = smul.addr %s168, 4
          %s170 = scalar_lea.vmem %s0, %s169
          %s171 = smul.u32 4, %s17
        $region20: #{calibvit_v2_forward.43} parent=15 // pred_fallthru
          _
        // Predicated region
        $region21: #{calibvit_v2_forward.43} parent=15 // pred_check
          %p172 = pneg %p78
        $region22: #{calibvit_v2_forward.43} parent=15 // pred_check_branch
          %174 = sbr.rel (%p172) target = $region24
        $region23: #{calibvit_v2_forward.43} parent=15 // pred_region
          %s175 = sand.u32 %s68, 1
          %s176 = sand.u32 %s68, 1
          %s177 = smul.addr %s176, 16
          %s178 = scalar_lea.vmem [#allocation5], %s177
          %s179 = smul.u32 4, %s18
          %s180 = smul.addr %s179, 2
          %s181 = smul.addr %s16, 8
          %s182 = sadd.s32 %s180, %s181
          %s183 = smul.addr %s182, 4
          %s184 = scalar_lea.vmem %s1, %s183
          // Predicated region
          $region25: #{calibvit_v2_forward.43} parent=23 // pred_check
            _
          $region26: #{calibvit_v2_forward.43} parent=23 // pred_check_branch
            %186 = sbr.rel (0) target = $region28
          $region27: #{calibvit_v2_forward.43} parent=23 // pred_region
            // Predicated region
            $region29: #{calibvit_v2_forward.43} parent=27 // pred_check
              _
            $region30: #{calibvit_v2_forward.43} parent=27 // pred_check_branch
              %188 = sbr.rel target = $region32
            $region31: #{calibvit_v2_forward.43} parent=27 // pred_region
              // Predicated region
              $region44: #{calibvit_v2_forward.43} parent=31 // pred_check
                _
              $region45: #{calibvit_v2_forward.43} parent=31 // pred_check_branch
                %210 = sbr.rel (0) target = $region47
              $region46: #{calibvit_v2_forward.43} parent=31 // pred_region
                loop: start=0, step=1, limit=1
                $region48: #{calibvit_v2_forward.43} parent=46 // loop_pre_header
                  _
                $region49: #{calibvit_v2_forward.43} parent=46 // loop_header
                  %s212 = sphi 0, %s216
                  %p213 = scmp.ge.s32.totalorder %s212, 1
                  %s217 = sphi %s184, %s184
                  %s218 = sphi %s178, %s178
                $region50: #{calibvit_v2_forward.43} parent=46 // loop_header_branch
                  %215 = sbr.rel (%p213) target = $region54
                $region51: #{calibvit_v2_forward.43} parent=46 // loop_body
                  _
                $region52: #{calibvit_v2_forward.43} parent=46 // loop_footer
                  %s216 = sadd.s32 1, %s212
                $region53: #{calibvit_v2_forward.43} parent=46 // loop_footer_branch
                  %211 = sbr.rel target = $region49
                $region54: #{calibvit_v2_forward.43} parent=46 // loop_exit
                  _
                %s220 = ssub.s32 16, 1
                loop: start=0, step=1, limit=1
                $region55: #{calibvit_v2_forward.43} parent=46 // loop_pre_header
                  _
                $region56: #{calibvit_v2_forward.43} parent=46 // loop_header
                  %s222 = sphi 0, %s226
                  %p223 = scmp.ge.s32.totalorder %s222, 1
                  %s227 = sphi %s184, %s184
                  %s228 = sphi %s178, %s178
                $region57: #{calibvit_v2_forward.43} parent=46 // loop_header_branch
                  %225 = sbr.rel (%p223) target = $region61
                $region58: #{calibvit_v2_forward.43} parent=46 // loop_body
                  %v229 = vld [vmem:[%s227] sm:%s220]
                  %230 = vst [vmem:[%s228] sm:%s220] %v229
                  %v231 = vld [vmem:[%s227 + $0x8] sm:%s220]
                  %232 = vst [vmem:[%s228 + $0x4] sm:%s220] %v231
                  %v233 = vld [vmem:[%s227 + $0x10] sm:%s220]
                  %234 = vst [vmem:[%s228 + $0x8] sm:%s220] %v233
                  %v235 = vld [vmem:[%s227 + $0x18] sm:%s220]
                  %236 = vst [vmem:[%s228 + $0xc] sm:%s220] %v235
                $region59: #{calibvit_v2_forward.43} parent=46 // loop_footer
                  %s226 = sadd.s32 1, %s222
                $region60: #{calibvit_v2_forward.43} parent=46 // loop_footer_branch
                  %221 = sbr.rel target = $region56
                $region61: #{calibvit_v2_forward.43} parent=46 // loop_exit
                  _
              $region47: #{calibvit_v2_forward.43} parent=31 // pred_fallthru
                _
            $region32: #{calibvit_v2_forward.43} parent=27 // pred_fallthru
              _
            // Predicated region
            $region33: #{calibvit_v2_forward.43} parent=27 // pred_check
              _
            $region34: #{calibvit_v2_forward.43} parent=27 // pred_check_branch
              %190 = sbr.rel (0) target = $region36
            $region35: #{calibvit_v2_forward.43} parent=27 // pred_region
              %s192 = ssub.s32 16, 1
              loop: start=0, step=1, limit=1
              $region37: #{calibvit_v2_forward.43} parent=35 // loop_pre_header
                _
              $region38: #{calibvit_v2_forward.43} parent=35 // loop_header
                %s194 = sphi 0, %s198
                %p195 = scmp.ge.s32.totalorder %s194, 1
                %s199 = sphi %s184, %s184
                %s200 = sphi %s178, %s178
              $region39: #{calibvit_v2_forward.43} parent=35 // loop_header_branch
                %197 = sbr.rel (%p195) target = $region43
              $region40: #{calibvit_v2_forward.43} parent=35 // loop_body
                %v201 = vld [vmem:[%s199] sm:%s192]
                %202 = vst [vmem:[%s200] sm:%s192] %v201
                %v203 = vld [vmem:[%s199 + $0x8] sm:%s192]
                %204 = vst [vmem:[%s200 + $0x4] sm:%s192] %v203
                %v205 = vld [vmem:[%s199 + $0x10] sm:%s192]
                %206 = vst [vmem:[%s200 + $0x8] sm:%s192] %v205
                %v207 = vld [vmem:[%s199 + $0x18] sm:%s192]
                %208 = vst [vmem:[%s200 + $0xc] sm:%s192] %v207
              $region41: #{calibvit_v2_forward.43} parent=35 // loop_footer
                %s198 = sadd.s32 1, %s194
              $region42: #{calibvit_v2_forward.43} parent=35 // loop_footer_branch
                %193 = sbr.rel target = $region38
              $region43: #{calibvit_v2_forward.43} parent=35 // loop_exit
                _
            $region36: #{calibvit_v2_forward.43} parent=27 // pred_fallthru
              _
          $region28: #{calibvit_v2_forward.43} parent=23 // pred_fallthru
            _
          %237 = vnop
        $region24: #{calibvit_v2_forward.43} parent=15 // pred_fallthru
          _
        // Predicated region
        $region62: #{calibvit_v2_forward.43} parent=15 // pred_check
          %p238 = pneg %p106
        $region63: #{calibvit_v2_forward.43} parent=15 // pred_check_branch
          %240 = sbr.rel (%p238) target = $region65
        $region64: #{calibvit_v2_forward.43} parent=15 // pred_region
          %s241 = sand.u32 %s96, 1
          %s242 = sand.u32 %s96, 1
          %s243 = smul.addr %s242, 16
          %s244 = scalar_lea.vmem [#allocation6], %s243
          %s245 = smul.u32 4, %s18
          %s246 = smul.addr %s245, 2
          %s247 = sadd.s32 1, %s246
          %s248 = smul.addr %s16, 8
          %s249 = sadd.s32 %s247, %s248
          %s250 = smul.addr %s249, 4
          %s251 = scalar_lea.vmem %s2, %s250
          // Predicated region
          $region66: #{calibvit_v2_forward.43} parent=64 // pred_check
            _
          $region67: #{calibvit_v2_forward.43} parent=64 // pred_check_branch
            %253 = sbr.rel (0) target = $region69
          $region68: #{calibvit_v2_forward.43} parent=64 // pred_region
            // Predicated region
            $region70: #{calibvit_v2_forward.43} parent=68 // pred_check
              _
            $region71: #{calibvit_v2_forward.43} parent=68 // pred_check_branch
              %255 = sbr.rel target = $region73
            $region72: #{calibvit_v2_forward.43} parent=68 // pred_region
              // Predicated region
              $region85: #{calibvit_v2_forward.43} parent=72 // pred_check
                _
              $region86: #{calibvit_v2_forward.43} parent=72 // pred_check_branch
                %277 = sbr.rel (0) target = $region88
              $region87: #{calibvit_v2_forward.43} parent=72 // pred_region
                loop: start=0, step=1, limit=1
                $region89: #{calibvit_v2_forward.43} parent=87 // loop_pre_header
                  _
                $region90: #{calibvit_v2_forward.43} parent=87 // loop_header
                  %s279 = sphi 0, %s283
                  %p280 = scmp.ge.s32.totalorder %s279, 1
                  %s284 = sphi %s251, %s251
                  %s285 = sphi %s244, %s244
                $region91: #{calibvit_v2_forward.43} parent=87 // loop_header_branch
                  %282 = sbr.rel (%p280) target = $region95
                $region92: #{calibvit_v2_forward.43} parent=87 // loop_body
                  _
                $region93: #{calibvit_v2_forward.43} parent=87 // loop_footer
                  %s283 = sadd.s32 1, %s279
                $region94: #{calibvit_v2_forward.43} parent=87 // loop_footer_branch
                  %278 = sbr.rel target = $region90
                $region95: #{calibvit_v2_forward.43} parent=87 // loop_exit
                  _
                %s287 = ssub.s32 16, 1
                loop: start=0, step=1, limit=1
                $region96: #{calibvit_v2_forward.43} parent=87 // loop_pre_header
                  _
                $region97: #{calibvit_v2_forward.43} parent=87 // loop_header
                  %s289 = sphi 0, %s293
                  %p290 = scmp.ge.s32.totalorder %s289, 1
                  %s294 = sphi %s251, %s251
                  %s295 = sphi %s244, %s244
                $region98: #{calibvit_v2_forward.43} parent=87 // loop_header_branch
                  %292 = sbr.rel (%p290) target = $region102
                $region99: #{calibvit_v2_forward.43} parent=87 // loop_body
                  %v296 = vld [vmem:[%s294] sm:%s287]
                  %297 = vst [vmem:[%s295] sm:%s287] %v296
                  %v298 = vld [vmem:[%s294 + $0x8] sm:%s287]
                  %299 = vst [vmem:[%s295 + $0x4] sm:%s287] %v298
                  %v300 = vld [vmem:[%s294 + $0x10] sm:%s287]
                  %301 = vst [vmem:[%s295 + $0x8] sm:%s287] %v300
                  %v302 = vld [vmem:[%s294 + $0x18] sm:%s287]
                  %303 = vst [vmem:[%s295 + $0xc] sm:%s287] %v302
                $region100: #{calibvit_v2_forward.43} parent=87 // loop_footer
                  %s293 = sadd.s32 1, %s289
                $region101: #{calibvit_v2_forward.43} parent=87 // loop_footer_branch
                  %288 = sbr.rel target = $region97
                $region102: #{calibvit_v2_forward.43} parent=87 // loop_exit
                  _
              $region88: #{calibvit_v2_forward.43} parent=72 // pred_fallthru
                _
            $region73: #{calibvit_v2_forward.43} parent=68 // pred_fallthru
              _
            // Predicated region
            $region74: #{calibvit_v2_forward.43} parent=68 // pred_check
              _
            $region75: #{calibvit_v2_forward.43} parent=68 // pred_check_branch
              %257 = sbr.rel (0) target = $region77
            $region76: #{calibvit_v2_forward.43} parent=68 // pred_region
              %s259 = ssub.s32 16, 1
              loop: start=0, step=1, limit=1
              $region78: #{calibvit_v2_forward.43} parent=76 // loop_pre_header
                _
              $region79: #{calibvit_v2_forward.43} parent=76 // loop_header
                %s261 = sphi 0, %s265
                %p262 = scmp.ge.s32.totalorder %s261, 1
                %s266 = sphi %s251, %s251
                %s267 = sphi %s244, %s244
              $region80: #{calibvit_v2_forward.43} parent=76 // loop_header_branch
                %264 = sbr.rel (%p262) target = $region84
              $region81: #{calibvit_v2_forward.43} parent=76 // loop_body
                %v268 = vld [vmem:[%s266] sm:%s259]
                %269 = vst [vmem:[%s267] sm:%s259] %v268
                %v270 = vld [vmem:[%s266 + $0x8] sm:%s259]
                %271 = vst [vmem:[%s267 + $0x4] sm:%s259] %v270
                %v272 = vld [vmem:[%s266 + $0x10] sm:%s259]
                %273 = vst [vmem:[%s267 + $0x8] sm:%s259] %v272
                %v274 = vld [vmem:[%s266 + $0x18] sm:%s259]
                %275 = vst [vmem:[%s267 + $0xc] sm:%s259] %v274
              $region82: #{calibvit_v2_forward.43} parent=76 // loop_footer
                %s265 = sadd.s32 1, %s261
              $region83: #{calibvit_v2_forward.43} parent=76 // loop_footer_branch
                %260 = sbr.rel target = $region79
              $region84: #{calibvit_v2_forward.43} parent=76 // loop_exit
                _
            $region77: #{calibvit_v2_forward.43} parent=68 // pred_fallthru
              _
          $region69: #{calibvit_v2_forward.43} parent=64 // pred_fallthru
            _
          %304 = vnop
        $region65: #{calibvit_v2_forward.43} parent=15 // pred_fallthru
          _
      $region16: #{calibvit_v2_forward.43} parent=5 // pred_fallthru
        _
      %p305 = scmp.le.s32.totalorder 1, %s9
      %p306 = scmp.lt.s32.totalorder %s9, 3
      %p307 = pnand %p305, %p306
      %p308 = pneg %p307
      // Predicated region
      $region103: #{calibvit_v2_forward.43} parent=5 // pred_check
        _
      $region104: #{calibvit_v2_forward.43} parent=5 // pred_check_branch
        %310 = sbr.rel (%p307) target = $region106
      $region105: #{calibvit_v2_forward.43} parent=5 // pred_region
        %s311 = ssub.s32 %s9, 1
        %s312 = sand.u32 %s71, 1
        %s313 = sand.u32 %s71, 1
        %s314 = smul.addr %s313, 16
        %s315 = scalar_lea.vmem [#allocation5], %s314
        // Predicated region
        $region107: #{calibvit_v2_forward.43} parent=105 // pred_check
          %p316 = pneg %p84
        $region108: #{calibvit_v2_forward.43} parent=105 // pred_check_branch
          %318 = sbr.rel (%p316) target = $region110
        $region109: #{calibvit_v2_forward.43} parent=105 // pred_region
          _
        $region110: #{calibvit_v2_forward.43} parent=105 // pred_fallthru
          _
        %s319 = sand.u32 %s99, 1
        %s320 = sand.u32 %s99, 1
        %s321 = smul.addr %s320, 16
        %s322 = scalar_lea.vmem [#allocation6], %s321
        // Predicated region
        $region111: #{calibvit_v2_forward.43} parent=105 // pred_check
          %p323 = pneg %p112
        $region112: #{calibvit_v2_forward.43} parent=105 // pred_check_branch
          %325 = sbr.rel (%p323) target = $region114
        $region113: #{calibvit_v2_forward.43} parent=105 // pred_region
          _
        $region114: #{calibvit_v2_forward.43} parent=105 // pred_fallthru
          _
        %s326 = smul.u32 4, %s20
        %p327 = scmp.lt.s32.totalorder %s19, 1
        %s328 = scalar_select %p327, %s19, 1
        %p329 = scmp.lt.s32.totalorder %s326, 3
        %s330 = scalar_select %p329, %s326, 3
        %s331 = smul.addr %s328, 4
        %s332 = sadd.s32 %s330, %s331
        %s333 = smul.addr %s332, 4
        %s334 = scalar_lea.vmem %s0, %s333
        %p335 = pneg %p56
        %p336 = pneg %p53
        %s337 = sand.u32 %s71, 1
        %s338 = sand.u32 %s71, 1
        %s339 = smul.addr %s338, 16
        %s340 = scalar_lea.vmem [#allocation5], %s339
        %p341 = pneg %p84
        %p342 = pneg %p81
        %s343 = sand.u32 %s99, 1
        %s344 = sand.u32 %s99, 1
        %s345 = smul.addr %s344, 16
        %s346 = scalar_lea.vmem [#allocation6], %s345
        %p347 = pneg %p112
        %p348 = pneg %p109
        %p349 = pneg %p140
        %p350 = pneg %p137
        %s351 = smul.u32 4, %s20
        %p352 = scmp.lt.s32.totalorder %s19, 1
        %s353 = scalar_select %p352, %s19, 1
        %p354 = scmp.lt.s32.totalorder %s351, 3
        %s355 = scalar_select %p354, %s351, 3
        %s356 = smul.addr %s353, 4
        %s357 = sadd.s32 %s355, %s356
        %s358 = smul.addr %s357, 4
        %s359 = scalar_lea.vmem %s3, %s358
        %s360 = smul.u32 4, %s20
        %p361 = scmp.lt.s32.totalorder %s19, 1
        %s362 = scalar_select %p361, %s19, 1
        %p363 = scmp.lt.s32.totalorder %s360, 3
        %s364 = scalar_select %p363, %s360, 3
        %s365 = smul.addr %s362, 4
        %s366 = sadd.s32 %s364, %s365
        %s367 = smul.addr %s366, 4
        %s368 = scalar_lea.vmem %s0, %s367
        %s369 = smul.u32 4, %s20
        %s370 = smul.u32 4, %s21
        %s371 = smul.u32 4, %s21
        %s372 = smul.u32 4, %s20
        %p373 = scmp.lt.s32.totalorder %s19, 1
        %s374 = scalar_select %p373, %s19, 1
        %p375 = scmp.lt.s32.totalorder %s372, 3
        %s376 = scalar_select %p375, %s372, 3
        %s377 = smul.addr %s374, 4
        %s378 = sadd.s32 %s376, %s377
        %s379 = smul.addr %s378, 4
        %s380 = scalar_lea.vmem %s3, %s379
        %s381 = smul.u32 4, %s20
        %p383 = scmp.eq.s32.totalorder %s21, 0
        // Predicated region
        $region115: #{calibvit_v2_forward.43} parent=105 // pred_check
          %p384 = pneg %p383
        $region116: #{calibvit_v2_forward.43} parent=105 // pred_check_branch
          %386 = sbr.rel (%p384) target = $region118
        $region117: #{calibvit_v2_forward.43} parent=105 // pred_region
          %vm387 = vcmask 31744
          %388 = vst.msk [vmem:[#allocation2] sm:$0xff] %vm387, -inf
          %389 = vst.msk [vmem:[#allocation2 + $0x8] sm:$0xff] %vm387, -inf
          %390 = vst.msk [vmem:[#allocation2 + $0x10] sm:$0xff] %vm387, -inf
          %391 = vst.msk [vmem:[#allocation2 + $0x18] sm:$0xff] %vm387, -inf
          %392 = vst.msk [vmem:[#allocation3] sm:$0xff] %vm387, 0.0
          %393 = vst.msk [vmem:[#allocation3 + $0x8] sm:$0xff] %vm387, 0.0
          %394 = vst.msk [vmem:[#allocation3 + $0x10] sm:$0xff] %vm387, 0.0
          %395 = vst.msk [vmem:[#allocation3 + $0x18] sm:$0xff] %vm387, 0.0
          %396 = vst [vmem:[#allocation4] sm:$0xff] 0.0
          %397 = vst [vmem:[#allocation4 + $0x8] sm:$0xff] 0.0
          %398 = vst [vmem:[#allocation4 + $0x10] sm:$0xff] 0.0
          %399 = vst [vmem:[#allocation4 + $0x18] sm:$0xff] 0.0
        $region118: #{calibvit_v2_forward.43} parent=105 // pred_fallthru
          _
        %v400 = vld [vmem:[%s368] sm:$0xf]
        %v401 = vld [vmem:[%s368 + $0x4] sm:$0xf]
        %v402 = vld [vmem:[%s368 + $0x8] sm:$0xf]
        %v403 = vld [vmem:[%s368 + $0xc] sm:$0xf]
        %v404 = vld [vmem:[%s315] sm:$0xf]
        %v405 = vld [vmem:[%s315 + $0x4] sm:$0xf]
        %v406 = vld [vmem:[%s315 + $0x8] sm:$0xf]
        %v407 = vld [vmem:[%s315 + $0xc] sm:$0xf]
        %v408 = vld [vmem:[%s322] sm:$0xf]
        %v409 = vld [vmem:[%s322 + $0x4] sm:$0xf]
        %v410 = vld [vmem:[%s322 + $0x8] sm:$0xf]
        %v411 = vld [vmem:[%s322 + $0xc] sm:$0xf]
        %v416 = vunpack.c.l.b16 %v400
        %v417 = vunpack.c.l.b16 %v401
        %v418 = vunpack.c.l.b16 %v402
        %v419 = vunpack.c.l.b16 %v403
        %v420 = vpack.c.b16 %v417, %v416
        %v421 = vpack.c.b16 %v419, %v418
        %v426 = vunpack.c.l.b16 %v404
        %v427 = vunpack.c.l.b16 %v405
        %v428 = vunpack.c.l.b16 %v406
        %v429 = vunpack.c.l.b16 %v407
        %v430 = vpack.c.b16 %v427, %v426
        %v431 = vpack.c.b16 %v429, %v428
        %vm432 = vcmask 261120
        %v434 = vsel %vm432, %v420, 0
        %v437 = vsel %vm432, %v421, 0
        %v440 = vsel %vm432, %v430, 0
        %v443 = vsel %vm432, %v431, 0
        %445 = vmatpush.bf16.xpose.msra.mxu0 0
        %446 = vmatpush.bf16.xpose.msra.mxu0 0
        %447 = vmatpush.bf16.xpose.msra.mxu0 0
        %448 = vmatpush.bf16.xpose.msra.mxu0 0
        %449 = vmatpush.bf16.xpose.msra.mxu0 0
        %450 = vmatpush.bf16.xpose.msra.mxu0 0
        %451 = vmatpush.bf16.xpose.msra.mxu0 %v443
        %452 = vmatpush.bf16.xpose.msra.mxu0 %v440
        %453 = vmatmul.bf16.gmra.mxu0 %v434
        %v454 = vpop.f32.mrf.mxu0
        %v455 = vadd.f32 0.0, %v454
        %v456 = vpop.f32.mrf.mxu0
        %v457 = vadd.f32 0.0, %v456
        %458 = vmatmul.bf16.gmra.mxu0 %v437
        %v459 = vpop.f32.mrf.mxu0
        %v460 = vadd.f32 0.0, %v459
        %v461 = vpop.f32.mrf.mxu0
        %v462 = vadd.f32 0.0, %v461
        %463 = vdwg.mxu0
        %v464 = vmul.f32 %v455, 0.17677669
        %v465 = vmul.f32 %v457, 0.17677669
        %v466 = vmul.f32 %v460, 0.17677669
        %v467 = vmul.f32 %v462, 0.17677669
        %v468 = vld [vmem:[#allocation2] sm:$0xff]
        %v469 = vld [vmem:[#allocation2 + $0x8] sm:$0xff]
        %v470 = vld [vmem:[#allocation2 + $0x10] sm:$0xff]
        %v471 = vld [vmem:[#allocation2 + $0x18] sm:$0xff]
        %v472 = vld [vmem:[#allocation3] sm:$0xff]
        %v473 = vld [vmem:[#allocation3 + $0x8] sm:$0xff]
        %v474 = vld [vmem:[#allocation3 + $0x10] sm:$0xff]
        %v475 = vld [vmem:[#allocation3 + $0x18] sm:$0xff]
        %v476 = vsel %vm432, %v464, -inf
        %477 = vmax.xlane.f32.xlu0 %v476
        %v478 = vpop.xlane.xlu0 %477
        %v479 = vsel %vm432, %v465, -inf
        %480 = vmax.xlane.f32.xlu0 %v479
        %v481 = vpop.xlane.xlu0 %480
        %v482 = vsel %vm432, %v466, -inf
        %483 = vmax.xlane.f32.xlu0 %v482
        %v484 = vpop.xlane.xlu0 %483
        %v485 = vsel %vm432, %v467, -inf
        %486 = vmax.xlane.f32.xlu0 %v485
        %v487 = vpop.xlane.xlu0 %486
        %v488 = vmax.f32 %v468, %v478
        %v489 = vmax.f32 %v469, %v481
        %v490 = vmax.f32 %v470, %v484
        %v491 = vmax.f32 %v471, %v487
        %v492 = vsub.f32 %v468, %v488
        %v493 = vsub.f32 %v469, %v489
        %v494 = vsub.f32 %v470, %v490
        %v495 = vsub.f32 %v471, %v491
        %v496 = vmul.f32 %v492, 1.442695
        %v497 = vpow.pop %v496
        %v498 = vmul.f32 %v493, 1.442695
        %v499 = vpow.pop %v498
        %v500 = vmul.f32 %v494, 1.442695
        %v501 = vpow.pop %v500
        %v502 = vmul.f32 %v495, 1.442695
        %v503 = vpow.pop %v502
        %505 = vset.pattern.permute.xlu0 0
        %506 = vperm.xlu0 %505, %v488
        %v507 = vpop.permute.xlu0 %506
        %510 = vset.pattern.permute.xlu0 0
        %511 = vperm.xlu0 %510, %v489
        %v512 = vpop.permute.xlu0 %511
        %515 = vset.pattern.permute.xlu0 0
        %516 = vperm.xlu0 %515, %v490
        %v517 = vpop.permute.xlu0 %516
        %520 = vset.pattern.permute.xlu0 0
        %521 = vperm.xlu0 %520, %v491
        %v522 = vpop.permute.xlu0 %521
        %v524 = vsub.f32 %v464, %v507
        %v525 = vsub.f32 %v465, %v512
        %v526 = vsub.f32 %v466, %v517
        %v527 = vsub.f32 %v467, %v522
        %v528 = vmul.f32 %v524, 1.442695
        %v529 = vpow.pop %v528
        %v530 = vmul.f32 %v525, 1.442695
        %v531 = vpow.pop %v530
        %v532 = vmul.f32 %v526, 1.442695
        %v533 = vpow.pop %v532
        %v534 = vmul.f32 %v527, 1.442695
        %v535 = vpow.pop %v534
        %v536 = vmul.f32 %v497, %v472
        %v537 = vmul.f32 %v499, %v473
        %v538 = vmul.f32 %v501, %v474
        %v539 = vmul.f32 %v503, %v475
        %v540 = vsel %vm432, %v529, 0.0
        %541 = vadd.xlane.f32.xlu0 %v540
        %v542 = vpop.xlane.xlu0 %541
        %v543 = vsel %vm432, %v531, 0.0
        %544 = vadd.xlane.f32.xlu0 %v543
        %v545 = vpop.xlane.xlu0 %544
        %v546 = vsel %vm432, %v533, 0.0
        %547 = vadd.xlane.f32.xlu0 %v546
        %v548 = vpop.xlane.xlu0 %547
        %v549 = vsel %vm432, %v535, 0.0
        %550 = vadd.xlane.f32.xlu0 %v549
        %v551 = vpop.xlane.xlu0 %550
        %v552 = vadd.f32 %v536, %v542
        %v553 = vadd.f32 %v537, %v545
        %v554 = vadd.f32 %v538, %v548
        %v555 = vadd.f32 %v539, %v551
        %v556 = vld [vmem:[#allocation4] sm:$0xff]
        %v557 = vld [vmem:[#allocation4 + $0x8] sm:$0xff]
        %v558 = vld [vmem:[#allocation4 + $0x10] sm:$0xff]
        %v559 = vld [vmem:[#allocation4 + $0x18] sm:$0xff]
        %561 = vset.pattern.permute.xlu0 0
        %562 = vperm.xlu0 %561, %v497
        %v563 = vpop.permute.xlu0 %562
        %566 = vset.pattern.permute.xlu0 0
        %567 = vperm.xlu0 %566, %v499
        %v568 = vpop.permute.xlu0 %567
        %571 = vset.pattern.permute.xlu0 0
        %572 = vperm.xlu0 %571, %v501
        %v573 = vpop.permute.xlu0 %572
        %576 = vset.pattern.permute.xlu0 0
        %577 = vperm.xlu0 %576, %v503
        %v578 = vpop.permute.xlu0 %577
        %v580 = vmul.f32 %v563, %v556
        %v581 = vmul.f32 %v568, %v557
        %v582 = vmul.f32 %v573, %v558
        %v583 = vmul.f32 %v578, %v559
        %v584 = vpack.c.bf16 %v531, %v529
        %v585 = vpack.c.bf16 %v535, %v533
        %v590 = vunpack.c.l.b16 %v408
        %v591 = vunpack.c.l.b16 %v409
        %v592 = vunpack.c.l.b16 %v410
        %v593 = vunpack.c.l.b16 %v411
        %v594 = vpack.c.b16 %v591, %v590
        %v595 = vpack.c.b16 %v593, %v592
        %v599 = vsel %vm432, %v584, 0
        %v602 = vsel %vm432, %v585, 0
        %604 = vmatpush.bf16.msra.mxu0 0
        %605 = vmatpush.bf16.msra.mxu0 0
        %606 = vmatpush.bf16.msra.mxu0 0
        %607 = vmatpush.bf16.msra.mxu0 0
        %608 = vmatpush.bf16.msra.mxu0 0
        %609 = vmatpush.bf16.msra.mxu0 0
        %610 = vmatpush.bf16.msra.mxu0 %v595
        %611 = vmatpush.bf16.msra.mxu0 %v594
        %612 = vmatmul.bf16.gmra.mxu0 %v599
        %v613 = vpop.f32.mrf.mxu0
        %v614 = vadd.f32 0.0, %v613
        %v615 = vpop.f32.mrf.mxu0
        %v616 = vadd.f32 0.0, %v615
        %617 = vmatmul.bf16.gmra.mxu0 %v602
        %v618 = vpop.f32.mrf.mxu0
        %v619 = vadd.f32 0.0, %v618
        %v620 = vpop.f32.mrf.mxu0
        %v621 = vadd.f32 0.0, %v620
        %622 = vdwg.mxu0
        %v623 = vadd.f32 %v580, %v614
        %v624 = vadd.f32 %v581, %v616
        %v625 = vadd.f32 %v582, %v619
        %v626 = vadd.f32 %v583, %v621
        %vm627 = vcmask 7168
        %628 = vst.msk [vmem:[#allocation2] sm:$0xff] %vm627, %v488
        %629 = vst.msk [vmem:[#allocation2 + $0x8] sm:$0xff] %vm627, %v489
        %630 = vst.msk [vmem:[#allocation2 + $0x10] sm:$0xff] %vm627, %v490
        %631 = vst.msk [vmem:[#allocation2 + $0x18] sm:$0xff] %vm627, %v491
        %632 = vst.msk [vmem:[#allocation3] sm:$0xff] %vm627, %v552
        %633 = vst.msk [vmem:[#allocation3 + $0x8] sm:$0xff] %vm627, %v553
        %634 = vst.msk [vmem:[#allocation3 + $0x10] sm:$0xff] %vm627, %v554
        %635 = vst.msk [vmem:[#allocation3 + $0x18] sm:$0xff] %vm627, %v555
        %636 = vst.msk [vmem:[#allocation4] sm:$0xff] %vm432, %v623
        %637 = vst.msk [vmem:[#allocation4 + $0x8] sm:$0xff] %vm432, %v624
        %638 = vst.msk [vmem:[#allocation4 + $0x10] sm:$0xff] %vm432, %v625
        %639 = vst.msk [vmem:[#allocation4 + $0x18] sm:$0xff] %vm432, %v626
        // Predicated region
        $region119: #{calibvit_v2_forward.43} parent=105 // pred_check
          %p640 = pneg %p383
        $region120: #{calibvit_v2_forward.43} parent=105 // pred_check_branch
          %642 = sbr.rel (%p640) target = $region122
        $region121: #{calibvit_v2_forward.43} parent=105 // pred_region
          %v643 = vrcp.pop %v552
          %v644 = vrcp.pop %v553
          %v645 = vrcp.pop %v554
          %v646 = vrcp.pop %v555
          %648 = vset.pattern.permute.xlu0 0
          %649 = vperm.xlu0 %648, %v643
          %v650 = vpop.permute.xlu0 %649
          %653 = vset.pattern.permute.xlu0 0
          %654 = vperm.xlu0 %653, %v644
          %v655 = vpop.permute.xlu0 %654
          %658 = vset.pattern.permute.xlu0 0
          %659 = vperm.xlu0 %658, %v645
          %v660 = vpop.permute.xlu0 %659
          %663 = vset.pattern.permute.xlu0 0
          %664 = vperm.xlu0 %663, %v646
          %v665 = vpop.permute.xlu0 %664
          %v667 = vmul.f32 %v623, %v650
          %v668 = vmul.f32 %v624, %v655
          %v669 = vmul.f32 %v625, %v660
          %v670 = vmul.f32 %v626, %v665
          %v671 = vpack.c.bf16 %v667, %v667
          %v672 = vpack.c.bf16 %v668, %v668
          %v673 = vpack.c.bf16 %v669, %v669
          %v674 = vpack.c.bf16 %v670, %v670
          %vm675 = vcmask 257024
          %676 = vst.msk [vmem:[%s380] sm:$0xf] %vm675, %v671
          %677 = vst.msk [vmem:[%s380 + $0x4] sm:$0xf] %vm675, %v672
          %678 = vst.msk [vmem:[%s380 + $0x8] sm:$0xf] %vm675, %v673
          %679 = vst.msk [vmem:[%s380 + $0xc] sm:$0xf] %vm675, %v674
        $region122: #{calibvit_v2_forward.43} parent=105 // pred_fallthru
          _
        %v680 = vld [vmem:[%s368] sm:$0xf]
        %v681 = vld [vmem:[%s368 + $0x4] sm:$0xf]
        %v682 = vld [vmem:[%s368 + $0x8] sm:$0xf]
        %v683 = vld [vmem:[%s368 + $0xc] sm:$0xf]
        %v684 = vld [vmem:[%s315] sm:$0xf]
        %v685 = vld [vmem:[%s315 + $0x4] sm:$0xf]
        %v686 = vld [vmem:[%s315 + $0x8] sm:$0xf]
        %v687 = vld [vmem:[%s315 + $0xc] sm:$0xf]
        %v688 = vld [vmem:[%s322] sm:$0xf]
        %v689 = vld [vmem:[%s322 + $0x4] sm:$0xf]
        %v690 = vld [vmem:[%s322 + $0x8] sm:$0xf]
        %v691 = vld [vmem:[%s322 + $0xc] sm:$0xf]
        %v696 = vunpack.c.l.b16 %v680
        %v697 = vunpack.c.l.b16 %v681
        %v698 = vunpack.c.l.b16 %v682
        %v699 = vunpack.c.l.b16 %v683
        %v700 = vpack.c.b16 %v697, %v696
        %v701 = vpack.c.b16 %v699, %v698
        %702 = vrot.lane.b32.xlu0 %v700, 96
        %v703 = vpop.permute.xlu0 %702
        %704 = vrot.lane.b32.xlu0 %v701, 96
        %v705 = vpop.permute.xlu0 %704
        %v710 = vunpack.c.l.b16 %v684
        %v711 = vunpack.c.l.b16 %v685
        %v712 = vunpack.c.l.b16 %v686
        %v713 = vunpack.c.l.b16 %v687
        %v714 = vpack.c.b16 %v711, %v710
        %v715 = vpack.c.b16 %v713, %v712
        %716 = vrot.lane.b32.xlu0 %v714, 96
        %v717 = vpop.permute.xlu0 %716
        %718 = vrot.lane.b32.xlu0 %v715, 96
        %v719 = vpop.permute.xlu0 %718
        %v721 = vsel %vm432, %v703, 0
        %v724 = vsel %vm432, %v705, 0
        %v727 = vsel %vm432, %v717, 0
        %v730 = vsel %vm432, %v719, 0
        %732 = vmatpush.bf16.xpose.msra.mxu0 0
        %733 = vmatpush.bf16.xpose.msra.mxu0 0
        %734 = vmatpush.bf16.xpose.msra.mxu0 0
        %735 = vmatpush.bf16.xpose.msra.mxu0 0
        %736 = vmatpush.bf16.xpose.msra.mxu0 0
        %737 = vmatpush.bf16.xpose.msra.mxu0 0
        %738 = vmatpush.bf16.xpose.msra.mxu0 %v730
        %739 = vmatpush.bf16.xpose.msra.mxu0 %v727
        %740 = vmatmul.bf16.gmra.mxu0 %v721
        %v741 = vpop.f32.mrf.mxu0
        %v742 = vadd.f32 0.0, %v741
        %v743 = vpop.f32.mrf.mxu0
        %v744 = vadd.f32 0.0, %v743
        %745 = vmatmul.bf16.gmra.mxu0 %v724
        %v746 = vpop.f32.mrf.mxu0
        %v747 = vadd.f32 0.0, %v746
        %v748 = vpop.f32.mrf.mxu0
        %v749 = vadd.f32 0.0, %v748
        %750 = vdwg.mxu0
        %v751 = vmul.f32 %v742, 0.17677669
        %v752 = vmul.f32 %v744, 0.17677669
        %v753 = vmul.f32 %v747, 0.17677669
        %v754 = vmul.f32 %v749, 0.17677669
        %v755 = vld [vmem:[#allocation2] sm:$0xff]
        %v756 = vld [vmem:[#allocation2 + $0x8] sm:$0xff]
        %v757 = vld [vmem:[#allocation2 + $0x10] sm:$0xff]
        %v758 = vld [vmem:[#allocation2 + $0x18] sm:$0xff]
        %v759 = vld [vmem:[#allocation3] sm:$0xff]
        %v760 = vld [vmem:[#allocation3 + $0x8] sm:$0xff]
        %v761 = vld [vmem:[#allocation3 + $0x10] sm:$0xff]
        %v762 = vld [vmem:[#allocation3 + $0x18] sm:$0xff]
        %v763 = vsel %vm432, %v751, -inf
        %764 = vmax.xlane.f32.xlu0 %v763
        %v765 = vpop.xlane.xlu0 %764
        %v766 = vsel %vm432, %v752, -inf
        %767 = vmax.xlane.f32.xlu0 %v766
        %v768 = vpop.xlane.xlu0 %767
        %v769 = vsel %vm432, %v753, -inf
        %770 = vmax.xlane.f32.xlu0 %v769
        %v771 = vpop.xlane.xlu0 %770
        %v772 = vsel %vm432, %v754, -inf
        %773 = vmax.xlane.f32.xlu0 %v772
        %v774 = vpop.xlane.xlu0 %773
        %v775 = vmax.f32 %v755, %v765
        %v776 = vmax.f32 %v756, %v768
        %v777 = vmax.f32 %v757, %v771
        %v778 = vmax.f32 %v758, %v774
        %v779 = vsub.f32 %v755, %v775
        %v780 = vsub.f32 %v756, %v776
        %v781 = vsub.f32 %v757, %v777
        %v782 = vsub.f32 %v758, %v778
        %v783 = vmul.f32 %v779, 1.442695
        %v784 = vpow.pop %v783
        %v785 = vmul.f32 %v780, 1.442695
        %v786 = vpow.pop %v785
        %v787 = vmul.f32 %v781, 1.442695
        %v788 = vpow.pop %v787
        %v789 = vmul.f32 %v782, 1.442695
        %v790 = vpow.pop %v789
        %792 = vset.pattern.permute.xlu0 1
        %793 = vperm.xlu0 %792, %v775
        %v794 = vpop.permute.xlu0 %793
        %797 = vset.pattern.permute.xlu0 1
        %798 = vperm.xlu0 %797, %v776
        %v799 = vpop.permute.xlu0 %798
        %802 = vset.pattern.permute.xlu0 1
        %803 = vperm.xlu0 %802, %v777
        %v804 = vpop.permute.xlu0 %803
        %807 = vset.pattern.permute.xlu0 1
        %808 = vperm.xlu0 %807, %v778
        %v809 = vpop.permute.xlu0 %808
        %v811 = vsub.f32 %v751, %v794
        %v812 = vsub.f32 %v752, %v799
        %v813 = vsub.f32 %v753, %v804
        %v814 = vsub.f32 %v754, %v809
        %v815 = vmul.f32 %v811, 1.442695
        %v816 = vpow.pop %v815
        %v817 = vmul.f32 %v812, 1.442695
        %v818 = vpow.pop %v817
        %v819 = vmul.f32 %v813, 1.442695
        %v820 = vpow.pop %v819
        %v821 = vmul.f32 %v814, 1.442695
        %v822 = vpow.pop %v821
        %v823 = vmul.f32 %v784, %v759
        %v824 = vmul.f32 %v786, %v760
        %v825 = vmul.f32 %v788, %v761
        %v826 = vmul.f32 %v790, %v762
        %v827 = vsel %vm432, %v816, 0.0
        %828 = vadd.xlane.f32.xlu0 %v827
        %v829 = vpop.xlane.xlu0 %828
        %v830 = vsel %vm432, %v818, 0.0
        %831 = vadd.xlane.f32.xlu0 %v830
        %v832 = vpop.xlane.xlu0 %831
        %v833 = vsel %vm432, %v820, 0.0
        %834 = vadd.xlane.f32.xlu0 %v833
        %v835 = vpop.xlane.xlu0 %834
        %v836 = vsel %vm432, %v822, 0.0
        %837 = vadd.xlane.f32.xlu0 %v836
        %v838 = vpop.xlane.xlu0 %837
        %v839 = vadd.f32 %v823, %v829
        %v840 = vadd.f32 %v824, %v832
        %v841 = vadd.f32 %v825, %v835
        %v842 = vadd.f32 %v826, %v838
        %v843 = vld [vmem:[#allocation4] sm:$0xff]
        %v844 = vld [vmem:[#allocation4 + $0x8] sm:$0xff]
        %v845 = vld [vmem:[#allocation4 + $0x10] sm:$0xff]
        %v846 = vld [vmem:[#allocation4 + $0x18] sm:$0xff]
        %848 = vset.pattern.permute.xlu0 1
        %849 = vperm.xlu0 %848, %v784
        %v850 = vpop.permute.xlu0 %849
        %853 = vset.pattern.permute.xlu0 1
        %854 = vperm.xlu0 %853, %v786
        %v855 = vpop.permute.xlu0 %854
        %858 = vset.pattern.permute.xlu0 1
        %859 = vperm.xlu0 %858, %v788
        %v860 = vpop.permute.xlu0 %859
        %863 = vset.pattern.permute.xlu0 1
        %864 = vperm.xlu0 %863, %v790
        %v865 = vpop.permute.xlu0 %864
        %v867 = vmul.f32 %v850, %v843
        %v868 = vmul.f32 %v855, %v844
        %v869 = vmul.f32 %v860, %v845
        %v870 = vmul.f32 %v865, %v846
        %v871 = vpack.c.bf16 %v818, %v816
        %v872 = vpack.c.bf16 %v822, %v820
        %v877 = vunpack.c.l.b16 %v688
        %v878 = vunpack.c.l.b16 %v689
        %v879 = vunpack.c.l.b16 %v690
        %v880 = vunpack.c.l.b16 %v691
        %v881 = vpack.c.b16 %v878, %v877
        %v882 = vpack.c.b16 %v880, %v879
        %883 = vrot.lane.b32.xlu0 %v881, 96
        %v884 = vpop.permute.xlu0 %883
        %885 = vrot.lane.b32.xlu0 %v882, 96
        %v886 = vpop.permute.xlu0 %885
        %v890 = vsel %vm432, %v871, 0
        %v893 = vsel %vm432, %v872, 0
        %895 = vmatpush.bf16.msra.mxu0 0
        %896 = vmatpush.bf16.msra.mxu0 0
        %897 = vmatpush.bf16.msra.mxu0 0
        %898 = vmatpush.bf16.msra.mxu0 0
        %899 = vmatpush.bf16.msra.mxu0 0
        %900 = vmatpush.bf16.msra.mxu0 0
        %901 = vmatpush.bf16.msra.mxu0 %v886
        %902 = vmatpush.bf16.msra.mxu0 %v884
        %903 = vmatmul.bf16.gmra.mxu0 %v890
        %v904 = vpop.f32.mrf.mxu0
        %v905 = vadd.f32 0.0, %v904
        %v906 = vpop.f32.mrf.mxu0
        %v907 = vadd.f32 0.0, %v906
        %908 = vmatmul.bf16.gmra.mxu0 %v893
        %v909 = vpop.f32.mrf.mxu0
        %v910 = vadd.f32 0.0, %v909
        %v911 = vpop.f32.mrf.mxu0
        %v912 = vadd.f32 0.0, %v911
        %913 = vdwg.mxu0
        %918 = vrot.lane.b32.xlu0 %v905, 32
        %v919 = vpop.permute.xlu0 %918
        %920 = vrot.lane.b32.xlu0 %v907, 32
        %v921 = vpop.permute.xlu0 %920
        %922 = vrot.lane.b32.xlu0 %v910, 32
        %v923 = vpop.permute.xlu0 %922
        %924 = vrot.lane.b32.xlu0 %v912, 32
        %v925 = vpop.permute.xlu0 %924
        %v930 = vadd.f32 %v867, %v919
        %v931 = vadd.f32 %v868, %v921
        %v932 = vadd.f32 %v869, %v923
        %v933 = vadd.f32 %v870, %v925
        %vm934 = vcmask 15368
        %935 = vst.msk [vmem:[#allocation2] sm:$0xff] %vm934, %v775
        %936 = vst.msk [vmem:[#allocation2 + $0x8] sm:$0xff] %vm934, %v776
        %937 = vst.msk [vmem:[#allocation2 + $0x10] sm:$0xff] %vm934, %v777
        %938 = vst.msk [vmem:[#allocation2 + $0x18] sm:$0xff] %vm934, %v778
        %939 = vst.msk [vmem:[#allocation3] sm:$0xff] %vm934, %v839
        %940 = vst.msk [vmem:[#allocation3 + $0x8] sm:$0xff] %vm934, %v840
        %941 = vst.msk [vmem:[#allocation3 + $0x10] sm:$0xff] %vm934, %v841
        %942 = vst.msk [vmem:[#allocation3 + $0x18] sm:$0xff] %vm934, %v842
        %vm943 = vcmask 523520
        %944 = vst.msk [vmem:[#allocation4] sm:$0xff] %vm943, %v930
        %945 = vst.msk [vmem:[#allocation4 + $0x8] sm:$0xff] %vm943, %v931
        %946 = vst.msk [vmem:[#allocation4 + $0x10] sm:$0xff] %vm943, %v932
        %947 = vst.msk [vmem:[#allocation4 + $0x18] sm:$0xff] %vm943, %v933
        // Predicated region
        $region123: #{calibvit_v2_forward.43} parent=105 // pred_check
          %p948 = pneg %p383
        $region124: #{calibvit_v2_forward.43} parent=105 // pred_check_branch
          %950 = sbr.rel (%p948) target = $region126
        $region125: #{calibvit_v2_forward.43} parent=105 // pred_region
          %v951 = vrcp.pop %v839
          %v952 = vrcp.pop %v840
          %v953 = vrcp.pop %v841
          %v954 = vrcp.pop %v842
          %956 = vset.pattern.permute.xlu0 1
          %957 = vperm.xlu0 %956, %v951
          %v958 = vpop.permute.xlu0 %957
          %961 = vset.pattern.permute.xlu0 1
          %962 = vperm.xlu0 %961, %v952
          %v963 = vpop.permute.xlu0 %962
          %966 = vset.pattern.permute.xlu0 1
          %967 = vperm.xlu0 %966, %v953
          %v968 = vpop.permute.xlu0 %967
          %971 = vset.pattern.permute.xlu0 1
          %972 = vperm.xlu0 %971, %v954
          %v973 = vpop.permute.xlu0 %972
          %v975 = vmul.f32 %v930, %v958
          %v976 = vmul.f32 %v931, %v963
          %v977 = vmul.f32 %v932, %v968
          %v978 = vmul.f32 %v933, %v973
          %v979 = vpack.c.bf16 %v975, %v975
          %v980 = vpack.c.bf16 %v976, %v976
          %v981 = vpack.c.bf16 %v977, %v977
          %v982 = vpack.c.bf16 %v978, %v978
          %vm983 = vcmask 519424
          %984 = vst.msk [vmem:[%s380] sm:$0xf] %vm983, %v979
          %985 = vst.msk [vmem:[%s380 + $0x4] sm:$0xf] %vm983, %v980
          %986 = vst.msk [vmem:[%s380 + $0x8] sm:$0xf] %vm983, %v981
          %987 = vst.msk [vmem:[%s380 + $0xc] sm:$0xf] %vm983, %v982
        $region126: #{calibvit_v2_forward.43} parent=105 // pred_fallthru
          _
        %v988 = vld [vmem:[%s368] sm:$0xf]
        %v989 = vld [vmem:[%s368 + $0x4] sm:$0xf]
        %v990 = vld [vmem:[%s368 + $0x8] sm:$0xf]
        %v991 = vld [vmem:[%s368 + $0xc] sm:$0xf]
        %v992 = vld [vmem:[%s315] sm:$0xf]
        %v993 = vld [vmem:[%s315 + $0x4] sm:$0xf]
        %v994 = vld [vmem:[%s315 + $0x8] sm:$0xf]
        %v995 = vld [vmem:[%s315 + $0xc] sm:$0xf]
        %v996 = vld [vmem:[%s322] sm:$0xf]
        %v997 = vld [vmem:[%s322 + $0x4] sm:$0xf]
        %v998 = vld [vmem:[%s322 + $0x8] sm:$0xf]
        %v999 = vld [vmem:[%s322 + $0xc] sm:$0xf]
        %v1004 = vunpack.c.l.b16 %v988
        %v1005 = vunpack.c.l.b16 %v989
        %v1006 = vunpack.c.l.b16 %v990
        %v1007 = vunpack.c.l.b16 %v991
        %v1008 = vpack.c.b16 %v1005, %v1004
        %v1009 = vpack.c.b16 %v1007, %v1006
        %1010 = vrot.lane.b32.xlu0 %v1008, 64
        %v1011 = vpop.permute.xlu0 %1010
        %1012 = vrot.lane.b32.xlu0 %v1009, 64
        %v1013 = vpop.permute.xlu0 %1012
        %v1018 = vunpack.c.l.b16 %v992
        %v1019 = vunpack.c.l.b16 %v993
        %v1020 = vunpack.c.l.b16 %v994
        %v1021 = vunpack.c.l.b16 %v995
        %v1022 = vpack.c.b16 %v1019, %v1018
        %v1023 = vpack.c.b16 %v1021, %v1020
        %1024 = vrot.lane.b32.xlu0 %v1022, 64
        %v1025 = vpop.permute.xlu0 %1024
        %1026 = vrot.lane.b32.xlu0 %v1023, 64
        %v1027 = vpop.permute.xlu0 %1026
        %v1029 = vsel %vm432, %v1011, 0
        %v1032 = vsel %vm432, %v1013, 0
        %v1035 = vsel %vm432, %v1025, 0
        %v1038 = vsel %vm432, %v1027, 0
        %1040 = vmatpush.bf16.xpose.msra.mxu0 0
        %1041 = vmatpush.bf16.xpose.msra.mxu0 0
        %1042 = vmatpush.bf16.xpose.msra.mxu0 0
        %1043 = vmatpush.bf16.xpose.msra.mxu0 0
        %1044 = vmatpush.bf16.xpose.msra.mxu0 0
        %1045 = vmatpush.bf16.xpose.msra.mxu0 0
        %1046 = vmatpush.bf16.xpose.msra.mxu0 %v1038
        %1047 = vmatpush.bf16.xpose.msra.mxu0 %v1035
        %1048 = vmatmul.bf16.gmra.mxu0 %v1029
        %v1049 = vpop.f32.mrf.mxu0
        %v1050 = vadd.f32 0.0, %v1049
        %v1051 = vpop.f32.mrf.mxu0
        %v1052 = vadd.f32 0.0, %v1051
        %1053 = vmatmul.bf16.gmra.mxu0 %v1032
        %v1054 = vpop.f32.mrf.mxu0
        %v1055 = vadd.f32 0.0, %v1054
        %v1056 = vpop.f32.mrf.mxu0
        %v1057 = vadd.f32 0.0, %v1056
        %1058 = vdwg.mxu0
        %v1059 = vmul.f32 %v1050, 0.17677669
        %v1060 = vmul.f32 %v1052, 0.17677669
        %v1061 = vmul.f32 %v1055, 0.17677669
        %v1062 = vmul.f32 %v1057, 0.17677669
        %v1063 = vld [vmem:[#allocation2] sm:$0xff]
        %v1064 = vld [vmem:[#allocation2 + $0x8] sm:$0xff]
        %v1065 = vld [vmem:[#allocation2 + $0x10] sm:$0xff]
        %v1066 = vld [vmem:[#allocation2 + $0x18] sm:$0xff]
        %v1067 = vld [vmem:[#allocation3] sm:$0xff]
        %v1068 = vld [vmem:[#allocation3 + $0x8] sm:$0xff]
        %v1069 = vld [vmem:[#allocation3 + $0x10] sm:$0xff]
        %v1070 = vld [vmem:[#allocation3 + $0x18] sm:$0xff]
        %v1071 = vsel %vm432, %v1059, -inf
        %1072 = vmax.xlane.f32.xlu0 %v1071
        %v1073 = vpop.xlane.xlu0 %1072
        %v1074 = vsel %vm432, %v1060, -inf
        %1075 = vmax.xlane.f32.xlu0 %v1074
        %v1076 = vpop.xlane.xlu0 %1075
        %v1077 = vsel %vm432, %v1061, -inf
        %1078 = vmax.xlane.f32.xlu0 %v1077
        %v1079 = vpop.xlane.xlu0 %1078
        %v1080 = vsel %vm432, %v1062, -inf
        %1081 = vmax.xlane.f32.xlu0 %v1080
        %v1082 = vpop.xlane.xlu0 %1081
        %v1083 = vmax.f32 %v1063, %v1073
        %v1084 = vmax.f32 %v1064, %v1076
        %v1085 = vmax.f32 %v1065, %v1079
        %v1086 = vmax.f32 %v1066, %v1082
        %v1087 = vsub.f32 %v1063, %v1083
        %v1088 = vsub.f32 %v1064, %v1084
        %v1089 = vsub.f32 %v1065, %v1085
        %v1090 = vsub.f32 %v1066, %v1086
        %v1091 = vmul.f32 %v1087, 1.442695
        %v1092 = vpow.pop %v1091
        %v1093 = vmul.f32 %v1088, 1.442695
        %v1094 = vpow.pop %v1093
        %v1095 = vmul.f32 %v1089, 1.442695
        %v1096 = vpow.pop %v1095
        %v1097 = vmul.f32 %v1090, 1.442695
        %v1098 = vpow.pop %v1097
        %1100 = vset.pattern.permute.xlu0 2
        %1101 = vperm.xlu0 %1100, %v1083
        %v1102 = vpop.permute.xlu0 %1101
        %1105 = vset.pattern.permute.xlu0 2
        %1106 = vperm.xlu0 %1105, %v1084
        %v1107 = vpop.permute.xlu0 %1106
        %1110 = vset.pattern.permute.xlu0 2
        %1111 = vperm.xlu0 %1110, %v1085
        %v1112 = vpop.permute.xlu0 %1111
        %1115 = vset.pattern.permute.xlu0 2
        %1116 = vperm.xlu0 %1115, %v1086
        %v1117 = vpop.permute.xlu0 %1116
        %v1119 = vsub.f32 %v1059, %v1102
        %v1120 = vsub.f32 %v1060, %v1107
        %v1121 = vsub.f32 %v1061, %v1112
        %v1122 = vsub.f32 %v1062, %v1117
        %v1123 = vmul.f32 %v1119, 1.442695
        %v1124 = vpow.pop %v1123
        %v1125 = vmul.f32 %v1120, 1.442695
        %v1126 = vpow.pop %v1125
        %v1127 = vmul.f32 %v1121, 1.442695
        %v1128 = vpow.pop %v1127
        %v1129 = vmul.f32 %v1122, 1.442695
        %v1130 = vpow.pop %v1129
        %v1131 = vmul.f32 %v1092, %v1067
        %v1132 = vmul.f32 %v1094, %v1068
        %v1133 = vmul.f32 %v1096, %v1069
        %v1134 = vmul.f32 %v1098, %v1070
        %v1135 = vsel %vm432, %v1124, 0.0
        %1136 = vadd.xlane.f32.xlu0 %v1135
        %v1137 = vpop.xlane.xlu0 %1136
        %v1138 = vsel %vm432, %v1126, 0.0
        %1139 = vadd.xlane.f32.xlu0 %v1138
        %v1140 = vpop.xlane.xlu0 %1139
        %v1141 = vsel %vm432, %v1128, 0.0
        %1142 = vadd.xlane.f32.xlu0 %v1141
        %v1143 = vpop.xlane.xlu0 %1142
        %v1144 = vsel %vm432, %v1130, 0.0
        %1145 = vadd.xlane.f32.xlu0 %v1144
        %v1146 = vpop.xlane.xlu0 %1145
        %v1147 = vadd.f32 %v1131, %v1137
        %v1148 = vadd.f32 %v1132, %v1140
        %v1149 = vadd.f32 %v1133, %v1143
        %v1150 = vadd.f32 %v1134, %v1146
        %v1151 = vld [vmem:[#allocation4] sm:$0xff]
        %v1152 = vld [vmem:[#allocation4 + $0x8] sm:$0xff]
        %v1153 = vld [vmem:[#allocation4 + $0x10] sm:$0xff]
        %v1154 = vld [vmem:[#allocation4 + $0x18] sm:$0xff]
        %1156 = vset.pattern.permute.xlu0 2
        %1157 = vperm.xlu0 %1156, %v1092
        %v1158 = vpop.permute.xlu0 %1157
        %1161 = vset.pattern.permute.xlu0 2
        %1162 = vperm.xlu0 %1161, %v1094
        %v1163 = vpop.permute.xlu0 %1162
        %1166 = vset.pattern.permute.xlu0 2
        %1167 = vperm.xlu0 %1166, %v1096
        %v1168 = vpop.permute.xlu0 %1167
        %1171 = vset.pattern.permute.xlu0 2
        %1172 = vperm.xlu0 %1171, %v1098
        %v1173 = vpop.permute.xlu0 %1172
        %v1175 = vmul.f32 %v1158, %v1151
        %v1176 = vmul.f32 %v1163, %v1152
        %v1177 = vmul.f32 %v1168, %v1153
        %v1178 = vmul.f32 %v1173, %v1154
        %v1179 = vpack.c.bf16 %v1126, %v1124
        %v1180 = vpack.c.bf16 %v1130, %v1128
        %v1185 = vunpack.c.l.b16 %v996
        %v1186 = vunpack.c.l.b16 %v997
        %v1187 = vunpack.c.l.b16 %v998
        %v1188 = vunpack.c.l.b16 %v999
        %v1189 = vpack.c.b16 %v1186, %v1185
        %v1190 = vpack.c.b16 %v1188, %v1187
        %1191 = vrot.lane.b32.xlu0 %v1189, 64
        %v1192 = vpop.permute.xlu0 %1191
        %1193 = vrot.lane.b32.xlu0 %v1190, 64
        %v1194 = vpop.permute.xlu0 %1193
        %v1198 = vsel %vm432, %v1179, 0
        %v1201 = vsel %vm432, %v1180, 0
        %1203 = vmatpush.bf16.msra.mxu0 0
        %1204 = vmatpush.bf16.msra.mxu0 0
        %1205 = vmatpush.bf16.msra.mxu0 0
        %1206 = vmatpush.bf16.msra.mxu0 0
        %1207 = vmatpush.bf16.msra.mxu0 0
        %1208 = vmatpush.bf16.msra.mxu0 0
        %1209 = vmatpush.bf16.msra.mxu0 %v1194
        %1210 = vmatpush.bf16.msra.mxu0 %v1192
        %1211 = vmatmul.bf16.gmra.mxu0 %v1198
        %v1212 = vpop.f32.mrf.mxu0
        %v1213 = vadd.f32 0.0, %v1212
        %v1214 = vpop.f32.mrf.mxu0
        %v1215 = vadd.f32 0.0, %v1214
        %1216 = vmatmul.bf16.gmra.mxu0 %v1201
        %v1217 = vpop.f32.mrf.mxu0
        %v1218 = vadd.f32 0.0, %v1217
        %v1219 = vpop.f32.mrf.mxu0
        %v1220 = vadd.f32 0.0, %v1219
        %1221 = vdwg.mxu0
        %1226 = vrot.lane.b32.xlu0 %v1213, 64
        %v1227 = vpop.permute.xlu0 %1226
        %1228 = vrot.lane.b32.xlu0 %v1215, 64
        %v1229 = vpop.permute.xlu0 %1228
        %1230 = vrot.lane.b32.xlu0 %v1218, 64
        %v1231 = vpop.permute.xlu0 %1230
        %1232 = vrot.lane.b32.xlu0 %v1220, 64
        %v1233 = vpop.permute.xlu0 %1232
        %v1238 = vadd.f32 %v1175, %v1227
        %v1239 = vadd.f32 %v1176, %v1229
        %v1240 = vadd.f32 %v1177, %v1231
        %v1241 = vadd.f32 %v1178, %v1233
        %vm1242 = vcmask 23568
        %1243 = vst.msk [vmem:[#allocation2] sm:$0xff] %vm1242, %v1083
        %1244 = vst.msk [vmem:[#allocation2 + $0x8] sm:$0xff] %vm1242, %v1084
        %1245 = vst.msk [vmem:[#allocation2 + $0x10] sm:$0xff] %vm1242, %v1085
        %1246 = vst.msk [vmem:[#allocation2 + $0x18] sm:$0xff] %vm1242, %v1086
        %1247 = vst.msk [vmem:[#allocation3] sm:$0xff] %vm1242, %v1147
        %1248 = vst.msk [vmem:[#allocation3 + $0x8] sm:$0xff] %vm1242, %v1148
        %1249 = vst.msk [vmem:[#allocation3 + $0x10] sm:$0xff] %vm1242, %v1149
        %1250 = vst.msk [vmem:[#allocation3 + $0x18] sm:$0xff] %vm1242, %v1150
        %vm1251 = vcmask 785920
        %1252 = vst.msk [vmem:[#allocation4] sm:$0xff] %vm1251, %v1238
        %1253 = vst.msk [vmem:[#allocation4 + $0x8] sm:$0xff] %vm1251, %v1239
        %1254 = vst.msk [vmem:[#allocation4 + $0x10] sm:$0xff] %vm1251, %v1240
        %1255 = vst.msk [vmem:[#allocation4 + $0x18] sm:$0xff] %vm1251, %v1241
        // Predicated region
        $region127: #{calibvit_v2_forward.43} parent=105 // pred_check
          %p1256 = pneg %p383
        $region128: #{calibvit_v2_forward.43} parent=105 // pred_check_branch
          %1258 = sbr.rel (%p1256) target = $region130
        $region129: #{calibvit_v2_forward.43} parent=105 // pred_region
          %v1259 = vrcp.pop %v1147
          %v1260 = vrcp.pop %v1148
          %v1261 = vrcp.pop %v1149
          %v1262 = vrcp.pop %v1150
          %1264 = vset.pattern.permute.xlu0 2
          %1265 = vperm.xlu0 %1264, %v1259
          %v1266 = vpop.permute.xlu0 %1265
          %1269 = vset.pattern.permute.xlu0 2
          %1270 = vperm.xlu0 %1269, %v1260
          %v1271 = vpop.permute.xlu0 %1270
          %1274 = vset.pattern.permute.xlu0 2
          %1275 = vperm.xlu0 %1274, %v1261
          %v1276 = vpop.permute.xlu0 %1275
          %1279 = vset.pattern.permute.xlu0 2
          %1280 = vperm.xlu0 %1279, %v1262
          %v1281 = vpop.permute.xlu0 %1280
          %v1283 = vmul.f32 %v1238, %v1266
          %v1284 = vmul.f32 %v1239, %v1271
          %v1285 = vmul.f32 %v1240, %v1276
          %v1286 = vmul.f32 %v1241, %v1281
          %v1287 = vpack.c.bf16 %v1283, %v1283
          %v1288 = vpack.c.bf16 %v1284, %v1284
          %v1289 = vpack.c.bf16 %v1285, %v1285
          %v1290 = vpack.c.bf16 %v1286, %v1286
          %vm1291 = vcmask 781824
          %1292 = vst.msk [vmem:[%s380] sm:$0xf] %vm1291, %v1287
          %1293 = vst.msk [vmem:[%s380 + $0x4] sm:$0xf] %vm1291, %v1288
          %1294 = vst.msk [vmem:[%s380 + $0x8] sm:$0xf] %vm1291, %v1289
          %1295 = vst.msk [vmem:[%s380 + $0xc] sm:$0xf] %vm1291, %v1290
        $region130: #{calibvit_v2_forward.43} parent=105 // pred_fallthru
          _
        %v1296 = vld [vmem:[%s368] sm:$0xf]
        %v1297 = vld [vmem:[%s368 + $0x4] sm:$0xf]
        %v1298 = vld [vmem:[%s368 + $0x8] sm:$0xf]
        %v1299 = vld [vmem:[%s368 + $0xc] sm:$0xf]
        %v1300 = vld [vmem:[%s315] sm:$0xf]
        %v1301 = vld [vmem:[%s315 + $0x4] sm:$0xf]
        %v1302 = vld [vmem:[%s315 + $0x8] sm:$0xf]
        %v1303 = vld [vmem:[%s315 + $0xc] sm:$0xf]
        %v1304 = vld [vmem:[%s322] sm:$0xf]
        %v1305 = vld [vmem:[%s322 + $0x4] sm:$0xf]
        %v1306 = vld [vmem:[%s322 + $0x8] sm:$0xf]
        %v1307 = vld [vmem:[%s322 + $0xc] sm:$0xf]
        %v1312 = vunpack.c.l.b16 %v1296
        %v1313 = vunpack.c.l.b16 %v1297
        %v1314 = vunpack.c.l.b16 %v1298
        %v1315 = vunpack.c.l.b16 %v1299
        %v1316 = vpack.c.b16 %v1313, %v1312
        %v1317 = vpack.c.b16 %v1315, %v1314
        %1318 = vrot.lane.b32.xlu0 %v1316, 32
        %v1319 = vpop.permute.xlu0 %1318
        %1320 = vrot.lane.b32.xlu0 %v1317, 32
        %v1321 = vpop.permute.xlu0 %1320
        %v1326 = vunpack.c.l.b16 %v1300
        %v1327 = vunpack.c.l.b16 %v1301
        %v1328 = vunpack.c.l.b16 %v1302
        %v1329 = vunpack.c.l.b16 %v1303
        %v1330 = vpack.c.b16 %v1327, %v1326
        %v1331 = vpack.c.b16 %v1329, %v1328
        %1332 = vrot.lane.b32.xlu0 %v1330, 32
        %v1333 = vpop.permute.xlu0 %1332
        %1334 = vrot.lane.b32.xlu0 %v1331, 32
        %v1335 = vpop.permute.xlu0 %1334
        %v1337 = vsel %vm432, %v1319, 0
        %v1340 = vsel %vm432, %v1321, 0
        %v1343 = vsel %vm432, %v1333, 0
        %v1346 = vsel %vm432, %v1335, 0
        %1348 = vmatpush.bf16.xpose.msra.mxu0 0
        %1349 = vmatpush.bf16.xpose.msra.mxu0 0
        %1350 = vmatpush.bf16.xpose.msra.mxu0 0
        %1351 = vmatpush.bf16.xpose.msra.mxu0 0
        %1352 = vmatpush.bf16.xpose.msra.mxu0 0
        %1353 = vmatpush.bf16.xpose.msra.mxu0 0
        %1354 = vmatpush.bf16.xpose.msra.mxu0 %v1346
        %1355 = vmatpush.bf16.xpose.msra.mxu0 %v1343
        %1356 = vmatmul.bf16.gmra.mxu0 %v1337
        %v1357 = vpop.f32.mrf.mxu0
        %v1358 = vadd.f32 0.0, %v1357
        %v1359 = vpop.f32.mrf.mxu0
        %v1360 = vadd.f32 0.0, %v1359
        %1361 = vmatmul.bf16.gmra.mxu0 %v1340
        %v1362 = vpop.f32.mrf.mxu0
        %v1363 = vadd.f32 0.0, %v1362
        %v1364 = vpop.f32.mrf.mxu0
        %v1365 = vadd.f32 0.0, %v1364
        %1366 = vdwg.mxu0
        %v1367 = vmul.f32 %v1358, 0.17677669
        %v1368 = vmul.f32 %v1360, 0.17677669
        %v1369 = vmul.f32 %v1363, 0.17677669
        %v1370 = vmul.f32 %v1365, 0.17677669
        %v1371 = vld [vmem:[#allocation2] sm:$0xff]
        %v1372 = vld [vmem:[#allocation2 + $0x8] sm:$0xff]
        %v1373 = vld [vmem:[#allocation2 + $0x10] sm:$0xff]
        %v1374 = vld [vmem:[#allocation2 + $0x18] sm:$0xff]
        %v1375 = vld [vmem:[#allocation3] sm:$0xff]
        %v1376 = vld [vmem:[#allocation3 + $0x8] sm:$0xff]
        %v1377 = vld [vmem:[#allocation3 + $0x10] sm:$0xff]
        %v1378 = vld [vmem:[#allocation3 + $0x18] sm:$0xff]
        %v1379 = vsel %vm432, %v1367, -inf
        %1380 = vmax.xlane.f32.xlu0 %v1379
        %v1381 = vpop.xlane.xlu0 %1380
        %v1382 = vsel %vm432, %v1368, -inf
        %1383 = vmax.xlane.f32.xlu0 %v1382
        %v1384 = vpop.xlane.xlu0 %1383
        %v1385 = vsel %vm432, %v1369, -inf
        %1386 = vmax.xlane.f32.xlu0 %v1385
        %v1387 = vpop.xlane.xlu0 %1386
        %v1388 = vsel %vm432, %v1370, -inf
        %1389 = vmax.xlane.f32.xlu0 %v1388
        %v1390 = vpop.xlane.xlu0 %1389
        %v1391 = vmax.f32 %v1371, %v1381
        %v1392 = vmax.f32 %v1372, %v1384
        %v1393 = vmax.f32 %v1373, %v1387
        %v1394 = vmax.f32 %v1374, %v1390
        %v1395 = vsub.f32 %v1371, %v1391
        %v1396 = vsub.f32 %v1372, %v1392
        %v1397 = vsub.f32 %v1373, %v1393
        %v1398 = vsub.f32 %v1374, %v1394
        %v1399 = vmul.f32 %v1395, 1.442695
        %v1400 = vpow.pop %v1399
        %v1401 = vmul.f32 %v1396, 1.442695
        %v1402 = vpow.pop %v1401
        %v1403 = vmul.f32 %v1397, 1.442695
        %v1404 = vpow.pop %v1403
        %v1405 = vmul.f32 %v1398, 1.442695
        %v1406 = vpow.pop %v1405
        %1408 = vset.pattern.permute.xlu0 3
        %1409 = vperm.xlu0 %1408, %v1391
        %v1410 = vpop.permute.xlu0 %1409
        %1413 = vset.pattern.permute.xlu0 3
        %1414 = vperm.xlu0 %1413, %v1392
        %v1415 = vpop.permute.xlu0 %1414
        %1418 = vset.pattern.permute.xlu0 3
        %1419 = vperm.xlu0 %1418, %v1393
        %v1420 = vpop.permute.xlu0 %1419
        %1423 = vset.pattern.permute.xlu0 3
        %1424 = vperm.xlu0 %1423, %v1394
        %v1425 = vpop.permute.xlu0 %1424
        %v1427 = vsub.f32 %v1367, %v1410
        %v1428 = vsub.f32 %v1368, %v1415
        %v1429 = vsub.f32 %v1369, %v1420
        %v1430 = vsub.f32 %v1370, %v1425
        %v1431 = vmul.f32 %v1427, 1.442695
        %v1432 = vpow.pop %v1431
        %v1433 = vmul.f32 %v1428, 1.442695
        %v1434 = vpow.pop %v1433
        %v1435 = vmul.f32 %v1429, 1.442695
        %v1436 = vpow.pop %v1435
        %v1437 = vmul.f32 %v1430, 1.442695
        %v1438 = vpow.pop %v1437
        %v1439 = vmul.f32 %v1400, %v1375
        %v1440 = vmul.f32 %v1402, %v1376
        %v1441 = vmul.f32 %v1404, %v1377
        %v1442 = vmul.f32 %v1406, %v1378
        %v1443 = vsel %vm432, %v1432, 0.0
        %1444 = vadd.xlane.f32.xlu0 %v1443
        %v1445 = vpop.xlane.xlu0 %1444
        %v1446 = vsel %vm432, %v1434, 0.0
        %1447 = vadd.xlane.f32.xlu0 %v1446
        %v1448 = vpop.xlane.xlu0 %1447
        %v1449 = vsel %vm432, %v1436, 0.0
        %1450 = vadd.xlane.f32.xlu0 %v1449
        %v1451 = vpop.xlane.xlu0 %1450
        %v1452 = vsel %vm432, %v1438, 0.0
        %1453 = vadd.xlane.f32.xlu0 %v1452
        %v1454 = vpop.xlane.xlu0 %1453
        %v1455 = vadd.f32 %v1439, %v1445
        %v1456 = vadd.f32 %v1440, %v1448
        %v1457 = vadd.f32 %v1441, %v1451
        %v1458 = vadd.f32 %v1442, %v1454
        %v1459 = vld [vmem:[#allocation4] sm:$0xff]
        %v1460 = vld [vmem:[#allocation4 + $0x8] sm:$0xff]
        %v1461 = vld [vmem:[#allocation4 + $0x10] sm:$0xff]
        %v1462 = vld [vmem:[#allocation4 + $0x18] sm:$0xff]
        %1464 = vset.pattern.permute.xlu0 3
        %1465 = vperm.xlu0 %1464, %v1400
        %v1466 = vpop.permute.xlu0 %1465
        %1469 = vset.pattern.permute.xlu0 3
        %1470 = vperm.xlu0 %1469, %v1402
        %v1471 = vpop.permute.xlu0 %1470
        %1474 = vset.pattern.permute.xlu0 3
        %1475 = vperm.xlu0 %1474, %v1404
        %v1476 = vpop.permute.xlu0 %1475
        %1479 = vset.pattern.permute.xlu0 3
        %1480 = vperm.xlu0 %1479, %v1406
        %v1481 = vpop.permute.xlu0 %1480
        %v1483 = vmul.f32 %v1466, %v1459
        %v1484 = vmul.f32 %v1471, %v1460
        %v1485 = vmul.f32 %v1476, %v1461
        %v1486 = vmul.f32 %v1481, %v1462
        %v1487 = vpack.c.bf16 %v1434, %v1432
        %v1488 = vpack.c.bf16 %v1438, %v1436
        %v1493 = vunpack.c.l.b16 %v1304
        %v1494 = vunpack.c.l.b16 %v1305
        %v1495 = vunpack.c.l.b16 %v1306
        %v1496 = vunpack.c.l.b16 %v1307
        %v1497 = vpack.c.b16 %v1494, %v1493
        %v1498 = vpack.c.b16 %v1496, %v1495
        %1499 = vrot.lane.b32.xlu0 %v1497, 32
        %v1500 = vpop.permute.xlu0 %1499
        %1501 = vrot.lane.b32.xlu0 %v1498, 32
        %v1502 = vpop.permute.xlu0 %1501
        %v1506 = vsel %vm432, %v1487, 0
        %v1509 = vsel %vm432, %v1488, 0
        %1511 = vmatpush.bf16.msra.mxu0 0
        %1512 = vmatpush.bf16.msra.mxu0 0
        %1513 = vmatpush.bf16.msra.mxu0 0
        %1514 = vmatpush.bf16.msra.mxu0 0
        %1515 = vmatpush.bf16.msra.mxu0 0
        %1516 = vmatpush.bf16.msra.mxu0 0
        %1517 = vmatpush.bf16.msra.mxu0 %v1502
        %1518 = vmatpush.bf16.msra.mxu0 %v1500
        %1519 = vmatmul.bf16.gmra.mxu0 %v1506
        %v1520 = vpop.f32.mrf.mxu0
        %v1521 = vadd.f32 0.0, %v1520
        %v1522 = vpop.f32.mrf.mxu0
        %v1523 = vadd.f32 0.0, %v1522
        %1524 = vmatmul.bf16.gmra.mxu0 %v1509
        %v1525 = vpop.f32.mrf.mxu0
        %v1526 = vadd.f32 0.0, %v1525
        %v1527 = vpop.f32.mrf.mxu0
        %v1528 = vadd.f32 0.0, %v1527
        %1529 = vdwg.mxu0
        %1534 = vrot.lane.b32.xlu0 %v1521, 96
        %v1535 = vpop.permute.xlu0 %1534
        %1536 = vrot.lane.b32.xlu0 %v1523, 96
        %v1537 = vpop.permute.xlu0 %1536
        %1538 = vrot.lane.b32.xlu0 %v1526, 96
        %v1539 = vpop.permute.xlu0 %1538
        %1540 = vrot.lane.b32.xlu0 %v1528, 96
        %v1541 = vpop.permute.xlu0 %1540
        %v1546 = vadd.f32 %v1483, %v1535
        %v1547 = vadd.f32 %v1484, %v1537
        %v1548 = vadd.f32 %v1485, %v1539
        %v1549 = vadd.f32 %v1486, %v1541
        %vm1550 = vcmask 31768
        %1551 = vst.msk [vmem:[#allocation2] sm:$0xff] %vm1550, %v1391
        %1552 = vst.msk [vmem:[#allocation2 + $0x8] sm:$0xff] %vm1550, %v1392
        %1553 = vst.msk [vmem:[#allocation2 + $0x10] sm:$0xff] %vm1550, %v1393
        %1554 = vst.msk [vmem:[#allocation2 + $0x18] sm:$0xff] %vm1550, %v1394
        %1555 = vst.msk [vmem:[#allocation3] sm:$0xff] %vm1550, %v1455
        %1556 = vst.msk [vmem:[#allocation3 + $0x8] sm:$0xff] %vm1550, %v1456
        %1557 = vst.msk [vmem:[#allocation3 + $0x10] sm:$0xff] %vm1550, %v1457
        %1558 = vst.msk [vmem:[#allocation3 + $0x18] sm:$0xff] %vm1550, %v1458
        %vm1559 = vcmask 1048320
        %1560 = vst.msk [vmem:[#allocation4] sm:$0xff] %vm1559, %v1546
        %1561 = vst.msk [vmem:[#allocation4 + $0x8] sm:$0xff] %vm1559, %v1547
        %1562 = vst.msk [vmem:[#allocation4 + $0x10] sm:$0xff] %vm1559, %v1548
        %1563 = vst.msk [vmem:[#allocation4 + $0x18] sm:$0xff] %vm1559, %v1549
        // Predicated region
        $region131: #{calibvit_v2_forward.43} parent=105 // pred_check
          %p1564 = pneg %p383
        $region132: #{calibvit_v2_forward.43} parent=105 // pred_check_branch
          %1566 = sbr.rel (%p1564) target = $region134
        $region133: #{calibvit_v2_forward.43} parent=105 // pred_region
          %v1567 = vrcp.pop %v1455
          %v1568 = vrcp.pop %v1456
          %v1569 = vrcp.pop %v1457
          %v1570 = vrcp.pop %v1458
          %1572 = vset.pattern.permute.xlu0 3
          %1573 = vperm.xlu0 %1572, %v1567
          %v1574 = vpop.permute.xlu0 %1573
          %1577 = vset.pattern.permute.xlu0 3
          %1578 = vperm.xlu0 %1577, %v1568
          %v1579 = vpop.permute.xlu0 %1578
          %1582 = vset.pattern.permute.xlu0 3
          %1583 = vperm.xlu0 %1582, %v1569
          %v1584 = vpop.permute.xlu0 %1583
          %1587 = vset.pattern.permute.xlu0 3
          %1588 = vperm.xlu0 %1587, %v1570
          %v1589 = vpop.permute.xlu0 %1588
          %v1591 = vmul.f32 %v1546, %v1574
          %v1592 = vmul.f32 %v1547, %v1579
          %v1593 = vmul.f32 %v1548, %v1584
          %v1594 = vmul.f32 %v1549, %v1589
          %v1595 = vpack.c.bf16 %v1591, %v1591
          %v1596 = vpack.c.bf16 %v1592, %v1592
          %v1597 = vpack.c.bf16 %v1593, %v1593
          %v1598 = vpack.c.bf16 %v1594, %v1594
          %vm1599 = vcmask 1044224
          %1600 = vst.msk [vmem:[%s380] sm:$0xf] %vm1599, %v1595
          %1601 = vst.msk [vmem:[%s380 + $0x4] sm:$0xf] %vm1599, %v1596
          %1602 = vst.msk [vmem:[%s380 + $0x8] sm:$0xf] %vm1599, %v1597
          %1603 = vst.msk [vmem:[%s380 + $0xc] sm:$0xf] %vm1599, %v1598
        $region134: #{calibvit_v2_forward.43} parent=105 // pred_fallthru
          _
        %s1604 = smul.u32 4, %s20
        %p1605 = scmp.lt.s32.totalorder %s19, 1
        %s1606 = scalar_select %p1605, %s19, 1
        %p1607 = scmp.lt.s32.totalorder %s1604, 3
        %s1608 = scalar_select %p1607, %s1604, 3
        %s1609 = smul.addr %s1606, 4
        %s1610 = sadd.s32 %s1608, %s1609
        %s1611 = smul.addr %s1610, 4
        %s1612 = scalar_lea.vmem %s3, %s1611
        // Predicated region
        $region135: #{calibvit_v2_forward.43} parent=105 // pred_check
          %p1613 = pneg %p137
        $region136: #{calibvit_v2_forward.43} parent=105 // pred_check_branch
          %1615 = sbr.rel (%p1613) target = $region138
        $region137: #{calibvit_v2_forward.43} parent=105 // pred_region
          %s1616 = smul.u32 4, %s20
        $region138: #{calibvit_v2_forward.43} parent=105 // pred_fallthru
          _
      $region106: #{calibvit_v2_forward.43} parent=5 // pred_fallthru
        _
      %p1617 = scmp.le.s32.totalorder 2, %s9
      // Predicated region
      $region139: #{calibvit_v2_forward.43} parent=5 // pred_check
        %p1618 = pneg %p1617
      $region140: #{calibvit_v2_forward.43} parent=5 // pred_check_branch
        %1620 = sbr.rel (%p1618) target = $region142
      $region141: #{calibvit_v2_forward.43} parent=5 // pred_region
        %s1621 = ssub.s32 %s9, 2
        // Predicated region
        $region143: #{calibvit_v2_forward.43} parent=141 // pred_check
          %p1622 = pneg %p143
        $region144: #{calibvit_v2_forward.43} parent=141 // pred_check_branch
          %1624 = sbr.rel (%p1622) target = $region146
        $region145: #{calibvit_v2_forward.43} parent=141 // pred_region
          %s1625 = smul.u32 4, %s23
          %p1626 = scmp.lt.s32.totalorder %s22, 1
          %s1627 = scalar_select %p1626, %s22, 1
          %p1628 = scmp.lt.s32.totalorder %s1625, 3
          %s1629 = scalar_select %p1628, %s1625, 3
          %s1630 = smul.addr %s1627, 4
          %s1631 = sadd.s32 %s1629, %s1630
          %s1632 = smul.addr %s1631, 4
          %s1633 = scalar_lea.vmem %s3, %s1632
        $region146: #{calibvit_v2_forward.43} parent=141 // pred_fallthru
          _
      $region142: #{calibvit_v2_forward.43} parent=5 // pred_fallthru
        _
    $region6: #{calibvit_v2_forward.43} parent=1 // loop_footer
      %s13 = sadd.s32 1, %s9
    $region7: #{calibvit_v2_forward.43} parent=1 // loop_footer_branch
      %8 = sbr.rel target = $region3
    $region8: #{calibvit_v2_forward.43} parent=1 // loop_exit
      _

// kernel: calibvit_v2_forward.47
$region0: #{calibvit_v2_forward.47}
  #allocation0 [shape = 'u32[]', space=smem, size = 0x4, offset = 0x4, fixed_abs, tag = 'smem constant byte address 0x4 - core index']
  #allocation1 [shape = 'u32[72,128]{1,0:T(1,128)}', space=vmem, size = 0x9000, scoped, tag = 'internal scratch']
  #allocation2 [shape = 'bf16[64,128]{1,0:T(8,128)(2,1)}', space=vmem, size = 0x4000, scoped, tag = 'scratch operand']
  %s0 = inlined_call_operand.vmem [shape: bf16[64,128], index: 0, kind: input, shape index: {}]
  %s1 = inlined_call_operand.vmem [shape: f32[1,128], index: 1, kind: input, shape index: {}]
  %s2 = inlined_call_operand.vmem [shape: f32[1,128], index: 2, kind: input, shape index: {}]
  %s3 = inlined_call_operand.hbm [shape: bf16[128,128], index: 3, kind: input, shape index: {}]
  %s4 = inlined_call_operand.vmem [shape: f32[1,128], index: 4, kind: input, shape index: {}]
  %s5 = inlined_call_operand.vmem [shape: bf16[64,128], index: 5, kind: output, shape index: {}]
  %s6 = sld [smem:[#allocation0]]
  $region38: #{calibvit_v2_forward.47} parent=0
    _
  %s8 = ssub.s32 1, %s6
  %s9 = scalar_select 0, %s8, %s6
  $region1: #{calibvit_v2_forward.47} parent=0
    #allocation3 [shape = 'u8[32768]{0}', space=vmem, size = 0x8000, scoped, tag = 'input window, operand 3, single buffered']
    #allocation4 [shape = 's32[1]{0}', space=sflag, size = 0x4, scoped, tag = 'scoped memory for calibvit_v2_forward.47']
    %10 = vsyncpa [#allocation4], 0
    // Predicated region
    $region2: #{calibvit_v2_forward.47} parent=1 // pred_check
      _
    $region3: #{calibvit_v2_forward.47} parent=1 // pred_check_branch
      %12 = sbr.rel (0) target = $region5
    $region4: #{calibvit_v2_forward.47} parent=1 // pred_region
      _
    $region5: #{calibvit_v2_forward.47} parent=1 // pred_fallthru
      _
    // Predicated region
    $region6: #{calibvit_v2_forward.47} parent=1 // pred_check
      _
    $region7: #{calibvit_v2_forward.47} parent=1 // pred_check_branch
      %14 = sbr.rel (0) target = $region9
    $region8: #{calibvit_v2_forward.47} parent=1 // pred_region
      _
    $region9: #{calibvit_v2_forward.47} parent=1 // pred_fallthru
      _
    // Predicated region
    $region10: #{calibvit_v2_forward.47} parent=1 // pred_check
      _
    $region11: #{calibvit_v2_forward.47} parent=1 // pred_check_branch
      %16 = sbr.rel (0) target = $region13
    $region12: #{calibvit_v2_forward.47} parent=1 // pred_region
      _
    $region13: #{calibvit_v2_forward.47} parent=1 // pred_fallthru
      _
    // Predicated region
    $region14: #{calibvit_v2_forward.47} parent=1 // pred_check
      _
    $region15: #{calibvit_v2_forward.47} parent=1 // pred_check_branch
      %18 = sbr.rel (0) target = $region17
    $region16: #{calibvit_v2_forward.47} parent=1 // pred_region
      %20 = vsyncadd [#allocation4], 0
      %s21 = sshll.u32 %s3, 4
      %s22 = int_to_ptr.hbm [resolvable:$true] %s21
      %s23 = sshll.u32 [#allocation3], 4
      %s24 = int_to_ptr.vmem [resolvable:$true] %s23
      %29 = dma.hbm_to_vmem [thread:$0]  %s22, 1024, %s24, [#allocation4], 64, 64, 4
    $region17: #{calibvit_v2_forward.47} parent=1 // pred_fallthru
      _
    // Predicated region
    $region18: #{calibvit_v2_forward.47} parent=1 // pred_check
      _
    $region19: #{calibvit_v2_forward.47} parent=1 // pred_check_branch
      %31 = sbr.rel (0) target = $region21
    $region20: #{calibvit_v2_forward.47} parent=1 // pred_region
      _
    $region21: #{calibvit_v2_forward.47} parent=1 // pred_fallthru
      _
    // Predicated region
    $region22: #{calibvit_v2_forward.47} parent=1 // pred_check
      _
    $region23: #{calibvit_v2_forward.47} parent=1 // pred_check_branch
      %33 = sbr.rel (0) target = $region25
    $region24: #{calibvit_v2_forward.47} parent=1 // pred_region
      %35 = dma.done [#allocation4], 1024
    $region25: #{calibvit_v2_forward.47} parent=1 // pred_fallthru
      _
    %p36 = scmp.eq.s32.totalorder 0, 0
    // Predicated region
    $region26: #{calibvit_v2_forward.47} parent=1 // pred_check
      %p37 = pneg %p36
    $region27: #{calibvit_v2_forward.47} parent=1 // pred_check_branch
      %39 = sbr.rel (%p37) target = $region29
    $region28: #{calibvit_v2_forward.47} parent=1 // pred_region
      %v40 = vld [vmem:[%s0] sm:$0xf]
      %v41 = vld [vmem:[%s0 + $0x4] sm:$0xf]
      %v42 = vld [vmem:[%s0 + $0x8] sm:$0xf]
      %v43 = vld [vmem:[%s0 + $0xc] sm:$0xf]
      %v44 = vld [vmem:[%s0 + $0x10] sm:$0xf]
      %v45 = vld [vmem:[%s0 + $0x14] sm:$0xf]
      %v46 = vld [vmem:[%s0 + $0x18] sm:$0xf]
      %v47 = vld [vmem:[%s0 + $0x1c] sm:$0xf]
      %v48 = vunpack.c.l.bf16 %v40
      %v49 = vunpack.c.l.bf16 %v41
      %v50 = vunpack.c.l.bf16 %v42
      %v51 = vunpack.c.l.bf16 %v43
      %v52 = vunpack.c.l.bf16 %v44
      %v53 = vunpack.c.l.bf16 %v45
      %v54 = vunpack.c.l.bf16 %v46
      %v55 = vunpack.c.l.bf16 %v47
      %56 = vadd.xlane.f32.xlu0 %v48
      %v57 = vpop.xlane.xlu0 %56
      %58 = vadd.xlane.f32.xlu0 %v49
      %v59 = vpop.xlane.xlu0 %58
      %60 = vadd.xlane.f32.xlu0 %v50
      %v61 = vpop.xlane.xlu0 %60
      %62 = vadd.xlane.f32.xlu0 %v51
      %v63 = vpop.xlane.xlu0 %62
      %64 = vadd.xlane.f32.xlu0 %v52
      %v65 = vpop.xlane.xlu0 %64
      %66 = vadd.xlane.f32.xlu0 %v53
      %v67 = vpop.xlane.xlu0 %66
      %68 = vadd.xlane.f32.xlu0 %v54
      %v69 = vpop.xlane.xlu0 %68
      %70 = vadd.xlane.f32.xlu0 %v55
      %v71 = vpop.xlane.xlu0 %70
      %v72 = vrcp.pop 128.0
      %v73 = vmul.f32 128.0, %v72
      %v74 = vsub.f32 1.0, %v73
      %v75 = vmul.f32 %v72, %v74
      %v76 = vadd.f32 %v72, %v75
      %vm77 = vweird.f32 %v72
      %v78 = vsel %vm77, %v72, %v76
      %v79 = vmul.f32 %v57, %v78
      %v80 = vmul.f32 %v59, %v78
      %v81 = vmul.f32 %v61, %v78
      %v82 = vmul.f32 %v63, %v78
      %v83 = vmul.f32 %v65, %v78
      %v84 = vmul.f32 %v67, %v78
      %v85 = vmul.f32 %v69, %v78
      %v86 = vmul.f32 %v71, %v78
      %v87 = vsub.f32 %v48, %v79
      %v88 = vsub.f32 %v49, %v80
      %v89 = vsub.f32 %v50, %v81
      %v90 = vsub.f32 %v51, %v82
      %v91 = vsub.f32 %v52, %v83
      %v92 = vsub.f32 %v53, %v84
      %v93 = vsub.f32 %v54, %v85
      %v94 = vsub.f32 %v55, %v86
      %v95 = vmul.f32 %v87, %v87
      %v96 = vmul.f32 %v88, %v88
      %v97 = vmul.f32 %v89, %v89
      %v98 = vmul.f32 %v90, %v90
      %v99 = vmul.f32 %v91, %v91
      %v100 = vmul.f32 %v92, %v92
      %v101 = vmul.f32 %v93, %v93
      %v102 = vmul.f32 %v94, %v94
      %103 = vadd.xlane.f32.xlu0 %v95
      %v104 = vpop.xlane.xlu0 %103
      %105 = vadd.xlane.f32.xlu0 %v96
      %v106 = vpop.xlane.xlu0 %105
      %107 = vadd.xlane.f32.xlu0 %v97
      %v108 = vpop.xlane.xlu0 %107
      %109 = vadd.xlane.f32.xlu0 %v98
      %v110 = vpop.xlane.xlu0 %109
      %111 = vadd.xlane.f32.xlu0 %v99
      %v112 = vpop.xlane.xlu0 %111
      %113 = vadd.xlane.f32.xlu0 %v100
      %v114 = vpop.xlane.xlu0 %113
      %115 = vadd.xlane.f32.xlu0 %v101
      %v116 = vpop.xlane.xlu0 %115
      %117 = vadd.xlane.f32.xlu0 %v102
      %v118 = vpop.xlane.xlu0 %117
      %v119 = vmul.f32 %v104, %v78
      %v120 = vmul.f32 %v106, %v78
      %v121 = vmul.f32 %v108, %v78
      %v122 = vmul.f32 %v110, %v78
      %v123 = vmul.f32 %v112, %v78
      %v124 = vmul.f32 %v114, %v78
      %v125 = vmul.f32 %v116, %v78
      %v126 = vmul.f32 %v118, %v78
      %v127 = vadd.f32 %v119, 1e-05
      %v128 = vadd.f32 %v120, 1e-05
      %v129 = vadd.f32 %v121, 1e-05
      %v130 = vadd.f32 %v122, 1e-05
      %v131 = vadd.f32 %v123, 1e-05
      %v132 = vadd.f32 %v124, 1e-05
      %v133 = vadd.f32 %v125, 1e-05
      %v134 = vadd.f32 %v126, 1e-05
      %v135 = vrsqrt.pop %v127
      %v136 = vmul.f32 %v135, %v127
      %v137 = vmul.f32 %v136, %v135
      %v138 = vmul.f32 0.5, %v137
      %v139 = vsub.f32 1.5, %v138
      %v140 = vmul.f32 %v135, %v139
      %vm141 = vweird.f32 %v127
      %vm142 = vweird.f32 %v135
      %vm143 = vmor %vm141, %vm142
      %v144 = vsel %vm143, %v135, %v140
      %v145 = vrsqrt.pop %v128
      %v146 = vmul.f32 %v145, %v128
      %v147 = vmul.f32 %v146, %v145
      %v148 = vmul.f32 0.5, %v147
      %v149 = vsub.f32 1.5, %v148
      %v150 = vmul.f32 %v145, %v149
      %vm151 = vweird.f32 %v128
      %vm152 = vweird.f32 %v145
      %vm153 = vmor %vm151, %vm152
      %v154 = vsel %vm153, %v145, %v150
      %v155 = vrsqrt.pop %v129
      %v156 = vmul.f32 %v155, %v129
      %v157 = vmul.f32 %v156, %v155
      %v158 = vmul.f32 0.5, %v157
      %v159 = vsub.f32 1.5, %v158
      %v160 = vmul.f32 %v155, %v159
      %vm161 = vweird.f32 %v129
      %vm162 = vweird.f32 %v155
      %vm163 = vmor %vm161, %vm162
      %v164 = vsel %vm163, %v155, %v160
      %v165 = vrsqrt.pop %v130
      %v166 = vmul.f32 %v165, %v130
      %v167 = vmul.f32 %v166, %v165
      %v168 = vmul.f32 0.5, %v167
      %v169 = vsub.f32 1.5, %v168
      %v170 = vmul.f32 %v165, %v169
      %vm171 = vweird.f32 %v130
      %vm172 = vweird.f32 %v165
      %vm173 = vmor %vm171, %vm172
      %v174 = vsel %vm173, %v165, %v170
      %v175 = vrsqrt.pop %v131
      %v176 = vmul.f32 %v175, %v131
      %v177 = vmul.f32 %v176, %v175
      %v178 = vmul.f32 0.5, %v177
      %v179 = vsub.f32 1.5, %v178
      %v180 = vmul.f32 %v175, %v179
      %vm181 = vweird.f32 %v131
      %vm182 = vweird.f32 %v175
      %vm183 = vmor %vm181, %vm182
      %v184 = vsel %vm183, %v175, %v180
      %v185 = vrsqrt.pop %v132
      %v186 = vmul.f32 %v185, %v132
      %v187 = vmul.f32 %v186, %v185
      %v188 = vmul.f32 0.5, %v187
      %v189 = vsub.f32 1.5, %v188
      %v190 = vmul.f32 %v185, %v189
      %vm191 = vweird.f32 %v132
      %vm192 = vweird.f32 %v185
      %vm193 = vmor %vm191, %vm192
      %v194 = vsel %vm193, %v185, %v190
      %v195 = vrsqrt.pop %v133
      %v196 = vmul.f32 %v195, %v133
      %v197 = vmul.f32 %v196, %v195
      %v198 = vmul.f32 0.5, %v197
      %v199 = vsub.f32 1.5, %v198
      %v200 = vmul.f32 %v195, %v199
      %vm201 = vweird.f32 %v133
      %vm202 = vweird.f32 %v195
      %vm203 = vmor %vm201, %vm202
      %v204 = vsel %vm203, %v195, %v200
      %v205 = vrsqrt.pop %v134
      %v206 = vmul.f32 %v205, %v134
      %v207 = vmul.f32 %v206, %v205
      %v208 = vmul.f32 0.5, %v207
      %v209 = vsub.f32 1.5, %v208
      %v210 = vmul.f32 %v205, %v209
      %vm211 = vweird.f32 %v134
      %vm212 = vweird.f32 %v205
      %vm213 = vmor %vm211, %vm212
      %v214 = vsel %vm213, %v205, %v210
      %v215 = vmul.f32 %v87, %v144
      %v216 = vmul.f32 %v88, %v154
      %v217 = vmul.f32 %v89, %v164
      %v218 = vmul.f32 %v90, %v174
      %v219 = vmul.f32 %v91, %v184
      %v220 = vmul.f32 %v92, %v194
      %v221 = vmul.f32 %v93, %v204
      %v222 = vmul.f32 %v94, %v214
      %v223 = vld [vmem:[%s1] sm:$0x1]
      %v225 = vperm.slane %v223, 0
      %v227 = vmul.f32 %v215, %v225
      %v228 = vmul.f32 %v216, %v225
      %v229 = vmul.f32 %v217, %v225
      %v230 = vmul.f32 %v218, %v225
      %v231 = vmul.f32 %v219, %v225
      %v232 = vmul.f32 %v220, %v225
      %v233 = vmul.f32 %v221, %v225
      %v234 = vmul.f32 %v222, %v225
      %v235 = vld [vmem:[%s2] sm:$0x1]
      %v237 = vperm.slane %v235, 0
      %v239 = vadd.f32 %v227, %v237
      %v240 = vadd.f32 %v228, %v237
      %v241 = vadd.f32 %v229, %v237
      %v242 = vadd.f32 %v230, %v237
      %v243 = vadd.f32 %v231, %v237
      %v244 = vadd.f32 %v232, %v237
      %v245 = vadd.f32 %v233, %v237
      %v246 = vadd.f32 %v234, %v237
      %v247 = vpack.c.bf16 %v239, %v239
      %v248 = vpack.c.bf16 %v240, %v240
      %v249 = vpack.c.bf16 %v241, %v241
      %v250 = vpack.c.bf16 %v242, %v242
      %v251 = vpack.c.bf16 %v243, %v243
      %v252 = vpack.c.bf16 %v244, %v244
      %v253 = vpack.c.bf16 %v245, %v245
      %v254 = vpack.c.bf16 %v246, %v246
      %255 = vst [vmem:[#allocation2] sm:$0xf] %v247
      %256 = vst [vmem:[#allocation2 + $0x4] sm:$0xf] %v248
      %257 = vst [vmem:[#allocation2 + $0x8] sm:$0xf] %v249
      %258 = vst [vmem:[#allocation2 + $0xc] sm:$0xf] %v250
      %259 = vst [vmem:[#allocation2 + $0x10] sm:$0xf] %v251
      %260 = vst [vmem:[#allocation2 + $0x14] sm:$0xf] %v252
      %261 = vst [vmem:[#allocation2 + $0x18] sm:$0xf] %v253
      %262 = vst [vmem:[#allocation2 + $0x1c] sm:$0xf] %v254
    $region29: #{calibvit_v2_forward.47} parent=1 // pred_fallthru
      _
    %v263 = vld [vmem:[#allocation2] sm:$0xf]
    %v264 = vld [vmem:[#allocation2 + $0x4] sm:$0xf]
    %v265 = vld [vmem:[#allocation2 + $0x8] sm:$0xf]
    %v266 = vld [vmem:[#allocation2 + $0xc] sm:$0xf]
    %v267 = vld [vmem:[#allocation2 + $0x10] sm:$0xf]
    %v268 = vld [vmem:[#allocation2 + $0x14] sm:$0xf]
    %v269 = vld [vmem:[#allocation2 + $0x18] sm:$0xf]
    %v270 = vld [vmem:[#allocation2 + $0x1c] sm:$0xf]
    %v271 = vld [vmem:[#allocation3] sm:$0xf]
    %v272 = vld [vmem:[#allocation3 + $0x4] sm:$0xf]
    %v273 = vld [vmem:[#allocation3 + $0x8] sm:$0xf]
    %v274 = vld [vmem:[#allocation3 + $0xc] sm:$0xf]
    %v275 = vld [vmem:[#allocation3 + $0x10] sm:$0xf]
    %v276 = vld [vmem:[#allocation3 + $0x14] sm:$0xf]
    %v277 = vld [vmem:[#allocation3 + $0x18] sm:$0xf]
    %v278 = vld [vmem:[#allocation3 + $0x1c] sm:$0xf]
    %v279 = vld [vmem:[#allocation3 + $0x20] sm:$0xf]
    %v280 = vld [vmem:[#allocation3 + $0x24] sm:$0xf]
    %v281 = vld [vmem:[#allocation3 + $0x28] sm:$0xf]
    %v282 = vld [vmem:[#allocation3 + $0x2c] sm:$0xf]
    %v283 = vld [vmem:[#allocation3 + $0x30] sm:$0xf]
    %v284 = vld [vmem:[#allocation3 + $0x34] sm:$0xf]
    %v285 = vld [vmem:[#allocation3 + $0x38] sm:$0xf]
    %v286 = vld [vmem:[#allocation3 + $0x3c] sm:$0xf]
    %v287 = vld [vmem:[%s4] sm:$0x1]
    %v289 = vperm.slane %v287, 0
    %v299 = vunpack.c.l.b16 %v263
    %v300 = vunpack.c.l.b16 %v264
    %v301 = vunpack.c.l.b16 %v265
    %v302 = vunpack.c.l.b16 %v266
    %v303 = vunpack.c.l.b16 %v267
    %v304 = vunpack.c.l.b16 %v268
    %v305 = vunpack.c.l.b16 %v269
    %v306 = vunpack.c.l.b16 %v270
    %v307 = vpack.c.b16 %v300, %v299
    %v308 = vpack.c.b16 %v302, %v301
    %v309 = vpack.c.b16 %v304, %v303
    %v310 = vpack.c.b16 %v306, %v305
    %v331 = vunpack.c.l.b16 %v271
    %v332 = vunpack.c.l.b16 %v272
    %v333 = vunpack.c.l.b16 %v273
    %v334 = vunpack.c.l.b16 %v274
    %v335 = vunpack.c.l.b16 %v275
    %v336 = vunpack.c.l.b16 %v276
    %v337 = vunpack.c.l.b16 %v277
    %v338 = vunpack.c.l.b16 %v278
    %v339 = vunpack.c.l.b16 %v279
    %v340 = vunpack.c.l.b16 %v280
    %v341 = vunpack.c.l.b16 %v281
    %v342 = vunpack.c.l.b16 %v282
    %v343 = vunpack.c.l.b16 %v283
    %v344 = vunpack.c.l.b16 %v284
    %v345 = vunpack.c.l.b16 %v285
    %v346 = vunpack.c.l.b16 %v286
    %v347 = vpack.c.b16 %v332, %v331
    %v348 = vpack.c.b16 %v334, %v333
    %v349 = vpack.c.b16 %v336, %v335
    %v350 = vpack.c.b16 %v338, %v337
    %v351 = vpack.c.b16 %v340, %v339
    %v352 = vpack.c.b16 %v342, %v341
    %v353 = vpack.c.b16 %v344, %v343
    %v354 = vpack.c.b16 %v346, %v345
    %363 = vmatpush.bf16.msra.mxu0 %v354
    %364 = vmatpush.bf16.msra.mxu0 %v353
    %365 = vmatpush.bf16.msra.mxu0 %v352
    %366 = vmatpush.bf16.msra.mxu0 %v351
    %367 = vmatpush.bf16.msra.mxu0 %v350
    %368 = vmatpush.bf16.msra.mxu0 %v349
    %369 = vmatpush.bf16.msra.mxu0 %v348
    %370 = vmatpush.bf16.msra.mxu0 %v347
    %371 = vmatmul.bf16.gmra.mxu0 %v307
    %v372 = vpop.f32.mrf.mxu0
    %v373 = vadd.f32 %v289, %v372
    %v374 = vpop.f32.mrf.mxu0
    %v375 = vadd.f32 %v289, %v374
    %376 = vmatmul.bf16.gmra.mxu0 %v308
    %v377 = vpop.f32.mrf.mxu0
    %v378 = vadd.f32 %v289, %v377
    %v379 = vpop.f32.mrf.mxu0
    %v380 = vadd.f32 %v289, %v379
    %381 = vmatmul.bf16.gmra.mxu0 %v309
    %v382 = vpop.f32.mrf.mxu0
    %v383 = vadd.f32 %v289, %v382
    %v384 = vpop.f32.mrf.mxu0
    %v385 = vadd.f32 %v289, %v384
    %386 = vmatmul.bf16.gmra.mxu0 %v310
    %v387 = vpop.f32.mrf.mxu0
    %v388 = vadd.f32 %v289, %v387
    %v389 = vpop.f32.mrf.mxu0
    %v390 = vadd.f32 %v289, %v389
    %391 = vdwg.mxu0
    %v392 = vpack.c.bf16 %v373, %v373
    %v393 = vpack.c.bf16 %v375, %v375
    %v394 = vpack.c.bf16 %v378, %v378
    %v395 = vpack.c.bf16 %v380, %v380
    %v396 = vpack.c.bf16 %v383, %v383
    %v397 = vpack.c.bf16 %v385, %v385
    %v398 = vpack.c.bf16 %v388, %v388
    %v399 = vpack.c.bf16 %v390, %v390
    %400 = vst [vmem:[%s5] sm:$0xf] %v392
    %401 = vst [vmem:[%s5 + $0x4] sm:$0xf] %v393
    %402 = vst [vmem:[%s5 + $0x8] sm:$0xf] %v394
    %403 = vst [vmem:[%s5 + $0xc] sm:$0xf] %v395
    %404 = vst [vmem:[%s5 + $0x10] sm:$0xf] %v396
    %405 = vst [vmem:[%s5 + $0x14] sm:$0xf] %v397
    %406 = vst [vmem:[%s5 + $0x18] sm:$0xf] %v398
    %407 = vst [vmem:[%s5 + $0x1c] sm:$0xf] %v399
    // Predicated region
    $region30: #{calibvit_v2_forward.47} parent=1 // pred_check
      _
    $region31: #{calibvit_v2_forward.47} parent=1 // pred_check_branch
      %409 = sbr.rel (0) target = $region33
    $region32: #{calibvit_v2_forward.47} parent=1 // pred_region
      _
    $region33: #{calibvit_v2_forward.47} parent=1 // pred_fallthru
      _
    // Predicated region
    $region34: #{calibvit_v2_forward.47} parent=1 // pred_check
      _
    $region35: #{calibvit_v2_forward.47} parent=1 // pred_check_branch
      %411 = sbr.rel (0) target = $region37
    $region36: #{calibvit_v2_forward.47} parent=1 // pred_region
      _
    $region37: #{calibvit_v2_forward.47} parent=1 // pred_fallthru
      _
    %412 = vsyncpa [#allocation4], 1

// kernel: calibvit_v2_forward.53
$region0: #{calibvit_v2_forward.53}
  #allocation0 [shape = 'u32[]', space=smem, size = 0x4, offset = 0x4, fixed_abs, tag = 'smem constant byte address 0x4 - core index']
  #allocation1 [shape = 'u32[72,128]{1,0:T(1,128)}', space=vmem, size = 0x9000, scoped, tag = 'internal scratch']
  %s0 = inlined_call_operand.vmem [shape: bf16[2,32,128], index: 0, kind: input, shape index: {}]
  %s1 = inlined_call_operand.vmem [shape: f32[1,1,128], index: 1, kind: input, shape index: {}]
  %s2 = inlined_call_operand.vmem [shape: f32[1,1,128], index: 2, kind: input, shape index: {}]
  %s3 = inlined_call_operand.vmem [shape: f32[32,128], index: 3, kind: input, shape index: {}]
  %s4 = inlined_call_operand.vmem [shape: f32[1,128], index: 4, kind: input, shape index: {}]
  %s5 = inlined_call_operand.vmem [shape: f32[128,6], index: 5, kind: input, shape index: {}]
  %s6 = inlined_call_operand.vmem [shape: f32[1,6], index: 6, kind: input, shape index: {}]
  %s7 = inlined_call_operand.vmem [shape: f32[2,6], index: 7, kind: output, shape index: {}]
  %s8 = sld [smem:[#allocation0]]
  $region38: #{calibvit_v2_forward.53} parent=0
    _
  %s10 = ssub.s32 1, %s8
  %s11 = scalar_select 0, %s10, %s8
  // Predicated region
  $region2: #{calibvit_v2_forward.53} parent=0 // pred_check
    _
  $region3: #{calibvit_v2_forward.53} parent=0 // pred_check_branch
    %13 = sbr.rel (0) target = $region5
  $region4: #{calibvit_v2_forward.53} parent=0 // pred_region
    _
  $region5: #{calibvit_v2_forward.53} parent=0 // pred_fallthru
    _
  // Predicated region
  $region6: #{calibvit_v2_forward.53} parent=0 // pred_check
    _
  $region7: #{calibvit_v2_forward.53} parent=0 // pred_check_branch
    %15 = sbr.rel (0) target = $region9
  $region8: #{calibvit_v2_forward.53} parent=0 // pred_region
    _
  $region9: #{calibvit_v2_forward.53} parent=0 // pred_fallthru
    _
  // Predicated region
  $region10: #{calibvit_v2_forward.53} parent=0 // pred_check
    _
  $region11: #{calibvit_v2_forward.53} parent=0 // pred_check_branch
    %17 = sbr.rel (0) target = $region13
  $region12: #{calibvit_v2_forward.53} parent=0 // pred_region
    _
  $region13: #{calibvit_v2_forward.53} parent=0 // pred_fallthru
    _
  // Predicated region
  $region14: #{calibvit_v2_forward.53} parent=0 // pred_check
    _
  $region15: #{calibvit_v2_forward.53} parent=0 // pred_check_branch
    %19 = sbr.rel (0) target = $region17
  $region16: #{calibvit_v2_forward.53} parent=0 // pred_region
    _
  $region17: #{calibvit_v2_forward.53} parent=0 // pred_fallthru
    _
  // Predicated region
  $region18: #{calibvit_v2_forward.53} parent=0 // pred_check
    _
  $region19: #{calibvit_v2_forward.53} parent=0 // pred_check_branch
    %21 = sbr.rel (0) target = $region21
  $region20: #{calibvit_v2_forward.53} parent=0 // pred_region
    _
  $region21: #{calibvit_v2_forward.53} parent=0 // pred_fallthru
    _
  // Predicated region
  $region22: #{calibvit_v2_forward.53} parent=0 // pred_check
    _
  $region23: #{calibvit_v2_forward.53} parent=0 // pred_check_branch
    %23 = sbr.rel (0) target = $region25
  $region24: #{calibvit_v2_forward.53} parent=0 // pred_region
    _
  $region25: #{calibvit_v2_forward.53} parent=0 // pred_fallthru
    _
  // Predicated region
  $region26: #{calibvit_v2_forward.53} parent=0 // pred_check
    _
  $region27: #{calibvit_v2_forward.53} parent=0 // pred_check_branch
    %25 = sbr.rel (0) target = $region29
  $region28: #{calibvit_v2_forward.53} parent=0 // pred_region
    _
  $region29: #{calibvit_v2_forward.53} parent=0 // pred_fallthru
    _
  %v26 = vld [vmem:[%s0] sm:$0xf]
  %v27 = vld [vmem:[%s0 + $0x4] sm:$0xf]
  %v28 = vld [vmem:[%s0 + $0x8] sm:$0xf]
  %v29 = vld [vmem:[%s0 + $0xc] sm:$0xf]
  %v30 = vld [vmem:[%s0 + $0x10] sm:$0xf]
  %v31 = vld [vmem:[%s0 + $0x14] sm:$0xf]
  %v32 = vld [vmem:[%s0 + $0x18] sm:$0xf]
  %v33 = vld [vmem:[%s0 + $0x1c] sm:$0xf]
  %v34 = vunpack.c.l.bf16 %v26
  %v35 = vunpack.c.l.bf16 %v27
  %v36 = vunpack.c.l.bf16 %v28
  %v37 = vunpack.c.l.bf16 %v29
  %v38 = vunpack.c.l.bf16 %v30
  %v39 = vunpack.c.l.bf16 %v31
  %v40 = vunpack.c.l.bf16 %v32
  %v41 = vunpack.c.l.bf16 %v33
  %42 = vadd.xlane.f32.xlu0 %v34
  %v43 = vpop.xlane.xlu0 %42
  %44 = vadd.xlane.f32.xlu0 %v35
  %v45 = vpop.xlane.xlu0 %44
  %46 = vadd.xlane.f32.xlu0 %v36
  %v47 = vpop.xlane.xlu0 %46
  %48 = vadd.xlane.f32.xlu0 %v37
  %v49 = vpop.xlane.xlu0 %48
  %50 = vadd.xlane.f32.xlu0 %v38
  %v51 = vpop.xlane.xlu0 %50
  %52 = vadd.xlane.f32.xlu0 %v39
  %v53 = vpop.xlane.xlu0 %52
  %54 = vadd.xlane.f32.xlu0 %v40
  %v55 = vpop.xlane.xlu0 %54
  %56 = vadd.xlane.f32.xlu0 %v41
  %v57 = vpop.xlane.xlu0 %56
  %v58 = vrcp.pop 128.0
  %v59 = vmul.f32 128.0, %v58
  %v60 = vsub.f32 1.0, %v59
  %v61 = vmul.f32 %v58, %v60
  %v62 = vadd.f32 %v58, %v61
  %vm63 = vweird.f32 %v58
  %v64 = vsel %vm63, %v58, %v62
  %v65 = vmul.f32 %v43, %v64
  %v66 = vmul.f32 %v45, %v64
  %v67 = vmul.f32 %v47, %v64
  %v68 = vmul.f32 %v49, %v64
  %v69 = vmul.f32 %v51, %v64
  %v70 = vmul.f32 %v53, %v64
  %v71 = vmul.f32 %v55, %v64
  %v72 = vmul.f32 %v57, %v64
  %v73 = vsub.f32 %v34, %v65
  %v74 = vsub.f32 %v35, %v66
  %v75 = vsub.f32 %v36, %v67
  %v76 = vsub.f32 %v37, %v68
  %v77 = vsub.f32 %v38, %v69
  %v78 = vsub.f32 %v39, %v70
  %v79 = vsub.f32 %v40, %v71
  %v80 = vsub.f32 %v41, %v72
  %v81 = vmul.f32 %v73, %v73
  %v82 = vmul.f32 %v74, %v74
  %v83 = vmul.f32 %v75, %v75
  %v84 = vmul.f32 %v76, %v76
  %v85 = vmul.f32 %v77, %v77
  %v86 = vmul.f32 %v78, %v78
  %v87 = vmul.f32 %v79, %v79
  %v88 = vmul.f32 %v80, %v80
  %89 = vadd.xlane.f32.xlu0 %v81
  %v90 = vpop.xlane.xlu0 %89
  %91 = vadd.xlane.f32.xlu0 %v82
  %v92 = vpop.xlane.xlu0 %91
  %93 = vadd.xlane.f32.xlu0 %v83
  %v94 = vpop.xlane.xlu0 %93
  %95 = vadd.xlane.f32.xlu0 %v84
  %v96 = vpop.xlane.xlu0 %95
  %97 = vadd.xlane.f32.xlu0 %v85
  %v98 = vpop.xlane.xlu0 %97
  %99 = vadd.xlane.f32.xlu0 %v86
  %v100 = vpop.xlane.xlu0 %99
  %101 = vadd.xlane.f32.xlu0 %v87
  %v102 = vpop.xlane.xlu0 %101
  %103 = vadd.xlane.f32.xlu0 %v88
  %v104 = vpop.xlane.xlu0 %103
  %v105 = vmul.f32 %v90, %v64
  %v106 = vmul.f32 %v92, %v64
  %v107 = vmul.f32 %v94, %v64
  %v108 = vmul.f32 %v96, %v64
  %v109 = vmul.f32 %v98, %v64
  %v110 = vmul.f32 %v100, %v64
  %v111 = vmul.f32 %v102, %v64
  %v112 = vmul.f32 %v104, %v64
  %v113 = vadd.f32 %v105, 1e-05
  %v114 = vadd.f32 %v106, 1e-05
  %v115 = vadd.f32 %v107, 1e-05
  %v116 = vadd.f32 %v108, 1e-05
  %v117 = vadd.f32 %v109, 1e-05
  %v118 = vadd.f32 %v110, 1e-05
  %v119 = vadd.f32 %v111, 1e-05
  %v120 = vadd.f32 %v112, 1e-05
  %v121 = vrsqrt.pop %v113
  %v122 = vmul.f32 %v121, %v113
  %v123 = vmul.f32 %v122, %v121
  %v124 = vmul.f32 0.5, %v123
  %v125 = vsub.f32 1.5, %v124
  %v126 = vmul.f32 %v121, %v125
  %vm127 = vweird.f32 %v113
  %vm128 = vweird.f32 %v121
  %vm129 = vmor %vm127, %vm128
  %v130 = vsel %vm129, %v121, %v126
  %v131 = vrsqrt.pop %v114
  %v132 = vmul.f32 %v131, %v114
  %v133 = vmul.f32 %v132, %v131
  %v134 = vmul.f32 0.5, %v133
  %v135 = vsub.f32 1.5, %v134
  %v136 = vmul.f32 %v131, %v135
  %vm137 = vweird.f32 %v114
  %vm138 = vweird.f32 %v131
  %vm139 = vmor %vm137, %vm138
  %v140 = vsel %vm139, %v131, %v136
  %v141 = vrsqrt.pop %v115
  %v142 = vmul.f32 %v141, %v115
  %v143 = vmul.f32 %v142, %v141
  %v144 = vmul.f32 0.5, %v143
  %v145 = vsub.f32 1.5, %v144
  %v146 = vmul.f32 %v141, %v145
  %vm147 = vweird.f32 %v115
  %vm148 = vweird.f32 %v141
  %vm149 = vmor %vm147, %vm148
  %v150 = vsel %vm149, %v141, %v146
  %v151 = vrsqrt.pop %v116
  %v152 = vmul.f32 %v151, %v116
  %v153 = vmul.f32 %v152, %v151
  %v154 = vmul.f32 0.5, %v153
  %v155 = vsub.f32 1.5, %v154
  %v156 = vmul.f32 %v151, %v155
  %vm157 = vweird.f32 %v116
  %vm158 = vweird.f32 %v151
  %vm159 = vmor %vm157, %vm158
  %v160 = vsel %vm159, %v151, %v156
  %v161 = vrsqrt.pop %v117
  %v162 = vmul.f32 %v161, %v117
  %v163 = vmul.f32 %v162, %v161
  %v164 = vmul.f32 0.5, %v163
  %v165 = vsub.f32 1.5, %v164
  %v166 = vmul.f32 %v161, %v165
  %vm167 = vweird.f32 %v117
  %vm168 = vweird.f32 %v161
  %vm169 = vmor %vm167, %vm168
  %v170 = vsel %vm169, %v161, %v166
  %v171 = vrsqrt.pop %v118
  %v172 = vmul.f32 %v171, %v118
  %v173 = vmul.f32 %v172, %v171
  %v174 = vmul.f32 0.5, %v173
  %v175 = vsub.f32 1.5, %v174
  %v176 = vmul.f32 %v171, %v175
  %vm177 = vweird.f32 %v118
  %vm178 = vweird.f32 %v171
  %vm179 = vmor %vm177, %vm178
  %v180 = vsel %vm179, %v171, %v176
  %v181 = vrsqrt.pop %v119
  %v182 = vmul.f32 %v181, %v119
  %v183 = vmul.f32 %v182, %v181
  %v184 = vmul.f32 0.5, %v183
  %v185 = vsub.f32 1.5, %v184
  %v186 = vmul.f32 %v181, %v185
  %vm187 = vweird.f32 %v119
  %vm188 = vweird.f32 %v181
  %vm189 = vmor %vm187, %vm188
  %v190 = vsel %vm189, %v181, %v186
  %v191 = vrsqrt.pop %v120
  %v192 = vmul.f32 %v191, %v120
  %v193 = vmul.f32 %v192, %v191
  %v194 = vmul.f32 0.5, %v193
  %v195 = vsub.f32 1.5, %v194
  %v196 = vmul.f32 %v191, %v195
  %vm197 = vweird.f32 %v120
  %vm198 = vweird.f32 %v191
  %vm199 = vmor %vm197, %vm198
  %v200 = vsel %vm199, %v191, %v196
  %v201 = vmul.f32 %v73, %v130
  %v202 = vmul.f32 %v74, %v140
  %v203 = vmul.f32 %v75, %v150
  %v204 = vmul.f32 %v76, %v160
  %v205 = vmul.f32 %v77, %v170
  %v206 = vmul.f32 %v78, %v180
  %v207 = vmul.f32 %v79, %v190
  %v208 = vmul.f32 %v80, %v200
  %v209 = vld [vmem:[%s1] sm:$0x1]
  %v211 = vperm.slane %v209, 0
  %v213 = vmul.f32 %v201, %v211
  %v214 = vmul.f32 %v202, %v211
  %v215 = vmul.f32 %v203, %v211
  %v216 = vmul.f32 %v204, %v211
  %v217 = vmul.f32 %v205, %v211
  %v218 = vmul.f32 %v206, %v211
  %v219 = vmul.f32 %v207, %v211
  %v220 = vmul.f32 %v208, %v211
  %v221 = vld [vmem:[%s2] sm:$0x1]
  %v223 = vperm.slane %v221, 0
  %v225 = vadd.f32 %v213, %v223
  %v226 = vadd.f32 %v214, %v223
  %v227 = vadd.f32 %v215, %v223
  %v228 = vadd.f32 %v216, %v223
  %v229 = vadd.f32 %v217, %v223
  %v230 = vadd.f32 %v218, %v223
  %v231 = vadd.f32 %v219, %v223
  %v232 = vadd.f32 %v220, %v223
  %233 = vadd.xlane.f32.xlu0 %v225
  %v234 = vpop.xlane.xlu0 %233
  %235 = vadd.xlane.f32.xlu0 %v226
  %v236 = vpop.xlane.xlu0 %235
  %237 = vadd.xlane.f32.xlu0 %v227
  %v238 = vpop.xlane.xlu0 %237
  %239 = vadd.xlane.f32.xlu0 %v228
  %v240 = vpop.xlane.xlu0 %239
  %241 = vadd.xlane.f32.xlu0 %v229
  %v242 = vpop.xlane.xlu0 %241
  %243 = vadd.xlane.f32.xlu0 %v230
  %v244 = vpop.xlane.xlu0 %243
  %245 = vadd.xlane.f32.xlu0 %v231
  %v246 = vpop.xlane.xlu0 %245
  %247 = vadd.xlane.f32.xlu0 %v232
  %v248 = vpop.xlane.xlu0 %247
  %v249 = vmul.f32 %v234, %v64
  %v250 = vmul.f32 %v236, %v64
  %v251 = vmul.f32 %v238, %v64
  %v252 = vmul.f32 %v240, %v64
  %v253 = vmul.f32 %v242, %v64
  %v254 = vmul.f32 %v244, %v64
  %v255 = vmul.f32 %v246, %v64
  %v256 = vmul.f32 %v248, %v64
  %v257 = vld [vmem:[%s3] sm:$0xff]
  %v258 = vld [vmem:[%s3 + $0x8] sm:$0xff]
  %v259 = vld [vmem:[%s3 + $0x10] sm:$0xff]
  %v260 = vld [vmem:[%s3 + $0x18] sm:$0xff]
  %v261 = vld [vmem:[%s4] sm:$0x1]
  %v263 = vperm.slane %v261, 0
  %v273 = vlaneseq
  %v274 = vand.u32 %v273, 127
  %v275 = vperm.slane %v249, %v274
  %v276 = vadd.s32 %v274, 4294967288
  %v277 = vperm.slane %v250, %v276
  %vm278 = vcmask 130112
  %v279 = vsel %vm278, %v277, %v275
  %v280 = vadd.s32 %v274, 4294967280
  %v281 = vperm.slane %v251, %v280
  %vm282 = vcmask 195712
  %v283 = vsel %vm282, %v281, %v279
  %v284 = vadd.s32 %v274, 4294967272
  %v285 = vperm.slane %v252, %v284
  %vm286 = vcmask 261312
  %v287 = vsel %vm286, %v285, %v283
  %v288 = vperm.slane %v253, %v274
  %v289 = vperm.slane %v254, %v276
  %v290 = vsel %vm278, %v289, %v288
  %v291 = vperm.slane %v255, %v280
  %v292 = vsel %vm282, %v291, %v290
  %v293 = vperm.slane %v256, %v284
  %v294 = vsel %vm286, %v293, %v292
  %vm295 = vcmask 1041409
  %v296 = vsel %vm295, %v294, %v287
  %vm297 = vcmask 261120
  %v298 = vsel %vm297, %v296, 0
  %300 = vmatpush.msra.mxu0 0.0
  %301 = vmatpush.msra.mxu0 0.0
  %302 = vmatpush.msra.mxu0 0.0
  %303 = vmatpush.msra.mxu0 0.0
  %304 = vmatpush.msra.mxu0 0.0
  %305 = vmatpush.msra.mxu0 0.0
  %306 = vmatpush.msra.mxu0 0.0
  %307 = vmatpush.msra.mxu0 0.0
  %308 = vmatpush.msra.mxu0 0.0
  %309 = vmatpush.msra.mxu0 0.0
  %310 = vmatpush.msra.mxu0 0.0
  %311 = vmatpush.msra.mxu0 0.0
  %312 = vmatpush.msra.mxu0 %v260
  %313 = vmatpush.msra.mxu0 %v259
  %314 = vmatpush.msra.mxu0 %v258
  %315 = vmatpush.msra.mxu0 %v257
  %316 = vmatmul.f32.gmra.mxu0 %v298
  %v317 = vpop.f32.mrf.mxu0
  %v318 = vadd.f32 %v263, %v317
  %319 = vdwg.mxu0
  %v320 = vmax.f32 %v318, 0.0
  %v321 = vld [vmem:[%s5] sm:$0xff]
  %v322 = vld [vmem:[%s5 + $0x8] sm:$0xff]
  %v323 = vld [vmem:[%s5 + $0x10] sm:$0xff]
  %v324 = vld [vmem:[%s5 + $0x18] sm:$0xff]
  %v325 = vld [vmem:[%s5 + $0x20] sm:$0xff]
  %v326 = vld [vmem:[%s5 + $0x28] sm:$0xff]
  %v327 = vld [vmem:[%s5 + $0x30] sm:$0xff]
  %v328 = vld [vmem:[%s5 + $0x38] sm:$0xff]
  %v329 = vld [vmem:[%s5 + $0x40] sm:$0xff]
  %v330 = vld [vmem:[%s5 + $0x48] sm:$0xff]
  %v331 = vld [vmem:[%s5 + $0x50] sm:$0xff]
  %v332 = vld [vmem:[%s5 + $0x58] sm:$0xff]
  %v333 = vld [vmem:[%s5 + $0x60] sm:$0xff]
  %v334 = vld [vmem:[%s5 + $0x68] sm:$0xff]
  %v335 = vld [vmem:[%s5 + $0x70] sm:$0xff]
  %v336 = vld [vmem:[%s5 + $0x78] sm:$0xff]
  %v337 = vld [vmem:[%s6] sm:$0x1]
  %v339 = vperm.slane %v337, 0
  %341 = vmatpush.msra.mxu0 %v336
  %342 = vmatpush.msra.mxu0 %v335
  %343 = vmatpush.msra.mxu0 %v334
  %344 = vmatpush.msra.mxu0 %v333
  %345 = vmatpush.msra.mxu0 %v332
  %346 = vmatpush.msra.mxu0 %v331
  %347 = vmatpush.msra.mxu0 %v330
  %348 = vmatpush.msra.mxu0 %v329
  %349 = vmatpush.msra.mxu0 %v328
  %350 = vmatpush.msra.mxu0 %v327
  %351 = vmatpush.msra.mxu0 %v326
  %352 = vmatpush.msra.mxu0 %v325
  %353 = vmatpush.msra.mxu0 %v324
  %354 = vmatpush.msra.mxu0 %v323
  %355 = vmatpush.msra.mxu0 %v322
  %356 = vmatpush.msra.mxu0 %v321
  %357 = vmatmul.f32.gmra.mxu0 %v320
  %v358 = vpop.f32.mrf.mxu0
  %v359 = vadd.f32 %v339, %v358
  %360 = vdwg.mxu0
  %vm361 = vcmask 41984
  %362 = vst.msk [vmem:[%s7] sm:$0x3] %vm361, %v359
  // Predicated region
  $region30: #{calibvit_v2_forward.53} parent=0 // pred_check
    _
  $region31: #{calibvit_v2_forward.53} parent=0 // pred_check_branch
    %364 = sbr.rel (0) target = $region33
  $region32: #{calibvit_v2_forward.53} parent=0 // pred_region
    _
  $region33: #{calibvit_v2_forward.53} parent=0 // pred_fallthru
    _
  // Predicated region
  $region34: #{calibvit_v2_forward.53} parent=0 // pred_check
    _
  $region35: #{calibvit_v2_forward.53} parent=0 // pred_check_branch
    %366 = sbr.rel (0) target = $region37
  $region36: #{calibvit_v2_forward.53} parent=0 // pred_region
    _
  $region37: #{calibvit_v2_forward.53} parent=0 // pred_fallthru
    _

</llo_original>
